<compile_context>
chip_gen: v7x
topology: tpu7x:2x2x1
jax: 0.10.0
libtpu: 0.0.40
codegen_flags: <defaults>
</compile_context>

<pallas_src>
import functools
import math

import jax
import jax.numpy as jnp
from jax.experimental import pallas as pl
from jax.experimental.pallas import tpu as pltpu

D_MODEL = 512
D_HIDDEN = 4 * D_MODEL          # 2048
NUM_HEADS = 8
HEAD_DIM = D_MODEL // NUM_HEADS  # 64
LN_EPS = 1e-5
ATTN_SCALE = 1.0 / math.sqrt(HEAD_DIM)
NEG_INF = float("-inf")


def _layer_norm_f32(x, gamma, beta):
    mu = jnp.mean(x, axis=-1, keepdims=True)
    c = x - mu
    var = jnp.mean(c * c, axis=-1, keepdims=True)
    return c * jax.lax.rsqrt(var + LN_EPS) * gamma + beta


# --------------------- kernel 1: out = x + MHA(LN1(x)) ----------------------
def mha_block_kernel(x_ref, g_ref, b_ref, wq_ref, wk_ref, wv_ref, wo_ref,
                     bo_ref, o_ref, k_scr, v_scr):
    # x_ref: (1, T, D) f32 (full sequence for this batch element, only
    #        re-DMA'd when the batch index changes)
    # wq/wk/wv/wo: (D, D) bf16 full-width weights; k_scr/v_scr: (T, D) bf16
    tq = o_ref.shape[1]
    qi = pl.program_id(1)

    # ---- per-batch K/V: computed once at the first q-tile, kept in scratch
    @pl.when(qi == 0)
    def _():
        ln_kv = _layer_norm_f32(x_ref[0], g_ref[...], b_ref[...]
                                ).astype(jnp.bfloat16)
        k_scr[...] = jnp.dot(ln_kv, wk_ref[...],
                             preferred_element_type=jnp.float32
                             ).astype(jnp.bfloat16)
        v_scr[...] = jnp.dot(ln_kv, wv_ref[...],
                             preferred_element_type=jnp.float32
                             ).astype(jnp.bfloat16)

    # ---- Q for this query tile (full-width 512-wide MXU matmul)
    q_start = pl.multiple_of(qi * tq, tq)
    x_q = x_ref[0, pl.ds(q_start, tq), :]                       # (tq, D) f32
    ln_q = _layer_norm_f32(x_q, g_ref[...], b_ref[...])
    q_all = jnp.dot(ln_q.astype(jnp.bfloat16), wq_ref[...],
                    preferred_element_type=jnp.float32)         # (tq, D) f32

    q_rows = qi * tq + jax.lax.broadcasted_iota(jnp.int32, (tq, tq), 0)

    ctx_heads = []
    for h in range(NUM_HEADS):                 # static head loop (8)
        hs = h * HEAD_DIM
        q_h = q_all[:, hs:hs + HEAD_DIM].astype(jnp.bfloat16)   # (tq, Dh)

        def kv_step(kv, carry, q_h=q_h, hs=hs):
            m_p, l_p, acc_p = carry
            start = pl.multiple_of(kv * tq, tq)
            k_blk = k_scr[pl.ds(start, tq), hs:hs + HEAD_DIM]   # (tq, Dh) bf16
            v_blk = v_scr[pl.ds(start, tq), hs:hs + HEAD_DIM]
            # q_h @ k_blk^T without materializing a transpose
            s = jax.lax.dot_general(
                q_h, k_blk, (((1,), (1,)), ((), ())),
                preferred_element_type=jnp.float32) * ATTN_SCALE
            k_cols = start + jax.lax.broadcasted_iota(jnp.int32, (tq, tq), 1)
            s = jnp.where(k_cols <= q_rows, s, NEG_INF)
            m_n = jnp.maximum(m_p, s.max(-1, keepdims=True))
            alpha = jnp.exp(m_p - m_n)
            p = jnp.exp(s - m_n)                                # f32 softmax
            l_n = alpha * l_p + p.sum(-1, keepdims=True)
            acc_n = alpha * acc_p + jnp.dot(
                p.astype(jnp.bfloat16), v_blk,
                preferred_element_type=jnp.float32)
            return m_n, l_n, acc_n

        m0 = jnp.full((tq, 1), NEG_INF, jnp.float32)
        l0 = jnp.zeros((tq, 1), jnp.float32)
        a0 = jnp.zeros((tq, HEAD_DIM), jnp.float32)
        # causal block skipping: KV tiles > qi are fully masked -> never run
        _, l_f, acc_f = jax.lax.fori_loop(0, qi + 1, kv_step, (m0, l0, a0))
        ctx_heads.append(acc_f * pl.reciprocal(l_f, approx=True))

    ctx = jnp.concatenate(ctx_heads, axis=-1).astype(jnp.bfloat16)  # (tq, D)
    attn = jnp.dot(ctx, wo_ref[...], preferred_element_type=jnp.float32)
    o_ref[0] = (x_q + attn + bo_ref[...]).astype(o_ref.dtype)   # residual


# --------------------- kernel 2: out = x + FFN(LN2(x)) ----------------------
def ffn_block_kernel(x_ref, g_ref, b_ref, w1_ref, b1_ref, w2_ref, b2_ref,
                     o_ref):
    # x_ref: (TM, D) f32; w1: (D, 4D) bf16; w2: (4D, D) bf16; biases f32
    x = x_ref[...]
    ln = _layer_norm_f32(x, g_ref[...], b_ref[...])
    h = jnp.dot(ln.astype(jnp.bfloat16), w1_ref[...],
                preferred_element_type=jnp.float32)
    h = jnp.maximum(h + b1_ref[...], 0.0)                       # f32 bias+ReLU
    y = jnp.dot(h.astype(jnp.bfloat16), w2_ref[...],
                preferred_element_type=jnp.float32) + b2_ref[...]
    o_ref[...] = (x + y).astype(o_ref.dtype)                    # residual


# ------------------------------ wrappers ------------------------------------
def _round_up(n, m):
    return ((n + m - 1) // m) * m


def _choose_q_tile(T, tq_max=256):
    """Largest tile <= tq_max that divides T (falls back to T: no padded rows,
    so the causal -inf mask can never produce an all-masked query row)."""
    t = min(tq_max, T)
    while t >= 8:
        if T % t == 0:
            return t
        t -= 8
    return T


def _choose_row_tile(n, tm_max):
    # One large sublane-aligned tile (single-TensorCore parts prefer this);
    # v7x callers can lower tm_max to force >=2 grid steps for megacore.
    return min(tm_max, _round_up(n, 8))


def _mha_residual(x, p):
    B, T, D = x.shape
    bf16 = jnp.bfloat16
    # fuse per-head projections into full-width (D, D) matrices
    wq = p["wq"].transpose(1, 0, 2).reshape(D, D).astype(bf16)
    wk = p["wk"].transpose(1, 0, 2).reshape(D, D).astype(bf16)
    wv = p["wv"].transpose(1, 0, 2).reshape(D, D).astype(bf16)
    wo = p["wo"].reshape(D, D).astype(bf16)

    tq = _choose_q_tile(T)
    n_q = T // tq

    flops = B * (3 * 2 * T * D * D          # Q + K + V projections
                 + 2 * T * T * D            # QK^T + PV (causal ~half of 2x)
                 + 2 * T * D * D)           # output projection
    cost = pl.CostEstimate(
        flops=flops,
        transcendentals=B * NUM_HEADS * T * T // 2,
        bytes_accessed=2 * B * T * D * 4 + 4 * D * D * 2)

    vec = pl.BlockSpec((1, D), lambda b, q: (0, 0))
    wmat = pl.BlockSpec((D, D), lambda b, q: (0, 0))
    return pl.pallas_call(
        mha_block_kernel,
        out_shape=jax.ShapeDtypeStruct((B, T, D), x.dtype),
        grid_spec=pltpu.PrefetchScalarGridSpec(
            num_scalar_prefetch=0,
            grid=(B, n_q),
            in_specs=[
                pl.BlockSpec((1, T, D), lambda b, q: (b, 0, 0)),  # x full seq
                vec, vec,                                         # ln1 g/b
                wmat, wmat, wmat, wmat,                           # Wq Wk Wv Wo
                vec,                                              # bo
            ],
            out_specs=pl.BlockSpec((1, tq, D), lambda b, q: (b, q, 0)),
            scratch_shapes=[pltpu.VMEM((T, D), jnp.bfloat16),     # K cache
                            pltpu.VMEM((T, D), jnp.bfloat16)],    # V cache
        ),
        compiler_params=pltpu.CompilerParams(
            dimension_semantics=("parallel", "arbitrary"),
            vmem_limit_bytes=48 << 20,
        ),
        cost_estimate=cost,
    )(x, p["g1"], p["be1"], wq, wk, wv, wo, p["bo"])


def _ffn_residual(x, p, tm_max):
    B, T, D = x.shape
    N = B * T
    tm = _choose_row_tile(N, tm_max)
    Np = _round_up(N, tm)
    x2 = x.reshape(N, D)
    if Np != N:                                                  # ragged rows
        x2 = jnp.pad(x2, ((0, Np - N), (0, 0)))
    bf16 = jnp.bfloat16
    w1 = p["w1"].astype(bf16)
    w2 = p["w2"].astype(bf16)
    cost = pl.CostEstimate(flops=2 * 2 * Np * D * D_HIDDEN,
                           transcendentals=0,
                           bytes_accessed=2 * Np * D * 4 + 2 * D * D_HIDDEN * 2)
    out = pl.pallas_call(
        ffn_block_kernel,
        out_shape=jax.ShapeDtypeStruct((Np, D), x.dtype),
        grid_spec=pltpu.PrefetchScalarGridSpec(
            num_scalar_prefetch=0,
            grid=(Np // tm,),
            in_specs=[
                pl.BlockSpec((tm, D), lambda i: (i, 0)),          # x rows
                pl.BlockSpec((1, D), lambda i: (0, 0)),           # ln2 gamma
                pl.BlockSpec((1, D), lambda i: (0, 0)),           # ln2 beta
                pl.BlockSpec((D, D_HIDDEN), lambda i: (0, 0)),    # W1 (bf16)
                pl.BlockSpec((1, D_HIDDEN), lambda i: (0, 0)),    # b1 (f32)
                pl.BlockSpec((D_HIDDEN, D), lambda i: (0, 0)),    # W2 (bf16)
                pl.BlockSpec((1, D), lambda i: (0, 0)),           # b2 (f32)
            ],
            out_specs=pl.BlockSpec((tm, D), lambda i: (i, 0)),
        ),
        compiler_params=pltpu.CompilerParams(
            dimension_semantics=("parallel",),
            vmem_limit_bytes=48 << 20,
        ),
        cost_estimate=cost,
    )(x2, p["g2"], p["be2"], w1, p["b1"], w2, p["b2"])
    return out[:N].reshape(B, T, D)


@functools.partial(jax.jit, static_argnames=("tm_max",))
def transformer_block(x, params, *, tm_max=512):
    x = _mha_residual(x, params)
    x = _ffn_residual(x, params, tm_max)
    return x


# ------------------------- params / reference -------------------------------
def init_params(key):
    """nn.Linear-style U(-1/sqrt(fan_in), 1/sqrt(fan_in)); LN gamma=1, beta=0."""
    ks = jax.random.split(key, 9)
    bd = 1.0 / math.sqrt(D_MODEL)
    bh = 1.0 / math.sqrt(D_HIDDEN)
    u = lambda k, shp, b: jax.random.uniform(k, shp, jnp.float32, -b, b)
    return dict(
        g1=jnp.ones((1, D_MODEL), jnp.float32),
        be1=jnp.zeros((1, D_MODEL), jnp.float32),
        g2=jnp.ones((1, D_MODEL), jnp.float32),
        be2=jnp.zeros((1, D_MODEL), jnp.float32),
        # attention weights stored (in, out), stacked per head
        wq=u(ks[0], (NUM_HEADS, D_MODEL, HEAD_DIM), bd),
        wk=u(ks[1], (NUM_HEADS, D_MODEL, HEAD_DIM), bd),
        wv=u(ks[2], (NUM_HEADS, D_MODEL, HEAD_DIM), bd),
        wo=u(ks[3], (NUM_HEADS, HEAD_DIM, D_MODEL), bd),
        bo=u(ks[4], (1, D_MODEL), bd),
        w1=u(ks[5], (D_MODEL, D_HIDDEN), bd),
        b1=u(ks[6], (1, D_HIDDEN), bd),
        w2=u(ks[7], (D_HIDDEN, D_MODEL), bh),
        b2=u(ks[8], (1, D_MODEL), bh),
    )


def reference_block(x, p, low_precision):
    """Pure-JAX reference. low_precision=True replicates the kernel's bf16-in /
    f32-accumulate matmul recipe; False is the plain f32 module semantics."""
    f32 = jnp.float32
    cast = ((lambda a: a.astype(jnp.bfloat16)) if low_precision
            else (lambda a: a.astype(f32)))
    dot = lambda a, b: jnp.dot(cast(a), cast(b), preferred_element_type=f32)

    B, T, D = x.shape
    ln1 = _layer_norm_f32(x, p["g1"], p["be1"])
    causal = jnp.arange(T)[None, :] <= jnp.arange(T)[:, None]
    attn = []
    for b in range(B):
        acc = jnp.zeros((T, D), f32)
        for h in range(NUM_HEADS):
            q = dot(ln1[b], p["wq"][h])
            k = dot(ln1[b], p["wk"][h])
            v = dot(ln1[b], p["wv"][h])
            s = jnp.einsum("td,sd->ts", cast(q), cast(k),
                           preferred_element_type=f32) * ATTN_SCALE
            s = jnp.where(causal, s, -jnp.inf)
            s = s - jnp.max(s, axis=-1, keepdims=True)
            pr = jnp.exp(s)
            pr = pr / jnp.sum(pr, axis=-1, keepdims=True)
            ctx = dot(pr, v)
            acc = acc + dot(ctx, p["wo"][h])
        attn.append(acc + p["bo"])
    x = x + jnp.stack(attn, 0)

    ln2 = _layer_norm_f32(x, p["g2"], p["be2"])
    h = jnp.maximum(dot(ln2.reshape(-1, D), p["w1"]) + p["b1"], 0.0)
    y = dot(h, p["w2"]) + p["b2"]
    return x + y.reshape(B, T, D)


if __name__ == "__main__":
    key = jax.random.PRNGKey(0)
    kx, kp = jax.random.split(key)

    B, T = 2, 8                     # small demo shapes; d_model fixed at 512
    x = jax.random.normal(kx, (B, T, D_MODEL), jnp.float32)
    params = init_params(kp)

    out = transformer_block(x, params)
    out = jax.block_until_ready(out)
    assert out.shape == (B, T, D_MODEL)

    # Check vs a reference that uses the same bf16/f32 recipe (approx recip
    # and online-softmax rounding are the only deltas).
    ref_lp = reference_block(x, params, low_precision=True)
    assert jnp.allclose(out, ref_lp, atol=1e-2, rtol=1e-2), float(
        jnp.max(jnp.abs(out - ref_lp)))

    # Loose check vs the full-f32 module semantics (bf16 MXU rounding only).
    ref_full = reference_block(x, params, low_precision=False)
    assert jnp.allclose(out, ref_full, atol=5e-2, rtol=5e-2), float(
        jnp.max(jnp.abs(out - ref_full)))

    print("KERNEL_OK")
</pallas_src>

<mosaic_0001>
module attributes {stable_mosaic.version = 11 : i64} {
  func.func @mha_block_kernel(%arg0: i32, %arg1: i32, %arg2: memref<1x8x512xf32, #tpu.memory_space<vmem>>, %arg3: memref<1x512xf32, #tpu.memory_space<vmem>>, %arg4: memref<1x512xf32, #tpu.memory_space<vmem>>, %arg5: memref<512x512xbf16, #tpu.memory_space<vmem>>, %arg6: memref<512x512xbf16, #tpu.memory_space<vmem>>, %arg7: memref<512x512xbf16, #tpu.memory_space<vmem>>, %arg8: memref<512x512xbf16, #tpu.memory_space<vmem>>, %arg9: memref<1x512xf32, #tpu.memory_space<vmem>>, %arg10: memref<1x8x512xf32, #tpu.memory_space<vmem>>, %arg11: memref<8x512xbf16, #tpu.memory_space<vmem>>, %arg12: memref<8x512xbf16, #tpu.memory_space<vmem>>) attributes {dimension_semantics = [#tpu.dimension_semantics<parallel>, #tpu.dimension_semantics<arbitrary>], iteration_bounds = array<i64: 2, 1>, scalar_prefetch = 0 : i64, scratch_operands = 2 : i64, tpu.core_type = #tpu.core_type<tc>, window_params = [{transform_indices = @transform_0, window_bounds = array<i64: 1, 8, 512>}, {pipeline_mode = #tpu.pipeline_mode<synchronous>, transform_indices = @transform_1, window_bounds = array<i64: 1, 512>}, {pipeline_mode = #tpu.pipeline_mode<synchronous>, transform_indices = @transform_2, window_bounds = array<i64: 1, 512>}, {pipeline_mode = #tpu.pipeline_mode<synchronous>, transform_indices = @transform_3, window_bounds = array<i64: 512, 512>}, {pipeline_mode = #tpu.pipeline_mode<synchronous>, transform_indices = @transform_4, window_bounds = array<i64: 512, 512>}, {pipeline_mode = #tpu.pipeline_mode<synchronous>, transform_indices = @transform_5, window_bounds = array<i64: 512, 512>}, {pipeline_mode = #tpu.pipeline_mode<synchronous>, transform_indices = @transform_6, window_bounds = array<i64: 512, 512>}, {pipeline_mode = #tpu.pipeline_mode<synchronous>, transform_indices = @transform_7, window_bounds = array<i64: 1, 512>}, {transform_indices = @transform_8, window_bounds = array<i64: 1, 8, 512>}]} {
    %c0_i32 = arith.constant 0 : i32
    %0 = arith.cmpi eq, %arg1, %c0_i32 : i32
    %1 = arith.extui %0 : i1 to i32
    %c0_i32_0 = arith.constant 0 : i32
    %2 = arith.cmpi ne, %1, %c0_i32_0 : i32
    scf.if %2 {
      %c0_69 = arith.constant 0 : index
      %c0_70 = arith.constant 0 : index
      %c0_71 = arith.constant 0 : index
      %144 = vector.load %arg2[%c0_69, %c0_70, %c0_71] : memref<1x8x512xf32, #tpu.memory_space<vmem>>, vector<1x8x512xf32>
      %145 = vector.shape_cast %144 : vector<1x8x512xf32> to vector<8x512xf32>
      %c0_72 = arith.constant 0 : index
      %c0_73 = arith.constant 0 : index
      %146 = vector.load %arg3[%c0_72, %c0_73] : memref<1x512xf32, #tpu.memory_space<vmem>>, vector<1x512xf32>
      %c0_74 = arith.constant 0 : index
      %c0_75 = arith.constant 0 : index
      %147 = vector.load %arg4[%c0_74, %c0_75] : memref<1x512xf32, #tpu.memory_space<vmem>>, vector<1x512xf32>
      %cst_76 = arith.constant dense<0.000000e+00> : vector<8xf32>
      %148 = vector.multi_reduction <add>, %145, %cst_76 [1] : vector<8x512xf32> to vector<8xf32>
      %149 = vector.shape_cast %148 : vector<8xf32> to vector<8x1xf32>
      %cst_77 = arith.constant 5.120000e+02 : f32
      %150 = vector.broadcast %cst_77 : f32 to vector<8x1xf32>
      %151 = arith.divf %149, %150 : vector<8x1xf32>
      %152 = vector.broadcast %151 : vector<8x1xf32> to vector<8x512xf32>
      %153 = arith.subf %145, %152 : vector<8x512xf32>
      %154 = arith.mulf %153, %153 : vector<8x512xf32>
      %cst_78 = arith.constant dense<0.000000e+00> : vector<8xf32>
      %155 = vector.multi_reduction <add>, %154, %cst_78 [1] : vector<8x512xf32> to vector<8xf32>
      %156 = vector.shape_cast %155 : vector<8xf32> to vector<8x1xf32>
      %cst_79 = arith.constant 5.120000e+02 : f32
      %157 = vector.broadcast %cst_79 : f32 to vector<8x1xf32>
      %158 = arith.divf %156, %157 : vector<8x1xf32>
      %cst_80 = arith.constant 9.99999974E-6 : f32
      %159 = vector.broadcast %cst_80 : f32 to vector<8x1xf32>
      %160 = arith.addf %158, %159 : vector<8x1xf32>
      %161 = math.rsqrt %160 : vector<8x1xf32>
      %162 = vector.broadcast %161 : vector<8x1xf32> to vector<8x512xf32>
      %163 = arith.mulf %153, %162 : vector<8x512xf32>
      %164 = vector.broadcast %146 : vector<1x512xf32> to vector<8x512xf32>
      %165 = arith.mulf %163, %164 : vector<8x512xf32>
      %166 = vector.broadcast %147 : vector<1x512xf32> to vector<8x512xf32>
      %167 = arith.addf %165, %166 : vector<8x512xf32>
      %168 = arith.truncf %167 : vector<8x512xf32> to vector<8x512xbf16>
      %c0_81 = arith.constant 0 : index
      %c0_82 = arith.constant 0 : index
      %169 = vector.load %arg6[%c0_81, %c0_82] : memref<512x512xbf16, #tpu.memory_space<vmem>>, vector<512x512xbf16>
      %cst_83 = arith.constant dense<0.000000e+00> : vector<8x512xf32>
      %170 = tpu.matmul %168, %169, %cst_83 {dimension_numbers = #tpu.dot_dimension_numbers<[1], [0], [0], [1], [0, 0, 1, 1], [], []>} : vector<8x512xbf16>, vector<512x512xbf16>, vector<8x512xf32> -> vector<8x512xf32>
      %171 = arith.truncf %170 : vector<8x512xf32> to vector<8x512xbf16>
      %c0_84 = arith.constant 0 : index
      %c0_85 = arith.constant 0 : index
      %172 = vector.load %arg11[%c0_84, %c0_85] : memref<8x512xbf16, #tpu.memory_space<vmem>>, vector<8x512xbf16>
      tpu.vector_store %arg11[%c0_84, %c0_85], %171 {strides = array<i32>} : memref<8x512xbf16, #tpu.memory_space<vmem>>, vector<8x512xbf16>,
      %c0_86 = arith.constant 0 : index
      %c0_87 = arith.constant 0 : index
      %173 = vector.load %arg7[%c0_86, %c0_87] : memref<512x512xbf16, #tpu.memory_space<vmem>>, vector<512x512xbf16>
      %cst_88 = arith.constant dense<0.000000e+00> : vector<8x512xf32>
      %174 = tpu.matmul %168, %173, %cst_88 {dimension_numbers = #tpu.dot_dimension_numbers<[1], [0], [0], [1], [0, 0, 1, 1], [], []>} : vector<8x512xbf16>, vector<512x512xbf16>, vector<8x512xf32> -> vector<8x512xf32>
      %175 = arith.truncf %174 : vector<8x512xf32> to vector<8x512xbf16>
      %c0_89 = arith.constant 0 : index
      %c0_90 = arith.constant 0 : index
      %176 = vector.load %arg12[%c0_89, %c0_90] : memref<8x512xbf16, #tpu.memory_space<vmem>>, vector<8x512xbf16>
      tpu.vector_store %arg12[%c0_89, %c0_90], %175 {strides = array<i32>} : memref<8x512xbf16, #tpu.memory_space<vmem>>, vector<8x512xbf16>,
    } else {
    }
    %c8_i32 = arith.constant 8 : i32
    %3 = arith.muli %arg1, %c8_i32 : i32
    %4 = tpu.assume_multiple %3, 8 : i32
    %c0 = arith.constant 0 : index
    %5 = arith.index_cast %4 : i32 to index
    %c0_1 = arith.constant 0 : index
    %6 = vector.load %arg2[%c0, %5, %c0_1] : memref<1x8x512xf32, #tpu.memory_space<vmem>>, vector<1x8x512xf32>
    %7 = vector.shape_cast %6 : vector<1x8x512xf32> to vector<8x512xf32>
    %c0_2 = arith.constant 0 : index
    %c0_3 = arith.constant 0 : index
    %8 = vector.load %arg3[%c0_2, %c0_3] : memref<1x512xf32, #tpu.memory_space<vmem>>, vector<1x512xf32>
    %c0_4 = arith.constant 0 : index
    %c0_5 = arith.constant 0 : index
    %9 = vector.load %arg4[%c0_4, %c0_5] : memref<1x512xf32, #tpu.memory_space<vmem>>, vector<1x512xf32>
    %cst = arith.constant dense<0.000000e+00> : vector<8xf32>
    %10 = vector.multi_reduction <add>, %7, %cst [1] : vector<8x512xf32> to vector<8xf32>
    %11 = vector.shape_cast %10 : vector<8xf32> to vector<8x1xf32>
    %cst_6 = arith.constant 5.120000e+02 : f32
    %12 = vector.broadcast %cst_6 : f32 to vector<8x1xf32>
    %13 = arith.divf %11, %12 : vector<8x1xf32>
    %14 = vector.broadcast %13 : vector<8x1xf32> to vector<8x512xf32>
    %15 = arith.subf %7, %14 : vector<8x512xf32>
    %16 = arith.mulf %15, %15 : vector<8x512xf32>
    %cst_7 = arith.constant dense<0.000000e+00> : vector<8xf32>
    %17 = vector.multi_reduction <add>, %16, %cst_7 [1] : vector<8x512xf32> to vector<8xf32>
    %18 = vector.shape_cast %17 : vector<8xf32> to vector<8x1xf32>
    %cst_8 = arith.constant 5.120000e+02 : f32
    %19 = vector.broadcast %cst_8 : f32 to vector<8x1xf32>
    %20 = arith.divf %18, %19 : vector<8x1xf32>
    %cst_9 = arith.constant 9.99999974E-6 : f32
    %21 = vector.broadcast %cst_9 : f32 to vector<8x1xf32>
    %22 = arith.addf %20, %21 : vector<8x1xf32>
    %23 = math.rsqrt %22 : vector<8x1xf32>
    %24 = vector.broadcast %23 : vector<8x1xf32> to vector<8x512xf32>
    %25 = arith.mulf %15, %24 : vector<8x512xf32>
    %26 = vector.broadcast %8 : vector<1x512xf32> to vector<8x512xf32>
    %27 = arith.mulf %25, %26 : vector<8x512xf32>
    %28 = vector.broadcast %9 : vector<1x512xf32> to vector<8x512xf32>
    %29 = arith.addf %27, %28 : vector<8x512xf32>
    %30 = arith.truncf %29 : vector<8x512xf32> to vector<8x512xbf16>
    %c0_10 = arith.constant 0 : index
    %c0_11 = arith.constant 0 : index
    %31 = vector.load %arg5[%c0_10, %c0_11] : memref<512x512xbf16, #tpu.memory_space<vmem>>, vector<512x512xbf16>
    %cst_12 = arith.constant dense<0.000000e+00> : vector<8x512xf32>
    %32 = tpu.matmul %30, %31, %cst_12 {dimension_numbers = #tpu.dot_dimension_numbers<[1], [0], [0], [1], [0, 0, 1, 1], [], []>} : vector<8x512xbf16>, vector<512x512xbf16>, vector<8x512xf32> -> vector<8x512xf32>
    %c8_i32_13 = arith.constant 8 : i32
    %33 = arith.muli %arg1, %c8_i32_13 : i32
    %34 = tpu.iota {dimensions = array<i32: 0>} : vector<8x8xi32>
    %35 = vector.broadcast %33 : i32 to vector<8x8xi32>
    %36 = arith.addi %35, %34 : vector<8x8xi32>
    %37 = vector.extract_strided_slice %32 {offsets = [0, 0], sizes = [8, 64], strides = [1, 1]} : vector<8x512xf32> to vector<8x64xf32>
    %38 = arith.truncf %37 : vector<8x64xf32> to vector<8x64xbf16>
    %cst_14 = arith.constant 0xFF800000 : f32
    %39 = vector.broadcast %cst_14 : f32 to vector<8x1xf32>
    %cst_15 = arith.constant 0.000000e+00 : f32
    %40 = vector.broadcast %cst_15 : f32 to vector<8x1xf32>
    %cst_16 = arith.constant 0.000000e+00 : f32
    %41 = vector.broadcast %cst_16 : f32 to vector<8x64xf32>
    %c1_i32 = arith.constant 1 : i32
    %42 = arith.addi %arg1, %c1_i32 : i32
    %c0_i32_17 = arith.constant 0 : i32
    %43 = arith.subi %42, %c0_i32_17 : i32
    %44 = arith.addi %c0_i32_17, %43 : i32
    %c1_i32_18 = arith.constant 1 : i32
    %45:3 = scf.for %arg13 = %c0_i32_17 to %44 step %c1_i32_18 iter_args(%arg14 = %39, %arg15 = %40, %arg16 = %41) -> (vector<8x1xf32>, vector<8x1xf32>, vector<8x64xf32>)  : i32 {
      %c8_i32_69 = arith.constant 8 : i32
      %144 = arith.muli %arg13, %c8_i32_69 : i32
      %145 = tpu.assume_multiple %144, 8 : i32
      %146 = arith.index_cast %145 : i32 to index
      %c0_70 = arith.constant 0 : index
      %147 = vector.load %arg11[%146, %c0_70] : memref<8x512xbf16, #tpu.memory_space<vmem>>, vector<8x64xbf16>
      %148 = arith.index_cast %145 : i32 to index
      %c0_71 = arith.constant 0 : index
      %149 = vector.load %arg12[%148, %c0_71] : memref<8x512xbf16, #tpu.memory_space<vmem>>, vector<8x64xbf16>
      %cst_72 = arith.constant dense<0.000000e+00> : vector<8x8xf32>
      %150 = tpu.matmul %38, %147, %cst_72 {dimension_numbers = #tpu.dot_dimension_numbers<[1], [1], [0], [0], [0, 0, 1, 0], [], []>} : vector<8x64xbf16>, vector<8x64xbf16>, vector<8x8xf32> -> vector<8x8xf32>
      %cst_73 = arith.constant 1.250000e-01 : f32
      %151 = vector.broadcast %cst_73 : f32 to vector<8x8xf32>
      %152 = arith.mulf %150, %151 : vector<8x8xf32>
      %153 = tpu.iota {dimensions = array<i32: 1>} : vector<8x8xi32>
      %154 = vector.broadcast %145 : i32 to vector<8x8xi32>
      %155 = arith.addi %154, %153 : vector<8x8xi32>
      %156 = arith.cmpi sle, %155, %36 : vector<8x8xi32>
      %cst_74 = arith.constant 0xFF800000 : f32
      %157 = vector.broadcast %cst_74 : f32 to vector<8x8xf32>
      %158 = arith.select %156, %152, %157 : vector<8x8xi1>, vector<8x8xf32>
      %cst_75 = arith.constant dense<0xFF800000> : vector<8xf32>
      %159 = vector.multi_reduction <maximumf>, %158, %cst_75 [1] : vector<8x8xf32> to vector<8xf32>
      %160 = vector.shape_cast %159 : vector<8xf32> to vector<8x1xf32>
      %161 = arith.maximumf %arg14, %160 : vector<8x1xf32>
      %162 = arith.subf %arg14, %161 : vector<8x1xf32>
      %163 = math.exp %162 : vector<8x1xf32>
      %164 = vector.broadcast %161 : vector<8x1xf32> to vector<8x8xf32>
      %165 = arith.subf %158, %164 : vector<8x8xf32>
      %166 = math.exp %165 : vector<8x8xf32>
      %167 = arith.mulf %163, %arg15 : vector<8x1xf32>
      %cst_76 = arith.constant dense<0.000000e+00> : vector<8xf32>
      %168 = vector.multi_reduction <add>, %166, %cst_76 [1] : vector<8x8xf32> to vector<8xf32>
      %169 = vector.shape_cast %168 : vector<8xf32> to vector<8x1xf32>
      %170 = arith.addf %167, %169 : vector<8x1xf32>
      %171 = vector.broadcast %163 : vector<8x1xf32> to vector<8x64xf32>
      %172 = arith.mulf %171, %arg16 : vector<8x64xf32>
      %173 = arith.truncf %166 : vector<8x8xf32> to vector<8x8xbf16>
      %cst_77 = arith.constant dense<0.000000e+00> : vector<8x64xf32>
      %174 = tpu.matmul %173, %149, %cst_77 {dimension_numbers = #tpu.dot_dimension_numbers<[1], [0], [0], [1], [0, 0, 1, 1], [], []>} : vector<8x8xbf16>, vector<8x64xbf16>, vector<8x64xf32> -> vector<8x64xf32>
      %175 = arith.addf %172, %174 : vector<8x64xf32>
      scf.yield %161, %170, %175 : vector<8x1xf32>, vector<8x1xf32>, vector<8x64xf32>
    }
    %46 = tpu.reciprocal %45#1 {approx = true} : vector<8x1xf32> -> vector<8x1xf32>
    %47 = vector.broadcast %46 : vector<8x1xf32> to vector<8x64xf32>
    %48 = arith.mulf %45#2, %47 : vector<8x64xf32>
    %49 = vector.extract_strided_slice %32 {offsets = [0, 64], sizes = [8, 64], strides = [1, 1]} : vector<8x512xf32> to vector<8x64xf32>
    %50 = arith.truncf %49 : vector<8x64xf32> to vector<8x64xbf16>
    %cst_19 = arith.constant 0xFF800000 : f32
    %51 = vector.broadcast %cst_19 : f32 to vector<8x1xf32>
    %cst_20 = arith.constant 0.000000e+00 : f32
    %52 = vector.broadcast %cst_20 : f32 to vector<8x1xf32>
    %cst_21 = arith.constant 0.000000e+00 : f32
    %53 = vector.broadcast %cst_21 : f32 to vector<8x64xf32>
    %c1_i32_22 = arith.constant 1 : i32
    %54 = arith.addi %arg1, %c1_i32_22 : i32
    %c0_i32_23 = arith.constant 0 : i32
    %55 = arith.subi %54, %c0_i32_23 : i32
    %56 = arith.addi %c0_i32_23, %55 : i32
    %c1_i32_24 = arith.constant 1 : i32
    %57:3 = scf.for %arg13 = %c0_i32_23 to %56 step %c1_i32_24 iter_args(%arg14 = %51, %arg15 = %52, %arg16 = %53) -> (vector<8x1xf32>, vector<8x1xf32>, vector<8x64xf32>)  : i32 {
      %c8_i32_69 = arith.constant 8 : i32
      %144 = arith.muli %arg13, %c8_i32_69 : i32
      %145 = tpu.assume_multiple %144, 8 : i32
      %146 = arith.index_cast %145 : i32 to index
      %c64 = arith.constant 64 : index
      %147 = vector.load %arg11[%146, %c64] : memref<8x512xbf16, #tpu.memory_space<vmem>>, vector<8x64xbf16>
      %148 = arith.index_cast %145 : i32 to index
      %c64_70 = arith.constant 64 : index
      %149 = vector.load %arg12[%148, %c64_70] : memref<8x512xbf16, #tpu.memory_space<vmem>>, vector<8x64xbf16>
      %cst_71 = arith.constant dense<0.000000e+00> : vector<8x8xf32>
      %150 = tpu.matmul %50, %147, %cst_71 {dimension_numbers = #tpu.dot_dimension_numbers<[1], [1], [0], [0], [0, 0, 1, 0], [], []>} : vector<8x64xbf16>, vector<8x64xbf16>, vector<8x8xf32> -> vector<8x8xf32>
      %cst_72 = arith.constant 1.250000e-01 : f32
      %151 = vector.broadcast %cst_72 : f32 to vector<8x8xf32>
      %152 = arith.mulf %150, %151 : vector<8x8xf32>
      %153 = tpu.iota {dimensions = array<i32: 1>} : vector<8x8xi32>
      %154 = vector.broadcast %145 : i32 to vector<8x8xi32>
      %155 = arith.addi %154, %153 : vector<8x8xi32>
      %156 = arith.cmpi sle, %155, %36 : vector<8x8xi32>
      %cst_73 = arith.constant 0xFF800000 : f32
      %157 = vector.broadcast %cst_73 : f32 to vector<8x8xf32>
      %158 = arith.select %156, %152, %157 : vector<8x8xi1>, vector<8x8xf32>
      %cst_74 = arith.constant dense<0xFF800000> : vector<8xf32>
      %159 = vector.multi_reduction <maximumf>, %158, %cst_74 [1] : vector<8x8xf32> to vector<8xf32>
      %160 = vector.shape_cast %159 : vector<8xf32> to vector<8x1xf32>
      %161 = arith.maximumf %arg14, %160 : vector<8x1xf32>
      %162 = arith.subf %arg14, %161 : vector<8x1xf32>
      %163 = math.exp %162 : vector<8x1xf32>
      %164 = vector.broadcast %161 : vector<8x1xf32> to vector<8x8xf32>
      %165 = arith.subf %158, %164 : vector<8x8xf32>
      %166 = math.exp %165 : vector<8x8xf32>
      %167 = arith.mulf %163, %arg15 : vector<8x1xf32>
      %cst_75 = arith.constant dense<0.000000e+00> : vector<8xf32>
      %168 = vector.multi_reduction <add>, %166, %cst_75 [1] : vector<8x8xf32> to vector<8xf32>
      %169 = vector.shape_cast %168 : vector<8xf32> to vector<8x1xf32>
      %170 = arith.addf %167, %169 : vector<8x1xf32>
      %171 = vector.broadcast %163 : vector<8x1xf32> to vector<8x64xf32>
      %172 = arith.mulf %171, %arg16 : vector<8x64xf32>
      %173 = arith.truncf %166 : vector<8x8xf32> to vector<8x8xbf16>
      %cst_76 = arith.constant dense<0.000000e+00> : vector<8x64xf32>
      %174 = tpu.matmul %173, %149, %cst_76 {dimension_numbers = #tpu.dot_dimension_numbers<[1], [0], [0], [1], [0, 0, 1, 1], [], []>} : vector<8x8xbf16>, vector<8x64xbf16>, vector<8x64xf32> -> vector<8x64xf32>
      %175 = arith.addf %172, %174 : vector<8x64xf32>
      scf.yield %161, %170, %175 : vector<8x1xf32>, vector<8x1xf32>, vector<8x64xf32>
    }
    %58 = tpu.reciprocal %57#1 {approx = true} : vector<8x1xf32> -> vector<8x1xf32>
    %59 = vector.broadcast %58 : vector<8x1xf32> to vector<8x64xf32>
    %60 = arith.mulf %57#2, %59 : vector<8x64xf32>
    %61 = vector.extract_strided_slice %32 {offsets = [0, 128], sizes = [8, 64], strides = [1, 1]} : vector<8x512xf32> to vector<8x64xf32>
    %62 = arith.truncf %61 : vector<8x64xf32> to vector<8x64xbf16>
    %cst_25 = arith.constant 0xFF800000 : f32
    %63 = vector.broadcast %cst_25 : f32 to vector<8x1xf32>
    %cst_26 = arith.constant 0.000000e+00 : f32
    %64 = vector.broadcast %cst_26 : f32 to vector<8x1xf32>
    %cst_27 = arith.constant 0.000000e+00 : f32
    %65 = vector.broadcast %cst_27 : f32 to vector<8x64xf32>
    %c1_i32_28 = arith.constant 1 : i32
    %66 = arith.addi %arg1, %c1_i32_28 : i32
    %c0_i32_29 = arith.constant 0 : i32
    %67 = arith.subi %66, %c0_i32_29 : i32
    %68 = arith.addi %c0_i32_29, %67 : i32
    %c1_i32_30 = arith.constant 1 : i32
    %69:3 = scf.for %arg13 = %c0_i32_29 to %68 step %c1_i32_30 iter_args(%arg14 = %63, %arg15 = %64, %arg16 = %65) -> (vector<8x1xf32>, vector<8x1xf32>, vector<8x64xf32>)  : i32 {
      %c8_i32_69 = arith.constant 8 : i32
      %144 = arith.muli %arg13, %c8_i32_69 : i32
      %145 = tpu.assume_multiple %144, 8 : i32
      %146 = arith.index_cast %145 : i32 to index
      %c128 = arith.constant 128 : index
      %147 = vector.load %arg11[%146, %c128] : memref<8x512xbf16, #tpu.memory_space<vmem>>, vector<8x64xbf16>
      %148 = arith.index_cast %145 : i32 to index
      %c128_70 = arith.constant 128 : index
      %149 = vector.load %arg12[%148, %c128_70] : memref<8x512xbf16, #tpu.memory_space<vmem>>, vector<8x64xbf16>
      %cst_71 = arith.constant dense<0.000000e+00> : vector<8x8xf32>
      %150 = tpu.matmul %62, %147, %cst_71 {dimension_numbers = #tpu.dot_dimension_numbers<[1], [1], [0], [0], [0, 0, 1, 0], [], []>} : vector<8x64xbf16>, vector<8x64xbf16>, vector<8x8xf32> -> vector<8x8xf32>
      %cst_72 = arith.constant 1.250000e-01 : f32
      %151 = vector.broadcast %cst_72 : f32 to vector<8x8xf32>
      %152 = arith.mulf %150, %151 : vector<8x8xf32>
      %153 = tpu.iota {dimensions = array<i32: 1>} : vector<8x8xi32>
      %154 = vector.broadcast %145 : i32 to vector<8x8xi32>
      %155 = arith.addi %154, %153 : vector<8x8xi32>
      %156 = arith.cmpi sle, %155, %36 : vector<8x8xi32>
      %cst_73 = arith.constant 0xFF800000 : f32
      %157 = vector.broadcast %cst_73 : f32 to vector<8x8xf32>
      %158 = arith.select %156, %152, %157 : vector<8x8xi1>, vector<8x8xf32>
      %cst_74 = arith.constant dense<0xFF800000> : vector<8xf32>
      %159 = vector.multi_reduction <maximumf>, %158, %cst_74 [1] : vector<8x8xf32> to vector<8xf32>
      %160 = vector.shape_cast %159 : vector<8xf32> to vector<8x1xf32>
      %161 = arith.maximumf %arg14, %160 : vector<8x1xf32>
      %162 = arith.subf %arg14, %161 : vector<8x1xf32>
      %163 = math.exp %162 : vector<8x1xf32>
      %164 = vector.broadcast %161 : vector<8x1xf32> to vector<8x8xf32>
      %165 = arith.subf %158, %164 : vector<8x8xf32>
      %166 = math.exp %165 : vector<8x8xf32>
      %167 = arith.mulf %163, %arg15 : vector<8x1xf32>
      %cst_75 = arith.constant dense<0.000000e+00> : vector<8xf32>
      %168 = vector.multi_reduction <add>, %166, %cst_75 [1] : vector<8x8xf32> to vector<8xf32>
      %169 = vector.shape_cast %168 : vector<8xf32> to vector<8x1xf32>
      %170 = arith.addf %167, %169 : vector<8x1xf32>
      %171 = vector.broadcast %163 : vector<8x1xf32> to vector<8x64xf32>
      %172 = arith.mulf %171, %arg16 : vector<8x64xf32>
      %173 = arith.truncf %166 : vector<8x8xf32> to vector<8x8xbf16>
      %cst_76 = arith.constant dense<0.000000e+00> : vector<8x64xf32>
      %174 = tpu.matmul %173, %149, %cst_76 {dimension_numbers = #tpu.dot_dimension_numbers<[1], [0], [0], [1], [0, 0, 1, 1], [], []>} : vector<8x8xbf16>, vector<8x64xbf16>, vector<8x64xf32> -> vector<8x64xf32>
      %175 = arith.addf %172, %174 : vector<8x64xf32>
      scf.yield %161, %170, %175 : vector<8x1xf32>, vector<8x1xf32>, vector<8x64xf32>
    }
    %70 = tpu.reciprocal %69#1 {approx = true} : vector<8x1xf32> -> vector<8x1xf32>
    %71 = vector.broadcast %70 : vector<8x1xf32> to vector<8x64xf32>
    %72 = arith.mulf %69#2, %71 : vector<8x64xf32>
    %73 = vector.extract_strided_slice %32 {offsets = [0, 192], sizes = [8, 64], strides = [1, 1]} : vector<8x512xf32> to vector<8x64xf32>
    %74 = arith.truncf %73 : vector<8x64xf32> to vector<8x64xbf16>
    %cst_31 = arith.constant 0xFF800000 : f32
    %75 = vector.broadcast %cst_31 : f32 to vector<8x1xf32>
    %cst_32 = arith.constant 0.000000e+00 : f32
    %76 = vector.broadcast %cst_32 : f32 to vector<8x1xf32>
    %cst_33 = arith.constant 0.000000e+00 : f32
    %77 = vector.broadcast %cst_33 : f32 to vector<8x64xf32>
    %c1_i32_34 = arith.constant 1 : i32
    %78 = arith.addi %arg1, %c1_i32_34 : i32
    %c0_i32_35 = arith.constant 0 : i32
    %79 = arith.subi %78, %c0_i32_35 : i32
    %80 = arith.addi %c0_i32_35, %79 : i32
    %c1_i32_36 = arith.constant 1 : i32
    %81:3 = scf.for %arg13 = %c0_i32_35 to %80 step %c1_i32_36 iter_args(%arg14 = %75, %arg15 = %76, %arg16 = %77) -> (vector<8x1xf32>, vector<8x1xf32>, vector<8x64xf32>)  : i32 {
      %c8_i32_69 = arith.constant 8 : i32
      %144 = arith.muli %arg13, %c8_i32_69 : i32
      %145 = tpu.assume_multiple %144, 8 : i32
      %146 = arith.index_cast %145 : i32 to index
      %c192 = arith.constant 192 : index
      %147 = vector.load %arg11[%146, %c192] : memref<8x512xbf16, #tpu.memory_space<vmem>>, vector<8x64xbf16>
      %148 = arith.index_cast %145 : i32 to index
      %c192_70 = arith.constant 192 : index
      %149 = vector.load %arg12[%148, %c192_70] : memref<8x512xbf16, #tpu.memory_space<vmem>>, vector<8x64xbf16>
      %cst_71 = arith.constant dense<0.000000e+00> : vector<8x8xf32>
      %150 = tpu.matmul %74, %147, %cst_71 {dimension_numbers = #tpu.dot_dimension_numbers<[1], [1], [0], [0], [0, 0, 1, 0], [], []>} : vector<8x64xbf16>, vector<8x64xbf16>, vector<8x8xf32> -> vector<8x8xf32>
      %cst_72 = arith.constant 1.250000e-01 : f32
      %151 = vector.broadcast %cst_72 : f32 to vector<8x8xf32>
      %152 = arith.mulf %150, %151 : vector<8x8xf32>
      %153 = tpu.iota {dimensions = array<i32: 1>} : vector<8x8xi32>
      %154 = vector.broadcast %145 : i32 to vector<8x8xi32>
      %155 = arith.addi %154, %153 : vector<8x8xi32>
      %156 = arith.cmpi sle, %155, %36 : vector<8x8xi32>
      %cst_73 = arith.constant 0xFF800000 : f32
      %157 = vector.broadcast %cst_73 : f32 to vector<8x8xf32>
      %158 = arith.select %156, %152, %157 : vector<8x8xi1>, vector<8x8xf32>
      %cst_74 = arith.constant dense<0xFF800000> : vector<8xf32>
      %159 = vector.multi_reduction <maximumf>, %158, %cst_74 [1] : vector<8x8xf32> to vector<8xf32>
      %160 = vector.shape_cast %159 : vector<8xf32> to vector<8x1xf32>
      %161 = arith.maximumf %arg14, %160 : vector<8x1xf32>
      %162 = arith.subf %arg14, %161 : vector<8x1xf32>
      %163 = math.exp %162 : vector<8x1xf32>
      %164 = vector.broadcast %161 : vector<8x1xf32> to vector<8x8xf32>
      %165 = arith.subf %158, %164 : vector<8x8xf32>
      %166 = math.exp %165 : vector<8x8xf32>
      %167 = arith.mulf %163, %arg15 : vector<8x1xf32>
      %cst_75 = arith.constant dense<0.000000e+00> : vector<8xf32>
      %168 = vector.multi_reduction <add>, %166, %cst_75 [1] : vector<8x8xf32> to vector<8xf32>
      %169 = vector.shape_cast %168 : vector<8xf32> to vector<8x1xf32>
      %170 = arith.addf %167, %169 : vector<8x1xf32>
      %171 = vector.broadcast %163 : vector<8x1xf32> to vector<8x64xf32>
      %172 = arith.mulf %171, %arg16 : vector<8x64xf32>
      %173 = arith.truncf %166 : vector<8x8xf32> to vector<8x8xbf16>
      %cst_76 = arith.constant dense<0.000000e+00> : vector<8x64xf32>
      %174 = tpu.matmul %173, %149, %cst_76 {dimension_numbers = #tpu.dot_dimension_numbers<[1], [0], [0], [1], [0, 0, 1, 1], [], []>} : vector<8x8xbf16>, vector<8x64xbf16>, vector<8x64xf32> -> vector<8x64xf32>
      %175 = arith.addf %172, %174 : vector<8x64xf32>
      scf.yield %161, %170, %175 : vector<8x1xf32>, vector<8x1xf32>, vector<8x64xf32>
    }
    %82 = tpu.reciprocal %81#1 {approx = true} : vector<8x1xf32> -> vector<8x1xf32>
    %83 = vector.broadcast %82 : vector<8x1xf32> to vector<8x64xf32>
    %84 = arith.mulf %81#2, %83 : vector<8x64xf32>
    %85 = vector.extract_strided_slice %32 {offsets = [0, 256], sizes = [8, 64], strides = [1, 1]} : vector<8x512xf32> to vector<8x64xf32>
    %86 = arith.truncf %85 : vector<8x64xf32> to vector<8x64xbf16>
    %cst_37 = arith.constant 0xFF800000 : f32
    %87 = vector.broadcast %cst_37 : f32 to vector<8x1xf32>
    %cst_38 = arith.constant 0.000000e+00 : f32
    %88 = vector.broadcast %cst_38 : f32 to vector<8x1xf32>
    %cst_39 = arith.constant 0.000000e+00 : f32
    %89 = vector.broadcast %cst_39 : f32 to vector<8x64xf32>
    %c1_i32_40 = arith.constant 1 : i32
    %90 = arith.addi %arg1, %c1_i32_40 : i32
    %c0_i32_41 = arith.constant 0 : i32
    %91 = arith.subi %90, %c0_i32_41 : i32
    %92 = arith.addi %c0_i32_41, %91 : i32
    %c1_i32_42 = arith.constant 1 : i32
    %93:3 = scf.for %arg13 = %c0_i32_41 to %92 step %c1_i32_42 iter_args(%arg14 = %87, %arg15 = %88, %arg16 = %89) -> (vector<8x1xf32>, vector<8x1xf32>, vector<8x64xf32>)  : i32 {
      %c8_i32_69 = arith.constant 8 : i32
      %144 = arith.muli %arg13, %c8_i32_69 : i32
      %145 = tpu.assume_multiple %144, 8 : i32
      %146 = arith.index_cast %145 : i32 to index
      %c256 = arith.constant 256 : index
      %147 = vector.load %arg11[%146, %c256] : memref<8x512xbf16, #tpu.memory_space<vmem>>, vector<8x64xbf16>
      %148 = arith.index_cast %145 : i32 to index
      %c256_70 = arith.constant 256 : index
      %149 = vector.load %arg12[%148, %c256_70] : memref<8x512xbf16, #tpu.memory_space<vmem>>, vector<8x64xbf16>
      %cst_71 = arith.constant dense<0.000000e+00> : vector<8x8xf32>
      %150 = tpu.matmul %86, %147, %cst_71 {dimension_numbers = #tpu.dot_dimension_numbers<[1], [1], [0], [0], [0, 0, 1, 0], [], []>} : vector<8x64xbf16>, vector<8x64xbf16>, vector<8x8xf32> -> vector<8x8xf32>
      %cst_72 = arith.constant 1.250000e-01 : f32
      %151 = vector.broadcast %cst_72 : f32 to vector<8x8xf32>
      %152 = arith.mulf %150, %151 : vector<8x8xf32>
      %153 = tpu.iota {dimensions = array<i32: 1>} : vector<8x8xi32>
      %154 = vector.broadcast %145 : i32 to vector<8x8xi32>
      %155 = arith.addi %154, %153 : vector<8x8xi32>
      %156 = arith.cmpi sle, %155, %36 : vector<8x8xi32>
      %cst_73 = arith.constant 0xFF800000 : f32
      %157 = vector.broadcast %cst_73 : f32 to vector<8x8xf32>
      %158 = arith.select %156, %152, %157 : vector<8x8xi1>, vector<8x8xf32>
      %cst_74 = arith.constant dense<0xFF800000> : vector<8xf32>
      %159 = vector.multi_reduction <maximumf>, %158, %cst_74 [1] : vector<8x8xf32> to vector<8xf32>
      %160 = vector.shape_cast %159 : vector<8xf32> to vector<8x1xf32>
      %161 = arith.maximumf %arg14, %160 : vector<8x1xf32>
      %162 = arith.subf %arg14, %161 : vector<8x1xf32>
      %163 = math.exp %162 : vector<8x1xf32>
      %164 = vector.broadcast %161 : vector<8x1xf32> to vector<8x8xf32>
      %165 = arith.subf %158, %164 : vector<8x8xf32>
      %166 = math.exp %165 : vector<8x8xf32>
      %167 = arith.mulf %163, %arg15 : vector<8x1xf32>
      %cst_75 = arith.constant dense<0.000000e+00> : vector<8xf32>
      %168 = vector.multi_reduction <add>, %166, %cst_75 [1] : vector<8x8xf32> to vector<8xf32>
      %169 = vector.shape_cast %168 : vector<8xf32> to vector<8x1xf32>
      %170 = arith.addf %167, %169 : vector<8x1xf32>
      %171 = vector.broadcast %163 : vector<8x1xf32> to vector<8x64xf32>
      %172 = arith.mulf %171, %arg16 : vector<8x64xf32>
      %173 = arith.truncf %166 : vector<8x8xf32> to vector<8x8xbf16>
      %cst_76 = arith.constant dense<0.000000e+00> : vector<8x64xf32>
      %174 = tpu.matmul %173, %149, %cst_76 {dimension_numbers = #tpu.dot_dimension_numbers<[1], [0], [0], [1], [0, 0, 1, 1], [], []>} : vector<8x8xbf16>, vector<8x64xbf16>, vector<8x64xf32> -> vector<8x64xf32>
      %175 = arith.addf %172, %174 : vector<8x64xf32>
      scf.yield %161, %170, %175 : vector<8x1xf32>, vector<8x1xf32>, vector<8x64xf32>
    }
    %94 = tpu.reciprocal %93#1 {approx = true} : vector<8x1xf32> -> vector<8x1xf32>
    %95 = vector.broadcast %94 : vector<8x1xf32> to vector<8x64xf32>
    %96 = arith.mulf %93#2, %95 : vector<8x64xf32>
    %97 = vector.extract_strided_slice %32 {offsets = [0, 320], sizes = [8, 64], strides = [1, 1]} : vector<8x512xf32> to vector<8x64xf32>
    %98 = arith.truncf %97 : vector<8x64xf32> to vector<8x64xbf16>
    %cst_43 = arith.constant 0xFF800000 : f32
    %99 = vector.broadcast %cst_43 : f32 to vector<8x1xf32>
    %cst_44 = arith.constant 0.000000e+00 : f32
    %100 = vector.broadcast %cst_44 : f32 to vector<8x1xf32>
    %cst_45 = arith.constant 0.000000e+00 : f32
    %101 = vector.broadcast %cst_45 : f32 to vector<8x64xf32>
    %c1_i32_46 = arith.constant 1 : i32
    %102 = arith.addi %arg1, %c1_i32_46 : i32
    %c0_i32_47 = arith.constant 0 : i32
    %103 = arith.subi %102, %c0_i32_47 : i32
    %104 = arith.addi %c0_i32_47, %103 : i32
    %c1_i32_48 = arith.constant 1 : i32
    %105:3 = scf.for %arg13 = %c0_i32_47 to %104 step %c1_i32_48 iter_args(%arg14 = %99, %arg15 = %100, %arg16 = %101) -> (vector<8x1xf32>, vector<8x1xf32>, vector<8x64xf32>)  : i32 {
      %c8_i32_69 = arith.constant 8 : i32
      %144 = arith.muli %arg13, %c8_i32_69 : i32
      %145 = tpu.assume_multiple %144, 8 : i32
      %146 = arith.index_cast %145 : i32 to index
      %c320 = arith.constant 320 : index
      %147 = vector.load %arg11[%146, %c320] : memref<8x512xbf16, #tpu.memory_space<vmem>>, vector<8x64xbf16>
      %148 = arith.index_cast %145 : i32 to index
      %c320_70 = arith.constant 320 : index
      %149 = vector.load %arg12[%148, %c320_70] : memref<8x512xbf16, #tpu.memory_space<vmem>>, vector<8x64xbf16>
      %cst_71 = arith.constant dense<0.000000e+00> : vector<8x8xf32>
      %150 = tpu.matmul %98, %147, %cst_71 {dimension_numbers = #tpu.dot_dimension_numbers<[1], [1], [0], [0], [0, 0, 1, 0], [], []>} : vector<8x64xbf16>, vector<8x64xbf16>, vector<8x8xf32> -> vector<8x8xf32>
      %cst_72 = arith.constant 1.250000e-01 : f32
      %151 = vector.broadcast %cst_72 : f32 to vector<8x8xf32>
      %152 = arith.mulf %150, %151 : vector<8x8xf32>
      %153 = tpu.iota {dimensions = array<i32: 1>} : vector<8x8xi32>
      %154 = vector.broadcast %145 : i32 to vector<8x8xi32>
      %155 = arith.addi %154, %153 : vector<8x8xi32>
      %156 = arith.cmpi sle, %155, %36 : vector<8x8xi32>
      %cst_73 = arith.constant 0xFF800000 : f32
      %157 = vector.broadcast %cst_73 : f32 to vector<8x8xf32>
      %158 = arith.select %156, %152, %157 : vector<8x8xi1>, vector<8x8xf32>
      %cst_74 = arith.constant dense<0xFF800000> : vector<8xf32>
      %159 = vector.multi_reduction <maximumf>, %158, %cst_74 [1] : vector<8x8xf32> to vector<8xf32>
      %160 = vector.shape_cast %159 : vector<8xf32> to vector<8x1xf32>
      %161 = arith.maximumf %arg14, %160 : vector<8x1xf32>
      %162 = arith.subf %arg14, %161 : vector<8x1xf32>
      %163 = math.exp %162 : vector<8x1xf32>
      %164 = vector.broadcast %161 : vector<8x1xf32> to vector<8x8xf32>
      %165 = arith.subf %158, %164 : vector<8x8xf32>
      %166 = math.exp %165 : vector<8x8xf32>
      %167 = arith.mulf %163, %arg15 : vector<8x1xf32>
      %cst_75 = arith.constant dense<0.000000e+00> : vector<8xf32>
      %168 = vector.multi_reduction <add>, %166, %cst_75 [1] : vector<8x8xf32> to vector<8xf32>
      %169 = vector.shape_cast %168 : vector<8xf32> to vector<8x1xf32>
      %170 = arith.addf %167, %169 : vector<8x1xf32>
      %171 = vector.broadcast %163 : vector<8x1xf32> to vector<8x64xf32>
      %172 = arith.mulf %171, %arg16 : vector<8x64xf32>
      %173 = arith.truncf %166 : vector<8x8xf32> to vector<8x8xbf16>
      %cst_76 = arith.constant dense<0.000000e+00> : vector<8x64xf32>
      %174 = tpu.matmul %173, %149, %cst_76 {dimension_numbers = #tpu.dot_dimension_numbers<[1], [0], [0], [1], [0, 0, 1, 1], [], []>} : vector<8x8xbf16>, vector<8x64xbf16>, vector<8x64xf32> -> vector<8x64xf32>
      %175 = arith.addf %172, %174 : vector<8x64xf32>
      scf.yield %161, %170, %175 : vector<8x1xf32>, vector<8x1xf32>, vector<8x64xf32>
    }
    %106 = tpu.reciprocal %105#1 {approx = true} : vector<8x1xf32> -> vector<8x1xf32>
    %107 = vector.broadcast %106 : vector<8x1xf32> to vector<8x64xf32>
    %108 = arith.mulf %105#2, %107 : vector<8x64xf32>
    %109 = vector.extract_strided_slice %32 {offsets = [0, 384], sizes = [8, 64], strides = [1, 1]} : vector<8x512xf32> to vector<8x64xf32>
    %110 = arith.truncf %109 : vector<8x64xf32> to vector<8x64xbf16>
    %cst_49 = arith.constant 0xFF800000 : f32
    %111 = vector.broadcast %cst_49 : f32 to vector<8x1xf32>
    %cst_50 = arith.constant 0.000000e+00 : f32
    %112 = vector.broadcast %cst_50 : f32 to vector<8x1xf32>
    %cst_51 = arith.constant 0.000000e+00 : f32
    %113 = vector.broadcast %cst_51 : f32 to vector<8x64xf32>
    %c1_i32_52 = arith.constant 1 : i32
    %114 = arith.addi %arg1, %c1_i32_52 : i32
    %c0_i32_53 = arith.constant 0 : i32
    %115 = arith.subi %114, %c0_i32_53 : i32
    %116 = arith.addi %c0_i32_53, %115 : i32
    %c1_i32_54 = arith.constant 1 : i32
    %117:3 = scf.for %arg13 = %c0_i32_53 to %116 step %c1_i32_54 iter_args(%arg14 = %111, %arg15 = %112, %arg16 = %113) -> (vector<8x1xf32>, vector<8x1xf32>, vector<8x64xf32>)  : i32 {
      %c8_i32_69 = arith.constant 8 : i32
      %144 = arith.muli %arg13, %c8_i32_69 : i32
      %145 = tpu.assume_multiple %144, 8 : i32
      %146 = arith.index_cast %145 : i32 to index
      %c384 = arith.constant 384 : index
      %147 = vector.load %arg11[%146, %c384] : memref<8x512xbf16, #tpu.memory_space<vmem>>, vector<8x64xbf16>
      %148 = arith.index_cast %145 : i32 to index
      %c384_70 = arith.constant 384 : index
      %149 = vector.load %arg12[%148, %c384_70] : memref<8x512xbf16, #tpu.memory_space<vmem>>, vector<8x64xbf16>
      %cst_71 = arith.constant dense<0.000000e+00> : vector<8x8xf32>
      %150 = tpu.matmul %110, %147, %cst_71 {dimension_numbers = #tpu.dot_dimension_numbers<[1], [1], [0], [0], [0, 0, 1, 0], [], []>} : vector<8x64xbf16>, vector<8x64xbf16>, vector<8x8xf32> -> vector<8x8xf32>
      %cst_72 = arith.constant 1.250000e-01 : f32
      %151 = vector.broadcast %cst_72 : f32 to vector<8x8xf32>
      %152 = arith.mulf %150, %151 : vector<8x8xf32>
      %153 = tpu.iota {dimensions = array<i32: 1>} : vector<8x8xi32>
      %154 = vector.broadcast %145 : i32 to vector<8x8xi32>
      %155 = arith.addi %154, %153 : vector<8x8xi32>
      %156 = arith.cmpi sle, %155, %36 : vector<8x8xi32>
      %cst_73 = arith.constant 0xFF800000 : f32
      %157 = vector.broadcast %cst_73 : f32 to vector<8x8xf32>
      %158 = arith.select %156, %152, %157 : vector<8x8xi1>, vector<8x8xf32>
      %cst_74 = arith.constant dense<0xFF800000> : vector<8xf32>
      %159 = vector.multi_reduction <maximumf>, %158, %cst_74 [1] : vector<8x8xf32> to vector<8xf32>
      %160 = vector.shape_cast %159 : vector<8xf32> to vector<8x1xf32>
      %161 = arith.maximumf %arg14, %160 : vector<8x1xf32>
      %162 = arith.subf %arg14, %161 : vector<8x1xf32>
      %163 = math.exp %162 : vector<8x1xf32>
      %164 = vector.broadcast %161 : vector<8x1xf32> to vector<8x8xf32>
      %165 = arith.subf %158, %164 : vector<8x8xf32>
      %166 = math.exp %165 : vector<8x8xf32>
      %167 = arith.mulf %163, %arg15 : vector<8x1xf32>
      %cst_75 = arith.constant dense<0.000000e+00> : vector<8xf32>
      %168 = vector.multi_reduction <add>, %166, %cst_75 [1] : vector<8x8xf32> to vector<8xf32>
      %169 = vector.shape_cast %168 : vector<8xf32> to vector<8x1xf32>
      %170 = arith.addf %167, %169 : vector<8x1xf32>
      %171 = vector.broadcast %163 : vector<8x1xf32> to vector<8x64xf32>
      %172 = arith.mulf %171, %arg16 : vector<8x64xf32>
      %173 = arith.truncf %166 : vector<8x8xf32> to vector<8x8xbf16>
      %cst_76 = arith.constant dense<0.000000e+00> : vector<8x64xf32>
      %174 = tpu.matmul %173, %149, %cst_76 {dimension_numbers = #tpu.dot_dimension_numbers<[1], [0], [0], [1], [0, 0, 1, 1], [], []>} : vector<8x8xbf16>, vector<8x64xbf16>, vector<8x64xf32> -> vector<8x64xf32>
      %175 = arith.addf %172, %174 : vector<8x64xf32>
      scf.yield %161, %170, %175 : vector<8x1xf32>, vector<8x1xf32>, vector<8x64xf32>
    }
    %118 = tpu.reciprocal %117#1 {approx = true} : vector<8x1xf32> -> vector<8x1xf32>
    %119 = vector.broadcast %118 : vector<8x1xf32> to vector<8x64xf32>
    %120 = arith.mulf %117#2, %119 : vector<8x64xf32>
    %121 = vector.extract_strided_slice %32 {offsets = [0, 448], sizes = [8, 64], strides = [1, 1]} : vector<8x512xf32> to vector<8x64xf32>
    %122 = arith.truncf %121 : vector<8x64xf32> to vector<8x64xbf16>
    %cst_55 = arith.constant 0xFF800000 : f32
    %123 = vector.broadcast %cst_55 : f32 to vector<8x1xf32>
    %cst_56 = arith.constant 0.000000e+00 : f32
    %124 = vector.broadcast %cst_56 : f32 to vector<8x1xf32>
    %cst_57 = arith.constant 0.000000e+00 : f32
    %125 = vector.broadcast %cst_57 : f32 to vector<8x64xf32>
    %c1_i32_58 = arith.constant 1 : i32
    %126 = arith.addi %arg1, %c1_i32_58 : i32
    %c0_i32_59 = arith.constant 0 : i32
    %127 = arith.subi %126, %c0_i32_59 : i32
    %128 = arith.addi %c0_i32_59, %127 : i32
    %c1_i32_60 = arith.constant 1 : i32
    %129:3 = scf.for %arg13 = %c0_i32_59 to %128 step %c1_i32_60 iter_args(%arg14 = %123, %arg15 = %124, %arg16 = %125) -> (vector<8x1xf32>, vector<8x1xf32>, vector<8x64xf32>)  : i32 {
      %c8_i32_69 = arith.constant 8 : i32
      %144 = arith.muli %arg13, %c8_i32_69 : i32
      %145 = tpu.assume_multiple %144, 8 : i32
      %146 = arith.index_cast %145 : i32 to index
      %c448 = arith.constant 448 : index
      %147 = vector.load %arg11[%146, %c448] : memref<8x512xbf16, #tpu.memory_space<vmem>>, vector<8x64xbf16>
      %148 = arith.index_cast %145 : i32 to index
      %c448_70 = arith.constant 448 : index
      %149 = vector.load %arg12[%148, %c448_70] : memref<8x512xbf16, #tpu.memory_space<vmem>>, vector<8x64xbf16>
      %cst_71 = arith.constant dense<0.000000e+00> : vector<8x8xf32>
      %150 = tpu.matmul %122, %147, %cst_71 {dimension_numbers = #tpu.dot_dimension_numbers<[1], [1], [0], [0], [0, 0, 1, 0], [], []>} : vector<8x64xbf16>, vector<8x64xbf16>, vector<8x8xf32> -> vector<8x8xf32>
      %cst_72 = arith.constant 1.250000e-01 : f32
      %151 = vector.broadcast %cst_72 : f32 to vector<8x8xf32>
      %152 = arith.mulf %150, %151 : vector<8x8xf32>
      %153 = tpu.iota {dimensions = array<i32: 1>} : vector<8x8xi32>
      %154 = vector.broadcast %145 : i32 to vector<8x8xi32>
      %155 = arith.addi %154, %153 : vector<8x8xi32>
      %156 = arith.cmpi sle, %155, %36 : vector<8x8xi32>
      %cst_73 = arith.constant 0xFF800000 : f32
      %157 = vector.broadcast %cst_73 : f32 to vector<8x8xf32>
      %158 = arith.select %156, %152, %157 : vector<8x8xi1>, vector<8x8xf32>
      %cst_74 = arith.constant dense<0xFF800000> : vector<8xf32>
      %159 = vector.multi_reduction <maximumf>, %158, %cst_74 [1] : vector<8x8xf32> to vector<8xf32>
      %160 = vector.shape_cast %159 : vector<8xf32> to vector<8x1xf32>
      %161 = arith.maximumf %arg14, %160 : vector<8x1xf32>
      %162 = arith.subf %arg14, %161 : vector<8x1xf32>
      %163 = math.exp %162 : vector<8x1xf32>
      %164 = vector.broadcast %161 : vector<8x1xf32> to vector<8x8xf32>
      %165 = arith.subf %158, %164 : vector<8x8xf32>
      %166 = math.exp %165 : vector<8x8xf32>
      %167 = arith.mulf %163, %arg15 : vector<8x1xf32>
      %cst_75 = arith.constant dense<0.000000e+00> : vector<8xf32>
      %168 = vector.multi_reduction <add>, %166, %cst_75 [1] : vector<8x8xf32> to vector<8xf32>
      %169 = vector.shape_cast %168 : vector<8xf32> to vector<8x1xf32>
      %170 = arith.addf %167, %169 : vector<8x1xf32>
      %171 = vector.broadcast %163 : vector<8x1xf32> to vector<8x64xf32>
      %172 = arith.mulf %171, %arg16 : vector<8x64xf32>
      %173 = arith.truncf %166 : vector<8x8xf32> to vector<8x8xbf16>
      %cst_76 = arith.constant dense<0.000000e+00> : vector<8x64xf32>
      %174 = tpu.matmul %173, %149, %cst_76 {dimension_numbers = #tpu.dot_dimension_numbers<[1], [0], [0], [1], [0, 0, 1, 1], [], []>} : vector<8x8xbf16>, vector<8x64xbf16>, vector<8x64xf32> -> vector<8x64xf32>
      %175 = arith.addf %172, %174 : vector<8x64xf32>
      scf.yield %161, %170, %175 : vector<8x1xf32>, vector<8x1xf32>, vector<8x64xf32>
    }
    %130 = tpu.reciprocal %129#1 {approx = true} : vector<8x1xf32> -> vector<8x1xf32>
    %131 = vector.broadcast %130 : vector<8x1xf32> to vector<8x64xf32>
    %132 = arith.mulf %129#2, %131 : vector<8x64xf32>
    %133 = tpu.concatenate %48, %60, %72, %84, %96, %108, %120, %132 in 1 : vector<8x64xf32>, vector<8x64xf32>, vector<8x64xf32>, vector<8x64xf32>, vector<8x64xf32>, vector<8x64xf32>, vector<8x64xf32>, vector<8x64xf32> -> vector<8x512xf32>
    %134 = arith.truncf %133 : vector<8x512xf32> to vector<8x512xbf16>
    %c0_61 = arith.constant 0 : index
    %c0_62 = arith.constant 0 : index
    %135 = vector.load %arg8[%c0_61, %c0_62] : memref<512x512xbf16, #tpu.memory_space<vmem>>, vector<512x512xbf16>
    %cst_63 = arith.constant dense<0.000000e+00> : vector<8x512xf32>
    %136 = tpu.matmul %134, %135, %cst_63 {dimension_numbers = #tpu.dot_dimension_numbers<[1], [0], [0], [1], [0, 0, 1, 1], [], []>} : vector<8x512xbf16>, vector<512x512xbf16>, vector<8x512xf32> -> vector<8x512xf32>
    %137 = arith.addf %7, %136 : vector<8x512xf32>
    %c0_64 = arith.constant 0 : index
    %c0_65 = arith.constant 0 : index
    %138 = vector.load %arg9[%c0_64, %c0_65] : memref<1x512xf32, #tpu.memory_space<vmem>>, vector<1x512xf32>
    %139 = vector.broadcast %138 : vector<1x512xf32> to vector<8x512xf32>
    %140 = arith.addf %137, %139 : vector<8x512xf32>
    %c0_66 = arith.constant 0 : index
    %c0_67 = arith.constant 0 : index
    %c0_68 = arith.constant 0 : index
    %141 = vector.load %arg10[%c0_66, %c0_67, %c0_68] : memref<1x8x512xf32, #tpu.memory_space<vmem>>, vector<1x8x512xf32>
    %142 = vector.shape_cast %141 : vector<1x8x512xf32> to vector<8x512xf32>
    %143 = vector.shape_cast %140 : vector<8x512xf32> to vector<1x8x512xf32>
    tpu.vector_store %arg10[%c0_66, %c0_67, %c0_68], %143 {strides = array<i32>} : memref<1x8x512xf32, #tpu.memory_space<vmem>>, vector<1x8x512xf32>,
    return
  }
  func.func @transform_0(%arg0: i32, %arg1: i32) -> (i32, i32, i32) {
    %c0_i32 = arith.constant 0 : i32
    %c0_i32_0 = arith.constant 0 : i32
    %c0_i32_1 = arith.constant 0 : i32
    return %arg0, %c0_i32, %c0_i32_0 : i32, i32, i32
  }
  func.func @transform_1(%arg0: i32, %arg1: i32) -> (i32, i32) {
    %c0_i32 = arith.constant 0 : i32
    %c0_i32_0 = arith.constant 0 : i32
    %c0_i32_1 = arith.constant 0 : i32
    return %c0_i32, %c0_i32_0 : i32, i32
  }
  func.func @transform_2(%arg0: i32, %arg1: i32) -> (i32, i32) {
    %c0_i32 = arith.constant 0 : i32
    %c0_i32_0 = arith.constant 0 : i32
    %c0_i32_1 = arith.constant 0 : i32
    return %c0_i32, %c0_i32_0 : i32, i32
  }
  func.func @transform_3(%arg0: i32, %arg1: i32) -> (i32, i32) {
    %c0_i32 = arith.constant 0 : i32
    %c0_i32_0 = arith.constant 0 : i32
    %c0_i32_1 = arith.constant 0 : i32
    return %c0_i32, %c0_i32_0 : i32, i32
  }
  func.func @transform_4(%arg0: i32, %arg1: i32) -> (i32, i32) {
    %c0_i32 = arith.constant 0 : i32
    %c0_i32_0 = arith.constant 0 : i32
    %c0_i32_1 = arith.constant 0 : i32
    return %c0_i32, %c0_i32_0 : i32, i32
  }
  func.func @transform_5(%arg0: i32, %arg1: i32) -> (i32, i32) {
    %c0_i32 = arith.constant 0 : i32
    %c0_i32_0 = arith.constant 0 : i32
    %c0_i32_1 = arith.constant 0 : i32
    return %c0_i32, %c0_i32_0 : i32, i32
  }
  func.func @transform_6(%arg0: i32, %arg1: i32) -> (i32, i32) {
    %c0_i32 = arith.constant 0 : i32
    %c0_i32_0 = arith.constant 0 : i32
    %c0_i32_1 = arith.constant 0 : i32
    return %c0_i32, %c0_i32_0 : i32, i32
  }
  func.func @transform_7(%arg0: i32, %arg1: i32) -> (i32, i32) {
    %c0_i32 = arith.constant 0 : i32
    %c0_i32_0 = arith.constant 0 : i32
    %c0_i32_1 = arith.constant 0 : i32
    return %c0_i32, %c0_i32_0 : i32, i32
  }
  func.func @transform_8(%arg0: i32, %arg1: i32) -> (i32, i32, i32) {
    %c0_i32 = arith.constant 0 : i32
    %c0_i32_0 = arith.constant 0 : i32
    return %arg0, %arg1, %c0_i32 : i32, i32, i32
  }
}

module attributes {stable_mosaic.version = 11 : i64} {
  func.func @ffn_block_kernel(%arg0: i32, %arg1: memref<16x512xf32, #tpu.memory_space<vmem>>, %arg2: memref<1x512xf32, #tpu.memory_space<vmem>>, %arg3: memref<1x512xf32, #tpu.memory_space<vmem>>, %arg4: memref<512x2048xbf16, #tpu.memory_space<vmem>>, %arg5: memref<1x2048xf32, #tpu.memory_space<vmem>>, %arg6: memref<2048x512xbf16, #tpu.memory_space<vmem>>, %arg7: memref<1x512xf32, #tpu.memory_space<vmem>>, %arg8: memref<16x512xf32, #tpu.memory_space<vmem>>) attributes {dimension_semantics = [#tpu.dimension_semantics<parallel>], iteration_bounds = array<i64: 1>, scalar_prefetch = 0 : i64, scratch_operands = 0 : i64, tpu.core_type = #tpu.core_type<tc>, window_params = [{transform_indices = @transform_0, window_bounds = array<i64: 16, 512>}, {pipeline_mode = #tpu.pipeline_mode<synchronous>, transform_indices = @transform_1, window_bounds = array<i64: 1, 512>}, {pipeline_mode = #tpu.pipeline_mode<synchronous>, transform_indices = @transform_2, window_bounds = array<i64: 1, 512>}, {pipeline_mode = #tpu.pipeline_mode<synchronous>, transform_indices = @transform_3, window_bounds = array<i64: 512, 2048>}, {pipeline_mode = #tpu.pipeline_mode<synchronous>, transform_indices = @transform_4, window_bounds = array<i64: 1, 2048>}, {pipeline_mode = #tpu.pipeline_mode<synchronous>, transform_indices = @transform_5, window_bounds = array<i64: 2048, 512>}, {pipeline_mode = #tpu.pipeline_mode<synchronous>, transform_indices = @transform_6, window_bounds = array<i64: 1, 512>}, {transform_indices = @transform_7, window_bounds = array<i64: 16, 512>}]} {
    %c0 = arith.constant 0 : index
    %c0_0 = arith.constant 0 : index
    %0 = vector.load %arg1[%c0, %c0_0] : memref<16x512xf32, #tpu.memory_space<vmem>>, vector<16x512xf32>
    %c0_1 = arith.constant 0 : index
    %c0_2 = arith.constant 0 : index
    %1 = vector.load %arg2[%c0_1, %c0_2] : memref<1x512xf32, #tpu.memory_space<vmem>>, vector<1x512xf32>
    %c0_3 = arith.constant 0 : index
    %c0_4 = arith.constant 0 : index
    %2 = vector.load %arg3[%c0_3, %c0_4] : memref<1x512xf32, #tpu.memory_space<vmem>>, vector<1x512xf32>
    %cst = arith.constant dense<0.000000e+00> : vector<16xf32>
    %3 = vector.multi_reduction <add>, %0, %cst [1] : vector<16x512xf32> to vector<16xf32>
    %4 = vector.shape_cast %3 : vector<16xf32> to vector<16x1xf32>
    %cst_5 = arith.constant 5.120000e+02 : f32
    %5 = vector.broadcast %cst_5 : f32 to vector<16x1xf32>
    %6 = arith.divf %4, %5 : vector<16x1xf32>
    %7 = vector.broadcast %6 : vector<16x1xf32> to vector<16x512xf32>
    %8 = arith.subf %0, %7 : vector<16x512xf32>
    %9 = arith.mulf %8, %8 : vector<16x512xf32>
    %cst_6 = arith.constant dense<0.000000e+00> : vector<16xf32>
    %10 = vector.multi_reduction <add>, %9, %cst_6 [1] : vector<16x512xf32> to vector<16xf32>
    %11 = vector.shape_cast %10 : vector<16xf32> to vector<16x1xf32>
    %cst_7 = arith.constant 5.120000e+02 : f32
    %12 = vector.broadcast %cst_7 : f32 to vector<16x1xf32>
    %13 = arith.divf %11, %12 : vector<16x1xf32>
    %cst_8 = arith.constant 9.99999974E-6 : f32
    %14 = vector.broadcast %cst_8 : f32 to vector<16x1xf32>
    %15 = arith.addf %13, %14 : vector<16x1xf32>
    %16 = math.rsqrt %15 : vector<16x1xf32>
    %17 = vector.broadcast %16 : vector<16x1xf32> to vector<16x512xf32>
    %18 = arith.mulf %8, %17 : vector<16x512xf32>
    %19 = vector.broadcast %1 : vector<1x512xf32> to vector<16x512xf32>
    %20 = arith.mulf %18, %19 : vector<16x512xf32>
    %21 = vector.broadcast %2 : vector<1x512xf32> to vector<16x512xf32>
    %22 = arith.addf %20, %21 : vector<16x512xf32>
    %23 = arith.truncf %22 : vector<16x512xf32> to vector<16x512xbf16>
    %c0_9 = arith.constant 0 : index
    %c0_10 = arith.constant 0 : index
    %24 = vector.load %arg4[%c0_9, %c0_10] : memref<512x2048xbf16, #tpu.memory_space<vmem>>, vector<512x2048xbf16>
    %cst_11 = arith.constant dense<0.000000e+00> : vector<16x2048xf32>
    %25 = tpu.matmul %23, %24, %cst_11 {dimension_numbers = #tpu.dot_dimension_numbers<[1], [0], [0], [1], [0, 0, 1, 1], [], []>} : vector<16x512xbf16>, vector<512x2048xbf16>, vector<16x2048xf32> -> vector<16x2048xf32>
    %c0_12 = arith.constant 0 : index
    %c0_13 = arith.constant 0 : index
    %26 = vector.load %arg5[%c0_12, %c0_13] : memref<1x2048xf32, #tpu.memory_space<vmem>>, vector<1x2048xf32>
    %27 = vector.broadcast %26 : vector<1x2048xf32> to vector<16x2048xf32>
    %28 = arith.addf %25, %27 : vector<16x2048xf32>
    %cst_14 = arith.constant 0.000000e+00 : f32
    %29 = vector.broadcast %cst_14 : f32 to vector<16x2048xf32>
    %30 = arith.maximumf %28, %29 : vector<16x2048xf32>
    %31 = arith.truncf %30 : vector<16x2048xf32> to vector<16x2048xbf16>
    %c0_15 = arith.constant 0 : index
    %c0_16 = arith.constant 0 : index
    %32 = vector.load %arg6[%c0_15, %c0_16] : memref<2048x512xbf16, #tpu.memory_space<vmem>>, vector<2048x512xbf16>
    %cst_17 = arith.constant dense<0.000000e+00> : vector<16x512xf32>
    %33 = tpu.matmul %31, %32, %cst_17 {dimension_numbers = #tpu.dot_dimension_numbers<[1], [0], [0], [1], [0, 0, 1, 1], [], []>} : vector<16x2048xbf16>, vector<2048x512xbf16>, vector<16x512xf32> -> vector<16x512xf32>
    %c0_18 = arith.constant 0 : index
    %c0_19 = arith.constant 0 : index
    %34 = vector.load %arg7[%c0_18, %c0_19] : memref<1x512xf32, #tpu.memory_space<vmem>>, vector<1x512xf32>
    %35 = vector.broadcast %34 : vector<1x512xf32> to vector<16x512xf32>
    %36 = arith.addf %33, %35 : vector<16x512xf32>
    %37 = arith.addf %0, %36 : vector<16x512xf32>
    %c0_20 = arith.constant 0 : index
    %c0_21 = arith.constant 0 : index
    %38 = vector.load %arg8[%c0_20, %c0_21] : memref<16x512xf32, #tpu.memory_space<vmem>>, vector<16x512xf32>
    tpu.vector_store %arg8[%c0_20, %c0_21], %37 {strides = array<i32>} : memref<16x512xf32, #tpu.memory_space<vmem>>, vector<16x512xf32>,
    return
  }
  func.func @transform_0(%arg0: i32) -> (i32, i32) {
    %c0_i32 = arith.constant 0 : i32
    %c0_i32_0 = arith.constant 0 : i32
    return %arg0, %c0_i32 : i32, i32
  }
  func.func @transform_1(%arg0: i32) -> (i32, i32) {
    %c0_i32 = arith.constant 0 : i32
    %c0_i32_0 = arith.constant 0 : i32
    %c0_i32_1 = arith.constant 0 : i32
    return %c0_i32, %c0_i32_0 : i32, i32
  }
  func.func @transform_2(%arg0: i32) -> (i32, i32) {
    %c0_i32 = arith.constant 0 : i32
    %c0_i32_0 = arith.constant 0 : i32
    %c0_i32_1 = arith.constant 0 : i32
    return %c0_i32, %c0_i32_0 : i32, i32
  }
  func.func @transform_3(%arg0: i32) -> (i32, i32) {
    %c0_i32 = arith.constant 0 : i32
    %c0_i32_0 = arith.constant 0 : i32
    %c0_i32_1 = arith.constant 0 : i32
    return %c0_i32, %c0_i32_0 : i32, i32
  }
  func.func @transform_4(%arg0: i32) -> (i32, i32) {
    %c0_i32 = arith.constant 0 : i32
    %c0_i32_0 = arith.constant 0 : i32
    %c0_i32_1 = arith.constant 0 : i32
    return %c0_i32, %c0_i32_0 : i32, i32
  }
  func.func @transform_5(%arg0: i32) -> (i32, i32) {
    %c0_i32 = arith.constant 0 : i32
    %c0_i32_0 = arith.constant 0 : i32
    %c0_i32_1 = arith.constant 0 : i32
    return %c0_i32, %c0_i32_0 : i32, i32
  }
  func.func @transform_6(%arg0: i32) -> (i32, i32) {
    %c0_i32 = arith.constant 0 : i32
    %c0_i32_0 = arith.constant 0 : i32
    %c0_i32_1 = arith.constant 0 : i32
    return %c0_i32, %c0_i32_0 : i32, i32
  }
  func.func @transform_7(%arg0: i32) -> (i32, i32) {
    %c0_i32 = arith.constant 0 : i32
    %c0_i32_0 = arith.constant 0 : i32
    return %arg0, %c0_i32 : i32, i32
  }
}

</mosaic_0001>

<llo_original>
// kernel: transformer_block.2
$region0: #{transformer_block.2}
  #allocation0 [shape = 'u32[]', space=smem, size = 0x4, offset = 0x4, fixed_abs, tag = 'smem constant byte address 0x4 - core index']
  #allocation1 [shape = 'u32[144,128]{1,0:T(1,128)}', space=vmem, size = 0x12000, scoped, tag = 'internal scratch']
  #allocation2 [shape = 'bf16[8,512]{1,0:T(8,128)(2,1)}', space=vmem, size = 0x2000, scoped, tag = 'scratch operand']
  #allocation3 [shape = 'bf16[8,512]{1,0:T(8,128)(2,1)}', space=vmem, size = 0x2000, scoped, tag = 'scratch operand']
  %s0 = inlined_call_operand.vmem [shape: f32[2,8,512], index: 0, kind: input, shape index: {}]
  %s1 = inlined_call_operand.vmem [shape: f32[1,512], index: 1, kind: input, shape index: {}]
  %s2 = inlined_call_operand.vmem [shape: f32[1,512], index: 2, kind: input, shape index: {}]
  %s3 = inlined_call_operand.vmem [shape: bf16[512,512], index: 3, kind: input, shape index: {}]
  %s4 = inlined_call_operand.vmem [shape: bf16[512,512], index: 4, kind: input, shape index: {}]
  %s5 = inlined_call_operand.vmem [shape: bf16[512,512], index: 5, kind: input, shape index: {}]
  %s6 = inlined_call_operand.vmem [shape: bf16[512,512], index: 6, kind: input, shape index: {}]
  %s7 = inlined_call_operand.vmem [shape: f32[1,512], index: 7, kind: input, shape index: {}]
  %s8 = inlined_call_operand.vmem [shape: f32[2,8,512], index: 8, kind: output, shape index: {}]
  %s9 = sld [smem:[#allocation0]]
  $region125: #{transformer_block.2} parent=0
    _
  %s11 = ssub.s32 1, %s9
  %s12 = scalar_select 0, %s11, %s9
  loop: start=0, step=1, limit=4
  $region2: #{transformer_block.2} parent=0 // loop_pre_header
    _
  $region3: #{transformer_block.2} parent=0 // loop_header
    %s14 = sphi 0, %s18
    %p15 = scmp.ge.s32.totalorder %s14, 4
    %s21 = sphi 0, %s33
    %s22 = sphi 0, %s29
    %s23 = sphi 0, %s21
    %s24 = sphi 0, %s22
    %s25 = sphi 0, %s23
    %s26 = sphi 0, %s24
    %s36 = sphi 0, %s38
    %s39 = sphi 0, %s36
    %s40 = sphi 0, %s39
    %s56 = sphi 0, %s40
    %s60 = sphi 0, %s60
    %s62 = sphi 0, %s60
    %s63 = sphi 0, %s62
    %s77 = sphi 0, %s63
    %s81 = sphi 0, %s81
    %s83 = sphi 0, %s81
    %s84 = sphi 0, %s83
    %s98 = sphi 0, %s84
    %s102 = sphi 0, %s102
    %s104 = sphi 0, %s102
    %s105 = sphi 0, %s104
    %s119 = sphi 0, %s105
    %s123 = sphi 0, %s123
    %s125 = sphi 0, %s123
    %s126 = sphi 0, %s125
    %s140 = sphi 0, %s126
    %s144 = sphi 0, %s144
    %s146 = sphi 0, %s144
    %s147 = sphi 0, %s146
    %s161 = sphi 0, %s147
    %s165 = sphi 0, %s165
    %s167 = sphi 0, %s165
    %s168 = sphi 0, %s167
    %s182 = sphi 0, %s168
    %s186 = sphi 0, %s186
    %s188 = sphi 0, %s186
    %s189 = sphi 0, %s188
    %s203 = sphi 0, %s189
    %s211 = sphi 0, %s213
    %s214 = sphi 0, %s211
    %s215 = sphi 0, %s214
    %s231 = sphi 0, %s215
  $region4: #{transformer_block.2} parent=0 // loop_header_branch
    %17 = sbr.rel (%p15) target = $region8
  $region5: #{transformer_block.2} parent=0 // loop_body
    %s19 = ssub.s32 %s14, 1
    %s20 = ssub.s32 %s14, 2
    %s27 = sadd.s32 1, %s22
    %p28 = scmp.ge.s32.totalorder %s27, 1
    %s29 = scalar_select %p28, 0, %s27
    %s30 = sadd.s32 1, %s21
    %s31 = scalar_select %p28, %s30, %s21
    %p32 = scmp.ge.s32.totalorder %s31, 2
    %s33 = scalar_select %p32, 0, %s31
    %s34 = ssub.s32 %s21, %s33
    %p35 = scmp.eq.s32.totalorder %s34, 0
    %s37 = sadd.s32 %s36, 1
    %s38 = scalar_select %p35, %s36, %s37
    %p41 = pneg %p35
    %p42 = scmp.eq.s32.totalorder %s14, 1
    %p43 = por %p41, %p42
    %p44 = scmp.ne.s32.totalorder %s36, %s39
    %p45 = scmp.eq.s32.totalorder %s14, 0
    %p46 = por %p44, %p45
    %p47 = scmp.ne.s32.totalorder %s36, %s39
    %p48 = scmp.eq.s32.totalorder %s19, 1
    %p49 = por %p47, %p48
    %p50 = scmp.ne.s32.totalorder %s39, %s40
    %p51 = scmp.eq.s32.totalorder %s19, 0
    %p52 = por %p50, %p51
    %p53 = scmp.ne.s32.totalorder %s39, %s40
    %p54 = scmp.eq.s32.totalorder %s20, 1
    %p55 = por %p53, %p54
    %p57 = scmp.ne.s32.totalorder %s40, %s56
    %p58 = scmp.eq.s32.totalorder %s20, 0
    %p59 = por %p57, %p58
    %s61 = sadd.s32 %s60, 1
    %p64 = scmp.eq.s32.totalorder %s14, 1
    %p65 = scmp.ne.s32.totalorder %s60, %s62
    %p66 = scmp.eq.s32.totalorder %s14, 0
    %p67 = por %p65, %p66
    %p68 = scmp.ne.s32.totalorder %s60, %s62
    %p69 = scmp.eq.s32.totalorder %s19, 1
    %p70 = por %p68, %p69
    %p71 = scmp.ne.s32.totalorder %s62, %s63
    %p72 = scmp.eq.s32.totalorder %s19, 0
    %p73 = por %p71, %p72
    %p74 = scmp.ne.s32.totalorder %s62, %s63
    %p75 = scmp.eq.s32.totalorder %s20, 1
    %p76 = por %p74, %p75
    %p78 = scmp.ne.s32.totalorder %s63, %s77
    %p79 = scmp.eq.s32.totalorder %s20, 0
    %p80 = por %p78, %p79
    %s82 = sadd.s32 %s81, 1
    %p85 = scmp.eq.s32.totalorder %s14, 1
    %p86 = scmp.ne.s32.totalorder %s81, %s83
    %p87 = scmp.eq.s32.totalorder %s14, 0
    %p88 = por %p86, %p87
    %p89 = scmp.ne.s32.totalorder %s81, %s83
    %p90 = scmp.eq.s32.totalorder %s19, 1
    %p91 = por %p89, %p90
    %p92 = scmp.ne.s32.totalorder %s83, %s84
    %p93 = scmp.eq.s32.totalorder %s19, 0
    %p94 = por %p92, %p93
    %p95 = scmp.ne.s32.totalorder %s83, %s84
    %p96 = scmp.eq.s32.totalorder %s20, 1
    %p97 = por %p95, %p96
    %p99 = scmp.ne.s32.totalorder %s84, %s98
    %p100 = scmp.eq.s32.totalorder %s20, 0
    %p101 = por %p99, %p100
    %s103 = sadd.s32 %s102, 1
    %p106 = scmp.eq.s32.totalorder %s14, 1
    %p107 = scmp.ne.s32.totalorder %s102, %s104
    %p108 = scmp.eq.s32.totalorder %s14, 0
    %p109 = por %p107, %p108
    %p110 = scmp.ne.s32.totalorder %s102, %s104
    %p111 = scmp.eq.s32.totalorder %s19, 1
    %p112 = por %p110, %p111
    %p113 = scmp.ne.s32.totalorder %s104, %s105
    %p114 = scmp.eq.s32.totalorder %s19, 0
    %p115 = por %p113, %p114
    %p116 = scmp.ne.s32.totalorder %s104, %s105
    %p117 = scmp.eq.s32.totalorder %s20, 1
    %p118 = por %p116, %p117
    %p120 = scmp.ne.s32.totalorder %s105, %s119
    %p121 = scmp.eq.s32.totalorder %s20, 0
    %p122 = por %p120, %p121
    %s124 = sadd.s32 %s123, 1
    %p127 = scmp.eq.s32.totalorder %s14, 1
    %p128 = scmp.ne.s32.totalorder %s123, %s125
    %p129 = scmp.eq.s32.totalorder %s14, 0
    %p130 = por %p128, %p129
    %p131 = scmp.ne.s32.totalorder %s123, %s125
    %p132 = scmp.eq.s32.totalorder %s19, 1
    %p133 = por %p131, %p132
    %p134 = scmp.ne.s32.totalorder %s125, %s126
    %p135 = scmp.eq.s32.totalorder %s19, 0
    %p136 = por %p134, %p135
    %p137 = scmp.ne.s32.totalorder %s125, %s126
    %p138 = scmp.eq.s32.totalorder %s20, 1
    %p139 = por %p137, %p138
    %p141 = scmp.ne.s32.totalorder %s126, %s140
    %p142 = scmp.eq.s32.totalorder %s20, 0
    %p143 = por %p141, %p142
    %s145 = sadd.s32 %s144, 1
    %p148 = scmp.eq.s32.totalorder %s14, 1
    %p149 = scmp.ne.s32.totalorder %s144, %s146
    %p150 = scmp.eq.s32.totalorder %s14, 0
    %p151 = por %p149, %p150
    %p152 = scmp.ne.s32.totalorder %s144, %s146
    %p153 = scmp.eq.s32.totalorder %s19, 1
    %p154 = por %p152, %p153
    %p155 = scmp.ne.s32.totalorder %s146, %s147
    %p156 = scmp.eq.s32.totalorder %s19, 0
    %p157 = por %p155, %p156
    %p158 = scmp.ne.s32.totalorder %s146, %s147
    %p159 = scmp.eq.s32.totalorder %s20, 1
    %p160 = por %p158, %p159
    %p162 = scmp.ne.s32.totalorder %s147, %s161
    %p163 = scmp.eq.s32.totalorder %s20, 0
    %p164 = por %p162, %p163
    %s166 = sadd.s32 %s165, 1
    %p169 = scmp.eq.s32.totalorder %s14, 1
    %p170 = scmp.ne.s32.totalorder %s165, %s167
    %p171 = scmp.eq.s32.totalorder %s14, 0
    %p172 = por %p170, %p171
    %p173 = scmp.ne.s32.totalorder %s165, %s167
    %p174 = scmp.eq.s32.totalorder %s19, 1
    %p175 = por %p173, %p174
    %p176 = scmp.ne.s32.totalorder %s167, %s168
    %p177 = scmp.eq.s32.totalorder %s19, 0
    %p178 = por %p176, %p177
    %p179 = scmp.ne.s32.totalorder %s167, %s168
    %p180 = scmp.eq.s32.totalorder %s20, 1
    %p181 = por %p179, %p180
    %p183 = scmp.ne.s32.totalorder %s168, %s182
    %p184 = scmp.eq.s32.totalorder %s20, 0
    %p185 = por %p183, %p184
    %s187 = sadd.s32 %s186, 1
    %p190 = scmp.eq.s32.totalorder %s14, 1
    %p191 = scmp.ne.s32.totalorder %s186, %s188
    %p192 = scmp.eq.s32.totalorder %s14, 0
    %p193 = por %p191, %p192
    %p194 = scmp.ne.s32.totalorder %s186, %s188
    %p195 = scmp.eq.s32.totalorder %s19, 1
    %p196 = por %p194, %p195
    %p197 = scmp.ne.s32.totalorder %s188, %s189
    %p198 = scmp.eq.s32.totalorder %s19, 0
    %p199 = por %p197, %p198
    %p200 = scmp.ne.s32.totalorder %s188, %s189
    %p201 = scmp.eq.s32.totalorder %s20, 1
    %p202 = por %p200, %p201
    %p204 = scmp.ne.s32.totalorder %s189, %s203
    %p205 = scmp.eq.s32.totalorder %s20, 0
    %p206 = por %p204, %p205
    %s207 = ssub.s32 %s21, %s33
    %s208 = ssub.s32 %s22, %s29
    %s209 = sor.u32 %s207, %s208
    %p210 = scmp.eq.s32.totalorder %s209, 0
    %s212 = sadd.s32 %s211, 1
    %s213 = scalar_select %p210, %s211, %s212
    %p216 = pneg %p210
    %p217 = scmp.eq.s32.totalorder %s14, 1
    %p218 = por %p216, %p217
    %p219 = scmp.ne.s32.totalorder %s211, %s214
    %p220 = scmp.eq.s32.totalorder %s14, 0
    %p221 = por %p219, %p220
    %p222 = scmp.ne.s32.totalorder %s211, %s214
    %p223 = scmp.eq.s32.totalorder %s19, 1
    %p224 = por %p222, %p223
    %p225 = scmp.ne.s32.totalorder %s214, %s215
    %p226 = scmp.eq.s32.totalorder %s19, 0
    %p227 = por %p225, %p226
    %p228 = scmp.ne.s32.totalorder %s214, %s215
    %p229 = scmp.eq.s32.totalorder %s20, 1
    %p230 = por %p228, %p229
    %p232 = scmp.ne.s32.totalorder %s215, %s231
    %p233 = scmp.eq.s32.totalorder %s20, 0
    %p234 = por %p232, %p233
    %p235 = scmp.le.s32.totalorder 1, %s14
    %p236 = scmp.lt.s32.totalorder %s14, 3
    %p237 = pnand %p235, %p236
    %p238 = pneg %p237
    // Predicated region
    $region9: #{transformer_block.2} parent=5 // pred_check
      _
    $region10: #{transformer_block.2} parent=5 // pred_check_branch
      %240 = sbr.rel (%p237) target = $region12
    $region11: #{transformer_block.2} parent=5 // pred_region
      %s241 = ssub.s32 %s14, 1
      // Predicated region
      $region13: #{transformer_block.2} parent=11 // pred_check
        %p242 = pneg %p73
      $region14: #{transformer_block.2} parent=11 // pred_check_branch
        %244 = sbr.rel (%p242) target = $region16
      $region15: #{transformer_block.2} parent=11 // pred_region
        _
      $region16: #{transformer_block.2} parent=11 // pred_fallthru
        _
      // Predicated region
      $region17: #{transformer_block.2} parent=11 // pred_check
        %p245 = pneg %p94
      $region18: #{transformer_block.2} parent=11 // pred_check_branch
        %247 = sbr.rel (%p245) target = $region20
      $region19: #{transformer_block.2} parent=11 // pred_region
        _
      $region20: #{transformer_block.2} parent=11 // pred_fallthru
        _
      // Predicated region
      $region21: #{transformer_block.2} parent=11 // pred_check
        %p248 = pneg %p115
      $region22: #{transformer_block.2} parent=11 // pred_check_branch
        %250 = sbr.rel (%p248) target = $region24
      $region23: #{transformer_block.2} parent=11 // pred_region
        _
      $region24: #{transformer_block.2} parent=11 // pred_fallthru
        _
      // Predicated region
      $region25: #{transformer_block.2} parent=11 // pred_check
        %p251 = pneg %p136
      $region26: #{transformer_block.2} parent=11 // pred_check_branch
        %253 = sbr.rel (%p251) target = $region28
      $region27: #{transformer_block.2} parent=11 // pred_region
        _
      $region28: #{transformer_block.2} parent=11 // pred_fallthru
        _
      // Predicated region
      $region29: #{transformer_block.2} parent=11 // pred_check
        %p254 = pneg %p157
      $region30: #{transformer_block.2} parent=11 // pred_check_branch
        %256 = sbr.rel (%p254) target = $region32
      $region31: #{transformer_block.2} parent=11 // pred_region
        _
      $region32: #{transformer_block.2} parent=11 // pred_fallthru
        _
      // Predicated region
      $region33: #{transformer_block.2} parent=11 // pred_check
        %p257 = pneg %p178
      $region34: #{transformer_block.2} parent=11 // pred_check_branch
        %259 = sbr.rel (%p257) target = $region36
      $region35: #{transformer_block.2} parent=11 // pred_region
        _
      $region36: #{transformer_block.2} parent=11 // pred_fallthru
        _
      // Predicated region
      $region37: #{transformer_block.2} parent=11 // pred_check
        %p260 = pneg %p199
      $region38: #{transformer_block.2} parent=11 // pred_check_branch
        %262 = sbr.rel (%p260) target = $region40
      $region39: #{transformer_block.2} parent=11 // pred_region
        _
      $region40: #{transformer_block.2} parent=11 // pred_fallthru
        _
    $region12: #{transformer_block.2} parent=5 // pred_fallthru
      _
    %p263 = scmp.lt.s32.totalorder %s14, 2
    // Predicated region
    $region41: #{transformer_block.2} parent=5 // pred_check
      %p264 = pneg %p263
    $region42: #{transformer_block.2} parent=5 // pred_check_branch
      %266 = sbr.rel (%p264) target = $region44
    $region43: #{transformer_block.2} parent=5 // pred_region
      // Predicated region
      $region45: #{transformer_block.2} parent=43 // pred_check
        %p267 = pneg %p46
      $region46: #{transformer_block.2} parent=43 // pred_check_branch
        %269 = sbr.rel (%p267) target = $region48
      $region47: #{transformer_block.2} parent=43 // pred_region
        %p270 = scmp.lt.s32.totalorder %s21, 1
        %s271 = scalar_select %p270, %s21, 1
        %s272 = smul.addr %s271, 4
        %s273 = smul.addr %s272, 8
        %s274 = scalar_lea.vmem %s0, %s273
      $region48: #{transformer_block.2} parent=43 // pred_fallthru
        _
    $region44: #{transformer_block.2} parent=5 // pred_fallthru
      _
    %p275 = scmp.le.s32.totalorder 1, %s14
    %p276 = scmp.lt.s32.totalorder %s14, 3
    %p277 = pnand %p275, %p276
    %p278 = pneg %p277
    // Predicated region
    $region49: #{transformer_block.2} parent=5 // pred_check
      _
    $region50: #{transformer_block.2} parent=5 // pred_check_branch
      %280 = sbr.rel (%p277) target = $region52
    $region51: #{transformer_block.2} parent=5 // pred_region
      %s281 = ssub.s32 %s14, 1
      %p282 = scmp.lt.s32.totalorder %s23, 1
      %s283 = scalar_select %p282, %s23, 1
      %s284 = smul.addr %s283, 4
      %s285 = smul.addr %s284, 8
      %s286 = scalar_lea.vmem %s0, %s285
      %p287 = pneg %p52
      %p288 = pneg %p49
      %p289 = pneg %p73
      %p290 = pneg %p70
      %p291 = pneg %p94
      %p292 = pneg %p91
      %p293 = pneg %p115
      %p294 = pneg %p112
      %p295 = pneg %p136
      %p296 = pneg %p133
      %p297 = pneg %p157
      %p298 = pneg %p154
      %p299 = pneg %p178
      %p300 = pneg %p175
      %p301 = pneg %p199
      %p302 = pneg %p196
      %p303 = pneg %p227
      %p304 = pneg %p224
      %p305 = scmp.lt.s32.totalorder %s23, 1
      %s306 = scalar_select %p305, %s23, 1
      %p307 = scmp.lt.s32.totalorder %s24, 0
      %s308 = scalar_select %p307, %s24, 0
      %s309 = smul.addr %s308, 4
      %s310 = smul.addr %s306, 4
      %s311 = sadd.s32 %s309, %s310
      %s312 = smul.addr %s311, 8
      %s313 = scalar_lea.vmem %s8, %s312
      %p314 = scmp.lt.s32.totalorder %s23, 1
      %s315 = scalar_select %p314, %s23, 1
      %s316 = smul.addr %s315, 4
      %s317 = smul.addr %s316, 8
      %s318 = scalar_lea.vmem %s0, %s317
      %p319 = scmp.lt.s32.totalorder %s23, 1
      %s320 = scalar_select %p319, %s23, 1
      %p321 = scmp.lt.s32.totalorder %s24, 0
      %s322 = scalar_select %p321, %s24, 0
      %s323 = smul.addr %s322, 4
      %s324 = smul.addr %s320, 4
      %s325 = sadd.s32 %s323, %s324
      %s326 = smul.addr %s325, 8
      %s327 = scalar_lea.vmem %s8, %s326
      %p329 = scmp.eq.s32.totalorder %s24, 0
      // Predicated region
      $region53: #{transformer_block.2} parent=51 // pred_check
        %p330 = pneg %p329
      $region54: #{transformer_block.2} parent=51 // pred_check_branch
        %332 = sbr.rel (%p330) target = $region56
      $region55: #{transformer_block.2} parent=51 // pred_region
        %v333 = vld [vmem:[%s318] sm:$0xff]
        %v334 = vld [vmem:[%s318 + $0x8] sm:$0xff]
        %v335 = vld [vmem:[%s318 + $0x10] sm:$0xff]
        %v336 = vld [vmem:[%s318 + $0x18] sm:$0xff]
        %v337 = vld [vmem:[%s1] sm:$0xf]
        %v338 = vld [vmem:[%s2] sm:$0xf]
        %v339 = vadd.f32 %v333, %v334
        %v340 = vadd.f32 %v339, %v335
        %v341 = vadd.f32 %v340, %v336
        %342 = vadd.xlane.f32.xlu0 %v341
        %v343 = vpop.xlane.xlu0 %342
        %v344 = vrcp.pop 512.0
        %v345 = vmul.f32 %v343, %v344
        %v346 = vsub.f32 %v333, %v345
        %v347 = vsub.f32 %v334, %v345
        %v348 = vsub.f32 %v335, %v345
        %v349 = vsub.f32 %v336, %v345
        %v350 = vmul.f32 %v346, %v346
        %v351 = vmul.f32 %v347, %v347
        %v352 = vmul.f32 %v348, %v348
        %v353 = vmul.f32 %v349, %v349
        %v354 = vadd.f32 %v350, %v351
        %v355 = vadd.f32 %v354, %v352
        %v356 = vadd.f32 %v355, %v353
        %357 = vadd.xlane.f32.xlu0 %v356
        %v358 = vpop.xlane.xlu0 %357
        %v359 = vmul.f32 %v358, %v344
        %v360 = vadd.f32 %v359, 1e-05
        %v361 = vrsqrt.pop %v360
        %v362 = vmul.f32 %v346, %v361
        %v363 = vmul.f32 %v347, %v361
        %v364 = vmul.f32 %v348, %v361
        %v365 = vmul.f32 %v349, %v361
        %v367 = vlaneseq
        %v368 = vshrl.u32 %v367, 7
        %v369 = vsub.s32 0, %v368
        %v370 = vrot.slane %v337, %v369
        %v371 = vlaneseq
        %v372 = vshrl.u32 %v371, 7
        %v373 = vsub.s32 1, %v372
        %v374 = vrot.slane %v337, %v373
        %v375 = vlaneseq
        %v376 = vshrl.u32 %v375, 7
        %v377 = vsub.s32 2, %v376
        %v378 = vrot.slane %v337, %v377
        %v379 = vlaneseq
        %v380 = vshrl.u32 %v379, 7
        %v381 = vsub.s32 3, %v380
        %v382 = vrot.slane %v337, %v381
        %v387 = vmul.f32 %v362, %v370
        %v388 = vmul.f32 %v363, %v374
        %v389 = vmul.f32 %v364, %v378
        %v390 = vmul.f32 %v365, %v382
        %v392 = vlaneseq
        %v393 = vshrl.u32 %v392, 7
        %v394 = vsub.s32 0, %v393
        %v395 = vrot.slane %v338, %v394
        %v396 = vlaneseq
        %v397 = vshrl.u32 %v396, 7
        %v398 = vsub.s32 1, %v397
        %v399 = vrot.slane %v338, %v398
        %v400 = vlaneseq
        %v401 = vshrl.u32 %v400, 7
        %v402 = vsub.s32 2, %v401
        %v403 = vrot.slane %v338, %v402
        %v404 = vlaneseq
        %v405 = vshrl.u32 %v404, 7
        %v406 = vsub.s32 3, %v405
        %v407 = vrot.slane %v338, %v406
        %v412 = vadd.f32 %v387, %v395
        %v413 = vadd.f32 %v388, %v399
        %v414 = vadd.f32 %v389, %v403
        %v415 = vadd.f32 %v390, %v407
        %v416 = vpack.c.bf16 %v412, %v412
        %v417 = vpack.c.bf16 %v413, %v413
        %v418 = vpack.c.bf16 %v414, %v414
        %v419 = vpack.c.bf16 %v415, %v415
        %v420 = vld [vmem:[%s4] sm:$0xff]
        %v421 = vld [vmem:[%s4 + $0x8] sm:$0xff]
        %v422 = vld [vmem:[%s4 + $0x10] sm:$0xff]
        %v423 = vld [vmem:[%s4 + $0x18] sm:$0xff]
        %v424 = vld [vmem:[%s4 + $0x20] sm:$0xff]
        %v425 = vld [vmem:[%s4 + $0x28] sm:$0xff]
        %v426 = vld [vmem:[%s4 + $0x30] sm:$0xff]
        %v427 = vld [vmem:[%s4 + $0x38] sm:$0xff]
        %v428 = vld [vmem:[%s4 + $0x40] sm:$0xff]
        %v429 = vld [vmem:[%s4 + $0x48] sm:$0xff]
        %v430 = vld [vmem:[%s4 + $0x50] sm:$0xff]
        %v431 = vld [vmem:[%s4 + $0x58] sm:$0xff]
        %v432 = vld [vmem:[%s4 + $0x60] sm:$0xff]
        %v433 = vld [vmem:[%s4 + $0x68] sm:$0xff]
        %v434 = vld [vmem:[%s4 + $0x70] sm:$0xff]
        %v435 = vld [vmem:[%s4 + $0x78] sm:$0xff]
        %v436 = vld [vmem:[%s4 + $0x80] sm:$0xff]
        %v437 = vld [vmem:[%s4 + $0x88] sm:$0xff]
        %v438 = vld [vmem:[%s4 + $0x90] sm:$0xff]
        %v439 = vld [vmem:[%s4 + $0x98] sm:$0xff]
        %v440 = vld [vmem:[%s4 + $0xa0] sm:$0xff]
        %v441 = vld [vmem:[%s4 + $0xa8] sm:$0xff]
        %v442 = vld [vmem:[%s4 + $0xb0] sm:$0xff]
        %v443 = vld [vmem:[%s4 + $0xb8] sm:$0xff]
        %v444 = vld [vmem:[%s4 + $0xc0] sm:$0xff]
        %v445 = vld [vmem:[%s4 + $0xc8] sm:$0xff]
        %v446 = vld [vmem:[%s4 + $0xd0] sm:$0xff]
        %v447 = vld [vmem:[%s4 + $0xd8] sm:$0xff]
        %v448 = vld [vmem:[%s4 + $0xe0] sm:$0xff]
        %v449 = vld [vmem:[%s4 + $0xe8] sm:$0xff]
        %v450 = vld [vmem:[%s4 + $0xf0] sm:$0xff]
        %v451 = vld [vmem:[%s4 + $0xf8] sm:$0xff]
        %v452 = vld [vmem:[%s4 + $0x100] sm:$0xff]
        %v453 = vld [vmem:[%s4 + $0x108] sm:$0xff]
        %v454 = vld [vmem:[%s4 + $0x110] sm:$0xff]
        %v455 = vld [vmem:[%s4 + $0x118] sm:$0xff]
        %v456 = vld [vmem:[%s4 + $0x120] sm:$0xff]
        %v457 = vld [vmem:[%s4 + $0x128] sm:$0xff]
        %v458 = vld [vmem:[%s4 + $0x130] sm:$0xff]
        %v459 = vld [vmem:[%s4 + $0x138] sm:$0xff]
        %v460 = vld [vmem:[%s4 + $0x140] sm:$0xff]
        %v461 = vld [vmem:[%s4 + $0x148] sm:$0xff]
        %v462 = vld [vmem:[%s4 + $0x150] sm:$0xff]
        %v463 = vld [vmem:[%s4 + $0x158] sm:$0xff]
        %v464 = vld [vmem:[%s4 + $0x160] sm:$0xff]
        %v465 = vld [vmem:[%s4 + $0x168] sm:$0xff]
        %v466 = vld [vmem:[%s4 + $0x170] sm:$0xff]
        %v467 = vld [vmem:[%s4 + $0x178] sm:$0xff]
        %v468 = vld [vmem:[%s4 + $0x180] sm:$0xff]
        %v469 = vld [vmem:[%s4 + $0x188] sm:$0xff]
        %v470 = vld [vmem:[%s4 + $0x190] sm:$0xff]
        %v471 = vld [vmem:[%s4 + $0x198] sm:$0xff]
        %v472 = vld [vmem:[%s4 + $0x1a0] sm:$0xff]
        %v473 = vld [vmem:[%s4 + $0x1a8] sm:$0xff]
        %v474 = vld [vmem:[%s4 + $0x1b0] sm:$0xff]
        %v475 = vld [vmem:[%s4 + $0x1b8] sm:$0xff]
        %v476 = vld [vmem:[%s4 + $0x1c0] sm:$0xff]
        %v477 = vld [vmem:[%s4 + $0x1c8] sm:$0xff]
        %v478 = vld [vmem:[%s4 + $0x1d0] sm:$0xff]
        %v479 = vld [vmem:[%s4 + $0x1d8] sm:$0xff]
        %v480 = vld [vmem:[%s4 + $0x1e0] sm:$0xff]
        %v481 = vld [vmem:[%s4 + $0x1e8] sm:$0xff]
        %v482 = vld [vmem:[%s4 + $0x1f0] sm:$0xff]
        %v483 = vld [vmem:[%s4 + $0x1f8] sm:$0xff]
        %v484 = vld [vmem:[%s4 + $0x200] sm:$0xff]
        %v485 = vld [vmem:[%s4 + $0x208] sm:$0xff]
        %v486 = vld [vmem:[%s4 + $0x210] sm:$0xff]
        %v487 = vld [vmem:[%s4 + $0x218] sm:$0xff]
        %v488 = vld [vmem:[%s4 + $0x220] sm:$0xff]
        %v489 = vld [vmem:[%s4 + $0x228] sm:$0xff]
        %v490 = vld [vmem:[%s4 + $0x230] sm:$0xff]
        %v491 = vld [vmem:[%s4 + $0x238] sm:$0xff]
        %v492 = vld [vmem:[%s4 + $0x240] sm:$0xff]
        %v493 = vld [vmem:[%s4 + $0x248] sm:$0xff]
        %v494 = vld [vmem:[%s4 + $0x250] sm:$0xff]
        %v495 = vld [vmem:[%s4 + $0x258] sm:$0xff]
        %v496 = vld [vmem:[%s4 + $0x260] sm:$0xff]
        %v497 = vld [vmem:[%s4 + $0x268] sm:$0xff]
        %v498 = vld [vmem:[%s4 + $0x270] sm:$0xff]
        %v499 = vld [vmem:[%s4 + $0x278] sm:$0xff]
        %v500 = vld [vmem:[%s4 + $0x280] sm:$0xff]
        %v501 = vld [vmem:[%s4 + $0x288] sm:$0xff]
        %v502 = vld [vmem:[%s4 + $0x290] sm:$0xff]
        %v503 = vld [vmem:[%s4 + $0x298] sm:$0xff]
        %v504 = vld [vmem:[%s4 + $0x2a0] sm:$0xff]
        %v505 = vld [vmem:[%s4 + $0x2a8] sm:$0xff]
        %v506 = vld [vmem:[%s4 + $0x2b0] sm:$0xff]
        %v507 = vld [vmem:[%s4 + $0x2b8] sm:$0xff]
        %v508 = vld [vmem:[%s4 + $0x2c0] sm:$0xff]
        %v509 = vld [vmem:[%s4 + $0x2c8] sm:$0xff]
        %v510 = vld [vmem:[%s4 + $0x2d0] sm:$0xff]
        %v511 = vld [vmem:[%s4 + $0x2d8] sm:$0xff]
        %v512 = vld [vmem:[%s4 + $0x2e0] sm:$0xff]
        %v513 = vld [vmem:[%s4 + $0x2e8] sm:$0xff]
        %v514 = vld [vmem:[%s4 + $0x2f0] sm:$0xff]
        %v515 = vld [vmem:[%s4 + $0x2f8] sm:$0xff]
        %v516 = vld [vmem:[%s4 + $0x300] sm:$0xff]
        %v517 = vld [vmem:[%s4 + $0x308] sm:$0xff]
        %v518 = vld [vmem:[%s4 + $0x310] sm:$0xff]
        %v519 = vld [vmem:[%s4 + $0x318] sm:$0xff]
        %v520 = vld [vmem:[%s4 + $0x320] sm:$0xff]
        %v521 = vld [vmem:[%s4 + $0x328] sm:$0xff]
        %v522 = vld [vmem:[%s4 + $0x330] sm:$0xff]
        %v523 = vld [vmem:[%s4 + $0x338] sm:$0xff]
        %v524 = vld [vmem:[%s4 + $0x340] sm:$0xff]
        %v525 = vld [vmem:[%s4 + $0x348] sm:$0xff]
        %v526 = vld [vmem:[%s4 + $0x350] sm:$0xff]
        %v527 = vld [vmem:[%s4 + $0x358] sm:$0xff]
        %v528 = vld [vmem:[%s4 + $0x360] sm:$0xff]
        %v529 = vld [vmem:[%s4 + $0x368] sm:$0xff]
        %v530 = vld [vmem:[%s4 + $0x370] sm:$0xff]
        %v531 = vld [vmem:[%s4 + $0x378] sm:$0xff]
        %v532 = vld [vmem:[%s4 + $0x380] sm:$0xff]
        %v533 = vld [vmem:[%s4 + $0x388] sm:$0xff]
        %v534 = vld [vmem:[%s4 + $0x390] sm:$0xff]
        %v535 = vld [vmem:[%s4 + $0x398] sm:$0xff]
        %v536 = vld [vmem:[%s4 + $0x3a0] sm:$0xff]
        %v537 = vld [vmem:[%s4 + $0x3a8] sm:$0xff]
        %v538 = vld [vmem:[%s4 + $0x3b0] sm:$0xff]
        %v539 = vld [vmem:[%s4 + $0x3b8] sm:$0xff]
        %v540 = vld [vmem:[%s4 + $0x3c0] sm:$0xff]
        %v541 = vld [vmem:[%s4 + $0x3c8] sm:$0xff]
        %v542 = vld [vmem:[%s4 + $0x3d0] sm:$0xff]
        %v543 = vld [vmem:[%s4 + $0x3d8] sm:$0xff]
        %v544 = vld [vmem:[%s4 + $0x3e0] sm:$0xff]
        %v545 = vld [vmem:[%s4 + $0x3e8] sm:$0xff]
        %v546 = vld [vmem:[%s4 + $0x3f0] sm:$0xff]
        %v547 = vld [vmem:[%s4 + $0x3f8] sm:$0xff]
        %v676 = vunpack.c.l.b16 %v420
        %v677 = vunpack.c.h.b16 %v420
        %v678 = vunpack.c.l.b16 %v421
        %v679 = vunpack.c.h.b16 %v421
        %v680 = vunpack.c.l.b16 %v422
        %v681 = vunpack.c.h.b16 %v422
        %v682 = vunpack.c.l.b16 %v423
        %v683 = vunpack.c.h.b16 %v423
        %v684 = vunpack.c.l.b16 %v424
        %v685 = vunpack.c.h.b16 %v424
        %v686 = vunpack.c.l.b16 %v425
        %v687 = vunpack.c.h.b16 %v425
        %v688 = vunpack.c.l.b16 %v426
        %v689 = vunpack.c.h.b16 %v426
        %v690 = vunpack.c.l.b16 %v427
        %v691 = vunpack.c.h.b16 %v427
        %v692 = vunpack.c.l.b16 %v428
        %v693 = vunpack.c.h.b16 %v428
        %v694 = vunpack.c.l.b16 %v429
        %v695 = vunpack.c.h.b16 %v429
        %v696 = vunpack.c.l.b16 %v430
        %v697 = vunpack.c.h.b16 %v430
        %v698 = vunpack.c.l.b16 %v431
        %v699 = vunpack.c.h.b16 %v431
        %v700 = vunpack.c.l.b16 %v432
        %v701 = vunpack.c.h.b16 %v432
        %v702 = vunpack.c.l.b16 %v433
        %v703 = vunpack.c.h.b16 %v433
        %v704 = vunpack.c.l.b16 %v434
        %v705 = vunpack.c.h.b16 %v434
        %v706 = vunpack.c.l.b16 %v435
        %v707 = vunpack.c.h.b16 %v435
        %v708 = vunpack.c.l.b16 %v436
        %v709 = vunpack.c.h.b16 %v436
        %v710 = vunpack.c.l.b16 %v437
        %v711 = vunpack.c.h.b16 %v437
        %v712 = vunpack.c.l.b16 %v438
        %v713 = vunpack.c.h.b16 %v438
        %v714 = vunpack.c.l.b16 %v439
        %v715 = vunpack.c.h.b16 %v439
        %v716 = vunpack.c.l.b16 %v440
        %v717 = vunpack.c.h.b16 %v440
        %v718 = vunpack.c.l.b16 %v441
        %v719 = vunpack.c.h.b16 %v441
        %v720 = vunpack.c.l.b16 %v442
        %v721 = vunpack.c.h.b16 %v442
        %v722 = vunpack.c.l.b16 %v443
        %v723 = vunpack.c.h.b16 %v443
        %v724 = vunpack.c.l.b16 %v444
        %v725 = vunpack.c.h.b16 %v444
        %v726 = vunpack.c.l.b16 %v445
        %v727 = vunpack.c.h.b16 %v445
        %v728 = vunpack.c.l.b16 %v446
        %v729 = vunpack.c.h.b16 %v446
        %v730 = vunpack.c.l.b16 %v447
        %v731 = vunpack.c.h.b16 %v447
        %v732 = vunpack.c.l.b16 %v448
        %v733 = vunpack.c.h.b16 %v448
        %v734 = vunpack.c.l.b16 %v449
        %v735 = vunpack.c.h.b16 %v449
        %v736 = vunpack.c.l.b16 %v450
        %v737 = vunpack.c.h.b16 %v450
        %v738 = vunpack.c.l.b16 %v451
        %v739 = vunpack.c.h.b16 %v451
        %v740 = vunpack.c.l.b16 %v452
        %v741 = vunpack.c.h.b16 %v452
        %v742 = vunpack.c.l.b16 %v453
        %v743 = vunpack.c.h.b16 %v453
        %v744 = vunpack.c.l.b16 %v454
        %v745 = vunpack.c.h.b16 %v454
        %v746 = vunpack.c.l.b16 %v455
        %v747 = vunpack.c.h.b16 %v455
        %v748 = vunpack.c.l.b16 %v456
        %v749 = vunpack.c.h.b16 %v456
        %v750 = vunpack.c.l.b16 %v457
        %v751 = vunpack.c.h.b16 %v457
        %v752 = vunpack.c.l.b16 %v458
        %v753 = vunpack.c.h.b16 %v458
        %v754 = vunpack.c.l.b16 %v459
        %v755 = vunpack.c.h.b16 %v459
        %v756 = vunpack.c.l.b16 %v460
        %v757 = vunpack.c.h.b16 %v460
        %v758 = vunpack.c.l.b16 %v461
        %v759 = vunpack.c.h.b16 %v461
        %v760 = vunpack.c.l.b16 %v462
        %v761 = vunpack.c.h.b16 %v462
        %v762 = vunpack.c.l.b16 %v463
        %v763 = vunpack.c.h.b16 %v463
        %v764 = vunpack.c.l.b16 %v464
        %v765 = vunpack.c.h.b16 %v464
        %v766 = vunpack.c.l.b16 %v465
        %v767 = vunpack.c.h.b16 %v465
        %v768 = vunpack.c.l.b16 %v466
        %v769 = vunpack.c.h.b16 %v466
        %v770 = vunpack.c.l.b16 %v467
        %v771 = vunpack.c.h.b16 %v467
        %v772 = vunpack.c.l.b16 %v468
        %v773 = vunpack.c.h.b16 %v468
        %v774 = vunpack.c.l.b16 %v469
        %v775 = vunpack.c.h.b16 %v469
        %v776 = vunpack.c.l.b16 %v470
        %v777 = vunpack.c.h.b16 %v470
        %v778 = vunpack.c.l.b16 %v471
        %v779 = vunpack.c.h.b16 %v471
        %v780 = vunpack.c.l.b16 %v472
        %v781 = vunpack.c.h.b16 %v472
        %v782 = vunpack.c.l.b16 %v473
        %v783 = vunpack.c.h.b16 %v473
        %v784 = vunpack.c.l.b16 %v474
        %v785 = vunpack.c.h.b16 %v474
        %v786 = vunpack.c.l.b16 %v475
        %v787 = vunpack.c.h.b16 %v475
        %v788 = vunpack.c.l.b16 %v476
        %v789 = vunpack.c.h.b16 %v476
        %v790 = vunpack.c.l.b16 %v477
        %v791 = vunpack.c.h.b16 %v477
        %v792 = vunpack.c.l.b16 %v478
        %v793 = vunpack.c.h.b16 %v478
        %v794 = vunpack.c.l.b16 %v479
        %v795 = vunpack.c.h.b16 %v479
        %v796 = vunpack.c.l.b16 %v480
        %v797 = vunpack.c.h.b16 %v480
        %v798 = vunpack.c.l.b16 %v481
        %v799 = vunpack.c.h.b16 %v481
        %v800 = vunpack.c.l.b16 %v482
        %v801 = vunpack.c.h.b16 %v482
        %v802 = vunpack.c.l.b16 %v483
        %v803 = vunpack.c.h.b16 %v483
        %v804 = vunpack.c.l.b16 %v484
        %v805 = vunpack.c.h.b16 %v484
        %v806 = vunpack.c.l.b16 %v485
        %v807 = vunpack.c.h.b16 %v485
        %v808 = vunpack.c.l.b16 %v486
        %v809 = vunpack.c.h.b16 %v486
        %v810 = vunpack.c.l.b16 %v487
        %v811 = vunpack.c.h.b16 %v487
        %v812 = vunpack.c.l.b16 %v488
        %v813 = vunpack.c.h.b16 %v488
        %v814 = vunpack.c.l.b16 %v489
        %v815 = vunpack.c.h.b16 %v489
        %v816 = vunpack.c.l.b16 %v490
        %v817 = vunpack.c.h.b16 %v490
        %v818 = vunpack.c.l.b16 %v491
        %v819 = vunpack.c.h.b16 %v491
        %v820 = vunpack.c.l.b16 %v492
        %v821 = vunpack.c.h.b16 %v492
        %v822 = vunpack.c.l.b16 %v493
        %v823 = vunpack.c.h.b16 %v493
        %v824 = vunpack.c.l.b16 %v494
        %v825 = vunpack.c.h.b16 %v494
        %v826 = vunpack.c.l.b16 %v495
        %v827 = vunpack.c.h.b16 %v495
        %v828 = vunpack.c.l.b16 %v496
        %v829 = vunpack.c.h.b16 %v496
        %v830 = vunpack.c.l.b16 %v497
        %v831 = vunpack.c.h.b16 %v497
        %v832 = vunpack.c.l.b16 %v498
        %v833 = vunpack.c.h.b16 %v498
        %v834 = vunpack.c.l.b16 %v499
        %v835 = vunpack.c.h.b16 %v499
        %v836 = vunpack.c.l.b16 %v500
        %v837 = vunpack.c.h.b16 %v500
        %v838 = vunpack.c.l.b16 %v501
        %v839 = vunpack.c.h.b16 %v501
        %v840 = vunpack.c.l.b16 %v502
        %v841 = vunpack.c.h.b16 %v502
        %v842 = vunpack.c.l.b16 %v503
        %v843 = vunpack.c.h.b16 %v503
        %v844 = vunpack.c.l.b16 %v504
        %v845 = vunpack.c.h.b16 %v504
        %v846 = vunpack.c.l.b16 %v505
        %v847 = vunpack.c.h.b16 %v505
        %v848 = vunpack.c.l.b16 %v506
        %v849 = vunpack.c.h.b16 %v506
        %v850 = vunpack.c.l.b16 %v507
        %v851 = vunpack.c.h.b16 %v507
        %v852 = vunpack.c.l.b16 %v508
        %v853 = vunpack.c.h.b16 %v508
        %v854 = vunpack.c.l.b16 %v509
        %v855 = vunpack.c.h.b16 %v509
        %v856 = vunpack.c.l.b16 %v510
        %v857 = vunpack.c.h.b16 %v510
        %v858 = vunpack.c.l.b16 %v511
        %v859 = vunpack.c.h.b16 %v511
        %v860 = vunpack.c.l.b16 %v512
        %v861 = vunpack.c.h.b16 %v512
        %v862 = vunpack.c.l.b16 %v513
        %v863 = vunpack.c.h.b16 %v513
        %v864 = vunpack.c.l.b16 %v514
        %v865 = vunpack.c.h.b16 %v514
        %v866 = vunpack.c.l.b16 %v515
        %v867 = vunpack.c.h.b16 %v515
        %v868 = vunpack.c.l.b16 %v516
        %v869 = vunpack.c.h.b16 %v516
        %v870 = vunpack.c.l.b16 %v517
        %v871 = vunpack.c.h.b16 %v517
        %v872 = vunpack.c.l.b16 %v518
        %v873 = vunpack.c.h.b16 %v518
        %v874 = vunpack.c.l.b16 %v519
        %v875 = vunpack.c.h.b16 %v519
        %v876 = vunpack.c.l.b16 %v520
        %v877 = vunpack.c.h.b16 %v520
        %v878 = vunpack.c.l.b16 %v521
        %v879 = vunpack.c.h.b16 %v521
        %v880 = vunpack.c.l.b16 %v522
        %v881 = vunpack.c.h.b16 %v522
        %v882 = vunpack.c.l.b16 %v523
        %v883 = vunpack.c.h.b16 %v523
        %v884 = vunpack.c.l.b16 %v524
        %v885 = vunpack.c.h.b16 %v524
        %v886 = vunpack.c.l.b16 %v525
        %v887 = vunpack.c.h.b16 %v525
        %v888 = vunpack.c.l.b16 %v526
        %v889 = vunpack.c.h.b16 %v526
        %v890 = vunpack.c.l.b16 %v527
        %v891 = vunpack.c.h.b16 %v527
        %v892 = vunpack.c.l.b16 %v528
        %v893 = vunpack.c.h.b16 %v528
        %v894 = vunpack.c.l.b16 %v529
        %v895 = vunpack.c.h.b16 %v529
        %v896 = vunpack.c.l.b16 %v530
        %v897 = vunpack.c.h.b16 %v530
        %v898 = vunpack.c.l.b16 %v531
        %v899 = vunpack.c.h.b16 %v531
        %v900 = vunpack.c.l.b16 %v532
        %v901 = vunpack.c.h.b16 %v532
        %v902 = vunpack.c.l.b16 %v533
        %v903 = vunpack.c.h.b16 %v533
        %v904 = vunpack.c.l.b16 %v534
        %v905 = vunpack.c.h.b16 %v534
        %v906 = vunpack.c.l.b16 %v535
        %v907 = vunpack.c.h.b16 %v535
        %v908 = vunpack.c.l.b16 %v536
        %v909 = vunpack.c.h.b16 %v536
        %v910 = vunpack.c.l.b16 %v537
        %v911 = vunpack.c.h.b16 %v537
        %v912 = vunpack.c.l.b16 %v538
        %v913 = vunpack.c.h.b16 %v538
        %v914 = vunpack.c.l.b16 %v539
        %v915 = vunpack.c.h.b16 %v539
        %v916 = vunpack.c.l.b16 %v540
        %v917 = vunpack.c.h.b16 %v540
        %v918 = vunpack.c.l.b16 %v541
        %v919 = vunpack.c.h.b16 %v541
        %v920 = vunpack.c.l.b16 %v542
        %v921 = vunpack.c.h.b16 %v542
        %v922 = vunpack.c.l.b16 %v543
        %v923 = vunpack.c.h.b16 %v543
        %v924 = vunpack.c.l.b16 %v544
        %v925 = vunpack.c.h.b16 %v544
        %v926 = vunpack.c.l.b16 %v545
        %v927 = vunpack.c.h.b16 %v545
        %v928 = vunpack.c.l.b16 %v546
        %v929 = vunpack.c.h.b16 %v546
        %v930 = vunpack.c.l.b16 %v547
        %v931 = vunpack.c.h.b16 %v547
        %v932 = vpack.c.b16 %v680, %v676
        %v933 = vpack.c.b16 %v681, %v677
        %v934 = vpack.c.b16 %v682, %v678
        %v935 = vpack.c.b16 %v683, %v679
        %v936 = vpack.c.b16 %v688, %v684
        %v937 = vpack.c.b16 %v689, %v685
        %v938 = vpack.c.b16 %v690, %v686
        %v939 = vpack.c.b16 %v691, %v687
        %v940 = vpack.c.b16 %v696, %v692
        %v941 = vpack.c.b16 %v697, %v693
        %v942 = vpack.c.b16 %v698, %v694
        %v943 = vpack.c.b16 %v699, %v695
        %v944 = vpack.c.b16 %v704, %v700
        %v945 = vpack.c.b16 %v705, %v701
        %v946 = vpack.c.b16 %v706, %v702
        %v947 = vpack.c.b16 %v707, %v703
        %v948 = vpack.c.b16 %v712, %v708
        %v949 = vpack.c.b16 %v713, %v709
        %v950 = vpack.c.b16 %v714, %v710
        %v951 = vpack.c.b16 %v715, %v711
        %v952 = vpack.c.b16 %v720, %v716
        %v953 = vpack.c.b16 %v721, %v717
        %v954 = vpack.c.b16 %v722, %v718
        %v955 = vpack.c.b16 %v723, %v719
        %v956 = vpack.c.b16 %v728, %v724
        %v957 = vpack.c.b16 %v729, %v725
        %v958 = vpack.c.b16 %v730, %v726
        %v959 = vpack.c.b16 %v731, %v727
        %v960 = vpack.c.b16 %v736, %v732
        %v961 = vpack.c.b16 %v737, %v733
        %v962 = vpack.c.b16 %v738, %v734
        %v963 = vpack.c.b16 %v739, %v735
        %v964 = vpack.c.b16 %v744, %v740
        %v965 = vpack.c.b16 %v745, %v741
        %v966 = vpack.c.b16 %v746, %v742
        %v967 = vpack.c.b16 %v747, %v743
        %v968 = vpack.c.b16 %v752, %v748
        %v969 = vpack.c.b16 %v753, %v749
        %v970 = vpack.c.b16 %v754, %v750
        %v971 = vpack.c.b16 %v755, %v751
        %v972 = vpack.c.b16 %v760, %v756
        %v973 = vpack.c.b16 %v761, %v757
        %v974 = vpack.c.b16 %v762, %v758
        %v975 = vpack.c.b16 %v763, %v759
        %v976 = vpack.c.b16 %v768, %v764
        %v977 = vpack.c.b16 %v769, %v765
        %v978 = vpack.c.b16 %v770, %v766
        %v979 = vpack.c.b16 %v771, %v767
        %v980 = vpack.c.b16 %v776, %v772
        %v981 = vpack.c.b16 %v777, %v773
        %v982 = vpack.c.b16 %v778, %v774
        %v983 = vpack.c.b16 %v779, %v775
        %v984 = vpack.c.b16 %v784, %v780
        %v985 = vpack.c.b16 %v785, %v781
        %v986 = vpack.c.b16 %v786, %v782
        %v987 = vpack.c.b16 %v787, %v783
        %v988 = vpack.c.b16 %v792, %v788
        %v989 = vpack.c.b16 %v793, %v789
        %v990 = vpack.c.b16 %v794, %v790
        %v991 = vpack.c.b16 %v795, %v791
        %v992 = vpack.c.b16 %v800, %v796
        %v993 = vpack.c.b16 %v801, %v797
        %v994 = vpack.c.b16 %v802, %v798
        %v995 = vpack.c.b16 %v803, %v799
        %v996 = vpack.c.b16 %v808, %v804
        %v997 = vpack.c.b16 %v809, %v805
        %v998 = vpack.c.b16 %v810, %v806
        %v999 = vpack.c.b16 %v811, %v807
        %v1000 = vpack.c.b16 %v816, %v812
        %v1001 = vpack.c.b16 %v817, %v813
        %v1002 = vpack.c.b16 %v818, %v814
        %v1003 = vpack.c.b16 %v819, %v815
        %v1004 = vpack.c.b16 %v824, %v820
        %v1005 = vpack.c.b16 %v825, %v821
        %v1006 = vpack.c.b16 %v826, %v822
        %v1007 = vpack.c.b16 %v827, %v823
        %v1008 = vpack.c.b16 %v832, %v828
        %v1009 = vpack.c.b16 %v833, %v829
        %v1010 = vpack.c.b16 %v834, %v830
        %v1011 = vpack.c.b16 %v835, %v831
        %v1012 = vpack.c.b16 %v840, %v836
        %v1013 = vpack.c.b16 %v841, %v837
        %v1014 = vpack.c.b16 %v842, %v838
        %v1015 = vpack.c.b16 %v843, %v839
        %v1016 = vpack.c.b16 %v848, %v844
        %v1017 = vpack.c.b16 %v849, %v845
        %v1018 = vpack.c.b16 %v850, %v846
        %v1019 = vpack.c.b16 %v851, %v847
        %v1020 = vpack.c.b16 %v856, %v852
        %v1021 = vpack.c.b16 %v857, %v853
        %v1022 = vpack.c.b16 %v858, %v854
        %v1023 = vpack.c.b16 %v859, %v855
        %v1024 = vpack.c.b16 %v864, %v860
        %v1025 = vpack.c.b16 %v865, %v861
        %v1026 = vpack.c.b16 %v866, %v862
        %v1027 = vpack.c.b16 %v867, %v863
        %v1028 = vpack.c.b16 %v872, %v868
        %v1029 = vpack.c.b16 %v873, %v869
        %v1030 = vpack.c.b16 %v874, %v870
        %v1031 = vpack.c.b16 %v875, %v871
        %v1032 = vpack.c.b16 %v880, %v876
        %v1033 = vpack.c.b16 %v881, %v877
        %v1034 = vpack.c.b16 %v882, %v878
        %v1035 = vpack.c.b16 %v883, %v879
        %v1036 = vpack.c.b16 %v888, %v884
        %v1037 = vpack.c.b16 %v889, %v885
        %v1038 = vpack.c.b16 %v890, %v886
        %v1039 = vpack.c.b16 %v891, %v887
        %v1040 = vpack.c.b16 %v896, %v892
        %v1041 = vpack.c.b16 %v897, %v893
        %v1042 = vpack.c.b16 %v898, %v894
        %v1043 = vpack.c.b16 %v899, %v895
        %v1044 = vpack.c.b16 %v904, %v900
        %v1045 = vpack.c.b16 %v905, %v901
        %v1046 = vpack.c.b16 %v906, %v902
        %v1047 = vpack.c.b16 %v907, %v903
        %v1048 = vpack.c.b16 %v912, %v908
        %v1049 = vpack.c.b16 %v913, %v909
        %v1050 = vpack.c.b16 %v914, %v910
        %v1051 = vpack.c.b16 %v915, %v911
        %v1052 = vpack.c.b16 %v920, %v916
        %v1053 = vpack.c.b16 %v921, %v917
        %v1054 = vpack.c.b16 %v922, %v918
        %v1055 = vpack.c.b16 %v923, %v919
        %v1056 = vpack.c.b16 %v928, %v924
        %v1057 = vpack.c.b16 %v929, %v925
        %v1058 = vpack.c.b16 %v930, %v926
        %v1059 = vpack.c.b16 %v931, %v927
        %1188 = vmatprep.subr.bf16.mxu0 %v933
        %1189 = vmatpush1.bf16.msra.mxu0 %v932
        %1190 = vmatprep.subr.bf16.mxu0 %v937
        %1191 = vmatpush1.bf16.msra.mxu0 %v936
        %1192 = vmatprep.subr.bf16.mxu0 %v941
        %1193 = vmatpush1.bf16.msra.mxu0 %v940
        %1194 = vmatprep.subr.bf16.mxu0 %v945
        %1195 = vmatpush1.bf16.msra.mxu0 %v944
        %1196 = vmatprep.subr.bf16.mxu0 %v949
        %1197 = vmatpush1.bf16.msra.mxu0 %v948
        %1198 = vmatprep.subr.bf16.mxu0 %v953
        %1199 = vmatpush1.bf16.msra.mxu0 %v952
        %1200 = vmatprep.subr.bf16.mxu0 %v957
        %1201 = vmatpush1.bf16.msra.mxu0 %v956
        %1202 = vmatprep.subr.bf16.mxu0 %v961
        %1203 = vmatpush1.bf16.msra.mxu0 %v960
        %1204 = vmatprep.subr.bf16.mxu0 %v965
        %1205 = vmatpush1.bf16.msra.mxu0 %v964
        %1206 = vmatprep.subr.bf16.mxu0 %v969
        %1207 = vmatpush1.bf16.msra.mxu0 %v968
        %1208 = vmatprep.subr.bf16.mxu0 %v973
        %1209 = vmatpush1.bf16.msra.mxu0 %v972
        %1210 = vmatprep.subr.bf16.mxu0 %v977
        %1211 = vmatpush1.bf16.msra.mxu0 %v976
        %1212 = vmatprep.subr.bf16.mxu0 %v981
        %1213 = vmatpush1.bf16.msra.mxu0 %v980
        %1214 = vmatprep.subr.bf16.mxu0 %v985
        %1215 = vmatpush1.bf16.msra.mxu0 %v984
        %1216 = vmatprep.subr.bf16.mxu0 %v989
        %1217 = vmatpush1.bf16.msra.mxu0 %v988
        %1218 = vmatprep.subr.bf16.mxu0 %v993
        %1219 = vmatpush1.bf16.msra.mxu0 %v992
        %1220 = vmatprep.mubr.bf16.mxu0 %v417
        %1221 = vmatmul.mubr.bf16.gmra.mrb[0].mxu0 %v416
        %v1222 = vpop.f32.mrb[0].mxu0
        %v1223 = vadd.f32 0.0, %v1222
        %v1224 = vpop.f32.mrb[0].mxu0
        %v1225 = vadd.f32 0.0, %v1224
        %v1226 = vpop.f32.mrb[0].mxu0
        %v1227 = vpop.f32.mrb[0].mxu0
        %1228 = vdwg.mxu0
        %1229 = vmatprep.subr.bf16.mxu0 %v997
        %1230 = vmatpush1.bf16.msra.mxu0 %v996
        %1231 = vmatprep.subr.bf16.mxu0 %v1001
        %1232 = vmatpush1.bf16.msra.mxu0 %v1000
        %1233 = vmatprep.subr.bf16.mxu0 %v1005
        %1234 = vmatpush1.bf16.msra.mxu0 %v1004
        %1235 = vmatprep.subr.bf16.mxu0 %v1009
        %1236 = vmatpush1.bf16.msra.mxu0 %v1008
        %1237 = vmatprep.subr.bf16.mxu0 %v1013
        %1238 = vmatpush1.bf16.msra.mxu0 %v1012
        %1239 = vmatprep.subr.bf16.mxu0 %v1017
        %1240 = vmatpush1.bf16.msra.mxu0 %v1016
        %1241 = vmatprep.subr.bf16.mxu0 %v1021
        %1242 = vmatpush1.bf16.msra.mxu0 %v1020
        %1243 = vmatprep.subr.bf16.mxu0 %v1025
        %1244 = vmatpush1.bf16.msra.mxu0 %v1024
        %1245 = vmatprep.subr.bf16.mxu0 %v1029
        %1246 = vmatpush1.bf16.msra.mxu0 %v1028
        %1247 = vmatprep.subr.bf16.mxu0 %v1033
        %1248 = vmatpush1.bf16.msra.mxu0 %v1032
        %1249 = vmatprep.subr.bf16.mxu0 %v1037
        %1250 = vmatpush1.bf16.msra.mxu0 %v1036
        %1251 = vmatprep.subr.bf16.mxu0 %v1041
        %1252 = vmatpush1.bf16.msra.mxu0 %v1040
        %1253 = vmatprep.subr.bf16.mxu0 %v1045
        %1254 = vmatpush1.bf16.msra.mxu0 %v1044
        %1255 = vmatprep.subr.bf16.mxu0 %v1049
        %1256 = vmatpush1.bf16.msra.mxu0 %v1048
        %1257 = vmatprep.subr.bf16.mxu0 %v1053
        %1258 = vmatpush1.bf16.msra.mxu0 %v1052
        %1259 = vmatprep.subr.bf16.mxu0 %v1057
        %1260 = vmatpush1.bf16.msra.mxu0 %v1056
        %1261 = vmatprep.mubr.bf16.mxu0 %v419
        %1262 = vmatmul.mubr.bf16.gmra.mrb[0].mxu0 %v418
        %v1263 = vpop.f32.mrb[0].mxu0
        %v1264 = vadd.f32 %v1223, %v1263
        %v1265 = vpop.f32.mrb[0].mxu0
        %v1266 = vadd.f32 %v1225, %v1265
        %v1267 = vpop.f32.mrb[0].mxu0
        %v1268 = vpop.f32.mrb[0].mxu0
        %1269 = vdwg.mxu0
        %1270 = vmatprep.subr.bf16.mxu0 %v935
        %1271 = vmatpush1.bf16.msra.mxu0 %v934
        %1272 = vmatprep.subr.bf16.mxu0 %v939
        %1273 = vmatpush1.bf16.msra.mxu0 %v938
        %1274 = vmatprep.subr.bf16.mxu0 %v943
        %1275 = vmatpush1.bf16.msra.mxu0 %v942
        %1276 = vmatprep.subr.bf16.mxu0 %v947
        %1277 = vmatpush1.bf16.msra.mxu0 %v946
        %1278 = vmatprep.subr.bf16.mxu0 %v951
        %1279 = vmatpush1.bf16.msra.mxu0 %v950
        %1280 = vmatprep.subr.bf16.mxu0 %v955
        %1281 = vmatpush1.bf16.msra.mxu0 %v954
        %1282 = vmatprep.subr.bf16.mxu0 %v959
        %1283 = vmatpush1.bf16.msra.mxu0 %v958
        %1284 = vmatprep.subr.bf16.mxu0 %v963
        %1285 = vmatpush1.bf16.msra.mxu0 %v962
        %1286 = vmatprep.subr.bf16.mxu0 %v967
        %1287 = vmatpush1.bf16.msra.mxu0 %v966
        %1288 = vmatprep.subr.bf16.mxu0 %v971
        %1289 = vmatpush1.bf16.msra.mxu0 %v970
        %1290 = vmatprep.subr.bf16.mxu0 %v975
        %1291 = vmatpush1.bf16.msra.mxu0 %v974
        %1292 = vmatprep.subr.bf16.mxu0 %v979
        %1293 = vmatpush1.bf16.msra.mxu0 %v978
        %1294 = vmatprep.subr.bf16.mxu0 %v983
        %1295 = vmatpush1.bf16.msra.mxu0 %v982
        %1296 = vmatprep.subr.bf16.mxu0 %v987
        %1297 = vmatpush1.bf16.msra.mxu0 %v986
        %1298 = vmatprep.subr.bf16.mxu0 %v991
        %1299 = vmatpush1.bf16.msra.mxu0 %v990
        %1300 = vmatprep.subr.bf16.mxu0 %v995
        %1301 = vmatpush1.bf16.msra.mxu0 %v994
        %1302 = vmatprep.mubr.bf16.mxu0 %v417
        %1303 = vmatmul.mubr.bf16.gmra.mrb[0].mxu0 %v416
        %v1304 = vpop.f32.mrb[0].mxu0
        %v1305 = vadd.f32 0.0, %v1304
        %v1306 = vpop.f32.mrb[0].mxu0
        %v1307 = vadd.f32 0.0, %v1306
        %v1308 = vpop.f32.mrb[0].mxu0
        %v1309 = vpop.f32.mrb[0].mxu0
        %1310 = vdwg.mxu0
        %1311 = vmatprep.subr.bf16.mxu0 %v999
        %1312 = vmatpush1.bf16.msra.mxu0 %v998
        %1313 = vmatprep.subr.bf16.mxu0 %v1003
        %1314 = vmatpush1.bf16.msra.mxu0 %v1002
        %1315 = vmatprep.subr.bf16.mxu0 %v1007
        %1316 = vmatpush1.bf16.msra.mxu0 %v1006
        %1317 = vmatprep.subr.bf16.mxu0 %v1011
        %1318 = vmatpush1.bf16.msra.mxu0 %v1010
        %1319 = vmatprep.subr.bf16.mxu0 %v1015
        %1320 = vmatpush1.bf16.msra.mxu0 %v1014
        %1321 = vmatprep.subr.bf16.mxu0 %v1019
        %1322 = vmatpush1.bf16.msra.mxu0 %v1018
        %1323 = vmatprep.subr.bf16.mxu0 %v1023
        %1324 = vmatpush1.bf16.msra.mxu0 %v1022
        %1325 = vmatprep.subr.bf16.mxu0 %v1027
        %1326 = vmatpush1.bf16.msra.mxu0 %v1026
        %1327 = vmatprep.subr.bf16.mxu0 %v1031
        %1328 = vmatpush1.bf16.msra.mxu0 %v1030
        %1329 = vmatprep.subr.bf16.mxu0 %v1035
        %1330 = vmatpush1.bf16.msra.mxu0 %v1034
        %1331 = vmatprep.subr.bf16.mxu0 %v1039
        %1332 = vmatpush1.bf16.msra.mxu0 %v1038
        %1333 = vmatprep.subr.bf16.mxu0 %v1043
        %1334 = vmatpush1.bf16.msra.mxu0 %v1042
        %1335 = vmatprep.subr.bf16.mxu0 %v1047
        %1336 = vmatpush1.bf16.msra.mxu0 %v1046
        %1337 = vmatprep.subr.bf16.mxu0 %v1051
        %1338 = vmatpush1.bf16.msra.mxu0 %v1050
        %1339 = vmatprep.subr.bf16.mxu0 %v1055
        %1340 = vmatpush1.bf16.msra.mxu0 %v1054
        %1341 = vmatprep.subr.bf16.mxu0 %v1059
        %1342 = vmatpush1.bf16.msra.mxu0 %v1058
        %1343 = vmatprep.mubr.bf16.mxu0 %v419
        %1344 = vmatmul.mubr.bf16.gmra.mrb[0].mxu0 %v418
        %v1345 = vpop.f32.mrb[0].mxu0
        %v1346 = vadd.f32 %v1305, %v1345
        %v1347 = vpop.f32.mrb[0].mxu0
        %v1348 = vadd.f32 %v1307, %v1347
        %v1349 = vpop.f32.mrb[0].mxu0
        %v1350 = vpop.f32.mrb[0].mxu0
        %1351 = vdwg.mxu0
        %v1352 = vpack.c.bf16 %v1264, %v1264
        %v1353 = vpack.c.bf16 %v1266, %v1266
        %v1354 = vpack.c.bf16 %v1346, %v1346
        %v1355 = vpack.c.bf16 %v1348, %v1348
        %v1360 = vunpack.c.l.b16 %v1352
        %v1361 = vunpack.c.l.b16 %v1353
        %v1362 = vunpack.c.l.b16 %v1354
        %v1363 = vunpack.c.l.b16 %v1355
        %v1364 = vpack.c.b16 %v1361, %v1360
        %v1365 = vpack.c.b16 %v1363, %v1362
        %1368 = vst [vmem:[#allocation2] sm:$0xff] %v1364
        %1369 = vst [vmem:[#allocation2 + $0x8] sm:$0xff] %v1365
        %v1370 = vld [vmem:[%s5] sm:$0xff]
        %v1371 = vld [vmem:[%s5 + $0x8] sm:$0xff]
        %v1372 = vld [vmem:[%s5 + $0x10] sm:$0xff]
        %v1373 = vld [vmem:[%s5 + $0x18] sm:$0xff]
        %v1374 = vld [vmem:[%s5 + $0x20] sm:$0xff]
        %v1375 = vld [vmem:[%s5 + $0x28] sm:$0xff]
        %v1376 = vld [vmem:[%s5 + $0x30] sm:$0xff]
        %v1377 = vld [vmem:[%s5 + $0x38] sm:$0xff]
        %v1378 = vld [vmem:[%s5 + $0x40] sm:$0xff]
        %v1379 = vld [vmem:[%s5 + $0x48] sm:$0xff]
        %v1380 = vld [vmem:[%s5 + $0x50] sm:$0xff]
        %v1381 = vld [vmem:[%s5 + $0x58] sm:$0xff]
        %v1382 = vld [vmem:[%s5 + $0x60] sm:$0xff]
        %v1383 = vld [vmem:[%s5 + $0x68] sm:$0xff]
        %v1384 = vld [vmem:[%s5 + $0x70] sm:$0xff]
        %v1385 = vld [vmem:[%s5 + $0x78] sm:$0xff]
        %v1386 = vld [vmem:[%s5 + $0x80] sm:$0xff]
        %v1387 = vld [vmem:[%s5 + $0x88] sm:$0xff]
        %v1388 = vld [vmem:[%s5 + $0x90] sm:$0xff]
        %v1389 = vld [vmem:[%s5 + $0x98] sm:$0xff]
        %v1390 = vld [vmem:[%s5 + $0xa0] sm:$0xff]
        %v1391 = vld [vmem:[%s5 + $0xa8] sm:$0xff]
        %v1392 = vld [vmem:[%s5 + $0xb0] sm:$0xff]
        %v1393 = vld [vmem:[%s5 + $0xb8] sm:$0xff]
        %v1394 = vld [vmem:[%s5 + $0xc0] sm:$0xff]
        %v1395 = vld [vmem:[%s5 + $0xc8] sm:$0xff]
        %v1396 = vld [vmem:[%s5 + $0xd0] sm:$0xff]
        %v1397 = vld [vmem:[%s5 + $0xd8] sm:$0xff]
        %v1398 = vld [vmem:[%s5 + $0xe0] sm:$0xff]
        %v1399 = vld [vmem:[%s5 + $0xe8] sm:$0xff]
        %v1400 = vld [vmem:[%s5 + $0xf0] sm:$0xff]
        %v1401 = vld [vmem:[%s5 + $0xf8] sm:$0xff]
        %v1402 = vld [vmem:[%s5 + $0x100] sm:$0xff]
        %v1403 = vld [vmem:[%s5 + $0x108] sm:$0xff]
        %v1404 = vld [vmem:[%s5 + $0x110] sm:$0xff]
        %v1405 = vld [vmem:[%s5 + $0x118] sm:$0xff]
        %v1406 = vld [vmem:[%s5 + $0x120] sm:$0xff]
        %v1407 = vld [vmem:[%s5 + $0x128] sm:$0xff]
        %v1408 = vld [vmem:[%s5 + $0x130] sm:$0xff]
        %v1409 = vld [vmem:[%s5 + $0x138] sm:$0xff]
        %v1410 = vld [vmem:[%s5 + $0x140] sm:$0xff]
        %v1411 = vld [vmem:[%s5 + $0x148] sm:$0xff]
        %v1412 = vld [vmem:[%s5 + $0x150] sm:$0xff]
        %v1413 = vld [vmem:[%s5 + $0x158] sm:$0xff]
        %v1414 = vld [vmem:[%s5 + $0x160] sm:$0xff]
        %v1415 = vld [vmem:[%s5 + $0x168] sm:$0xff]
        %v1416 = vld [vmem:[%s5 + $0x170] sm:$0xff]
        %v1417 = vld [vmem:[%s5 + $0x178] sm:$0xff]
        %v1418 = vld [vmem:[%s5 + $0x180] sm:$0xff]
        %v1419 = vld [vmem:[%s5 + $0x188] sm:$0xff]
        %v1420 = vld [vmem:[%s5 + $0x190] sm:$0xff]
        %v1421 = vld [vmem:[%s5 + $0x198] sm:$0xff]
        %v1422 = vld [vmem:[%s5 + $0x1a0] sm:$0xff]
        %v1423 = vld [vmem:[%s5 + $0x1a8] sm:$0xff]
        %v1424 = vld [vmem:[%s5 + $0x1b0] sm:$0xff]
        %v1425 = vld [vmem:[%s5 + $0x1b8] sm:$0xff]
        %v1426 = vld [vmem:[%s5 + $0x1c0] sm:$0xff]
        %v1427 = vld [vmem:[%s5 + $0x1c8] sm:$0xff]
        %v1428 = vld [vmem:[%s5 + $0x1d0] sm:$0xff]
        %v1429 = vld [vmem:[%s5 + $0x1d8] sm:$0xff]
        %v1430 = vld [vmem:[%s5 + $0x1e0] sm:$0xff]
        %v1431 = vld [vmem:[%s5 + $0x1e8] sm:$0xff]
        %v1432 = vld [vmem:[%s5 + $0x1f0] sm:$0xff]
        %v1433 = vld [vmem:[%s5 + $0x1f8] sm:$0xff]
        %v1434 = vld [vmem:[%s5 + $0x200] sm:$0xff]
        %v1435 = vld [vmem:[%s5 + $0x208] sm:$0xff]
        %v1436 = vld [vmem:[%s5 + $0x210] sm:$0xff]
        %v1437 = vld [vmem:[%s5 + $0x218] sm:$0xff]
        %v1438 = vld [vmem:[%s5 + $0x220] sm:$0xff]
        %v1439 = vld [vmem:[%s5 + $0x228] sm:$0xff]
        %v1440 = vld [vmem:[%s5 + $0x230] sm:$0xff]
        %v1441 = vld [vmem:[%s5 + $0x238] sm:$0xff]
        %v1442 = vld [vmem:[%s5 + $0x240] sm:$0xff]
        %v1443 = vld [vmem:[%s5 + $0x248] sm:$0xff]
        %v1444 = vld [vmem:[%s5 + $0x250] sm:$0xff]
        %v1445 = vld [vmem:[%s5 + $0x258] sm:$0xff]
        %v1446 = vld [vmem:[%s5 + $0x260] sm:$0xff]
        %v1447 = vld [vmem:[%s5 + $0x268] sm:$0xff]
        %v1448 = vld [vmem:[%s5 + $0x270] sm:$0xff]
        %v1449 = vld [vmem:[%s5 + $0x278] sm:$0xff]
        %v1450 = vld [vmem:[%s5 + $0x280] sm:$0xff]
        %v1451 = vld [vmem:[%s5 + $0x288] sm:$0xff]
        %v1452 = vld [vmem:[%s5 + $0x290] sm:$0xff]
        %v1453 = vld [vmem:[%s5 + $0x298] sm:$0xff]
        %v1454 = vld [vmem:[%s5 + $0x2a0] sm:$0xff]
        %v1455 = vld [vmem:[%s5 + $0x2a8] sm:$0xff]
        %v1456 = vld [vmem:[%s5 + $0x2b0] sm:$0xff]
        %v1457 = vld [vmem:[%s5 + $0x2b8] sm:$0xff]
        %v1458 = vld [vmem:[%s5 + $0x2c0] sm:$0xff]
        %v1459 = vld [vmem:[%s5 + $0x2c8] sm:$0xff]
        %v1460 = vld [vmem:[%s5 + $0x2d0] sm:$0xff]
        %v1461 = vld [vmem:[%s5 + $0x2d8] sm:$0xff]
        %v1462 = vld [vmem:[%s5 + $0x2e0] sm:$0xff]
        %v1463 = vld [vmem:[%s5 + $0x2e8] sm:$0xff]
        %v1464 = vld [vmem:[%s5 + $0x2f0] sm:$0xff]
        %v1465 = vld [vmem:[%s5 + $0x2f8] sm:$0xff]
        %v1466 = vld [vmem:[%s5 + $0x300] sm:$0xff]
        %v1467 = vld [vmem:[%s5 + $0x308] sm:$0xff]
        %v1468 = vld [vmem:[%s5 + $0x310] sm:$0xff]
        %v1469 = vld [vmem:[%s5 + $0x318] sm:$0xff]
        %v1470 = vld [vmem:[%s5 + $0x320] sm:$0xff]
        %v1471 = vld [vmem:[%s5 + $0x328] sm:$0xff]
        %v1472 = vld [vmem:[%s5 + $0x330] sm:$0xff]
        %v1473 = vld [vmem:[%s5 + $0x338] sm:$0xff]
        %v1474 = vld [vmem:[%s5 + $0x340] sm:$0xff]
        %v1475 = vld [vmem:[%s5 + $0x348] sm:$0xff]
        %v1476 = vld [vmem:[%s5 + $0x350] sm:$0xff]
        %v1477 = vld [vmem:[%s5 + $0x358] sm:$0xff]
        %v1478 = vld [vmem:[%s5 + $0x360] sm:$0xff]
        %v1479 = vld [vmem:[%s5 + $0x368] sm:$0xff]
        %v1480 = vld [vmem:[%s5 + $0x370] sm:$0xff]
        %v1481 = vld [vmem:[%s5 + $0x378] sm:$0xff]
        %v1482 = vld [vmem:[%s5 + $0x380] sm:$0xff]
        %v1483 = vld [vmem:[%s5 + $0x388] sm:$0xff]
        %v1484 = vld [vmem:[%s5 + $0x390] sm:$0xff]
        %v1485 = vld [vmem:[%s5 + $0x398] sm:$0xff]
        %v1486 = vld [vmem:[%s5 + $0x3a0] sm:$0xff]
        %v1487 = vld [vmem:[%s5 + $0x3a8] sm:$0xff]
        %v1488 = vld [vmem:[%s5 + $0x3b0] sm:$0xff]
        %v1489 = vld [vmem:[%s5 + $0x3b8] sm:$0xff]
        %v1490 = vld [vmem:[%s5 + $0x3c0] sm:$0xff]
        %v1491 = vld [vmem:[%s5 + $0x3c8] sm:$0xff]
        %v1492 = vld [vmem:[%s5 + $0x3d0] sm:$0xff]
        %v1493 = vld [vmem:[%s5 + $0x3d8] sm:$0xff]
        %v1494 = vld [vmem:[%s5 + $0x3e0] sm:$0xff]
        %v1495 = vld [vmem:[%s5 + $0x3e8] sm:$0xff]
        %v1496 = vld [vmem:[%s5 + $0x3f0] sm:$0xff]
        %v1497 = vld [vmem:[%s5 + $0x3f8] sm:$0xff]
        %v1626 = vunpack.c.l.b16 %v1370
        %v1627 = vunpack.c.h.b16 %v1370
        %v1628 = vunpack.c.l.b16 %v1371
        %v1629 = vunpack.c.h.b16 %v1371
        %v1630 = vunpack.c.l.b16 %v1372
        %v1631 = vunpack.c.h.b16 %v1372
        %v1632 = vunpack.c.l.b16 %v1373
        %v1633 = vunpack.c.h.b16 %v1373
        %v1634 = vunpack.c.l.b16 %v1374
        %v1635 = vunpack.c.h.b16 %v1374
        %v1636 = vunpack.c.l.b16 %v1375
        %v1637 = vunpack.c.h.b16 %v1375
        %v1638 = vunpack.c.l.b16 %v1376
        %v1639 = vunpack.c.h.b16 %v1376
        %v1640 = vunpack.c.l.b16 %v1377
        %v1641 = vunpack.c.h.b16 %v1377
        %v1642 = vunpack.c.l.b16 %v1378
        %v1643 = vunpack.c.h.b16 %v1378
        %v1644 = vunpack.c.l.b16 %v1379
        %v1645 = vunpack.c.h.b16 %v1379
        %v1646 = vunpack.c.l.b16 %v1380
        %v1647 = vunpack.c.h.b16 %v1380
        %v1648 = vunpack.c.l.b16 %v1381
        %v1649 = vunpack.c.h.b16 %v1381
        %v1650 = vunpack.c.l.b16 %v1382
        %v1651 = vunpack.c.h.b16 %v1382
        %v1652 = vunpack.c.l.b16 %v1383
        %v1653 = vunpack.c.h.b16 %v1383
        %v1654 = vunpack.c.l.b16 %v1384
        %v1655 = vunpack.c.h.b16 %v1384
        %v1656 = vunpack.c.l.b16 %v1385
        %v1657 = vunpack.c.h.b16 %v1385
        %v1658 = vunpack.c.l.b16 %v1386
        %v1659 = vunpack.c.h.b16 %v1386
        %v1660 = vunpack.c.l.b16 %v1387
        %v1661 = vunpack.c.h.b16 %v1387
        %v1662 = vunpack.c.l.b16 %v1388
        %v1663 = vunpack.c.h.b16 %v1388
        %v1664 = vunpack.c.l.b16 %v1389
        %v1665 = vunpack.c.h.b16 %v1389
        %v1666 = vunpack.c.l.b16 %v1390
        %v1667 = vunpack.c.h.b16 %v1390
        %v1668 = vunpack.c.l.b16 %v1391
        %v1669 = vunpack.c.h.b16 %v1391
        %v1670 = vunpack.c.l.b16 %v1392
        %v1671 = vunpack.c.h.b16 %v1392
        %v1672 = vunpack.c.l.b16 %v1393
        %v1673 = vunpack.c.h.b16 %v1393
        %v1674 = vunpack.c.l.b16 %v1394
        %v1675 = vunpack.c.h.b16 %v1394
        %v1676 = vunpack.c.l.b16 %v1395
        %v1677 = vunpack.c.h.b16 %v1395
        %v1678 = vunpack.c.l.b16 %v1396
        %v1679 = vunpack.c.h.b16 %v1396
        %v1680 = vunpack.c.l.b16 %v1397
        %v1681 = vunpack.c.h.b16 %v1397
        %v1682 = vunpack.c.l.b16 %v1398
        %v1683 = vunpack.c.h.b16 %v1398
        %v1684 = vunpack.c.l.b16 %v1399
        %v1685 = vunpack.c.h.b16 %v1399
        %v1686 = vunpack.c.l.b16 %v1400
        %v1687 = vunpack.c.h.b16 %v1400
        %v1688 = vunpack.c.l.b16 %v1401
        %v1689 = vunpack.c.h.b16 %v1401
        %v1690 = vunpack.c.l.b16 %v1402
        %v1691 = vunpack.c.h.b16 %v1402
        %v1692 = vunpack.c.l.b16 %v1403
        %v1693 = vunpack.c.h.b16 %v1403
        %v1694 = vunpack.c.l.b16 %v1404
        %v1695 = vunpack.c.h.b16 %v1404
        %v1696 = vunpack.c.l.b16 %v1405
        %v1697 = vunpack.c.h.b16 %v1405
        %v1698 = vunpack.c.l.b16 %v1406
        %v1699 = vunpack.c.h.b16 %v1406
        %v1700 = vunpack.c.l.b16 %v1407
        %v1701 = vunpack.c.h.b16 %v1407
        %v1702 = vunpack.c.l.b16 %v1408
        %v1703 = vunpack.c.h.b16 %v1408
        %v1704 = vunpack.c.l.b16 %v1409
        %v1705 = vunpack.c.h.b16 %v1409
        %v1706 = vunpack.c.l.b16 %v1410
        %v1707 = vunpack.c.h.b16 %v1410
        %v1708 = vunpack.c.l.b16 %v1411
        %v1709 = vunpack.c.h.b16 %v1411
        %v1710 = vunpack.c.l.b16 %v1412
        %v1711 = vunpack.c.h.b16 %v1412
        %v1712 = vunpack.c.l.b16 %v1413
        %v1713 = vunpack.c.h.b16 %v1413
        %v1714 = vunpack.c.l.b16 %v1414
        %v1715 = vunpack.c.h.b16 %v1414
        %v1716 = vunpack.c.l.b16 %v1415
        %v1717 = vunpack.c.h.b16 %v1415
        %v1718 = vunpack.c.l.b16 %v1416
        %v1719 = vunpack.c.h.b16 %v1416
        %v1720 = vunpack.c.l.b16 %v1417
        %v1721 = vunpack.c.h.b16 %v1417
        %v1722 = vunpack.c.l.b16 %v1418
        %v1723 = vunpack.c.h.b16 %v1418
        %v1724 = vunpack.c.l.b16 %v1419
        %v1725 = vunpack.c.h.b16 %v1419
        %v1726 = vunpack.c.l.b16 %v1420
        %v1727 = vunpack.c.h.b16 %v1420
        %v1728 = vunpack.c.l.b16 %v1421
        %v1729 = vunpack.c.h.b16 %v1421
        %v1730 = vunpack.c.l.b16 %v1422
        %v1731 = vunpack.c.h.b16 %v1422
        %v1732 = vunpack.c.l.b16 %v1423
        %v1733 = vunpack.c.h.b16 %v1423
        %v1734 = vunpack.c.l.b16 %v1424
        %v1735 = vunpack.c.h.b16 %v1424
        %v1736 = vunpack.c.l.b16 %v1425
        %v1737 = vunpack.c.h.b16 %v1425
        %v1738 = vunpack.c.l.b16 %v1426
        %v1739 = vunpack.c.h.b16 %v1426
        %v1740 = vunpack.c.l.b16 %v1427
        %v1741 = vunpack.c.h.b16 %v1427
        %v1742 = vunpack.c.l.b16 %v1428
        %v1743 = vunpack.c.h.b16 %v1428
        %v1744 = vunpack.c.l.b16 %v1429
        %v1745 = vunpack.c.h.b16 %v1429
        %v1746 = vunpack.c.l.b16 %v1430
        %v1747 = vunpack.c.h.b16 %v1430
        %v1748 = vunpack.c.l.b16 %v1431
        %v1749 = vunpack.c.h.b16 %v1431
        %v1750 = vunpack.c.l.b16 %v1432
        %v1751 = vunpack.c.h.b16 %v1432
        %v1752 = vunpack.c.l.b16 %v1433
        %v1753 = vunpack.c.h.b16 %v1433
        %v1754 = vunpack.c.l.b16 %v1434
        %v1755 = vunpack.c.h.b16 %v1434
        %v1756 = vunpack.c.l.b16 %v1435
        %v1757 = vunpack.c.h.b16 %v1435
        %v1758 = vunpack.c.l.b16 %v1436
        %v1759 = vunpack.c.h.b16 %v1436
        %v1760 = vunpack.c.l.b16 %v1437
        %v1761 = vunpack.c.h.b16 %v1437
        %v1762 = vunpack.c.l.b16 %v1438
        %v1763 = vunpack.c.h.b16 %v1438
        %v1764 = vunpack.c.l.b16 %v1439
        %v1765 = vunpack.c.h.b16 %v1439
        %v1766 = vunpack.c.l.b16 %v1440
        %v1767 = vunpack.c.h.b16 %v1440
        %v1768 = vunpack.c.l.b16 %v1441
        %v1769 = vunpack.c.h.b16 %v1441
        %v1770 = vunpack.c.l.b16 %v1442
        %v1771 = vunpack.c.h.b16 %v1442
        %v1772 = vunpack.c.l.b16 %v1443
        %v1773 = vunpack.c.h.b16 %v1443
        %v1774 = vunpack.c.l.b16 %v1444
        %v1775 = vunpack.c.h.b16 %v1444
        %v1776 = vunpack.c.l.b16 %v1445
        %v1777 = vunpack.c.h.b16 %v1445
        %v1778 = vunpack.c.l.b16 %v1446
        %v1779 = vunpack.c.h.b16 %v1446
        %v1780 = vunpack.c.l.b16 %v1447
        %v1781 = vunpack.c.h.b16 %v1447
        %v1782 = vunpack.c.l.b16 %v1448
        %v1783 = vunpack.c.h.b16 %v1448
        %v1784 = vunpack.c.l.b16 %v1449
        %v1785 = vunpack.c.h.b16 %v1449
        %v1786 = vunpack.c.l.b16 %v1450
        %v1787 = vunpack.c.h.b16 %v1450
        %v1788 = vunpack.c.l.b16 %v1451
        %v1789 = vunpack.c.h.b16 %v1451
        %v1790 = vunpack.c.l.b16 %v1452
        %v1791 = vunpack.c.h.b16 %v1452
        %v1792 = vunpack.c.l.b16 %v1453
        %v1793 = vunpack.c.h.b16 %v1453
        %v1794 = vunpack.c.l.b16 %v1454
        %v1795 = vunpack.c.h.b16 %v1454
        %v1796 = vunpack.c.l.b16 %v1455
        %v1797 = vunpack.c.h.b16 %v1455
        %v1798 = vunpack.c.l.b16 %v1456
        %v1799 = vunpack.c.h.b16 %v1456
        %v1800 = vunpack.c.l.b16 %v1457
        %v1801 = vunpack.c.h.b16 %v1457
        %v1802 = vunpack.c.l.b16 %v1458
        %v1803 = vunpack.c.h.b16 %v1458
        %v1804 = vunpack.c.l.b16 %v1459
        %v1805 = vunpack.c.h.b16 %v1459
        %v1806 = vunpack.c.l.b16 %v1460
        %v1807 = vunpack.c.h.b16 %v1460
        %v1808 = vunpack.c.l.b16 %v1461
        %v1809 = vunpack.c.h.b16 %v1461
        %v1810 = vunpack.c.l.b16 %v1462
        %v1811 = vunpack.c.h.b16 %v1462
        %v1812 = vunpack.c.l.b16 %v1463
        %v1813 = vunpack.c.h.b16 %v1463
        %v1814 = vunpack.c.l.b16 %v1464
        %v1815 = vunpack.c.h.b16 %v1464
        %v1816 = vunpack.c.l.b16 %v1465
        %v1817 = vunpack.c.h.b16 %v1465
        %v1818 = vunpack.c.l.b16 %v1466
        %v1819 = vunpack.c.h.b16 %v1466
        %v1820 = vunpack.c.l.b16 %v1467
        %v1821 = vunpack.c.h.b16 %v1467
        %v1822 = vunpack.c.l.b16 %v1468
        %v1823 = vunpack.c.h.b16 %v1468
        %v1824 = vunpack.c.l.b16 %v1469
        %v1825 = vunpack.c.h.b16 %v1469
        %v1826 = vunpack.c.l.b16 %v1470
        %v1827 = vunpack.c.h.b16 %v1470
        %v1828 = vunpack.c.l.b16 %v1471
        %v1829 = vunpack.c.h.b16 %v1471
        %v1830 = vunpack.c.l.b16 %v1472
        %v1831 = vunpack.c.h.b16 %v1472
        %v1832 = vunpack.c.l.b16 %v1473
        %v1833 = vunpack.c.h.b16 %v1473
        %v1834 = vunpack.c.l.b16 %v1474
        %v1835 = vunpack.c.h.b16 %v1474
        %v1836 = vunpack.c.l.b16 %v1475
        %v1837 = vunpack.c.h.b16 %v1475
        %v1838 = vunpack.c.l.b16 %v1476
        %v1839 = vunpack.c.h.b16 %v1476
        %v1840 = vunpack.c.l.b16 %v1477
        %v1841 = vunpack.c.h.b16 %v1477
        %v1842 = vunpack.c.l.b16 %v1478
        %v1843 = vunpack.c.h.b16 %v1478
        %v1844 = vunpack.c.l.b16 %v1479
        %v1845 = vunpack.c.h.b16 %v1479
        %v1846 = vunpack.c.l.b16 %v1480
        %v1847 = vunpack.c.h.b16 %v1480
        %v1848 = vunpack.c.l.b16 %v1481
        %v1849 = vunpack.c.h.b16 %v1481
        %v1850 = vunpack.c.l.b16 %v1482
        %v1851 = vunpack.c.h.b16 %v1482
        %v1852 = vunpack.c.l.b16 %v1483
        %v1853 = vunpack.c.h.b16 %v1483
        %v1854 = vunpack.c.l.b16 %v1484
        %v1855 = vunpack.c.h.b16 %v1484
        %v1856 = vunpack.c.l.b16 %v1485
        %v1857 = vunpack.c.h.b16 %v1485
        %v1858 = vunpack.c.l.b16 %v1486
        %v1859 = vunpack.c.h.b16 %v1486
        %v1860 = vunpack.c.l.b16 %v1487
        %v1861 = vunpack.c.h.b16 %v1487
        %v1862 = vunpack.c.l.b16 %v1488
        %v1863 = vunpack.c.h.b16 %v1488
        %v1864 = vunpack.c.l.b16 %v1489
        %v1865 = vunpack.c.h.b16 %v1489
        %v1866 = vunpack.c.l.b16 %v1490
        %v1867 = vunpack.c.h.b16 %v1490
        %v1868 = vunpack.c.l.b16 %v1491
        %v1869 = vunpack.c.h.b16 %v1491
        %v1870 = vunpack.c.l.b16 %v1492
        %v1871 = vunpack.c.h.b16 %v1492
        %v1872 = vunpack.c.l.b16 %v1493
        %v1873 = vunpack.c.h.b16 %v1493
        %v1874 = vunpack.c.l.b16 %v1494
        %v1875 = vunpack.c.h.b16 %v1494
        %v1876 = vunpack.c.l.b16 %v1495
        %v1877 = vunpack.c.h.b16 %v1495
        %v1878 = vunpack.c.l.b16 %v1496
        %v1879 = vunpack.c.h.b16 %v1496
        %v1880 = vunpack.c.l.b16 %v1497
        %v1881 = vunpack.c.h.b16 %v1497
        %v1882 = vpack.c.b16 %v1630, %v1626
        %v1883 = vpack.c.b16 %v1631, %v1627
        %v1884 = vpack.c.b16 %v1632, %v1628
        %v1885 = vpack.c.b16 %v1633, %v1629
        %v1886 = vpack.c.b16 %v1638, %v1634
        %v1887 = vpack.c.b16 %v1639, %v1635
        %v1888 = vpack.c.b16 %v1640, %v1636
        %v1889 = vpack.c.b16 %v1641, %v1637
        %v1890 = vpack.c.b16 %v1646, %v1642
        %v1891 = vpack.c.b16 %v1647, %v1643
        %v1892 = vpack.c.b16 %v1648, %v1644
        %v1893 = vpack.c.b16 %v1649, %v1645
        %v1894 = vpack.c.b16 %v1654, %v1650
        %v1895 = vpack.c.b16 %v1655, %v1651
        %v1896 = vpack.c.b16 %v1656, %v1652
        %v1897 = vpack.c.b16 %v1657, %v1653
        %v1898 = vpack.c.b16 %v1662, %v1658
        %v1899 = vpack.c.b16 %v1663, %v1659
        %v1900 = vpack.c.b16 %v1664, %v1660
        %v1901 = vpack.c.b16 %v1665, %v1661
        %v1902 = vpack.c.b16 %v1670, %v1666
        %v1903 = vpack.c.b16 %v1671, %v1667
        %v1904 = vpack.c.b16 %v1672, %v1668
        %v1905 = vpack.c.b16 %v1673, %v1669
        %v1906 = vpack.c.b16 %v1678, %v1674
        %v1907 = vpack.c.b16 %v1679, %v1675
        %v1908 = vpack.c.b16 %v1680, %v1676
        %v1909 = vpack.c.b16 %v1681, %v1677
        %v1910 = vpack.c.b16 %v1686, %v1682
        %v1911 = vpack.c.b16 %v1687, %v1683
        %v1912 = vpack.c.b16 %v1688, %v1684
        %v1913 = vpack.c.b16 %v1689, %v1685
        %v1914 = vpack.c.b16 %v1694, %v1690
        %v1915 = vpack.c.b16 %v1695, %v1691
        %v1916 = vpack.c.b16 %v1696, %v1692
        %v1917 = vpack.c.b16 %v1697, %v1693
        %v1918 = vpack.c.b16 %v1702, %v1698
        %v1919 = vpack.c.b16 %v1703, %v1699
        %v1920 = vpack.c.b16 %v1704, %v1700
        %v1921 = vpack.c.b16 %v1705, %v1701
        %v1922 = vpack.c.b16 %v1710, %v1706
        %v1923 = vpack.c.b16 %v1711, %v1707
        %v1924 = vpack.c.b16 %v1712, %v1708
        %v1925 = vpack.c.b16 %v1713, %v1709
        %v1926 = vpack.c.b16 %v1718, %v1714
        %v1927 = vpack.c.b16 %v1719, %v1715
        %v1928 = vpack.c.b16 %v1720, %v1716
        %v1929 = vpack.c.b16 %v1721, %v1717
        %v1930 = vpack.c.b16 %v1726, %v1722
        %v1931 = vpack.c.b16 %v1727, %v1723
        %v1932 = vpack.c.b16 %v1728, %v1724
        %v1933 = vpack.c.b16 %v1729, %v1725
        %v1934 = vpack.c.b16 %v1734, %v1730
        %v1935 = vpack.c.b16 %v1735, %v1731
        %v1936 = vpack.c.b16 %v1736, %v1732
        %v1937 = vpack.c.b16 %v1737, %v1733
        %v1938 = vpack.c.b16 %v1742, %v1738
        %v1939 = vpack.c.b16 %v1743, %v1739
        %v1940 = vpack.c.b16 %v1744, %v1740
        %v1941 = vpack.c.b16 %v1745, %v1741
        %v1942 = vpack.c.b16 %v1750, %v1746
        %v1943 = vpack.c.b16 %v1751, %v1747
        %v1944 = vpack.c.b16 %v1752, %v1748
        %v1945 = vpack.c.b16 %v1753, %v1749
        %v1946 = vpack.c.b16 %v1758, %v1754
        %v1947 = vpack.c.b16 %v1759, %v1755
        %v1948 = vpack.c.b16 %v1760, %v1756
        %v1949 = vpack.c.b16 %v1761, %v1757
        %v1950 = vpack.c.b16 %v1766, %v1762
        %v1951 = vpack.c.b16 %v1767, %v1763
        %v1952 = vpack.c.b16 %v1768, %v1764
        %v1953 = vpack.c.b16 %v1769, %v1765
        %v1954 = vpack.c.b16 %v1774, %v1770
        %v1955 = vpack.c.b16 %v1775, %v1771
        %v1956 = vpack.c.b16 %v1776, %v1772
        %v1957 = vpack.c.b16 %v1777, %v1773
        %v1958 = vpack.c.b16 %v1782, %v1778
        %v1959 = vpack.c.b16 %v1783, %v1779
        %v1960 = vpack.c.b16 %v1784, %v1780
        %v1961 = vpack.c.b16 %v1785, %v1781
        %v1962 = vpack.c.b16 %v1790, %v1786
        %v1963 = vpack.c.b16 %v1791, %v1787
        %v1964 = vpack.c.b16 %v1792, %v1788
        %v1965 = vpack.c.b16 %v1793, %v1789
        %v1966 = vpack.c.b16 %v1798, %v1794
        %v1967 = vpack.c.b16 %v1799, %v1795
        %v1968 = vpack.c.b16 %v1800, %v1796
        %v1969 = vpack.c.b16 %v1801, %v1797
        %v1970 = vpack.c.b16 %v1806, %v1802
        %v1971 = vpack.c.b16 %v1807, %v1803
        %v1972 = vpack.c.b16 %v1808, %v1804
        %v1973 = vpack.c.b16 %v1809, %v1805
        %v1974 = vpack.c.b16 %v1814, %v1810
        %v1975 = vpack.c.b16 %v1815, %v1811
        %v1976 = vpack.c.b16 %v1816, %v1812
        %v1977 = vpack.c.b16 %v1817, %v1813
        %v1978 = vpack.c.b16 %v1822, %v1818
        %v1979 = vpack.c.b16 %v1823, %v1819
        %v1980 = vpack.c.b16 %v1824, %v1820
        %v1981 = vpack.c.b16 %v1825, %v1821
        %v1982 = vpack.c.b16 %v1830, %v1826
        %v1983 = vpack.c.b16 %v1831, %v1827
        %v1984 = vpack.c.b16 %v1832, %v1828
        %v1985 = vpack.c.b16 %v1833, %v1829
        %v1986 = vpack.c.b16 %v1838, %v1834
        %v1987 = vpack.c.b16 %v1839, %v1835
        %v1988 = vpack.c.b16 %v1840, %v1836
        %v1989 = vpack.c.b16 %v1841, %v1837
        %v1990 = vpack.c.b16 %v1846, %v1842
        %v1991 = vpack.c.b16 %v1847, %v1843
        %v1992 = vpack.c.b16 %v1848, %v1844
        %v1993 = vpack.c.b16 %v1849, %v1845
        %v1994 = vpack.c.b16 %v1854, %v1850
        %v1995 = vpack.c.b16 %v1855, %v1851
        %v1996 = vpack.c.b16 %v1856, %v1852
        %v1997 = vpack.c.b16 %v1857, %v1853
        %v1998 = vpack.c.b16 %v1862, %v1858
        %v1999 = vpack.c.b16 %v1863, %v1859
        %v2000 = vpack.c.b16 %v1864, %v1860
        %v2001 = vpack.c.b16 %v1865, %v1861
        %v2002 = vpack.c.b16 %v1870, %v1866
        %v2003 = vpack.c.b16 %v1871, %v1867
        %v2004 = vpack.c.b16 %v1872, %v1868
        %v2005 = vpack.c.b16 %v1873, %v1869
        %v2006 = vpack.c.b16 %v1878, %v1874
        %v2007 = vpack.c.b16 %v1879, %v1875
        %v2008 = vpack.c.b16 %v1880, %v1876
        %v2009 = vpack.c.b16 %v1881, %v1877
        %2138 = vmatprep.subr.bf16.mxu0 %v1883
        %2139 = vmatpush1.bf16.msra.mxu0 %v1882
        %2140 = vmatprep.subr.bf16.mxu0 %v1887
        %2141 = vmatpush1.bf16.msra.mxu0 %v1886
        %2142 = vmatprep.subr.bf16.mxu0 %v1891
        %2143 = vmatpush1.bf16.msra.mxu0 %v1890
        %2144 = vmatprep.subr.bf16.mxu0 %v1895
        %2145 = vmatpush1.bf16.msra.mxu0 %v1894
        %2146 = vmatprep.subr.bf16.mxu0 %v1899
        %2147 = vmatpush1.bf16.msra.mxu0 %v1898
        %2148 = vmatprep.subr.bf16.mxu0 %v1903
        %2149 = vmatpush1.bf16.msra.mxu0 %v1902
        %2150 = vmatprep.subr.bf16.mxu0 %v1907
        %2151 = vmatpush1.bf16.msra.mxu0 %v1906
        %2152 = vmatprep.subr.bf16.mxu0 %v1911
        %2153 = vmatpush1.bf16.msra.mxu0 %v1910
        %2154 = vmatprep.subr.bf16.mxu0 %v1915
        %2155 = vmatpush1.bf16.msra.mxu0 %v1914
        %2156 = vmatprep.subr.bf16.mxu0 %v1919
        %2157 = vmatpush1.bf16.msra.mxu0 %v1918
        %2158 = vmatprep.subr.bf16.mxu0 %v1923
        %2159 = vmatpush1.bf16.msra.mxu0 %v1922
        %2160 = vmatprep.subr.bf16.mxu0 %v1927
        %2161 = vmatpush1.bf16.msra.mxu0 %v1926
        %2162 = vmatprep.subr.bf16.mxu0 %v1931
        %2163 = vmatpush1.bf16.msra.mxu0 %v1930
        %2164 = vmatprep.subr.bf16.mxu0 %v1935
        %2165 = vmatpush1.bf16.msra.mxu0 %v1934
        %2166 = vmatprep.subr.bf16.mxu0 %v1939
        %2167 = vmatpush1.bf16.msra.mxu0 %v1938
        %2168 = vmatprep.subr.bf16.mxu0 %v1943
        %2169 = vmatpush1.bf16.msra.mxu0 %v1942
        %2170 = vmatprep.mubr.bf16.mxu0 %v417
        %2171 = vmatmul.mubr.bf16.gmra.mrb[0].mxu0 %v416
        %v2172 = vpop.f32.mrb[0].mxu0
        %v2173 = vadd.f32 0.0, %v2172
        %v2174 = vpop.f32.mrb[0].mxu0
        %v2175 = vadd.f32 0.0, %v2174
        %v2176 = vpop.f32.mrb[0].mxu0
        %v2177 = vpop.f32.mrb[0].mxu0
        %2178 = vdwg.mxu0
        %2179 = vmatprep.subr.bf16.mxu0 %v1947
        %2180 = vmatpush1.bf16.msra.mxu0 %v1946
        %2181 = vmatprep.subr.bf16.mxu0 %v1951
        %2182 = vmatpush1.bf16.msra.mxu0 %v1950
        %2183 = vmatprep.subr.bf16.mxu0 %v1955
        %2184 = vmatpush1.bf16.msra.mxu0 %v1954
        %2185 = vmatprep.subr.bf16.mxu0 %v1959
        %2186 = vmatpush1.bf16.msra.mxu0 %v1958
        %2187 = vmatprep.subr.bf16.mxu0 %v1963
        %2188 = vmatpush1.bf16.msra.mxu0 %v1962
        %2189 = vmatprep.subr.bf16.mxu0 %v1967
        %2190 = vmatpush1.bf16.msra.mxu0 %v1966
        %2191 = vmatprep.subr.bf16.mxu0 %v1971
        %2192 = vmatpush1.bf16.msra.mxu0 %v1970
        %2193 = vmatprep.subr.bf16.mxu0 %v1975
        %2194 = vmatpush1.bf16.msra.mxu0 %v1974
        %2195 = vmatprep.subr.bf16.mxu0 %v1979
        %2196 = vmatpush1.bf16.msra.mxu0 %v1978
        %2197 = vmatprep.subr.bf16.mxu0 %v1983
        %2198 = vmatpush1.bf16.msra.mxu0 %v1982
        %2199 = vmatprep.subr.bf16.mxu0 %v1987
        %2200 = vmatpush1.bf16.msra.mxu0 %v1986
        %2201 = vmatprep.subr.bf16.mxu0 %v1991
        %2202 = vmatpush1.bf16.msra.mxu0 %v1990
        %2203 = vmatprep.subr.bf16.mxu0 %v1995
        %2204 = vmatpush1.bf16.msra.mxu0 %v1994
        %2205 = vmatprep.subr.bf16.mxu0 %v1999
        %2206 = vmatpush1.bf16.msra.mxu0 %v1998
        %2207 = vmatprep.subr.bf16.mxu0 %v2003
        %2208 = vmatpush1.bf16.msra.mxu0 %v2002
        %2209 = vmatprep.subr.bf16.mxu0 %v2007
        %2210 = vmatpush1.bf16.msra.mxu0 %v2006
        %2211 = vmatprep.mubr.bf16.mxu0 %v419
        %2212 = vmatmul.mubr.bf16.gmra.mrb[0].mxu0 %v418
        %v2213 = vpop.f32.mrb[0].mxu0
        %v2214 = vadd.f32 %v2173, %v2213
        %v2215 = vpop.f32.mrb[0].mxu0
        %v2216 = vadd.f32 %v2175, %v2215
        %v2217 = vpop.f32.mrb[0].mxu0
        %v2218 = vpop.f32.mrb[0].mxu0
        %2219 = vdwg.mxu0
        %2220 = vmatprep.subr.bf16.mxu0 %v1885
        %2221 = vmatpush1.bf16.msra.mxu0 %v1884
        %2222 = vmatprep.subr.bf16.mxu0 %v1889
        %2223 = vmatpush1.bf16.msra.mxu0 %v1888
        %2224 = vmatprep.subr.bf16.mxu0 %v1893
        %2225 = vmatpush1.bf16.msra.mxu0 %v1892
        %2226 = vmatprep.subr.bf16.mxu0 %v1897
        %2227 = vmatpush1.bf16.msra.mxu0 %v1896
        %2228 = vmatprep.subr.bf16.mxu0 %v1901
        %2229 = vmatpush1.bf16.msra.mxu0 %v1900
        %2230 = vmatprep.subr.bf16.mxu0 %v1905
        %2231 = vmatpush1.bf16.msra.mxu0 %v1904
        %2232 = vmatprep.subr.bf16.mxu0 %v1909
        %2233 = vmatpush1.bf16.msra.mxu0 %v1908
        %2234 = vmatprep.subr.bf16.mxu0 %v1913
        %2235 = vmatpush1.bf16.msra.mxu0 %v1912
        %2236 = vmatprep.subr.bf16.mxu0 %v1917
        %2237 = vmatpush1.bf16.msra.mxu0 %v1916
        %2238 = vmatprep.subr.bf16.mxu0 %v1921
        %2239 = vmatpush1.bf16.msra.mxu0 %v1920
        %2240 = vmatprep.subr.bf16.mxu0 %v1925
        %2241 = vmatpush1.bf16.msra.mxu0 %v1924
        %2242 = vmatprep.subr.bf16.mxu0 %v1929
        %2243 = vmatpush1.bf16.msra.mxu0 %v1928
        %2244 = vmatprep.subr.bf16.mxu0 %v1933
        %2245 = vmatpush1.bf16.msra.mxu0 %v1932
        %2246 = vmatprep.subr.bf16.mxu0 %v1937
        %2247 = vmatpush1.bf16.msra.mxu0 %v1936
        %2248 = vmatprep.subr.bf16.mxu0 %v1941
        %2249 = vmatpush1.bf16.msra.mxu0 %v1940
        %2250 = vmatprep.subr.bf16.mxu0 %v1945
        %2251 = vmatpush1.bf16.msra.mxu0 %v1944
        %2252 = vmatprep.mubr.bf16.mxu0 %v417
        %2253 = vmatmul.mubr.bf16.gmra.mrb[0].mxu0 %v416
        %v2254 = vpop.f32.mrb[0].mxu0
        %v2255 = vadd.f32 0.0, %v2254
        %v2256 = vpop.f32.mrb[0].mxu0
        %v2257 = vadd.f32 0.0, %v2256
        %v2258 = vpop.f32.mrb[0].mxu0
        %v2259 = vpop.f32.mrb[0].mxu0
        %2260 = vdwg.mxu0
        %2261 = vmatprep.subr.bf16.mxu0 %v1949
        %2262 = vmatpush1.bf16.msra.mxu0 %v1948
        %2263 = vmatprep.subr.bf16.mxu0 %v1953
        %2264 = vmatpush1.bf16.msra.mxu0 %v1952
        %2265 = vmatprep.subr.bf16.mxu0 %v1957
        %2266 = vmatpush1.bf16.msra.mxu0 %v1956
        %2267 = vmatprep.subr.bf16.mxu0 %v1961
        %2268 = vmatpush1.bf16.msra.mxu0 %v1960
        %2269 = vmatprep.subr.bf16.mxu0 %v1965
        %2270 = vmatpush1.bf16.msra.mxu0 %v1964
        %2271 = vmatprep.subr.bf16.mxu0 %v1969
        %2272 = vmatpush1.bf16.msra.mxu0 %v1968
        %2273 = vmatprep.subr.bf16.mxu0 %v1973
        %2274 = vmatpush1.bf16.msra.mxu0 %v1972
        %2275 = vmatprep.subr.bf16.mxu0 %v1977
        %2276 = vmatpush1.bf16.msra.mxu0 %v1976
        %2277 = vmatprep.subr.bf16.mxu0 %v1981
        %2278 = vmatpush1.bf16.msra.mxu0 %v1980
        %2279 = vmatprep.subr.bf16.mxu0 %v1985
        %2280 = vmatpush1.bf16.msra.mxu0 %v1984
        %2281 = vmatprep.subr.bf16.mxu0 %v1989
        %2282 = vmatpush1.bf16.msra.mxu0 %v1988
        %2283 = vmatprep.subr.bf16.mxu0 %v1993
        %2284 = vmatpush1.bf16.msra.mxu0 %v1992
        %2285 = vmatprep.subr.bf16.mxu0 %v1997
        %2286 = vmatpush1.bf16.msra.mxu0 %v1996
        %2287 = vmatprep.subr.bf16.mxu0 %v2001
        %2288 = vmatpush1.bf16.msra.mxu0 %v2000
        %2289 = vmatprep.subr.bf16.mxu0 %v2005
        %2290 = vmatpush1.bf16.msra.mxu0 %v2004
        %2291 = vmatprep.subr.bf16.mxu0 %v2009
        %2292 = vmatpush1.bf16.msra.mxu0 %v2008
        %2293 = vmatprep.mubr.bf16.mxu0 %v419
        %2294 = vmatmul.mubr.bf16.gmra.mrb[0].mxu0 %v418
        %v2295 = vpop.f32.mrb[0].mxu0
        %v2296 = vadd.f32 %v2255, %v2295
        %v2297 = vpop.f32.mrb[0].mxu0
        %v2298 = vadd.f32 %v2257, %v2297
        %v2299 = vpop.f32.mrb[0].mxu0
        %v2300 = vpop.f32.mrb[0].mxu0
        %2301 = vdwg.mxu0
        %v2302 = vpack.c.bf16 %v2214, %v2214
        %v2303 = vpack.c.bf16 %v2216, %v2216
        %v2304 = vpack.c.bf16 %v2296, %v2296
        %v2305 = vpack.c.bf16 %v2298, %v2298
        %v2310 = vunpack.c.l.b16 %v2302
        %v2311 = vunpack.c.l.b16 %v2303
        %v2312 = vunpack.c.l.b16 %v2304
        %v2313 = vunpack.c.l.b16 %v2305
        %v2314 = vpack.c.b16 %v2311, %v2310
        %v2315 = vpack.c.b16 %v2313, %v2312
        %2318 = vst [vmem:[#allocation3] sm:$0xff] %v2314
        %2319 = vst [vmem:[#allocation3 + $0x8] sm:$0xff] %v2315
      $region56: #{transformer_block.2} parent=51 // pred_fallthru
        _
      %s2320 = smul.u32 %s24, 8
      %s2321 = sshra.s32 %s2320, 3
      %s2322 = sand.u32 %s2320, 7
      %s2323 = smul.u32 %s2321, 4
      %s2324 = smul.addr %s2323, 8
      %s2325 = scalar_lea.vmem %s318, %s2324
      %v2326 = vld [vmem:[%s2325] sm:$0xff]
      %v2327 = vld [vmem:[%s2325 + $0x8] sm:$0xff]
      %v2328 = vld [vmem:[%s2325 + $0x10] sm:$0xff]
      %v2329 = vld [vmem:[%s2325 + $0x18] sm:$0xff]
      %v2330 = vld [vmem:[%s1] sm:$0xf]
      %v2331 = vld [vmem:[%s2] sm:$0xf]
      %v2332 = vadd.f32 %v2326, %v2327
      %v2333 = vadd.f32 %v2332, %v2328
      %v2334 = vadd.f32 %v2333, %v2329
      %2335 = vadd.xlane.f32.xlu0 %v2334
      %v2336 = vpop.xlane.xlu0 %2335
      %v2337 = vrcp.pop 512.0
      %v2338 = vmul.f32 %v2336, %v2337
      %v2339 = vsub.f32 %v2326, %v2338
      %v2340 = vsub.f32 %v2327, %v2338
      %v2341 = vsub.f32 %v2328, %v2338
      %v2342 = vsub.f32 %v2329, %v2338
      %v2343 = vmul.f32 %v2339, %v2339
      %v2344 = vmul.f32 %v2340, %v2340
      %v2345 = vmul.f32 %v2341, %v2341
      %v2346 = vmul.f32 %v2342, %v2342
      %v2347 = vadd.f32 %v2343, %v2344
      %v2348 = vadd.f32 %v2347, %v2345
      %v2349 = vadd.f32 %v2348, %v2346
      %2350 = vadd.xlane.f32.xlu0 %v2349
      %v2351 = vpop.xlane.xlu0 %2350
      %v2352 = vmul.f32 %v2351, %v2337
      %v2353 = vadd.f32 %v2352, 1e-05
      %v2354 = vrsqrt.pop %v2353
      %v2355 = vmul.f32 %v2339, %v2354
      %v2356 = vmul.f32 %v2340, %v2354
      %v2357 = vmul.f32 %v2341, %v2354
      %v2358 = vmul.f32 %v2342, %v2354
      %v2360 = vlaneseq
      %v2361 = vshrl.u32 %v2360, 7
      %v2362 = vsub.s32 0, %v2361
      %v2363 = vrot.slane %v2330, %v2362
      %v2364 = vlaneseq
      %v2365 = vshrl.u32 %v2364, 7
      %v2366 = vsub.s32 1, %v2365
      %v2367 = vrot.slane %v2330, %v2366
      %v2368 = vlaneseq
      %v2369 = vshrl.u32 %v2368, 7
      %v2370 = vsub.s32 2, %v2369
      %v2371 = vrot.slane %v2330, %v2370
      %v2372 = vlaneseq
      %v2373 = vshrl.u32 %v2372, 7
      %v2374 = vsub.s32 3, %v2373
      %v2375 = vrot.slane %v2330, %v2374
      %v2380 = vmul.f32 %v2355, %v2363
      %v2381 = vmul.f32 %v2356, %v2367
      %v2382 = vmul.f32 %v2357, %v2371
      %v2383 = vmul.f32 %v2358, %v2375
      %v2385 = vlaneseq
      %v2386 = vshrl.u32 %v2385, 7
      %v2387 = vsub.s32 0, %v2386
      %v2388 = vrot.slane %v2331, %v2387
      %v2389 = vlaneseq
      %v2390 = vshrl.u32 %v2389, 7
      %v2391 = vsub.s32 1, %v2390
      %v2392 = vrot.slane %v2331, %v2391
      %v2393 = vlaneseq
      %v2394 = vshrl.u32 %v2393, 7
      %v2395 = vsub.s32 2, %v2394
      %v2396 = vrot.slane %v2331, %v2395
      %v2397 = vlaneseq
      %v2398 = vshrl.u32 %v2397, 7
      %v2399 = vsub.s32 3, %v2398
      %v2400 = vrot.slane %v2331, %v2399
      %v2405 = vadd.f32 %v2380, %v2388
      %v2406 = vadd.f32 %v2381, %v2392
      %v2407 = vadd.f32 %v2382, %v2396
      %v2408 = vadd.f32 %v2383, %v2400
      %v2409 = vpack.c.bf16 %v2405, %v2405
      %v2410 = vpack.c.bf16 %v2406, %v2406
      %v2411 = vpack.c.bf16 %v2407, %v2407
      %v2412 = vpack.c.bf16 %v2408, %v2408
      %v2413 = vld [vmem:[%s3] sm:$0xff]
      %v2414 = vld [vmem:[%s3 + $0x8] sm:$0xff]
      %v2415 = vld [vmem:[%s3 + $0x10] sm:$0xff]
      %v2416 = vld [vmem:[%s3 + $0x18] sm:$0xff]
      %v2417 = vld [vmem:[%s3 + $0x20] sm:$0xff]
      %v2418 = vld [vmem:[%s3 + $0x28] sm:$0xff]
      %v2419 = vld [vmem:[%s3 + $0x30] sm:$0xff]
      %v2420 = vld [vmem:[%s3 + $0x38] sm:$0xff]
      %v2421 = vld [vmem:[%s3 + $0x40] sm:$0xff]
      %v2422 = vld [vmem:[%s3 + $0x48] sm:$0xff]
      %v2423 = vld [vmem:[%s3 + $0x50] sm:$0xff]
      %v2424 = vld [vmem:[%s3 + $0x58] sm:$0xff]
      %v2425 = vld [vmem:[%s3 + $0x60] sm:$0xff]
      %v2426 = vld [vmem:[%s3 + $0x68] sm:$0xff]
      %v2427 = vld [vmem:[%s3 + $0x70] sm:$0xff]
      %v2428 = vld [vmem:[%s3 + $0x78] sm:$0xff]
      %v2429 = vld [vmem:[%s3 + $0x80] sm:$0xff]
      %v2430 = vld [vmem:[%s3 + $0x88] sm:$0xff]
      %v2431 = vld [vmem:[%s3 + $0x90] sm:$0xff]
      %v2432 = vld [vmem:[%s3 + $0x98] sm:$0xff]
      %v2433 = vld [vmem:[%s3 + $0xa0] sm:$0xff]
      %v2434 = vld [vmem:[%s3 + $0xa8] sm:$0xff]
      %v2435 = vld [vmem:[%s3 + $0xb0] sm:$0xff]
      %v2436 = vld [vmem:[%s3 + $0xb8] sm:$0xff]
      %v2437 = vld [vmem:[%s3 + $0xc0] sm:$0xff]
      %v2438 = vld [vmem:[%s3 + $0xc8] sm:$0xff]
      %v2439 = vld [vmem:[%s3 + $0xd0] sm:$0xff]
      %v2440 = vld [vmem:[%s3 + $0xd8] sm:$0xff]
      %v2441 = vld [vmem:[%s3 + $0xe0] sm:$0xff]
      %v2442 = vld [vmem:[%s3 + $0xe8] sm:$0xff]
      %v2443 = vld [vmem:[%s3 + $0xf0] sm:$0xff]
      %v2444 = vld [vmem:[%s3 + $0xf8] sm:$0xff]
      %v2445 = vld [vmem:[%s3 + $0x100] sm:$0xff]
      %v2446 = vld [vmem:[%s3 + $0x108] sm:$0xff]
      %v2447 = vld [vmem:[%s3 + $0x110] sm:$0xff]
      %v2448 = vld [vmem:[%s3 + $0x118] sm:$0xff]
      %v2449 = vld [vmem:[%s3 + $0x120] sm:$0xff]
      %v2450 = vld [vmem:[%s3 + $0x128] sm:$0xff]
      %v2451 = vld [vmem:[%s3 + $0x130] sm:$0xff]
      %v2452 = vld [vmem:[%s3 + $0x138] sm:$0xff]
      %v2453 = vld [vmem:[%s3 + $0x140] sm:$0xff]
      %v2454 = vld [vmem:[%s3 + $0x148] sm:$0xff]
      %v2455 = vld [vmem:[%s3 + $0x150] sm:$0xff]
      %v2456 = vld [vmem:[%s3 + $0x158] sm:$0xff]
      %v2457 = vld [vmem:[%s3 + $0x160] sm:$0xff]
      %v2458 = vld [vmem:[%s3 + $0x168] sm:$0xff]
      %v2459 = vld [vmem:[%s3 + $0x170] sm:$0xff]
      %v2460 = vld [vmem:[%s3 + $0x178] sm:$0xff]
      %v2461 = vld [vmem:[%s3 + $0x180] sm:$0xff]
      %v2462 = vld [vmem:[%s3 + $0x188] sm:$0xff]
      %v2463 = vld [vmem:[%s3 + $0x190] sm:$0xff]
      %v2464 = vld [vmem:[%s3 + $0x198] sm:$0xff]
      %v2465 = vld [vmem:[%s3 + $0x1a0] sm:$0xff]
      %v2466 = vld [vmem:[%s3 + $0x1a8] sm:$0xff]
      %v2467 = vld [vmem:[%s3 + $0x1b0] sm:$0xff]
      %v2468 = vld [vmem:[%s3 + $0x1b8] sm:$0xff]
      %v2469 = vld [vmem:[%s3 + $0x1c0] sm:$0xff]
      %v2470 = vld [vmem:[%s3 + $0x1c8] sm:$0xff]
      %v2471 = vld [vmem:[%s3 + $0x1d0] sm:$0xff]
      %v2472 = vld [vmem:[%s3 + $0x1d8] sm:$0xff]
      %v2473 = vld [vmem:[%s3 + $0x1e0] sm:$0xff]
      %v2474 = vld [vmem:[%s3 + $0x1e8] sm:$0xff]
      %v2475 = vld [vmem:[%s3 + $0x1f0] sm:$0xff]
      %v2476 = vld [vmem:[%s3 + $0x1f8] sm:$0xff]
      %v2477 = vld [vmem:[%s3 + $0x200] sm:$0xff]
      %v2478 = vld [vmem:[%s3 + $0x208] sm:$0xff]
      %v2479 = vld [vmem:[%s3 + $0x210] sm:$0xff]
      %v2480 = vld [vmem:[%s3 + $0x218] sm:$0xff]
      %v2481 = vld [vmem:[%s3 + $0x220] sm:$0xff]
      %v2482 = vld [vmem:[%s3 + $0x228] sm:$0xff]
      %v2483 = vld [vmem:[%s3 + $0x230] sm:$0xff]
      %v2484 = vld [vmem:[%s3 + $0x238] sm:$0xff]
      %v2485 = vld [vmem:[%s3 + $0x240] sm:$0xff]
      %v2486 = vld [vmem:[%s3 + $0x248] sm:$0xff]
      %v2487 = vld [vmem:[%s3 + $0x250] sm:$0xff]
      %v2488 = vld [vmem:[%s3 + $0x258] sm:$0xff]
      %v2489 = vld [vmem:[%s3 + $0x260] sm:$0xff]
      %v2490 = vld [vmem:[%s3 + $0x268] sm:$0xff]
      %v2491 = vld [vmem:[%s3 + $0x270] sm:$0xff]
      %v2492 = vld [vmem:[%s3 + $0x278] sm:$0xff]
      %v2493 = vld [vmem:[%s3 + $0x280] sm:$0xff]
      %v2494 = vld [vmem:[%s3 + $0x288] sm:$0xff]
      %v2495 = vld [vmem:[%s3 + $0x290] sm:$0xff]
      %v2496 = vld [vmem:[%s3 + $0x298] sm:$0xff]
      %v2497 = vld [vmem:[%s3 + $0x2a0] sm:$0xff]
      %v2498 = vld [vmem:[%s3 + $0x2a8] sm:$0xff]
      %v2499 = vld [vmem:[%s3 + $0x2b0] sm:$0xff]
      %v2500 = vld [vmem:[%s3 + $0x2b8] sm:$0xff]
      %v2501 = vld [vmem:[%s3 + $0x2c0] sm:$0xff]
      %v2502 = vld [vmem:[%s3 + $0x2c8] sm:$0xff]
      %v2503 = vld [vmem:[%s3 + $0x2d0] sm:$0xff]
      %v2504 = vld [vmem:[%s3 + $0x2d8] sm:$0xff]
      %v2505 = vld [vmem:[%s3 + $0x2e0] sm:$0xff]
      %v2506 = vld [vmem:[%s3 + $0x2e8] sm:$0xff]
      %v2507 = vld [vmem:[%s3 + $0x2f0] sm:$0xff]
      %v2508 = vld [vmem:[%s3 + $0x2f8] sm:$0xff]
      %v2509 = vld [vmem:[%s3 + $0x300] sm:$0xff]
      %v2510 = vld [vmem:[%s3 + $0x308] sm:$0xff]
      %v2511 = vld [vmem:[%s3 + $0x310] sm:$0xff]
      %v2512 = vld [vmem:[%s3 + $0x318] sm:$0xff]
      %v2513 = vld [vmem:[%s3 + $0x320] sm:$0xff]
      %v2514 = vld [vmem:[%s3 + $0x328] sm:$0xff]
      %v2515 = vld [vmem:[%s3 + $0x330] sm:$0xff]
      %v2516 = vld [vmem:[%s3 + $0x338] sm:$0xff]
      %v2517 = vld [vmem:[%s3 + $0x340] sm:$0xff]
      %v2518 = vld [vmem:[%s3 + $0x348] sm:$0xff]
      %v2519 = vld [vmem:[%s3 + $0x350] sm:$0xff]
      %v2520 = vld [vmem:[%s3 + $0x358] sm:$0xff]
      %v2521 = vld [vmem:[%s3 + $0x360] sm:$0xff]
      %v2522 = vld [vmem:[%s3 + $0x368] sm:$0xff]
      %v2523 = vld [vmem:[%s3 + $0x370] sm:$0xff]
      %v2524 = vld [vmem:[%s3 + $0x378] sm:$0xff]
      %v2525 = vld [vmem:[%s3 + $0x380] sm:$0xff]
      %v2526 = vld [vmem:[%s3 + $0x388] sm:$0xff]
      %v2527 = vld [vmem:[%s3 + $0x390] sm:$0xff]
      %v2528 = vld [vmem:[%s3 + $0x398] sm:$0xff]
      %v2529 = vld [vmem:[%s3 + $0x3a0] sm:$0xff]
      %v2530 = vld [vmem:[%s3 + $0x3a8] sm:$0xff]
      %v2531 = vld [vmem:[%s3 + $0x3b0] sm:$0xff]
      %v2532 = vld [vmem:[%s3 + $0x3b8] sm:$0xff]
      %v2533 = vld [vmem:[%s3 + $0x3c0] sm:$0xff]
      %v2534 = vld [vmem:[%s3 + $0x3c8] sm:$0xff]
      %v2535 = vld [vmem:[%s3 + $0x3d0] sm:$0xff]
      %v2536 = vld [vmem:[%s3 + $0x3d8] sm:$0xff]
      %v2537 = vld [vmem:[%s3 + $0x3e0] sm:$0xff]
      %v2538 = vld [vmem:[%s3 + $0x3e8] sm:$0xff]
      %v2539 = vld [vmem:[%s3 + $0x3f0] sm:$0xff]
      %v2540 = vld [vmem:[%s3 + $0x3f8] sm:$0xff]
      %v2669 = vunpack.c.l.b16 %v2413
      %v2670 = vunpack.c.h.b16 %v2413
      %v2671 = vunpack.c.l.b16 %v2414
      %v2672 = vunpack.c.h.b16 %v2414
      %v2673 = vunpack.c.l.b16 %v2415
      %v2674 = vunpack.c.h.b16 %v2415
      %v2675 = vunpack.c.l.b16 %v2416
      %v2676 = vunpack.c.h.b16 %v2416
      %v2677 = vunpack.c.l.b16 %v2417
      %v2678 = vunpack.c.h.b16 %v2417
      %v2679 = vunpack.c.l.b16 %v2418
      %v2680 = vunpack.c.h.b16 %v2418
      %v2681 = vunpack.c.l.b16 %v2419
      %v2682 = vunpack.c.h.b16 %v2419
      %v2683 = vunpack.c.l.b16 %v2420
      %v2684 = vunpack.c.h.b16 %v2420
      %v2685 = vunpack.c.l.b16 %v2421
      %v2686 = vunpack.c.h.b16 %v2421
      %v2687 = vunpack.c.l.b16 %v2422
      %v2688 = vunpack.c.h.b16 %v2422
      %v2689 = vunpack.c.l.b16 %v2423
      %v2690 = vunpack.c.h.b16 %v2423
      %v2691 = vunpack.c.l.b16 %v2424
      %v2692 = vunpack.c.h.b16 %v2424
      %v2693 = vunpack.c.l.b16 %v2425
      %v2694 = vunpack.c.h.b16 %v2425
      %v2695 = vunpack.c.l.b16 %v2426
      %v2696 = vunpack.c.h.b16 %v2426
      %v2697 = vunpack.c.l.b16 %v2427
      %v2698 = vunpack.c.h.b16 %v2427
      %v2699 = vunpack.c.l.b16 %v2428
      %v2700 = vunpack.c.h.b16 %v2428
      %v2701 = vunpack.c.l.b16 %v2429
      %v2702 = vunpack.c.h.b16 %v2429
      %v2703 = vunpack.c.l.b16 %v2430
      %v2704 = vunpack.c.h.b16 %v2430
      %v2705 = vunpack.c.l.b16 %v2431
      %v2706 = vunpack.c.h.b16 %v2431
      %v2707 = vunpack.c.l.b16 %v2432
      %v2708 = vunpack.c.h.b16 %v2432
      %v2709 = vunpack.c.l.b16 %v2433
      %v2710 = vunpack.c.h.b16 %v2433
      %v2711 = vunpack.c.l.b16 %v2434
      %v2712 = vunpack.c.h.b16 %v2434
      %v2713 = vunpack.c.l.b16 %v2435
      %v2714 = vunpack.c.h.b16 %v2435
      %v2715 = vunpack.c.l.b16 %v2436
      %v2716 = vunpack.c.h.b16 %v2436
      %v2717 = vunpack.c.l.b16 %v2437
      %v2718 = vunpack.c.h.b16 %v2437
      %v2719 = vunpack.c.l.b16 %v2438
      %v2720 = vunpack.c.h.b16 %v2438
      %v2721 = vunpack.c.l.b16 %v2439
      %v2722 = vunpack.c.h.b16 %v2439
      %v2723 = vunpack.c.l.b16 %v2440
      %v2724 = vunpack.c.h.b16 %v2440
      %v2725 = vunpack.c.l.b16 %v2441
      %v2726 = vunpack.c.h.b16 %v2441
      %v2727 = vunpack.c.l.b16 %v2442
      %v2728 = vunpack.c.h.b16 %v2442
      %v2729 = vunpack.c.l.b16 %v2443
      %v2730 = vunpack.c.h.b16 %v2443
      %v2731 = vunpack.c.l.b16 %v2444
      %v2732 = vunpack.c.h.b16 %v2444
      %v2733 = vunpack.c.l.b16 %v2445
      %v2734 = vunpack.c.h.b16 %v2445
      %v2735 = vunpack.c.l.b16 %v2446
      %v2736 = vunpack.c.h.b16 %v2446
      %v2737 = vunpack.c.l.b16 %v2447
      %v2738 = vunpack.c.h.b16 %v2447
      %v2739 = vunpack.c.l.b16 %v2448
      %v2740 = vunpack.c.h.b16 %v2448
      %v2741 = vunpack.c.l.b16 %v2449
      %v2742 = vunpack.c.h.b16 %v2449
      %v2743 = vunpack.c.l.b16 %v2450
      %v2744 = vunpack.c.h.b16 %v2450
      %v2745 = vunpack.c.l.b16 %v2451
      %v2746 = vunpack.c.h.b16 %v2451
      %v2747 = vunpack.c.l.b16 %v2452
      %v2748 = vunpack.c.h.b16 %v2452
      %v2749 = vunpack.c.l.b16 %v2453
      %v2750 = vunpack.c.h.b16 %v2453
      %v2751 = vunpack.c.l.b16 %v2454
      %v2752 = vunpack.c.h.b16 %v2454
      %v2753 = vunpack.c.l.b16 %v2455
      %v2754 = vunpack.c.h.b16 %v2455
      %v2755 = vunpack.c.l.b16 %v2456
      %v2756 = vunpack.c.h.b16 %v2456
      %v2757 = vunpack.c.l.b16 %v2457
      %v2758 = vunpack.c.h.b16 %v2457
      %v2759 = vunpack.c.l.b16 %v2458
      %v2760 = vunpack.c.h.b16 %v2458
      %v2761 = vunpack.c.l.b16 %v2459
      %v2762 = vunpack.c.h.b16 %v2459
      %v2763 = vunpack.c.l.b16 %v2460
      %v2764 = vunpack.c.h.b16 %v2460
      %v2765 = vunpack.c.l.b16 %v2461
      %v2766 = vunpack.c.h.b16 %v2461
      %v2767 = vunpack.c.l.b16 %v2462
      %v2768 = vunpack.c.h.b16 %v2462
      %v2769 = vunpack.c.l.b16 %v2463
      %v2770 = vunpack.c.h.b16 %v2463
      %v2771 = vunpack.c.l.b16 %v2464
      %v2772 = vunpack.c.h.b16 %v2464
      %v2773 = vunpack.c.l.b16 %v2465
      %v2774 = vunpack.c.h.b16 %v2465
      %v2775 = vunpack.c.l.b16 %v2466
      %v2776 = vunpack.c.h.b16 %v2466
      %v2777 = vunpack.c.l.b16 %v2467
      %v2778 = vunpack.c.h.b16 %v2467
      %v2779 = vunpack.c.l.b16 %v2468
      %v2780 = vunpack.c.h.b16 %v2468
      %v2781 = vunpack.c.l.b16 %v2469
      %v2782 = vunpack.c.h.b16 %v2469
      %v2783 = vunpack.c.l.b16 %v2470
      %v2784 = vunpack.c.h.b16 %v2470
      %v2785 = vunpack.c.l.b16 %v2471
      %v2786 = vunpack.c.h.b16 %v2471
      %v2787 = vunpack.c.l.b16 %v2472
      %v2788 = vunpack.c.h.b16 %v2472
      %v2789 = vunpack.c.l.b16 %v2473
      %v2790 = vunpack.c.h.b16 %v2473
      %v2791 = vunpack.c.l.b16 %v2474
      %v2792 = vunpack.c.h.b16 %v2474
      %v2793 = vunpack.c.l.b16 %v2475
      %v2794 = vunpack.c.h.b16 %v2475
      %v2795 = vunpack.c.l.b16 %v2476
      %v2796 = vunpack.c.h.b16 %v2476
      %v2797 = vunpack.c.l.b16 %v2477
      %v2798 = vunpack.c.h.b16 %v2477
      %v2799 = vunpack.c.l.b16 %v2478
      %v2800 = vunpack.c.h.b16 %v2478
      %v2801 = vunpack.c.l.b16 %v2479
      %v2802 = vunpack.c.h.b16 %v2479
      %v2803 = vunpack.c.l.b16 %v2480
      %v2804 = vunpack.c.h.b16 %v2480
      %v2805 = vunpack.c.l.b16 %v2481
      %v2806 = vunpack.c.h.b16 %v2481
      %v2807 = vunpack.c.l.b16 %v2482
      %v2808 = vunpack.c.h.b16 %v2482
      %v2809 = vunpack.c.l.b16 %v2483
      %v2810 = vunpack.c.h.b16 %v2483
      %v2811 = vunpack.c.l.b16 %v2484
      %v2812 = vunpack.c.h.b16 %v2484
      %v2813 = vunpack.c.l.b16 %v2485
      %v2814 = vunpack.c.h.b16 %v2485
      %v2815 = vunpack.c.l.b16 %v2486
      %v2816 = vunpack.c.h.b16 %v2486
      %v2817 = vunpack.c.l.b16 %v2487
      %v2818 = vunpack.c.h.b16 %v2487
      %v2819 = vunpack.c.l.b16 %v2488
      %v2820 = vunpack.c.h.b16 %v2488
      %v2821 = vunpack.c.l.b16 %v2489
      %v2822 = vunpack.c.h.b16 %v2489
      %v2823 = vunpack.c.l.b16 %v2490
      %v2824 = vunpack.c.h.b16 %v2490
      %v2825 = vunpack.c.l.b16 %v2491
      %v2826 = vunpack.c.h.b16 %v2491
      %v2827 = vunpack.c.l.b16 %v2492
      %v2828 = vunpack.c.h.b16 %v2492
      %v2829 = vunpack.c.l.b16 %v2493
      %v2830 = vunpack.c.h.b16 %v2493
      %v2831 = vunpack.c.l.b16 %v2494
      %v2832 = vunpack.c.h.b16 %v2494
      %v2833 = vunpack.c.l.b16 %v2495
      %v2834 = vunpack.c.h.b16 %v2495
      %v2835 = vunpack.c.l.b16 %v2496
      %v2836 = vunpack.c.h.b16 %v2496
      %v2837 = vunpack.c.l.b16 %v2497
      %v2838 = vunpack.c.h.b16 %v2497
      %v2839 = vunpack.c.l.b16 %v2498
      %v2840 = vunpack.c.h.b16 %v2498
      %v2841 = vunpack.c.l.b16 %v2499
      %v2842 = vunpack.c.h.b16 %v2499
      %v2843 = vunpack.c.l.b16 %v2500
      %v2844 = vunpack.c.h.b16 %v2500
      %v2845 = vunpack.c.l.b16 %v2501
      %v2846 = vunpack.c.h.b16 %v2501
      %v2847 = vunpack.c.l.b16 %v2502
      %v2848 = vunpack.c.h.b16 %v2502
      %v2849 = vunpack.c.l.b16 %v2503
      %v2850 = vunpack.c.h.b16 %v2503
      %v2851 = vunpack.c.l.b16 %v2504
      %v2852 = vunpack.c.h.b16 %v2504
      %v2853 = vunpack.c.l.b16 %v2505
      %v2854 = vunpack.c.h.b16 %v2505
      %v2855 = vunpack.c.l.b16 %v2506
      %v2856 = vunpack.c.h.b16 %v2506
      %v2857 = vunpack.c.l.b16 %v2507
      %v2858 = vunpack.c.h.b16 %v2507
      %v2859 = vunpack.c.l.b16 %v2508
      %v2860 = vunpack.c.h.b16 %v2508
      %v2861 = vunpack.c.l.b16 %v2509
      %v2862 = vunpack.c.h.b16 %v2509
      %v2863 = vunpack.c.l.b16 %v2510
      %v2864 = vunpack.c.h.b16 %v2510
      %v2865 = vunpack.c.l.b16 %v2511
      %v2866 = vunpack.c.h.b16 %v2511
      %v2867 = vunpack.c.l.b16 %v2512
      %v2868 = vunpack.c.h.b16 %v2512
      %v2869 = vunpack.c.l.b16 %v2513
      %v2870 = vunpack.c.h.b16 %v2513
      %v2871 = vunpack.c.l.b16 %v2514
      %v2872 = vunpack.c.h.b16 %v2514
      %v2873 = vunpack.c.l.b16 %v2515
      %v2874 = vunpack.c.h.b16 %v2515
      %v2875 = vunpack.c.l.b16 %v2516
      %v2876 = vunpack.c.h.b16 %v2516
      %v2877 = vunpack.c.l.b16 %v2517
      %v2878 = vunpack.c.h.b16 %v2517
      %v2879 = vunpack.c.l.b16 %v2518
      %v2880 = vunpack.c.h.b16 %v2518
      %v2881 = vunpack.c.l.b16 %v2519
      %v2882 = vunpack.c.h.b16 %v2519
      %v2883 = vunpack.c.l.b16 %v2520
      %v2884 = vunpack.c.h.b16 %v2520
      %v2885 = vunpack.c.l.b16 %v2521
      %v2886 = vunpack.c.h.b16 %v2521
      %v2887 = vunpack.c.l.b16 %v2522
      %v2888 = vunpack.c.h.b16 %v2522
      %v2889 = vunpack.c.l.b16 %v2523
      %v2890 = vunpack.c.h.b16 %v2523
      %v2891 = vunpack.c.l.b16 %v2524
      %v2892 = vunpack.c.h.b16 %v2524
      %v2893 = vunpack.c.l.b16 %v2525
      %v2894 = vunpack.c.h.b16 %v2525
      %v2895 = vunpack.c.l.b16 %v2526
      %v2896 = vunpack.c.h.b16 %v2526
      %v2897 = vunpack.c.l.b16 %v2527
      %v2898 = vunpack.c.h.b16 %v2527
      %v2899 = vunpack.c.l.b16 %v2528
      %v2900 = vunpack.c.h.b16 %v2528
      %v2901 = vunpack.c.l.b16 %v2529
      %v2902 = vunpack.c.h.b16 %v2529
      %v2903 = vunpack.c.l.b16 %v2530
      %v2904 = vunpack.c.h.b16 %v2530
      %v2905 = vunpack.c.l.b16 %v2531
      %v2906 = vunpack.c.h.b16 %v2531
      %v2907 = vunpack.c.l.b16 %v2532
      %v2908 = vunpack.c.h.b16 %v2532
      %v2909 = vunpack.c.l.b16 %v2533
      %v2910 = vunpack.c.h.b16 %v2533
      %v2911 = vunpack.c.l.b16 %v2534
      %v2912 = vunpack.c.h.b16 %v2534
      %v2913 = vunpack.c.l.b16 %v2535
      %v2914 = vunpack.c.h.b16 %v2535
      %v2915 = vunpack.c.l.b16 %v2536
      %v2916 = vunpack.c.h.b16 %v2536
      %v2917 = vunpack.c.l.b16 %v2537
      %v2918 = vunpack.c.h.b16 %v2537
      %v2919 = vunpack.c.l.b16 %v2538
      %v2920 = vunpack.c.h.b16 %v2538
      %v2921 = vunpack.c.l.b16 %v2539
      %v2922 = vunpack.c.h.b16 %v2539
      %v2923 = vunpack.c.l.b16 %v2540
      %v2924 = vunpack.c.h.b16 %v2540
      %v2925 = vpack.c.b16 %v2673, %v2669
      %v2926 = vpack.c.b16 %v2674, %v2670
      %v2927 = vpack.c.b16 %v2675, %v2671
      %v2928 = vpack.c.b16 %v2676, %v2672
      %v2929 = vpack.c.b16 %v2681, %v2677
      %v2930 = vpack.c.b16 %v2682, %v2678
      %v2931 = vpack.c.b16 %v2683, %v2679
      %v2932 = vpack.c.b16 %v2684, %v2680
      %v2933 = vpack.c.b16 %v2689, %v2685
      %v2934 = vpack.c.b16 %v2690, %v2686
      %v2935 = vpack.c.b16 %v2691, %v2687
      %v2936 = vpack.c.b16 %v2692, %v2688
      %v2937 = vpack.c.b16 %v2697, %v2693
      %v2938 = vpack.c.b16 %v2698, %v2694
      %v2939 = vpack.c.b16 %v2699, %v2695
      %v2940 = vpack.c.b16 %v2700, %v2696
      %v2941 = vpack.c.b16 %v2705, %v2701
      %v2942 = vpack.c.b16 %v2706, %v2702
      %v2943 = vpack.c.b16 %v2707, %v2703
      %v2944 = vpack.c.b16 %v2708, %v2704
      %v2945 = vpack.c.b16 %v2713, %v2709
      %v2946 = vpack.c.b16 %v2714, %v2710
      %v2947 = vpack.c.b16 %v2715, %v2711
      %v2948 = vpack.c.b16 %v2716, %v2712
      %v2949 = vpack.c.b16 %v2721, %v2717
      %v2950 = vpack.c.b16 %v2722, %v2718
      %v2951 = vpack.c.b16 %v2723, %v2719
      %v2952 = vpack.c.b16 %v2724, %v2720
      %v2953 = vpack.c.b16 %v2729, %v2725
      %v2954 = vpack.c.b16 %v2730, %v2726
      %v2955 = vpack.c.b16 %v2731, %v2727
      %v2956 = vpack.c.b16 %v2732, %v2728
      %v2957 = vpack.c.b16 %v2737, %v2733
      %v2958 = vpack.c.b16 %v2738, %v2734
      %v2959 = vpack.c.b16 %v2739, %v2735
      %v2960 = vpack.c.b16 %v2740, %v2736
      %v2961 = vpack.c.b16 %v2745, %v2741
      %v2962 = vpack.c.b16 %v2746, %v2742
      %v2963 = vpack.c.b16 %v2747, %v2743
      %v2964 = vpack.c.b16 %v2748, %v2744
      %v2965 = vpack.c.b16 %v2753, %v2749
      %v2966 = vpack.c.b16 %v2754, %v2750
      %v2967 = vpack.c.b16 %v2755, %v2751
      %v2968 = vpack.c.b16 %v2756, %v2752
      %v2969 = vpack.c.b16 %v2761, %v2757
      %v2970 = vpack.c.b16 %v2762, %v2758
      %v2971 = vpack.c.b16 %v2763, %v2759
      %v2972 = vpack.c.b16 %v2764, %v2760
      %v2973 = vpack.c.b16 %v2769, %v2765
      %v2974 = vpack.c.b16 %v2770, %v2766
      %v2975 = vpack.c.b16 %v2771, %v2767
      %v2976 = vpack.c.b16 %v2772, %v2768
      %v2977 = vpack.c.b16 %v2777, %v2773
      %v2978 = vpack.c.b16 %v2778, %v2774
      %v2979 = vpack.c.b16 %v2779, %v2775
      %v2980 = vpack.c.b16 %v2780, %v2776
      %v2981 = vpack.c.b16 %v2785, %v2781
      %v2982 = vpack.c.b16 %v2786, %v2782
      %v2983 = vpack.c.b16 %v2787, %v2783
      %v2984 = vpack.c.b16 %v2788, %v2784
      %v2985 = vpack.c.b16 %v2793, %v2789
      %v2986 = vpack.c.b16 %v2794, %v2790
      %v2987 = vpack.c.b16 %v2795, %v2791
      %v2988 = vpack.c.b16 %v2796, %v2792
      %v2989 = vpack.c.b16 %v2801, %v2797
      %v2990 = vpack.c.b16 %v2802, %v2798
      %v2991 = vpack.c.b16 %v2803, %v2799
      %v2992 = vpack.c.b16 %v2804, %v2800
      %v2993 = vpack.c.b16 %v2809, %v2805
      %v2994 = vpack.c.b16 %v2810, %v2806
      %v2995 = vpack.c.b16 %v2811, %v2807
      %v2996 = vpack.c.b16 %v2812, %v2808
      %v2997 = vpack.c.b16 %v2817, %v2813
      %v2998 = vpack.c.b16 %v2818, %v2814
      %v2999 = vpack.c.b16 %v2819, %v2815
      %v3000 = vpack.c.b16 %v2820, %v2816
      %v3001 = vpack.c.b16 %v2825, %v2821
      %v3002 = vpack.c.b16 %v2826, %v2822
      %v3003 = vpack.c.b16 %v2827, %v2823
      %v3004 = vpack.c.b16 %v2828, %v2824
      %v3005 = vpack.c.b16 %v2833, %v2829
      %v3006 = vpack.c.b16 %v2834, %v2830
      %v3007 = vpack.c.b16 %v2835, %v2831
      %v3008 = vpack.c.b16 %v2836, %v2832
      %v3009 = vpack.c.b16 %v2841, %v2837
      %v3010 = vpack.c.b16 %v2842, %v2838
      %v3011 = vpack.c.b16 %v2843, %v2839
      %v3012 = vpack.c.b16 %v2844, %v2840
      %v3013 = vpack.c.b16 %v2849, %v2845
      %v3014 = vpack.c.b16 %v2850, %v2846
      %v3015 = vpack.c.b16 %v2851, %v2847
      %v3016 = vpack.c.b16 %v2852, %v2848
      %v3017 = vpack.c.b16 %v2857, %v2853
      %v3018 = vpack.c.b16 %v2858, %v2854
      %v3019 = vpack.c.b16 %v2859, %v2855
      %v3020 = vpack.c.b16 %v2860, %v2856
      %v3021 = vpack.c.b16 %v2865, %v2861
      %v3022 = vpack.c.b16 %v2866, %v2862
      %v3023 = vpack.c.b16 %v2867, %v2863
      %v3024 = vpack.c.b16 %v2868, %v2864
      %v3025 = vpack.c.b16 %v2873, %v2869
      %v3026 = vpack.c.b16 %v2874, %v2870
      %v3027 = vpack.c.b16 %v2875, %v2871
      %v3028 = vpack.c.b16 %v2876, %v2872
      %v3029 = vpack.c.b16 %v2881, %v2877
      %v3030 = vpack.c.b16 %v2882, %v2878
      %v3031 = vpack.c.b16 %v2883, %v2879
      %v3032 = vpack.c.b16 %v2884, %v2880
      %v3033 = vpack.c.b16 %v2889, %v2885
      %v3034 = vpack.c.b16 %v2890, %v2886
      %v3035 = vpack.c.b16 %v2891, %v2887
      %v3036 = vpack.c.b16 %v2892, %v2888
      %v3037 = vpack.c.b16 %v2897, %v2893
      %v3038 = vpack.c.b16 %v2898, %v2894
      %v3039 = vpack.c.b16 %v2899, %v2895
      %v3040 = vpack.c.b16 %v2900, %v2896
      %v3041 = vpack.c.b16 %v2905, %v2901
      %v3042 = vpack.c.b16 %v2906, %v2902
      %v3043 = vpack.c.b16 %v2907, %v2903
      %v3044 = vpack.c.b16 %v2908, %v2904
      %v3045 = vpack.c.b16 %v2913, %v2909
      %v3046 = vpack.c.b16 %v2914, %v2910
      %v3047 = vpack.c.b16 %v2915, %v2911
      %v3048 = vpack.c.b16 %v2916, %v2912
      %v3049 = vpack.c.b16 %v2921, %v2917
      %v3050 = vpack.c.b16 %v2922, %v2918
      %v3051 = vpack.c.b16 %v2923, %v2919
      %v3052 = vpack.c.b16 %v2924, %v2920
      %3181 = vmatprep.subr.bf16.mxu0 %v2926
      %3182 = vmatpush1.bf16.msra.mxu0 %v2925
      %3183 = vmatprep.subr.bf16.mxu0 %v2930
      %3184 = vmatpush1.bf16.msra.mxu0 %v2929
      %3185 = vmatprep.subr.bf16.mxu0 %v2934
      %3186 = vmatpush1.bf16.msra.mxu0 %v2933
      %3187 = vmatprep.subr.bf16.mxu0 %v2938
      %3188 = vmatpush1.bf16.msra.mxu0 %v2937
      %3189 = vmatprep.subr.bf16.mxu0 %v2942
      %3190 = vmatpush1.bf16.msra.mxu0 %v2941
      %3191 = vmatprep.subr.bf16.mxu0 %v2946
      %3192 = vmatpush1.bf16.msra.mxu0 %v2945
      %3193 = vmatprep.subr.bf16.mxu0 %v2950
      %3194 = vmatpush1.bf16.msra.mxu0 %v2949
      %3195 = vmatprep.subr.bf16.mxu0 %v2954
      %3196 = vmatpush1.bf16.msra.mxu0 %v2953
      %3197 = vmatprep.subr.bf16.mxu0 %v2958
      %3198 = vmatpush1.bf16.msra.mxu0 %v2957
      %3199 = vmatprep.subr.bf16.mxu0 %v2962
      %3200 = vmatpush1.bf16.msra.mxu0 %v2961
      %3201 = vmatprep.subr.bf16.mxu0 %v2966
      %3202 = vmatpush1.bf16.msra.mxu0 %v2965
      %3203 = vmatprep.subr.bf16.mxu0 %v2970
      %3204 = vmatpush1.bf16.msra.mxu0 %v2969
      %3205 = vmatprep.subr.bf16.mxu0 %v2974
      %3206 = vmatpush1.bf16.msra.mxu0 %v2973
      %3207 = vmatprep.subr.bf16.mxu0 %v2978
      %3208 = vmatpush1.bf16.msra.mxu0 %v2977
      %3209 = vmatprep.subr.bf16.mxu0 %v2982
      %3210 = vmatpush1.bf16.msra.mxu0 %v2981
      %3211 = vmatprep.subr.bf16.mxu0 %v2986
      %3212 = vmatpush1.bf16.msra.mxu0 %v2985
      %3213 = vmatprep.mubr.bf16.mxu0 %v2410
      %3214 = vmatmul.mubr.bf16.gmra.mrb[0].mxu0 %v2409
      %v3215 = vpop.f32.mrb[0].mxu0
      %v3216 = vadd.f32 0.0, %v3215
      %v3217 = vpop.f32.mrb[0].mxu0
      %v3218 = vadd.f32 0.0, %v3217
      %v3219 = vpop.f32.mrb[0].mxu0
      %v3220 = vpop.f32.mrb[0].mxu0
      %3221 = vdwg.mxu0
      %3222 = vmatprep.subr.bf16.mxu0 %v2990
      %3223 = vmatpush1.bf16.msra.mxu0 %v2989
      %3224 = vmatprep.subr.bf16.mxu0 %v2994
      %3225 = vmatpush1.bf16.msra.mxu0 %v2993
      %3226 = vmatprep.subr.bf16.mxu0 %v2998
      %3227 = vmatpush1.bf16.msra.mxu0 %v2997
      %3228 = vmatprep.subr.bf16.mxu0 %v3002
      %3229 = vmatpush1.bf16.msra.mxu0 %v3001
      %3230 = vmatprep.subr.bf16.mxu0 %v3006
      %3231 = vmatpush1.bf16.msra.mxu0 %v3005
      %3232 = vmatprep.subr.bf16.mxu0 %v3010
      %3233 = vmatpush1.bf16.msra.mxu0 %v3009
      %3234 = vmatprep.subr.bf16.mxu0 %v3014
      %3235 = vmatpush1.bf16.msra.mxu0 %v3013
      %3236 = vmatprep.subr.bf16.mxu0 %v3018
      %3237 = vmatpush1.bf16.msra.mxu0 %v3017
      %3238 = vmatprep.subr.bf16.mxu0 %v3022
      %3239 = vmatpush1.bf16.msra.mxu0 %v3021
      %3240 = vmatprep.subr.bf16.mxu0 %v3026
      %3241 = vmatpush1.bf16.msra.mxu0 %v3025
      %3242 = vmatprep.subr.bf16.mxu0 %v3030
      %3243 = vmatpush1.bf16.msra.mxu0 %v3029
      %3244 = vmatprep.subr.bf16.mxu0 %v3034
      %3245 = vmatpush1.bf16.msra.mxu0 %v3033
      %3246 = vmatprep.subr.bf16.mxu0 %v3038
      %3247 = vmatpush1.bf16.msra.mxu0 %v3037
      %3248 = vmatprep.subr.bf16.mxu0 %v3042
      %3249 = vmatpush1.bf16.msra.mxu0 %v3041
      %3250 = vmatprep.subr.bf16.mxu0 %v3046
      %3251 = vmatpush1.bf16.msra.mxu0 %v3045
      %3252 = vmatprep.subr.bf16.mxu0 %v3050
      %3253 = vmatpush1.bf16.msra.mxu0 %v3049
      %3254 = vmatprep.mubr.bf16.mxu0 %v2412
      %3255 = vmatmul.mubr.bf16.gmra.mrb[0].mxu0 %v2411
      %v3256 = vpop.f32.mrb[0].mxu0
      %v3257 = vadd.f32 %v3216, %v3256
      %v3258 = vpop.f32.mrb[0].mxu0
      %v3259 = vadd.f32 %v3218, %v3258
      %v3260 = vpop.f32.mrb[0].mxu0
      %v3261 = vpop.f32.mrb[0].mxu0
      %3262 = vdwg.mxu0
      %3263 = vmatprep.subr.bf16.mxu0 %v2928
      %3264 = vmatpush1.bf16.msra.mxu0 %v2927
      %3265 = vmatprep.subr.bf16.mxu0 %v2932
      %3266 = vmatpush1.bf16.msra.mxu0 %v2931
      %3267 = vmatprep.subr.bf16.mxu0 %v2936
      %3268 = vmatpush1.bf16.msra.mxu0 %v2935
      %3269 = vmatprep.subr.bf16.mxu0 %v2940
      %3270 = vmatpush1.bf16.msra.mxu0 %v2939
      %3271 = vmatprep.subr.bf16.mxu0 %v2944
      %3272 = vmatpush1.bf16.msra.mxu0 %v2943
      %3273 = vmatprep.subr.bf16.mxu0 %v2948
      %3274 = vmatpush1.bf16.msra.mxu0 %v2947
      %3275 = vmatprep.subr.bf16.mxu0 %v2952
      %3276 = vmatpush1.bf16.msra.mxu0 %v2951
      %3277 = vmatprep.subr.bf16.mxu0 %v2956
      %3278 = vmatpush1.bf16.msra.mxu0 %v2955
      %3279 = vmatprep.subr.bf16.mxu0 %v2960
      %3280 = vmatpush1.bf16.msra.mxu0 %v2959
      %3281 = vmatprep.subr.bf16.mxu0 %v2964
      %3282 = vmatpush1.bf16.msra.mxu0 %v2963
      %3283 = vmatprep.subr.bf16.mxu0 %v2968
      %3284 = vmatpush1.bf16.msra.mxu0 %v2967
      %3285 = vmatprep.subr.bf16.mxu0 %v2972
      %3286 = vmatpush1.bf16.msra.mxu0 %v2971
      %3287 = vmatprep.subr.bf16.mxu0 %v2976
      %3288 = vmatpush1.bf16.msra.mxu0 %v2975
      %3289 = vmatprep.subr.bf16.mxu0 %v2980
      %3290 = vmatpush1.bf16.msra.mxu0 %v2979
      %3291 = vmatprep.subr.bf16.mxu0 %v2984
      %3292 = vmatpush1.bf16.msra.mxu0 %v2983
      %3293 = vmatprep.subr.bf16.mxu0 %v2988
      %3294 = vmatpush1.bf16.msra.mxu0 %v2987
      %3295 = vmatprep.mubr.bf16.mxu0 %v2410
      %3296 = vmatmul.mubr.bf16.gmra.mrb[0].mxu0 %v2409
      %v3297 = vpop.f32.mrb[0].mxu0
      %v3298 = vadd.f32 0.0, %v3297
      %v3299 = vpop.f32.mrb[0].mxu0
      %v3300 = vadd.f32 0.0, %v3299
      %v3301 = vpop.f32.mrb[0].mxu0
      %v3302 = vpop.f32.mrb[0].mxu0
      %3303 = vdwg.mxu0
      %3304 = vmatprep.subr.bf16.mxu0 %v2992
      %3305 = vmatpush1.bf16.msra.mxu0 %v2991
      %3306 = vmatprep.subr.bf16.mxu0 %v2996
      %3307 = vmatpush1.bf16.msra.mxu0 %v2995
      %3308 = vmatprep.subr.bf16.mxu0 %v3000
      %3309 = vmatpush1.bf16.msra.mxu0 %v2999
      %3310 = vmatprep.subr.bf16.mxu0 %v3004
      %3311 = vmatpush1.bf16.msra.mxu0 %v3003
      %3312 = vmatprep.subr.bf16.mxu0 %v3008
      %3313 = vmatpush1.bf16.msra.mxu0 %v3007
      %3314 = vmatprep.subr.bf16.mxu0 %v3012
      %3315 = vmatpush1.bf16.msra.mxu0 %v3011
      %3316 = vmatprep.subr.bf16.mxu0 %v3016
      %3317 = vmatpush1.bf16.msra.mxu0 %v3015
      %3318 = vmatprep.subr.bf16.mxu0 %v3020
      %3319 = vmatpush1.bf16.msra.mxu0 %v3019
      %3320 = vmatprep.subr.bf16.mxu0 %v3024
      %3321 = vmatpush1.bf16.msra.mxu0 %v3023
      %3322 = vmatprep.subr.bf16.mxu0 %v3028
      %3323 = vmatpush1.bf16.msra.mxu0 %v3027
      %3324 = vmatprep.subr.bf16.mxu0 %v3032
      %3325 = vmatpush1.bf16.msra.mxu0 %v3031
      %3326 = vmatprep.subr.bf16.mxu0 %v3036
      %3327 = vmatpush1.bf16.msra.mxu0 %v3035
      %3328 = vmatprep.subr.bf16.mxu0 %v3040
      %3329 = vmatpush1.bf16.msra.mxu0 %v3039
      %3330 = vmatprep.subr.bf16.mxu0 %v3044
      %3331 = vmatpush1.bf16.msra.mxu0 %v3043
      %3332 = vmatprep.subr.bf16.mxu0 %v3048
      %3333 = vmatpush1.bf16.msra.mxu0 %v3047
      %3334 = vmatprep.subr.bf16.mxu0 %v3052
      %3335 = vmatpush1.bf16.msra.mxu0 %v3051
      %3336 = vmatprep.mubr.bf16.mxu0 %v2412
      %3337 = vmatmul.mubr.bf16.gmra.mrb[0].mxu0 %v2411
      %v3338 = vpop.f32.mrb[0].mxu0
      %v3339 = vadd.f32 %v3298, %v3338
      %v3340 = vpop.f32.mrb[0].mxu0
      %v3341 = vadd.f32 %v3300, %v3340
      %v3342 = vpop.f32.mrb[0].mxu0
      %v3343 = vpop.f32.mrb[0].mxu0
      %3344 = vdwg.mxu0
      %v3345 = vlaneseq
      %v3346 = vshrl.u32 %v3345, 7
      %v3347 = vstv %s2320
      %v3348 = vadd.s32 %v3347, %v3346
      %v3349 = vpack.c.bf16 %v3257, %v3257
      %s3350 = sadd.s32 %s24, 1
      // While loop
      $region57: #{transformer_block.2} parent=51 // loop_pre_header
        _
      $region58: #{transformer_block.2} parent=51 // loop_header
        %s3352 = sphi 0, %s3354
        %p3353 = scmp.ge.s32.totalorder %s3352, %s3350
        %v3357 = vphi -inf, %v3428
        %v3358 = vphi 0.0, %v3439
        %v3359 = vphi 0.0, %v3489
      $region59: #{transformer_block.2} parent=51 // loop_header_branch
        %3356 = sbr.rel (%p3353) target = $region63
      $region60: #{transformer_block.2} parent=51 // loop_body
        %s3360 = smul.u32 %s3352, 8
        %s3361 = sshra.s32 %s3360, 3
        %s3362 = sand.u32 %s3360, 7
        %s3363 = smul.u32 %s3361, 4
        %s3364 = smul.addr %s3363, 4
        %s3365 = scalar_lea.vmem [#allocation2], %s3364
        %v3366 = vld [vmem:[%s3365] sm:$0xf]
        %s3367 = smul.addr %s3363, 4
        %s3368 = scalar_lea.vmem [#allocation3], %s3367
        %v3369 = vld [vmem:[%s3368] sm:$0xf]
        %vm3370 = vcmask 523264
        %v3372 = vsel %vm3370, %v3349, 0
        %v3375 = vsel %vm3370, %v3366, 0
        %3377 = vmatprep.subr.bf16.mxu0 0
        %3378 = vmatpush1.bf16.xpose.msra.mxu0 %v3375
        %3379 = vmatprep.subr.bf16.mxu0 0
        %3380 = vmatpush1.bf16.xpose.msra.mxu0 0
        %3381 = vmatprep.subr.bf16.mxu0 0
        %3382 = vmatpush1.bf16.xpose.msra.mxu0 0
        %3383 = vmatprep.subr.bf16.mxu0 0
        %3384 = vmatpush1.bf16.xpose.msra.mxu0 0
        %3385 = vmatprep.subr.bf16.mxu0 0
        %3386 = vmatpush1.bf16.xpose.msra.mxu0 0
        %3387 = vmatprep.subr.bf16.mxu0 0
        %3388 = vmatpush1.bf16.xpose.msra.mxu0 0
        %3389 = vmatprep.subr.bf16.mxu0 0
        %3390 = vmatpush1.bf16.xpose.msra.mxu0 0
        %3391 = vmatprep.subr.bf16.mxu0 0
        %3392 = vmatpush1.bf16.xpose.msra.mxu0 0
        %3393 = vmatprep.subr.bf16.mxu0 0
        %3394 = vmatpush1.bf16.xpose.msra.mxu0 0
        %3395 = vmatprep.subr.bf16.mxu0 0
        %3396 = vmatpush1.bf16.xpose.msra.mxu0 0
        %3397 = vmatprep.subr.bf16.mxu0 0
        %3398 = vmatpush1.bf16.xpose.msra.mxu0 0
        %3399 = vmatprep.subr.bf16.mxu0 0
        %3400 = vmatpush1.bf16.xpose.msra.mxu0 0
        %3401 = vmatprep.subr.bf16.mxu0 0
        %3402 = vmatpush1.bf16.xpose.msra.mxu0 0
        %3403 = vmatprep.subr.bf16.mxu0 0
        %3404 = vmatpush1.bf16.xpose.msra.mxu0 0
        %3405 = vmatprep.subr.bf16.mxu0 0
        %3406 = vmatpush1.bf16.xpose.msra.mxu0 0
        %3407 = vmatprep.subr.bf16.mxu0 0
        %3408 = vmatpush1.bf16.xpose.msra.mxu0 0
        %3409 = vmatprep.mubr.bf16.mxu0 0
        %3410 = vmatmul.mubr.bf16.gmra.mrb[0].mxu0 %v3372
        %v3411 = vpop.f32.mrb[0].mxu0
        %v3412 = vadd.f32 0.0, %v3411
        %v3413 = vpop.f32.mrb[0].mxu0
        %v3414 = vpop.f32.mrb[0].mxu0
        %v3415 = vpop.f32.mrb[0].mxu0
        %3416 = vdwg.mxu0
        %v3417 = vmul.f32 %v3412, 0.125
        %v3418 = vlaneseq
        %v3419 = vand.u32 %v3418, 127
        %v3420 = vstv %s3360
        %v3421 = vadd.s32 %v3420, %v3419
        %vm3422 = vcmp.le.s32.totalorder %v3421, %v3348
        %v3423 = vsel %vm3422, %v3417, -inf
        %vm3424 = vcmask 64512
        %v3425 = vsel %vm3424, %v3423, -inf
        %3426 = vmax.xlane.f32.xlu0 %v3425
        %v3427 = vpop.xlane.xlu0 %3426
        %v3428 = vmax.f32 %v3357, %v3427
        %v3429 = vsub.f32 %v3357, %v3428
        %v3430 = vmul.f32 %v3429, 1.442695
        %v3431 = vpow.pop %v3430
        %v3432 = vsub.f32 %v3423, %v3428
        %v3433 = vmul.f32 %v3432, 1.442695
        %v3434 = vpow.pop %v3433
        %v3435 = vmul.f32 %v3431, %v3358
        %v3436 = vsel %vm3424, %v3434, 0.0
        %3437 = vadd.xlane.f32.xlu0 %v3436
        %v3438 = vpop.xlane.xlu0 %3437
        %v3439 = vadd.f32 %v3435, %v3438
        %v3440 = vmul.f32 %v3431, %v3359
        %v3441 = vpack.c.bf16 %v3434, %v3434
        %v3443 = vsel %vm3424, %v3441, 0
        %vm3445 = vcmask 1043456
        %v3447 = vsel %vm3445, %v3369, 0
        %3449 = vmatprep.subr.bf16.mxu0 0
        %3450 = vmatpush1.bf16.msra.mxu0 %v3447
        %3451 = vmatprep.subr.bf16.mxu0 0
        %3452 = vmatpush1.bf16.msra.mxu0 0
        %3453 = vmatprep.subr.bf16.mxu0 0
        %3454 = vmatpush1.bf16.msra.mxu0 0
        %3455 = vmatprep.subr.bf16.mxu0 0
        %3456 = vmatpush1.bf16.msra.mxu0 0
        %3457 = vmatprep.subr.bf16.mxu0 0
        %3458 = vmatpush1.bf16.msra.mxu0 0
        %3459 = vmatprep.subr.bf16.mxu0 0
        %3460 = vmatpush1.bf16.msra.mxu0 0
        %3461 = vmatprep.subr.bf16.mxu0 0
        %3462 = vmatpush1.bf16.msra.mxu0 0
        %3463 = vmatprep.subr.bf16.mxu0 0
        %3464 = vmatpush1.bf16.msra.mxu0 0
        %3465 = vmatprep.subr.bf16.mxu0 0
        %3466 = vmatpush1.bf16.msra.mxu0 0
        %3467 = vmatprep.subr.bf16.mxu0 0
        %3468 = vmatpush1.bf16.msra.mxu0 0
        %3469 = vmatprep.subr.bf16.mxu0 0
        %3470 = vmatpush1.bf16.msra.mxu0 0
        %3471 = vmatprep.subr.bf16.mxu0 0
        %3472 = vmatpush1.bf16.msra.mxu0 0
        %3473 = vmatprep.subr.bf16.mxu0 0
        %3474 = vmatpush1.bf16.msra.mxu0 0
        %3475 = vmatprep.subr.bf16.mxu0 0
        %3476 = vmatpush1.bf16.msra.mxu0 0
        %3477 = vmatprep.subr.bf16.mxu0 0
        %3478 = vmatpush1.bf16.msra.mxu0 0
        %3479 = vmatprep.subr.bf16.mxu0 0
        %3480 = vmatpush1.bf16.msra.mxu0 0
        %3481 = vmatprep.mubr.bf16.mxu0 0
        %3482 = vmatmul.mubr.bf16.gmra.mrb[0].mxu0 %v3443
        %v3483 = vpop.f32.mrb[0].mxu0
        %v3484 = vadd.f32 0.0, %v3483
        %v3485 = vpop.f32.mrb[0].mxu0
        %v3486 = vpop.f32.mrb[0].mxu0
        %v3487 = vpop.f32.mrb[0].mxu0
        %3488 = vdwg.mxu0
        %v3489 = vadd.f32 %v3440, %v3484
      $region61: #{transformer_block.2} parent=51 // loop_footer
        %s3354 = sadd.s32 %s3352, 1
      $region62: #{transformer_block.2} parent=51 // loop_footer_branch
        %3351 = sbr.rel target = $region58
      $region63: #{transformer_block.2} parent=51 // loop_exit
        _
      %v3490 = vrcp.pop %v3358
      %v3491 = vmul.f32 %v3359, %v3490
      // While loop
      $region64: #{transformer_block.2} parent=51 // loop_pre_header
        _
      $region65: #{transformer_block.2} parent=51 // loop_header
        %s3493 = sphi 0, %s3495
        %p3494 = scmp.ge.s32.totalorder %s3493, %s3350
        %v3498 = vphi -inf, %v3577
        %v3499 = vphi 0.0, %v3588
        %v3500 = vphi 0.0, %v3643
      $region66: #{transformer_block.2} parent=51 // loop_header_branch
        %3497 = sbr.rel (%p3494) target = $region70
      $region67: #{transformer_block.2} parent=51 // loop_body
        %s3501 = smul.u32 %s3493, 8
        %s3502 = sshra.s32 %s3501, 3
        %s3503 = sand.u32 %s3501, 7
        %s3504 = smul.u32 %s3502, 4
        %s3505 = smul.addr %s3504, 4
        %s3506 = scalar_lea.vmem [#allocation2], %s3505
        %v3507 = vld [vmem:[%s3506] sm:$0xf]
        %s3508 = smul.addr %s3504, 4
        %s3509 = scalar_lea.vmem [#allocation3], %s3508
        %v3510 = vld [vmem:[%s3509] sm:$0xf]
        %3512 = vrot.lane.b32.xlu0 %v3349, 64
        %v3513 = vpop.permute.xlu0 %3512
        %v3515 = vunpack.c.l.b16 %v3507
        %v3516 = vpack.c.b16 %v3515, %v3515
        %3517 = vrot.lane.b32.xlu0 %v3516, 64
        %v3518 = vpop.permute.xlu0 %3517
        %vm3519 = vcmask 523264
        %v3521 = vsel %vm3519, %v3513, 0
        %v3524 = vsel %vm3519, %v3518, 0
        %3526 = vmatprep.subr.bf16.mxu0 0
        %3527 = vmatpush1.bf16.xpose.msra.mxu0 %v3524
        %3528 = vmatprep.subr.bf16.mxu0 0
        %3529 = vmatpush1.bf16.xpose.msra.mxu0 0
        %3530 = vmatprep.subr.bf16.mxu0 0
        %3531 = vmatpush1.bf16.xpose.msra.mxu0 0
        %3532 = vmatprep.subr.bf16.mxu0 0
        %3533 = vmatpush1.bf16.xpose.msra.mxu0 0
        %3534 = vmatprep.subr.bf16.mxu0 0
        %3535 = vmatpush1.bf16.xpose.msra.mxu0 0
        %3536 = vmatprep.subr.bf16.mxu0 0
        %3537 = vmatpush1.bf16.xpose.msra.mxu0 0
        %3538 = vmatprep.subr.bf16.mxu0 0
        %3539 = vmatpush1.bf16.xpose.msra.mxu0 0
        %3540 = vmatprep.subr.bf16.mxu0 0
        %3541 = vmatpush1.bf16.xpose.msra.mxu0 0
        %3542 = vmatprep.subr.bf16.mxu0 0
        %3543 = vmatpush1.bf16.xpose.msra.mxu0 0
        %3544 = vmatprep.subr.bf16.mxu0 0
        %3545 = vmatpush1.bf16.xpose.msra.mxu0 0
        %3546 = vmatprep.subr.bf16.mxu0 0
        %3547 = vmatpush1.bf16.xpose.msra.mxu0 0
        %3548 = vmatprep.subr.bf16.mxu0 0
        %3549 = vmatpush1.bf16.xpose.msra.mxu0 0
        %3550 = vmatprep.subr.bf16.mxu0 0
        %3551 = vmatpush1.bf16.xpose.msra.mxu0 0
        %3552 = vmatprep.subr.bf16.mxu0 0
        %3553 = vmatpush1.bf16.xpose.msra.mxu0 0
        %3554 = vmatprep.subr.bf16.mxu0 0
        %3555 = vmatpush1.bf16.xpose.msra.mxu0 0
        %3556 = vmatprep.subr.bf16.mxu0 0
        %3557 = vmatpush1.bf16.xpose.msra.mxu0 0
        %3558 = vmatprep.mubr.bf16.mxu0 0
        %3559 = vmatmul.mubr.bf16.gmra.mrb[0].mxu0 %v3521
        %v3560 = vpop.f32.mrb[0].mxu0
        %v3561 = vadd.f32 0.0, %v3560
        %v3562 = vpop.f32.mrb[0].mxu0
        %v3563 = vpop.f32.mrb[0].mxu0
        %v3564 = vpop.f32.mrb[0].mxu0
        %3565 = vdwg.mxu0
        %v3566 = vmul.f32 %v3561, 0.125
        %v3567 = vlaneseq
        %v3568 = vand.u32 %v3567, 127
        %v3569 = vstv %s3501
        %v3570 = vadd.s32 %v3569, %v3568
        %vm3571 = vcmp.le.s32.totalorder %v3570, %v3348
        %v3572 = vsel %vm3571, %v3566, -inf
        %vm3573 = vcmask 64512
        %v3574 = vsel %vm3573, %v3572, -inf
        %3575 = vmax.xlane.f32.xlu0 %v3574
        %v3576 = vpop.xlane.xlu0 %3575
        %v3577 = vmax.f32 %v3498, %v3576
        %v3578 = vsub.f32 %v3498, %v3577
        %v3579 = vmul.f32 %v3578, 1.442695
        %v3580 = vpow.pop %v3579
        %v3581 = vsub.f32 %v3572, %v3577
        %v3582 = vmul.f32 %v3581, 1.442695
        %v3583 = vpow.pop %v3582
        %v3584 = vmul.f32 %v3580, %v3499
        %v3585 = vsel %vm3573, %v3583, 0.0
        %3586 = vadd.xlane.f32.xlu0 %v3585
        %v3587 = vpop.xlane.xlu0 %3586
        %v3588 = vadd.f32 %v3584, %v3587
        %v3589 = vmul.f32 %v3580, %v3500
        %v3590 = vpack.c.bf16 %v3583, %v3583
        %v3592 = vunpack.c.l.b16 %v3510
        %v3593 = vpack.c.b16 %v3592, %v3592
        %3594 = vrot.lane.b32.xlu0 %v3593, 64
        %v3595 = vpop.permute.xlu0 %3594
        %v3597 = vsel %vm3573, %v3590, 0
        %vm3599 = vcmask 1043456
        %v3601 = vsel %vm3599, %v3595, 0
        %3603 = vmatprep.subr.bf16.mxu0 0
        %3604 = vmatpush1.bf16.msra.mxu0 %v3601
        %3605 = vmatprep.subr.bf16.mxu0 0
        %3606 = vmatpush1.bf16.msra.mxu0 0
        %3607 = vmatprep.subr.bf16.mxu0 0
        %3608 = vmatpush1.bf16.msra.mxu0 0
        %3609 = vmatprep.subr.bf16.mxu0 0
        %3610 = vmatpush1.bf16.msra.mxu0 0
        %3611 = vmatprep.subr.bf16.mxu0 0
        %3612 = vmatpush1.bf16.msra.mxu0 0
        %3613 = vmatprep.subr.bf16.mxu0 0
        %3614 = vmatpush1.bf16.msra.mxu0 0
        %3615 = vmatprep.subr.bf16.mxu0 0
        %3616 = vmatpush1.bf16.msra.mxu0 0
        %3617 = vmatprep.subr.bf16.mxu0 0
        %3618 = vmatpush1.bf16.msra.mxu0 0
        %3619 = vmatprep.subr.bf16.mxu0 0
        %3620 = vmatpush1.bf16.msra.mxu0 0
        %3621 = vmatprep.subr.bf16.mxu0 0
        %3622 = vmatpush1.bf16.msra.mxu0 0
        %3623 = vmatprep.subr.bf16.mxu0 0
        %3624 = vmatpush1.bf16.msra.mxu0 0
        %3625 = vmatprep.subr.bf16.mxu0 0
        %3626 = vmatpush1.bf16.msra.mxu0 0
        %3627 = vmatprep.subr.bf16.mxu0 0
        %3628 = vmatpush1.bf16.msra.mxu0 0
        %3629 = vmatprep.subr.bf16.mxu0 0
        %3630 = vmatpush1.bf16.msra.mxu0 0
        %3631 = vmatprep.subr.bf16.mxu0 0
        %3632 = vmatpush1.bf16.msra.mxu0 0
        %3633 = vmatprep.subr.bf16.mxu0 0
        %3634 = vmatpush1.bf16.msra.mxu0 0
        %3635 = vmatprep.mubr.bf16.mxu0 0
        %3636 = vmatmul.mubr.bf16.gmra.mrb[0].mxu0 %v3597
        %v3637 = vpop.f32.mrb[0].mxu0
        %v3638 = vadd.f32 0.0, %v3637
        %v3639 = vpop.f32.mrb[0].mxu0
        %v3640 = vpop.f32.mrb[0].mxu0
        %v3641 = vpop.f32.mrb[0].mxu0
        %3642 = vdwg.mxu0
        %v3643 = vadd.f32 %v3589, %v3638
      $region68: #{transformer_block.2} parent=51 // loop_footer
        %s3495 = sadd.s32 %s3493, 1
      $region69: #{transformer_block.2} parent=51 // loop_footer_branch
        %3492 = sbr.rel target = $region65
      $region70: #{transformer_block.2} parent=51 // loop_exit
        _
      %v3644 = vrcp.pop %v3499
      %v3645 = vmul.f32 %v3500, %v3644
      %v3646 = vpack.c.bf16 %v3259, %v3259
      // While loop
      $region71: #{transformer_block.2} parent=51 // loop_pre_header
        _
      $region72: #{transformer_block.2} parent=51 // loop_header
        %s3648 = sphi 0, %s3650
        %p3649 = scmp.ge.s32.totalorder %s3648, %s3350
        %v3653 = vphi -inf, %v3724
        %v3654 = vphi 0.0, %v3735
        %v3655 = vphi 0.0, %v3785
      $region73: #{transformer_block.2} parent=51 // loop_header_branch
        %3652 = sbr.rel (%p3649) target = $region77
      $region74: #{transformer_block.2} parent=51 // loop_body
        %s3656 = smul.u32 %s3648, 8
        %s3657 = sshra.s32 %s3656, 3
        %s3658 = sand.u32 %s3656, 7
        %s3659 = smul.u32 %s3657, 4
        %s3660 = smul.addr %s3659, 4
        %s3661 = scalar_lea.vmem [#allocation2], %s3660
        %v3662 = vld [vmem:[%s3661 + $0x4] sm:$0xf]
        %s3663 = smul.addr %s3659, 4
        %s3664 = scalar_lea.vmem [#allocation3], %s3663
        %v3665 = vld [vmem:[%s3664 + $0x4] sm:$0xf]
        %vm3666 = vcmask 523264
        %v3668 = vsel %vm3666, %v3646, 0
        %v3671 = vsel %vm3666, %v3662, 0
        %3673 = vmatprep.subr.bf16.mxu0 0
        %3674 = vmatpush1.bf16.xpose.msra.mxu0 %v3671
        %3675 = vmatprep.subr.bf16.mxu0 0
        %3676 = vmatpush1.bf16.xpose.msra.mxu0 0
        %3677 = vmatprep.subr.bf16.mxu0 0
        %3678 = vmatpush1.bf16.xpose.msra.mxu0 0
        %3679 = vmatprep.subr.bf16.mxu0 0
        %3680 = vmatpush1.bf16.xpose.msra.mxu0 0
        %3681 = vmatprep.subr.bf16.mxu0 0
        %3682 = vmatpush1.bf16.xpose.msra.mxu0 0
        %3683 = vmatprep.subr.bf16.mxu0 0
        %3684 = vmatpush1.bf16.xpose.msra.mxu0 0
        %3685 = vmatprep.subr.bf16.mxu0 0
        %3686 = vmatpush1.bf16.xpose.msra.mxu0 0
        %3687 = vmatprep.subr.bf16.mxu0 0
        %3688 = vmatpush1.bf16.xpose.msra.mxu0 0
        %3689 = vmatprep.subr.bf16.mxu0 0
        %3690 = vmatpush1.bf16.xpose.msra.mxu0 0
        %3691 = vmatprep.subr.bf16.mxu0 0
        %3692 = vmatpush1.bf16.xpose.msra.mxu0 0
        %3693 = vmatprep.subr.bf16.mxu0 0
        %3694 = vmatpush1.bf16.xpose.msra.mxu0 0
        %3695 = vmatprep.subr.bf16.mxu0 0
        %3696 = vmatpush1.bf16.xpose.msra.mxu0 0
        %3697 = vmatprep.subr.bf16.mxu0 0
        %3698 = vmatpush1.bf16.xpose.msra.mxu0 0
        %3699 = vmatprep.subr.bf16.mxu0 0
        %3700 = vmatpush1.bf16.xpose.msra.mxu0 0
        %3701 = vmatprep.subr.bf16.mxu0 0
        %3702 = vmatpush1.bf16.xpose.msra.mxu0 0
        %3703 = vmatprep.subr.bf16.mxu0 0
        %3704 = vmatpush1.bf16.xpose.msra.mxu0 0
        %3705 = vmatprep.mubr.bf16.mxu0 0
        %3706 = vmatmul.mubr.bf16.gmra.mrb[0].mxu0 %v3668
        %v3707 = vpop.f32.mrb[0].mxu0
        %v3708 = vadd.f32 0.0, %v3707
        %v3709 = vpop.f32.mrb[0].mxu0
        %v3710 = vpop.f32.mrb[0].mxu0
        %v3711 = vpop.f32.mrb[0].mxu0
        %3712 = vdwg.mxu0
        %v3713 = vmul.f32 %v3708, 0.125
        %v3714 = vlaneseq
        %v3715 = vand.u32 %v3714, 127
        %v3716 = vstv %s3656
        %v3717 = vadd.s32 %v3716, %v3715
        %vm3718 = vcmp.le.s32.totalorder %v3717, %v3348
        %v3719 = vsel %vm3718, %v3713, -inf
        %vm3720 = vcmask 64512
        %v3721 = vsel %vm3720, %v3719, -inf
        %3722 = vmax.xlane.f32.xlu0 %v3721
        %v3723 = vpop.xlane.xlu0 %3722
        %v3724 = vmax.f32 %v3653, %v3723
        %v3725 = vsub.f32 %v3653, %v3724
        %v3726 = vmul.f32 %v3725, 1.442695
        %v3727 = vpow.pop %v3726
        %v3728 = vsub.f32 %v3719, %v3724
        %v3729 = vmul.f32 %v3728, 1.442695
        %v3730 = vpow.pop %v3729
        %v3731 = vmul.f32 %v3727, %v3654
        %v3732 = vsel %vm3720, %v3730, 0.0
        %3733 = vadd.xlane.f32.xlu0 %v3732
        %v3734 = vpop.xlane.xlu0 %3733
        %v3735 = vadd.f32 %v3731, %v3734
        %v3736 = vmul.f32 %v3727, %v3655
        %v3737 = vpack.c.bf16 %v3730, %v3730
        %v3739 = vsel %vm3720, %v3737, 0
        %vm3741 = vcmask 1043456
        %v3743 = vsel %vm3741, %v3665, 0
        %3745 = vmatprep.subr.bf16.mxu0 0
        %3746 = vmatpush1.bf16.msra.mxu0 %v3743
        %3747 = vmatprep.subr.bf16.mxu0 0
        %3748 = vmatpush1.bf16.msra.mxu0 0
        %3749 = vmatprep.subr.bf16.mxu0 0
        %3750 = vmatpush1.bf16.msra.mxu0 0
        %3751 = vmatprep.subr.bf16.mxu0 0
        %3752 = vmatpush1.bf16.msra.mxu0 0
        %3753 = vmatprep.subr.bf16.mxu0 0
        %3754 = vmatpush1.bf16.msra.mxu0 0
        %3755 = vmatprep.subr.bf16.mxu0 0
        %3756 = vmatpush1.bf16.msra.mxu0 0
        %3757 = vmatprep.subr.bf16.mxu0 0
        %3758 = vmatpush1.bf16.msra.mxu0 0
        %3759 = vmatprep.subr.bf16.mxu0 0
        %3760 = vmatpush1.bf16.msra.mxu0 0
        %3761 = vmatprep.subr.bf16.mxu0 0
        %3762 = vmatpush1.bf16.msra.mxu0 0
        %3763 = vmatprep.subr.bf16.mxu0 0
        %3764 = vmatpush1.bf16.msra.mxu0 0
        %3765 = vmatprep.subr.bf16.mxu0 0
        %3766 = vmatpush1.bf16.msra.mxu0 0
        %3767 = vmatprep.subr.bf16.mxu0 0
        %3768 = vmatpush1.bf16.msra.mxu0 0
        %3769 = vmatprep.subr.bf16.mxu0 0
        %3770 = vmatpush1.bf16.msra.mxu0 0
        %3771 = vmatprep.subr.bf16.mxu0 0
        %3772 = vmatpush1.bf16.msra.mxu0 0
        %3773 = vmatprep.subr.bf16.mxu0 0
        %3774 = vmatpush1.bf16.msra.mxu0 0
        %3775 = vmatprep.subr.bf16.mxu0 0
        %3776 = vmatpush1.bf16.msra.mxu0 0
        %3777 = vmatprep.mubr.bf16.mxu0 0
        %3778 = vmatmul.mubr.bf16.gmra.mrb[0].mxu0 %v3739
        %v3779 = vpop.f32.mrb[0].mxu0
        %v3780 = vadd.f32 0.0, %v3779
        %v3781 = vpop.f32.mrb[0].mxu0
        %v3782 = vpop.f32.mrb[0].mxu0
        %v3783 = vpop.f32.mrb[0].mxu0
        %3784 = vdwg.mxu0
        %v3785 = vadd.f32 %v3736, %v3780
      $region75: #{transformer_block.2} parent=51 // loop_footer
        %s3650 = sadd.s32 %s3648, 1
      $region76: #{transformer_block.2} parent=51 // loop_footer_branch
        %3647 = sbr.rel target = $region72
      $region77: #{transformer_block.2} parent=51 // loop_exit
        _
      %v3786 = vrcp.pop %v3654
      %v3787 = vmul.f32 %v3655, %v3786
      // While loop
      $region78: #{transformer_block.2} parent=51 // loop_pre_header
        _
      $region79: #{transformer_block.2} parent=51 // loop_header
        %s3789 = sphi 0, %s3791
        %p3790 = scmp.ge.s32.totalorder %s3789, %s3350
        %v3794 = vphi -inf, %v3873
        %v3795 = vphi 0.0, %v3884
        %v3796 = vphi 0.0, %v3939
      $region80: #{transformer_block.2} parent=51 // loop_header_branch
        %3793 = sbr.rel (%p3790) target = $region84
      $region81: #{transformer_block.2} parent=51 // loop_body
        %s3797 = smul.u32 %s3789, 8
        %s3798 = sshra.s32 %s3797, 3
        %s3799 = sand.u32 %s3797, 7
        %s3800 = smul.u32 %s3798, 4
        %s3801 = smul.addr %s3800, 4
        %s3802 = scalar_lea.vmem [#allocation2], %s3801
        %v3803 = vld [vmem:[%s3802 + $0x4] sm:$0xf]
        %s3804 = smul.addr %s3800, 4
        %s3805 = scalar_lea.vmem [#allocation3], %s3804
        %v3806 = vld [vmem:[%s3805 + $0x4] sm:$0xf]
        %3808 = vrot.lane.b32.xlu0 %v3646, 64
        %v3809 = vpop.permute.xlu0 %3808
        %v3811 = vunpack.c.l.b16 %v3803
        %v3812 = vpack.c.b16 %v3811, %v3811
        %3813 = vrot.lane.b32.xlu0 %v3812, 64
        %v3814 = vpop.permute.xlu0 %3813
        %vm3815 = vcmask 523264
        %v3817 = vsel %vm3815, %v3809, 0
        %v3820 = vsel %vm3815, %v3814, 0
        %3822 = vmatprep.subr.bf16.mxu0 0
        %3823 = vmatpush1.bf16.xpose.msra.mxu0 %v3820
        %3824 = vmatprep.subr.bf16.mxu0 0
        %3825 = vmatpush1.bf16.xpose.msra.mxu0 0
        %3826 = vmatprep.subr.bf16.mxu0 0
        %3827 = vmatpush1.bf16.xpose.msra.mxu0 0
        %3828 = vmatprep.subr.bf16.mxu0 0
        %3829 = vmatpush1.bf16.xpose.msra.mxu0 0
        %3830 = vmatprep.subr.bf16.mxu0 0
        %3831 = vmatpush1.bf16.xpose.msra.mxu0 0
        %3832 = vmatprep.subr.bf16.mxu0 0
        %3833 = vmatpush1.bf16.xpose.msra.mxu0 0
        %3834 = vmatprep.subr.bf16.mxu0 0
        %3835 = vmatpush1.bf16.xpose.msra.mxu0 0
        %3836 = vmatprep.subr.bf16.mxu0 0
        %3837 = vmatpush1.bf16.xpose.msra.mxu0 0
        %3838 = vmatprep.subr.bf16.mxu0 0
        %3839 = vmatpush1.bf16.xpose.msra.mxu0 0
        %3840 = vmatprep.subr.bf16.mxu0 0
        %3841 = vmatpush1.bf16.xpose.msra.mxu0 0
        %3842 = vmatprep.subr.bf16.mxu0 0
        %3843 = vmatpush1.bf16.xpose.msra.mxu0 0
        %3844 = vmatprep.subr.bf16.mxu0 0
        %3845 = vmatpush1.bf16.xpose.msra.mxu0 0
        %3846 = vmatprep.subr.bf16.mxu0 0
        %3847 = vmatpush1.bf16.xpose.msra.mxu0 0
        %3848 = vmatprep.subr.bf16.mxu0 0
        %3849 = vmatpush1.bf16.xpose.msra.mxu0 0
        %3850 = vmatprep.subr.bf16.mxu0 0
        %3851 = vmatpush1.bf16.xpose.msra.mxu0 0
        %3852 = vmatprep.subr.bf16.mxu0 0
        %3853 = vmatpush1.bf16.xpose.msra.mxu0 0
        %3854 = vmatprep.mubr.bf16.mxu0 0
        %3855 = vmatmul.mubr.bf16.gmra.mrb[0].mxu0 %v3817
        %v3856 = vpop.f32.mrb[0].mxu0
        %v3857 = vadd.f32 0.0, %v3856
        %v3858 = vpop.f32.mrb[0].mxu0
        %v3859 = vpop.f32.mrb[0].mxu0
        %v3860 = vpop.f32.mrb[0].mxu0
        %3861 = vdwg.mxu0
        %v3862 = vmul.f32 %v3857, 0.125
        %v3863 = vlaneseq
        %v3864 = vand.u32 %v3863, 127
        %v3865 = vstv %s3797
        %v3866 = vadd.s32 %v3865, %v3864
        %vm3867 = vcmp.le.s32.totalorder %v3866, %v3348
        %v3868 = vsel %vm3867, %v3862, -inf
        %vm3869 = vcmask 64512
        %v3870 = vsel %vm3869, %v3868, -inf
        %3871 = vmax.xlane.f32.xlu0 %v3870
        %v3872 = vpop.xlane.xlu0 %3871
        %v3873 = vmax.f32 %v3794, %v3872
        %v3874 = vsub.f32 %v3794, %v3873
        %v3875 = vmul.f32 %v3874, 1.442695
        %v3876 = vpow.pop %v3875
        %v3877 = vsub.f32 %v3868, %v3873
        %v3878 = vmul.f32 %v3877, 1.442695
        %v3879 = vpow.pop %v3878
        %v3880 = vmul.f32 %v3876, %v3795
        %v3881 = vsel %vm3869, %v3879, 0.0
        %3882 = vadd.xlane.f32.xlu0 %v3881
        %v3883 = vpop.xlane.xlu0 %3882
        %v3884 = vadd.f32 %v3880, %v3883
        %v3885 = vmul.f32 %v3876, %v3796
        %v3886 = vpack.c.bf16 %v3879, %v3879
        %v3888 = vunpack.c.l.b16 %v3806
        %v3889 = vpack.c.b16 %v3888, %v3888
        %3890 = vrot.lane.b32.xlu0 %v3889, 64
        %v3891 = vpop.permute.xlu0 %3890
        %v3893 = vsel %vm3869, %v3886, 0
        %vm3895 = vcmask 1043456
        %v3897 = vsel %vm3895, %v3891, 0
        %3899 = vmatprep.subr.bf16.mxu0 0
        %3900 = vmatpush1.bf16.msra.mxu0 %v3897
        %3901 = vmatprep.subr.bf16.mxu0 0
        %3902 = vmatpush1.bf16.msra.mxu0 0
        %3903 = vmatprep.subr.bf16.mxu0 0
        %3904 = vmatpush1.bf16.msra.mxu0 0
        %3905 = vmatprep.subr.bf16.mxu0 0
        %3906 = vmatpush1.bf16.msra.mxu0 0
        %3907 = vmatprep.subr.bf16.mxu0 0
        %3908 = vmatpush1.bf16.msra.mxu0 0
        %3909 = vmatprep.subr.bf16.mxu0 0
        %3910 = vmatpush1.bf16.msra.mxu0 0
        %3911 = vmatprep.subr.bf16.mxu0 0
        %3912 = vmatpush1.bf16.msra.mxu0 0
        %3913 = vmatprep.subr.bf16.mxu0 0
        %3914 = vmatpush1.bf16.msra.mxu0 0
        %3915 = vmatprep.subr.bf16.mxu0 0
        %3916 = vmatpush1.bf16.msra.mxu0 0
        %3917 = vmatprep.subr.bf16.mxu0 0
        %3918 = vmatpush1.bf16.msra.mxu0 0
        %3919 = vmatprep.subr.bf16.mxu0 0
        %3920 = vmatpush1.bf16.msra.mxu0 0
        %3921 = vmatprep.subr.bf16.mxu0 0
        %3922 = vmatpush1.bf16.msra.mxu0 0
        %3923 = vmatprep.subr.bf16.mxu0 0
        %3924 = vmatpush1.bf16.msra.mxu0 0
        %3925 = vmatprep.subr.bf16.mxu0 0
        %3926 = vmatpush1.bf16.msra.mxu0 0
        %3927 = vmatprep.subr.bf16.mxu0 0
        %3928 = vmatpush1.bf16.msra.mxu0 0
        %3929 = vmatprep.subr.bf16.mxu0 0
        %3930 = vmatpush1.bf16.msra.mxu0 0
        %3931 = vmatprep.mubr.bf16.mxu0 0
        %3932 = vmatmul.mubr.bf16.gmra.mrb[0].mxu0 %v3893
        %v3933 = vpop.f32.mrb[0].mxu0
        %v3934 = vadd.f32 0.0, %v3933
        %v3935 = vpop.f32.mrb[0].mxu0
        %v3936 = vpop.f32.mrb[0].mxu0
        %v3937 = vpop.f32.mrb[0].mxu0
        %3938 = vdwg.mxu0
        %v3939 = vadd.f32 %v3885, %v3934
      $region82: #{transformer_block.2} parent=51 // loop_footer
        %s3791 = sadd.s32 %s3789, 1
      $region83: #{transformer_block.2} parent=51 // loop_footer_branch
        %3788 = sbr.rel target = $region79
      $region84: #{transformer_block.2} parent=51 // loop_exit
        _
      %v3940 = vrcp.pop %v3795
      %v3941 = vmul.f32 %v3796, %v3940
      %v3942 = vpack.c.bf16 %v3339, %v3339
      // While loop
      $region85: #{transformer_block.2} parent=51 // loop_pre_header
        _
      $region86: #{transformer_block.2} parent=51 // loop_header
        %s3944 = sphi 0, %s3946
        %p3945 = scmp.ge.s32.totalorder %s3944, %s3350
        %v3949 = vphi -inf, %v4020
        %v3950 = vphi 0.0, %v4031
        %v3951 = vphi 0.0, %v4081
      $region87: #{transformer_block.2} parent=51 // loop_header_branch
        %3948 = sbr.rel (%p3945) target = $region91
      $region88: #{transformer_block.2} parent=51 // loop_body
        %s3952 = smul.u32 %s3944, 8
        %s3953 = sshra.s32 %s3952, 3
        %s3954 = sand.u32 %s3952, 7
        %s3955 = smul.u32 %s3953, 4
        %s3956 = smul.addr %s3955, 4
        %s3957 = scalar_lea.vmem [#allocation2], %s3956
        %v3958 = vld [vmem:[%s3957 + $0x8] sm:$0xf]
        %s3959 = smul.addr %s3955, 4
        %s3960 = scalar_lea.vmem [#allocation3], %s3959
        %v3961 = vld [vmem:[%s3960 + $0x8] sm:$0xf]
        %vm3962 = vcmask 523264
        %v3964 = vsel %vm3962, %v3942, 0
        %v3967 = vsel %vm3962, %v3958, 0
        %3969 = vmatprep.subr.bf16.mxu0 0
        %3970 = vmatpush1.bf16.xpose.msra.mxu0 %v3967
        %3971 = vmatprep.subr.bf16.mxu0 0
        %3972 = vmatpush1.bf16.xpose.msra.mxu0 0
        %3973 = vmatprep.subr.bf16.mxu0 0
        %3974 = vmatpush1.bf16.xpose.msra.mxu0 0
        %3975 = vmatprep.subr.bf16.mxu0 0
        %3976 = vmatpush1.bf16.xpose.msra.mxu0 0
        %3977 = vmatprep.subr.bf16.mxu0 0
        %3978 = vmatpush1.bf16.xpose.msra.mxu0 0
        %3979 = vmatprep.subr.bf16.mxu0 0
        %3980 = vmatpush1.bf16.xpose.msra.mxu0 0
        %3981 = vmatprep.subr.bf16.mxu0 0
        %3982 = vmatpush1.bf16.xpose.msra.mxu0 0
        %3983 = vmatprep.subr.bf16.mxu0 0
        %3984 = vmatpush1.bf16.xpose.msra.mxu0 0
        %3985 = vmatprep.subr.bf16.mxu0 0
        %3986 = vmatpush1.bf16.xpose.msra.mxu0 0
        %3987 = vmatprep.subr.bf16.mxu0 0
        %3988 = vmatpush1.bf16.xpose.msra.mxu0 0
        %3989 = vmatprep.subr.bf16.mxu0 0
        %3990 = vmatpush1.bf16.xpose.msra.mxu0 0
        %3991 = vmatprep.subr.bf16.mxu0 0
        %3992 = vmatpush1.bf16.xpose.msra.mxu0 0
        %3993 = vmatprep.subr.bf16.mxu0 0
        %3994 = vmatpush1.bf16.xpose.msra.mxu0 0
        %3995 = vmatprep.subr.bf16.mxu0 0
        %3996 = vmatpush1.bf16.xpose.msra.mxu0 0
        %3997 = vmatprep.subr.bf16.mxu0 0
        %3998 = vmatpush1.bf16.xpose.msra.mxu0 0
        %3999 = vmatprep.subr.bf16.mxu0 0
        %4000 = vmatpush1.bf16.xpose.msra.mxu0 0
        %4001 = vmatprep.mubr.bf16.mxu0 0
        %4002 = vmatmul.mubr.bf16.gmra.mrb[0].mxu0 %v3964
        %v4003 = vpop.f32.mrb[0].mxu0
        %v4004 = vadd.f32 0.0, %v4003
        %v4005 = vpop.f32.mrb[0].mxu0
        %v4006 = vpop.f32.mrb[0].mxu0
        %v4007 = vpop.f32.mrb[0].mxu0
        %4008 = vdwg.mxu0
        %v4009 = vmul.f32 %v4004, 0.125
        %v4010 = vlaneseq
        %v4011 = vand.u32 %v4010, 127
        %v4012 = vstv %s3952
        %v4013 = vadd.s32 %v4012, %v4011
        %vm4014 = vcmp.le.s32.totalorder %v4013, %v3348
        %v4015 = vsel %vm4014, %v4009, -inf
        %vm4016 = vcmask 64512
        %v4017 = vsel %vm4016, %v4015, -inf
        %4018 = vmax.xlane.f32.xlu0 %v4017
        %v4019 = vpop.xlane.xlu0 %4018
        %v4020 = vmax.f32 %v3949, %v4019
        %v4021 = vsub.f32 %v3949, %v4020
        %v4022 = vmul.f32 %v4021, 1.442695
        %v4023 = vpow.pop %v4022
        %v4024 = vsub.f32 %v4015, %v4020
        %v4025 = vmul.f32 %v4024, 1.442695
        %v4026 = vpow.pop %v4025
        %v4027 = vmul.f32 %v4023, %v3950
        %v4028 = vsel %vm4016, %v4026, 0.0
        %4029 = vadd.xlane.f32.xlu0 %v4028
        %v4030 = vpop.xlane.xlu0 %4029
        %v4031 = vadd.f32 %v4027, %v4030
        %v4032 = vmul.f32 %v4023, %v3951
        %v4033 = vpack.c.bf16 %v4026, %v4026
        %v4035 = vsel %vm4016, %v4033, 0
        %vm4037 = vcmask 1043456
        %v4039 = vsel %vm4037, %v3961, 0
        %4041 = vmatprep.subr.bf16.mxu0 0
        %4042 = vmatpush1.bf16.msra.mxu0 %v4039
        %4043 = vmatprep.subr.bf16.mxu0 0
        %4044 = vmatpush1.bf16.msra.mxu0 0
        %4045 = vmatprep.subr.bf16.mxu0 0
        %4046 = vmatpush1.bf16.msra.mxu0 0
        %4047 = vmatprep.subr.bf16.mxu0 0
        %4048 = vmatpush1.bf16.msra.mxu0 0
        %4049 = vmatprep.subr.bf16.mxu0 0
        %4050 = vmatpush1.bf16.msra.mxu0 0
        %4051 = vmatprep.subr.bf16.mxu0 0
        %4052 = vmatpush1.bf16.msra.mxu0 0
        %4053 = vmatprep.subr.bf16.mxu0 0
        %4054 = vmatpush1.bf16.msra.mxu0 0
        %4055 = vmatprep.subr.bf16.mxu0 0
        %4056 = vmatpush1.bf16.msra.mxu0 0
        %4057 = vmatprep.subr.bf16.mxu0 0
        %4058 = vmatpush1.bf16.msra.mxu0 0
        %4059 = vmatprep.subr.bf16.mxu0 0
        %4060 = vmatpush1.bf16.msra.mxu0 0
        %4061 = vmatprep.subr.bf16.mxu0 0
        %4062 = vmatpush1.bf16.msra.mxu0 0
        %4063 = vmatprep.subr.bf16.mxu0 0
        %4064 = vmatpush1.bf16.msra.mxu0 0
        %4065 = vmatprep.subr.bf16.mxu0 0
        %4066 = vmatpush1.bf16.msra.mxu0 0
        %4067 = vmatprep.subr.bf16.mxu0 0
        %4068 = vmatpush1.bf16.msra.mxu0 0
        %4069 = vmatprep.subr.bf16.mxu0 0
        %4070 = vmatpush1.bf16.msra.mxu0 0
        %4071 = vmatprep.subr.bf16.mxu0 0
        %4072 = vmatpush1.bf16.msra.mxu0 0
        %4073 = vmatprep.mubr.bf16.mxu0 0
        %4074 = vmatmul.mubr.bf16.gmra.mrb[0].mxu0 %v4035
        %v4075 = vpop.f32.mrb[0].mxu0
        %v4076 = vadd.f32 0.0, %v4075
        %v4077 = vpop.f32.mrb[0].mxu0
        %v4078 = vpop.f32.mrb[0].mxu0
        %v4079 = vpop.f32.mrb[0].mxu0
        %4080 = vdwg.mxu0
        %v4081 = vadd.f32 %v4032, %v4076
      $region89: #{transformer_block.2} parent=51 // loop_footer
        %s3946 = sadd.s32 %s3944, 1
      $region90: #{transformer_block.2} parent=51 // loop_footer_branch
        %3943 = sbr.rel target = $region86
      $region91: #{transformer_block.2} parent=51 // loop_exit
        _
      %v4082 = vrcp.pop %v3950
      %v4083 = vmul.f32 %v3951, %v4082
      // While loop
      $region92: #{transformer_block.2} parent=51 // loop_pre_header
        _
      $region93: #{transformer_block.2} parent=51 // loop_header
        %s4085 = sphi 0, %s4087
        %p4086 = scmp.ge.s32.totalorder %s4085, %s3350
        %v4090 = vphi -inf, %v4169
        %v4091 = vphi 0.0, %v4180
        %v4092 = vphi 0.0, %v4235
      $region94: #{transformer_block.2} parent=51 // loop_header_branch
        %4089 = sbr.rel (%p4086) target = $region98
      $region95: #{transformer_block.2} parent=51 // loop_body
        %s4093 = smul.u32 %s4085, 8
        %s4094 = sshra.s32 %s4093, 3
        %s4095 = sand.u32 %s4093, 7
        %s4096 = smul.u32 %s4094, 4
        %s4097 = smul.addr %s4096, 4
        %s4098 = scalar_lea.vmem [#allocation2], %s4097
        %v4099 = vld [vmem:[%s4098 + $0x8] sm:$0xf]
        %s4100 = smul.addr %s4096, 4
        %s4101 = scalar_lea.vmem [#allocation3], %s4100
        %v4102 = vld [vmem:[%s4101 + $0x8] sm:$0xf]
        %4104 = vrot.lane.b32.xlu0 %v3942, 64
        %v4105 = vpop.permute.xlu0 %4104
        %v4107 = vunpack.c.l.b16 %v4099
        %v4108 = vpack.c.b16 %v4107, %v4107
        %4109 = vrot.lane.b32.xlu0 %v4108, 64
        %v4110 = vpop.permute.xlu0 %4109
        %vm4111 = vcmask 523264
        %v4113 = vsel %vm4111, %v4105, 0
        %v4116 = vsel %vm4111, %v4110, 0
        %4118 = vmatprep.subr.bf16.mxu0 0
        %4119 = vmatpush1.bf16.xpose.msra.mxu0 %v4116
        %4120 = vmatprep.subr.bf16.mxu0 0
        %4121 = vmatpush1.bf16.xpose.msra.mxu0 0
        %4122 = vmatprep.subr.bf16.mxu0 0
        %4123 = vmatpush1.bf16.xpose.msra.mxu0 0
        %4124 = vmatprep.subr.bf16.mxu0 0
        %4125 = vmatpush1.bf16.xpose.msra.mxu0 0
        %4126 = vmatprep.subr.bf16.mxu0 0
        %4127 = vmatpush1.bf16.xpose.msra.mxu0 0
        %4128 = vmatprep.subr.bf16.mxu0 0
        %4129 = vmatpush1.bf16.xpose.msra.mxu0 0
        %4130 = vmatprep.subr.bf16.mxu0 0
        %4131 = vmatpush1.bf16.xpose.msra.mxu0 0
        %4132 = vmatprep.subr.bf16.mxu0 0
        %4133 = vmatpush1.bf16.xpose.msra.mxu0 0
        %4134 = vmatprep.subr.bf16.mxu0 0
        %4135 = vmatpush1.bf16.xpose.msra.mxu0 0
        %4136 = vmatprep.subr.bf16.mxu0 0
        %4137 = vmatpush1.bf16.xpose.msra.mxu0 0
        %4138 = vmatprep.subr.bf16.mxu0 0
        %4139 = vmatpush1.bf16.xpose.msra.mxu0 0
        %4140 = vmatprep.subr.bf16.mxu0 0
        %4141 = vmatpush1.bf16.xpose.msra.mxu0 0
        %4142 = vmatprep.subr.bf16.mxu0 0
        %4143 = vmatpush1.bf16.xpose.msra.mxu0 0
        %4144 = vmatprep.subr.bf16.mxu0 0
        %4145 = vmatpush1.bf16.xpose.msra.mxu0 0
        %4146 = vmatprep.subr.bf16.mxu0 0
        %4147 = vmatpush1.bf16.xpose.msra.mxu0 0
        %4148 = vmatprep.subr.bf16.mxu0 0
        %4149 = vmatpush1.bf16.xpose.msra.mxu0 0
        %4150 = vmatprep.mubr.bf16.mxu0 0
        %4151 = vmatmul.mubr.bf16.gmra.mrb[0].mxu0 %v4113
        %v4152 = vpop.f32.mrb[0].mxu0
        %v4153 = vadd.f32 0.0, %v4152
        %v4154 = vpop.f32.mrb[0].mxu0
        %v4155 = vpop.f32.mrb[0].mxu0
        %v4156 = vpop.f32.mrb[0].mxu0
        %4157 = vdwg.mxu0
        %v4158 = vmul.f32 %v4153, 0.125
        %v4159 = vlaneseq
        %v4160 = vand.u32 %v4159, 127
        %v4161 = vstv %s4093
        %v4162 = vadd.s32 %v4161, %v4160
        %vm4163 = vcmp.le.s32.totalorder %v4162, %v3348
        %v4164 = vsel %vm4163, %v4158, -inf
        %vm4165 = vcmask 64512
        %v4166 = vsel %vm4165, %v4164, -inf
        %4167 = vmax.xlane.f32.xlu0 %v4166
        %v4168 = vpop.xlane.xlu0 %4167
        %v4169 = vmax.f32 %v4090, %v4168
        %v4170 = vsub.f32 %v4090, %v4169
        %v4171 = vmul.f32 %v4170, 1.442695
        %v4172 = vpow.pop %v4171
        %v4173 = vsub.f32 %v4164, %v4169
        %v4174 = vmul.f32 %v4173, 1.442695
        %v4175 = vpow.pop %v4174
        %v4176 = vmul.f32 %v4172, %v4091
        %v4177 = vsel %vm4165, %v4175, 0.0
        %4178 = vadd.xlane.f32.xlu0 %v4177
        %v4179 = vpop.xlane.xlu0 %4178
        %v4180 = vadd.f32 %v4176, %v4179
        %v4181 = vmul.f32 %v4172, %v4092
        %v4182 = vpack.c.bf16 %v4175, %v4175
        %v4184 = vunpack.c.l.b16 %v4102
        %v4185 = vpack.c.b16 %v4184, %v4184
        %4186 = vrot.lane.b32.xlu0 %v4185, 64
        %v4187 = vpop.permute.xlu0 %4186
        %v4189 = vsel %vm4165, %v4182, 0
        %vm4191 = vcmask 1043456
        %v4193 = vsel %vm4191, %v4187, 0
        %4195 = vmatprep.subr.bf16.mxu0 0
        %4196 = vmatpush1.bf16.msra.mxu0 %v4193
        %4197 = vmatprep.subr.bf16.mxu0 0
        %4198 = vmatpush1.bf16.msra.mxu0 0
        %4199 = vmatprep.subr.bf16.mxu0 0
        %4200 = vmatpush1.bf16.msra.mxu0 0
        %4201 = vmatprep.subr.bf16.mxu0 0
        %4202 = vmatpush1.bf16.msra.mxu0 0
        %4203 = vmatprep.subr.bf16.mxu0 0
        %4204 = vmatpush1.bf16.msra.mxu0 0
        %4205 = vmatprep.subr.bf16.mxu0 0
        %4206 = vmatpush1.bf16.msra.mxu0 0
        %4207 = vmatprep.subr.bf16.mxu0 0
        %4208 = vmatpush1.bf16.msra.mxu0 0
        %4209 = vmatprep.subr.bf16.mxu0 0
        %4210 = vmatpush1.bf16.msra.mxu0 0
        %4211 = vmatprep.subr.bf16.mxu0 0
        %4212 = vmatpush1.bf16.msra.mxu0 0
        %4213 = vmatprep.subr.bf16.mxu0 0
        %4214 = vmatpush1.bf16.msra.mxu0 0
        %4215 = vmatprep.subr.bf16.mxu0 0
        %4216 = vmatpush1.bf16.msra.mxu0 0
        %4217 = vmatprep.subr.bf16.mxu0 0
        %4218 = vmatpush1.bf16.msra.mxu0 0
        %4219 = vmatprep.subr.bf16.mxu0 0
        %4220 = vmatpush1.bf16.msra.mxu0 0
        %4221 = vmatprep.subr.bf16.mxu0 0
        %4222 = vmatpush1.bf16.msra.mxu0 0
        %4223 = vmatprep.subr.bf16.mxu0 0
        %4224 = vmatpush1.bf16.msra.mxu0 0
        %4225 = vmatprep.subr.bf16.mxu0 0
        %4226 = vmatpush1.bf16.msra.mxu0 0
        %4227 = vmatprep.mubr.bf16.mxu0 0
        %4228 = vmatmul.mubr.bf16.gmra.mrb[0].mxu0 %v4189
        %v4229 = vpop.f32.mrb[0].mxu0
        %v4230 = vadd.f32 0.0, %v4229
        %v4231 = vpop.f32.mrb[0].mxu0
        %v4232 = vpop.f32.mrb[0].mxu0
        %v4233 = vpop.f32.mrb[0].mxu0
        %4234 = vdwg.mxu0
        %v4235 = vadd.f32 %v4181, %v4230
      $region96: #{transformer_block.2} parent=51 // loop_footer
        %s4087 = sadd.s32 %s4085, 1
      $region97: #{transformer_block.2} parent=51 // loop_footer_branch
        %4084 = sbr.rel target = $region93
      $region98: #{transformer_block.2} parent=51 // loop_exit
        _
      %v4236 = vrcp.pop %v4091
      %v4237 = vmul.f32 %v4092, %v4236
      %v4238 = vpack.c.bf16 %v3341, %v3341
      // While loop
      $region99: #{transformer_block.2} parent=51 // loop_pre_header
        _
      $region100: #{transformer_block.2} parent=51 // loop_header
        %s4240 = sphi 0, %s4242
        %p4241 = scmp.ge.s32.totalorder %s4240, %s3350
        %v4245 = vphi -inf, %v4316
        %v4246 = vphi 0.0, %v4327
        %v4247 = vphi 0.0, %v4377
      $region101: #{transformer_block.2} parent=51 // loop_header_branch
        %4244 = sbr.rel (%p4241) target = $region105
      $region102: #{transformer_block.2} parent=51 // loop_body
        %s4248 = smul.u32 %s4240, 8
        %s4249 = sshra.s32 %s4248, 3
        %s4250 = sand.u32 %s4248, 7
        %s4251 = smul.u32 %s4249, 4
        %s4252 = smul.addr %s4251, 4
        %s4253 = scalar_lea.vmem [#allocation2], %s4252
        %v4254 = vld [vmem:[%s4253 + $0xc] sm:$0xf]
        %s4255 = smul.addr %s4251, 4
        %s4256 = scalar_lea.vmem [#allocation3], %s4255
        %v4257 = vld [vmem:[%s4256 + $0xc] sm:$0xf]
        %vm4258 = vcmask 523264
        %v4260 = vsel %vm4258, %v4238, 0
        %v4263 = vsel %vm4258, %v4254, 0
        %4265 = vmatprep.subr.bf16.mxu0 0
        %4266 = vmatpush1.bf16.xpose.msra.mxu0 %v4263
        %4267 = vmatprep.subr.bf16.mxu0 0
        %4268 = vmatpush1.bf16.xpose.msra.mxu0 0
        %4269 = vmatprep.subr.bf16.mxu0 0
        %4270 = vmatpush1.bf16.xpose.msra.mxu0 0
        %4271 = vmatprep.subr.bf16.mxu0 0
        %4272 = vmatpush1.bf16.xpose.msra.mxu0 0
        %4273 = vmatprep.subr.bf16.mxu0 0
        %4274 = vmatpush1.bf16.xpose.msra.mxu0 0
        %4275 = vmatprep.subr.bf16.mxu0 0
        %4276 = vmatpush1.bf16.xpose.msra.mxu0 0
        %4277 = vmatprep.subr.bf16.mxu0 0
        %4278 = vmatpush1.bf16.xpose.msra.mxu0 0
        %4279 = vmatprep.subr.bf16.mxu0 0
        %4280 = vmatpush1.bf16.xpose.msra.mxu0 0
        %4281 = vmatprep.subr.bf16.mxu0 0
        %4282 = vmatpush1.bf16.xpose.msra.mxu0 0
        %4283 = vmatprep.subr.bf16.mxu0 0
        %4284 = vmatpush1.bf16.xpose.msra.mxu0 0
        %4285 = vmatprep.subr.bf16.mxu0 0
        %4286 = vmatpush1.bf16.xpose.msra.mxu0 0
        %4287 = vmatprep.subr.bf16.mxu0 0
        %4288 = vmatpush1.bf16.xpose.msra.mxu0 0
        %4289 = vmatprep.subr.bf16.mxu0 0
        %4290 = vmatpush1.bf16.xpose.msra.mxu0 0
        %4291 = vmatprep.subr.bf16.mxu0 0
        %4292 = vmatpush1.bf16.xpose.msra.mxu0 0
        %4293 = vmatprep.subr.bf16.mxu0 0
        %4294 = vmatpush1.bf16.xpose.msra.mxu0 0
        %4295 = vmatprep.subr.bf16.mxu0 0
        %4296 = vmatpush1.bf16.xpose.msra.mxu0 0
        %4297 = vmatprep.mubr.bf16.mxu0 0
        %4298 = vmatmul.mubr.bf16.gmra.mrb[0].mxu0 %v4260
        %v4299 = vpop.f32.mrb[0].mxu0
        %v4300 = vadd.f32 0.0, %v4299
        %v4301 = vpop.f32.mrb[0].mxu0
        %v4302 = vpop.f32.mrb[0].mxu0
        %v4303 = vpop.f32.mrb[0].mxu0
        %4304 = vdwg.mxu0
        %v4305 = vmul.f32 %v4300, 0.125
        %v4306 = vlaneseq
        %v4307 = vand.u32 %v4306, 127
        %v4308 = vstv %s4248
        %v4309 = vadd.s32 %v4308, %v4307
        %vm4310 = vcmp.le.s32.totalorder %v4309, %v3348
        %v4311 = vsel %vm4310, %v4305, -inf
        %vm4312 = vcmask 64512
        %v4313 = vsel %vm4312, %v4311, -inf
        %4314 = vmax.xlane.f32.xlu0 %v4313
        %v4315 = vpop.xlane.xlu0 %4314
        %v4316 = vmax.f32 %v4245, %v4315
        %v4317 = vsub.f32 %v4245, %v4316
        %v4318 = vmul.f32 %v4317, 1.442695
        %v4319 = vpow.pop %v4318
        %v4320 = vsub.f32 %v4311, %v4316
        %v4321 = vmul.f32 %v4320, 1.442695
        %v4322 = vpow.pop %v4321
        %v4323 = vmul.f32 %v4319, %v4246
        %v4324 = vsel %vm4312, %v4322, 0.0
        %4325 = vadd.xlane.f32.xlu0 %v4324
        %v4326 = vpop.xlane.xlu0 %4325
        %v4327 = vadd.f32 %v4323, %v4326
        %v4328 = vmul.f32 %v4319, %v4247
        %v4329 = vpack.c.bf16 %v4322, %v4322
        %v4331 = vsel %vm4312, %v4329, 0
        %vm4333 = vcmask 1043456
        %v4335 = vsel %vm4333, %v4257, 0
        %4337 = vmatprep.subr.bf16.mxu0 0
        %4338 = vmatpush1.bf16.msra.mxu0 %v4335
        %4339 = vmatprep.subr.bf16.mxu0 0
        %4340 = vmatpush1.bf16.msra.mxu0 0
        %4341 = vmatprep.subr.bf16.mxu0 0
        %4342 = vmatpush1.bf16.msra.mxu0 0
        %4343 = vmatprep.subr.bf16.mxu0 0
        %4344 = vmatpush1.bf16.msra.mxu0 0
        %4345 = vmatprep.subr.bf16.mxu0 0
        %4346 = vmatpush1.bf16.msra.mxu0 0
        %4347 = vmatprep.subr.bf16.mxu0 0
        %4348 = vmatpush1.bf16.msra.mxu0 0
        %4349 = vmatprep.subr.bf16.mxu0 0
        %4350 = vmatpush1.bf16.msra.mxu0 0
        %4351 = vmatprep.subr.bf16.mxu0 0
        %4352 = vmatpush1.bf16.msra.mxu0 0
        %4353 = vmatprep.subr.bf16.mxu0 0
        %4354 = vmatpush1.bf16.msra.mxu0 0
        %4355 = vmatprep.subr.bf16.mxu0 0
        %4356 = vmatpush1.bf16.msra.mxu0 0
        %4357 = vmatprep.subr.bf16.mxu0 0
        %4358 = vmatpush1.bf16.msra.mxu0 0
        %4359 = vmatprep.subr.bf16.mxu0 0
        %4360 = vmatpush1.bf16.msra.mxu0 0
        %4361 = vmatprep.subr.bf16.mxu0 0
        %4362 = vmatpush1.bf16.msra.mxu0 0
        %4363 = vmatprep.subr.bf16.mxu0 0
        %4364 = vmatpush1.bf16.msra.mxu0 0
        %4365 = vmatprep.subr.bf16.mxu0 0
        %4366 = vmatpush1.bf16.msra.mxu0 0
        %4367 = vmatprep.subr.bf16.mxu0 0
        %4368 = vmatpush1.bf16.msra.mxu0 0
        %4369 = vmatprep.mubr.bf16.mxu0 0
        %4370 = vmatmul.mubr.bf16.gmra.mrb[0].mxu0 %v4331
        %v4371 = vpop.f32.mrb[0].mxu0
        %v4372 = vadd.f32 0.0, %v4371
        %v4373 = vpop.f32.mrb[0].mxu0
        %v4374 = vpop.f32.mrb[0].mxu0
        %v4375 = vpop.f32.mrb[0].mxu0
        %4376 = vdwg.mxu0
        %v4377 = vadd.f32 %v4328, %v4372
      $region103: #{transformer_block.2} parent=51 // loop_footer
        %s4242 = sadd.s32 %s4240, 1
      $region104: #{transformer_block.2} parent=51 // loop_footer_branch
        %4239 = sbr.rel target = $region100
      $region105: #{transformer_block.2} parent=51 // loop_exit
        _
      %v4378 = vrcp.pop %v4246
      %v4379 = vmul.f32 %v4247, %v4378
      // While loop
      $region106: #{transformer_block.2} parent=51 // loop_pre_header
        _
      $region107: #{transformer_block.2} parent=51 // loop_header
        %s4381 = sphi 0, %s4383
        %p4382 = scmp.ge.s32.totalorder %s4381, %s3350
        %v4386 = vphi -inf, %v4465
        %v4387 = vphi 0.0, %v4476
        %v4388 = vphi 0.0, %v4531
      $region108: #{transformer_block.2} parent=51 // loop_header_branch
        %4385 = sbr.rel (%p4382) target = $region112
      $region109: #{transformer_block.2} parent=51 // loop_body
        %s4389 = smul.u32 %s4381, 8
        %s4390 = sshra.s32 %s4389, 3
        %s4391 = sand.u32 %s4389, 7
        %s4392 = smul.u32 %s4390, 4
        %s4393 = smul.addr %s4392, 4
        %s4394 = scalar_lea.vmem [#allocation2], %s4393
        %v4395 = vld [vmem:[%s4394 + $0xc] sm:$0xf]
        %s4396 = smul.addr %s4392, 4
        %s4397 = scalar_lea.vmem [#allocation3], %s4396
        %v4398 = vld [vmem:[%s4397 + $0xc] sm:$0xf]
        %4400 = vrot.lane.b32.xlu0 %v4238, 64
        %v4401 = vpop.permute.xlu0 %4400
        %v4403 = vunpack.c.l.b16 %v4395
        %v4404 = vpack.c.b16 %v4403, %v4403
        %4405 = vrot.lane.b32.xlu0 %v4404, 64
        %v4406 = vpop.permute.xlu0 %4405
        %vm4407 = vcmask 523264
        %v4409 = vsel %vm4407, %v4401, 0
        %v4412 = vsel %vm4407, %v4406, 0
        %4414 = vmatprep.subr.bf16.mxu0 0
        %4415 = vmatpush1.bf16.xpose.msra.mxu0 %v4412
        %4416 = vmatprep.subr.bf16.mxu0 0
        %4417 = vmatpush1.bf16.xpose.msra.mxu0 0
        %4418 = vmatprep.subr.bf16.mxu0 0
        %4419 = vmatpush1.bf16.xpose.msra.mxu0 0
        %4420 = vmatprep.subr.bf16.mxu0 0
        %4421 = vmatpush1.bf16.xpose.msra.mxu0 0
        %4422 = vmatprep.subr.bf16.mxu0 0
        %4423 = vmatpush1.bf16.xpose.msra.mxu0 0
        %4424 = vmatprep.subr.bf16.mxu0 0
        %4425 = vmatpush1.bf16.xpose.msra.mxu0 0
        %4426 = vmatprep.subr.bf16.mxu0 0
        %4427 = vmatpush1.bf16.xpose.msra.mxu0 0
        %4428 = vmatprep.subr.bf16.mxu0 0
        %4429 = vmatpush1.bf16.xpose.msra.mxu0 0
        %4430 = vmatprep.subr.bf16.mxu0 0
        %4431 = vmatpush1.bf16.xpose.msra.mxu0 0
        %4432 = vmatprep.subr.bf16.mxu0 0
        %4433 = vmatpush1.bf16.xpose.msra.mxu0 0
        %4434 = vmatprep.subr.bf16.mxu0 0
        %4435 = vmatpush1.bf16.xpose.msra.mxu0 0
        %4436 = vmatprep.subr.bf16.mxu0 0
        %4437 = vmatpush1.bf16.xpose.msra.mxu0 0
        %4438 = vmatprep.subr.bf16.mxu0 0
        %4439 = vmatpush1.bf16.xpose.msra.mxu0 0
        %4440 = vmatprep.subr.bf16.mxu0 0
        %4441 = vmatpush1.bf16.xpose.msra.mxu0 0
        %4442 = vmatprep.subr.bf16.mxu0 0
        %4443 = vmatpush1.bf16.xpose.msra.mxu0 0
        %4444 = vmatprep.subr.bf16.mxu0 0
        %4445 = vmatpush1.bf16.xpose.msra.mxu0 0
        %4446 = vmatprep.mubr.bf16.mxu0 0
        %4447 = vmatmul.mubr.bf16.gmra.mrb[0].mxu0 %v4409
        %v4448 = vpop.f32.mrb[0].mxu0
        %v4449 = vadd.f32 0.0, %v4448
        %v4450 = vpop.f32.mrb[0].mxu0
        %v4451 = vpop.f32.mrb[0].mxu0
        %v4452 = vpop.f32.mrb[0].mxu0
        %4453 = vdwg.mxu0
        %v4454 = vmul.f32 %v4449, 0.125
        %v4455 = vlaneseq
        %v4456 = vand.u32 %v4455, 127
        %v4457 = vstv %s4389
        %v4458 = vadd.s32 %v4457, %v4456
        %vm4459 = vcmp.le.s32.totalorder %v4458, %v3348
        %v4460 = vsel %vm4459, %v4454, -inf
        %vm4461 = vcmask 64512
        %v4462 = vsel %vm4461, %v4460, -inf
        %4463 = vmax.xlane.f32.xlu0 %v4462
        %v4464 = vpop.xlane.xlu0 %4463
        %v4465 = vmax.f32 %v4386, %v4464
        %v4466 = vsub.f32 %v4386, %v4465
        %v4467 = vmul.f32 %v4466, 1.442695
        %v4468 = vpow.pop %v4467
        %v4469 = vsub.f32 %v4460, %v4465
        %v4470 = vmul.f32 %v4469, 1.442695
        %v4471 = vpow.pop %v4470
        %v4472 = vmul.f32 %v4468, %v4387
        %v4473 = vsel %vm4461, %v4471, 0.0
        %4474 = vadd.xlane.f32.xlu0 %v4473
        %v4475 = vpop.xlane.xlu0 %4474
        %v4476 = vadd.f32 %v4472, %v4475
        %v4477 = vmul.f32 %v4468, %v4388
        %v4478 = vpack.c.bf16 %v4471, %v4471
        %v4480 = vunpack.c.l.b16 %v4398
        %v4481 = vpack.c.b16 %v4480, %v4480
        %4482 = vrot.lane.b32.xlu0 %v4481, 64
        %v4483 = vpop.permute.xlu0 %4482
        %v4485 = vsel %vm4461, %v4478, 0
        %vm4487 = vcmask 1043456
        %v4489 = vsel %vm4487, %v4483, 0
        %4491 = vmatprep.subr.bf16.mxu0 0
        %4492 = vmatpush1.bf16.msra.mxu0 %v4489
        %4493 = vmatprep.subr.bf16.mxu0 0
        %4494 = vmatpush1.bf16.msra.mxu0 0
        %4495 = vmatprep.subr.bf16.mxu0 0
        %4496 = vmatpush1.bf16.msra.mxu0 0
        %4497 = vmatprep.subr.bf16.mxu0 0
        %4498 = vmatpush1.bf16.msra.mxu0 0
        %4499 = vmatprep.subr.bf16.mxu0 0
        %4500 = vmatpush1.bf16.msra.mxu0 0
        %4501 = vmatprep.subr.bf16.mxu0 0
        %4502 = vmatpush1.bf16.msra.mxu0 0
        %4503 = vmatprep.subr.bf16.mxu0 0
        %4504 = vmatpush1.bf16.msra.mxu0 0
        %4505 = vmatprep.subr.bf16.mxu0 0
        %4506 = vmatpush1.bf16.msra.mxu0 0
        %4507 = vmatprep.subr.bf16.mxu0 0
        %4508 = vmatpush1.bf16.msra.mxu0 0
        %4509 = vmatprep.subr.bf16.mxu0 0
        %4510 = vmatpush1.bf16.msra.mxu0 0
        %4511 = vmatprep.subr.bf16.mxu0 0
        %4512 = vmatpush1.bf16.msra.mxu0 0
        %4513 = vmatprep.subr.bf16.mxu0 0
        %4514 = vmatpush1.bf16.msra.mxu0 0
        %4515 = vmatprep.subr.bf16.mxu0 0
        %4516 = vmatpush1.bf16.msra.mxu0 0
        %4517 = vmatprep.subr.bf16.mxu0 0
        %4518 = vmatpush1.bf16.msra.mxu0 0
        %4519 = vmatprep.subr.bf16.mxu0 0
        %4520 = vmatpush1.bf16.msra.mxu0 0
        %4521 = vmatprep.subr.bf16.mxu0 0
        %4522 = vmatpush1.bf16.msra.mxu0 0
        %4523 = vmatprep.mubr.bf16.mxu0 0
        %4524 = vmatmul.mubr.bf16.gmra.mrb[0].mxu0 %v4485
        %v4525 = vpop.f32.mrb[0].mxu0
        %v4526 = vadd.f32 0.0, %v4525
        %v4527 = vpop.f32.mrb[0].mxu0
        %v4528 = vpop.f32.mrb[0].mxu0
        %v4529 = vpop.f32.mrb[0].mxu0
        %4530 = vdwg.mxu0
        %v4531 = vadd.f32 %v4477, %v4526
      $region110: #{transformer_block.2} parent=51 // loop_footer
        %s4383 = sadd.s32 %s4381, 1
      $region111: #{transformer_block.2} parent=51 // loop_footer_branch
        %4380 = sbr.rel target = $region107
      $region112: #{transformer_block.2} parent=51 // loop_exit
        _
      %v4532 = vrcp.pop %v4387
      %v4533 = vmul.f32 %v4388, %v4532
      %4535 = vrot.lane.b32.xlu0 %v3645, 64
      %v4536 = vpop.permute.xlu0 %4535
      %4539 = vrot.lane.b32.xlu0 %v3941, 64
      %v4540 = vpop.permute.xlu0 %4539
      %4543 = vrot.lane.b32.xlu0 %v4237, 64
      %v4544 = vpop.permute.xlu0 %4543
      %4547 = vrot.lane.b32.xlu0 %v4533, 64
      %v4548 = vpop.permute.xlu0 %4547
      %vm4550 = vcmask 523264
      %v4551 = vsel %vm4550, %v3491, %v4536
      %v4552 = vsel %vm4550, %v3787, %v4540
      %v4553 = vsel %vm4550, %v4083, %v4544
      %v4554 = vsel %vm4550, %v4379, %v4548
      %v4555 = vpack.c.bf16 %v4551, %v4551
      %v4556 = vpack.c.bf16 %v4552, %v4552
      %v4557 = vpack.c.bf16 %v4553, %v4553
      %v4558 = vpack.c.bf16 %v4554, %v4554
      %v4559 = vld [vmem:[%s6] sm:$0xff]
      %v4560 = vld [vmem:[%s6 + $0x8] sm:$0xff]
      %v4561 = vld [vmem:[%s6 + $0x10] sm:$0xff]
      %v4562 = vld [vmem:[%s6 + $0x18] sm:$0xff]
      %v4563 = vld [vmem:[%s6 + $0x20] sm:$0xff]
      %v4564 = vld [vmem:[%s6 + $0x28] sm:$0xff]
      %v4565 = vld [vmem:[%s6 + $0x30] sm:$0xff]
      %v4566 = vld [vmem:[%s6 + $0x38] sm:$0xff]
      %v4567 = vld [vmem:[%s6 + $0x40] sm:$0xff]
      %v4568 = vld [vmem:[%s6 + $0x48] sm:$0xff]
      %v4569 = vld [vmem:[%s6 + $0x50] sm:$0xff]
      %v4570 = vld [vmem:[%s6 + $0x58] sm:$0xff]
      %v4571 = vld [vmem:[%s6 + $0x60] sm:$0xff]
      %v4572 = vld [vmem:[%s6 + $0x68] sm:$0xff]
      %v4573 = vld [vmem:[%s6 + $0x70] sm:$0xff]
      %v4574 = vld [vmem:[%s6 + $0x78] sm:$0xff]
      %v4575 = vld [vmem:[%s6 + $0x80] sm:$0xff]
      %v4576 = vld [vmem:[%s6 + $0x88] sm:$0xff]
      %v4577 = vld [vmem:[%s6 + $0x90] sm:$0xff]
      %v4578 = vld [vmem:[%s6 + $0x98] sm:$0xff]
      %v4579 = vld [vmem:[%s6 + $0xa0] sm:$0xff]
      %v4580 = vld [vmem:[%s6 + $0xa8] sm:$0xff]
      %v4581 = vld [vmem:[%s6 + $0xb0] sm:$0xff]
      %v4582 = vld [vmem:[%s6 + $0xb8] sm:$0xff]
      %v4583 = vld [vmem:[%s6 + $0xc0] sm:$0xff]
      %v4584 = vld [vmem:[%s6 + $0xc8] sm:$0xff]
      %v4585 = vld [vmem:[%s6 + $0xd0] sm:$0xff]
      %v4586 = vld [vmem:[%s6 + $0xd8] sm:$0xff]
      %v4587 = vld [vmem:[%s6 + $0xe0] sm:$0xff]
      %v4588 = vld [vmem:[%s6 + $0xe8] sm:$0xff]
      %v4589 = vld [vmem:[%s6 + $0xf0] sm:$0xff]
      %v4590 = vld [vmem:[%s6 + $0xf8] sm:$0xff]
      %v4591 = vld [vmem:[%s6 + $0x100] sm:$0xff]
      %v4592 = vld [vmem:[%s6 + $0x108] sm:$0xff]
      %v4593 = vld [vmem:[%s6 + $0x110] sm:$0xff]
      %v4594 = vld [vmem:[%s6 + $0x118] sm:$0xff]
      %v4595 = vld [vmem:[%s6 + $0x120] sm:$0xff]
      %v4596 = vld [vmem:[%s6 + $0x128] sm:$0xff]
      %v4597 = vld [vmem:[%s6 + $0x130] sm:$0xff]
      %v4598 = vld [vmem:[%s6 + $0x138] sm:$0xff]
      %v4599 = vld [vmem:[%s6 + $0x140] sm:$0xff]
      %v4600 = vld [vmem:[%s6 + $0x148] sm:$0xff]
      %v4601 = vld [vmem:[%s6 + $0x150] sm:$0xff]
      %v4602 = vld [vmem:[%s6 + $0x158] sm:$0xff]
      %v4603 = vld [vmem:[%s6 + $0x160] sm:$0xff]
      %v4604 = vld [vmem:[%s6 + $0x168] sm:$0xff]
      %v4605 = vld [vmem:[%s6 + $0x170] sm:$0xff]
      %v4606 = vld [vmem:[%s6 + $0x178] sm:$0xff]
      %v4607 = vld [vmem:[%s6 + $0x180] sm:$0xff]
      %v4608 = vld [vmem:[%s6 + $0x188] sm:$0xff]
      %v4609 = vld [vmem:[%s6 + $0x190] sm:$0xff]
      %v4610 = vld [vmem:[%s6 + $0x198] sm:$0xff]
      %v4611 = vld [vmem:[%s6 + $0x1a0] sm:$0xff]
      %v4612 = vld [vmem:[%s6 + $0x1a8] sm:$0xff]
      %v4613 = vld [vmem:[%s6 + $0x1b0] sm:$0xff]
      %v4614 = vld [vmem:[%s6 + $0x1b8] sm:$0xff]
      %v4615 = vld [vmem:[%s6 + $0x1c0] sm:$0xff]
      %v4616 = vld [vmem:[%s6 + $0x1c8] sm:$0xff]
      %v4617 = vld [vmem:[%s6 + $0x1d0] sm:$0xff]
      %v4618 = vld [vmem:[%s6 + $0x1d8] sm:$0xff]
      %v4619 = vld [vmem:[%s6 + $0x1e0] sm:$0xff]
      %v4620 = vld [vmem:[%s6 + $0x1e8] sm:$0xff]
      %v4621 = vld [vmem:[%s6 + $0x1f0] sm:$0xff]
      %v4622 = vld [vmem:[%s6 + $0x1f8] sm:$0xff]
      %v4623 = vld [vmem:[%s6 + $0x200] sm:$0xff]
      %v4624 = vld [vmem:[%s6 + $0x208] sm:$0xff]
      %v4625 = vld [vmem:[%s6 + $0x210] sm:$0xff]
      %v4626 = vld [vmem:[%s6 + $0x218] sm:$0xff]
      %v4627 = vld [vmem:[%s6 + $0x220] sm:$0xff]
      %v4628 = vld [vmem:[%s6 + $0x228] sm:$0xff]
      %v4629 = vld [vmem:[%s6 + $0x230] sm:$0xff]
      %v4630 = vld [vmem:[%s6 + $0x238] sm:$0xff]
      %v4631 = vld [vmem:[%s6 + $0x240] sm:$0xff]
      %v4632 = vld [vmem:[%s6 + $0x248] sm:$0xff]
      %v4633 = vld [vmem:[%s6 + $0x250] sm:$0xff]
      %v4634 = vld [vmem:[%s6 + $0x258] sm:$0xff]
      %v4635 = vld [vmem:[%s6 + $0x260] sm:$0xff]
      %v4636 = vld [vmem:[%s6 + $0x268] sm:$0xff]
      %v4637 = vld [vmem:[%s6 + $0x270] sm:$0xff]
      %v4638 = vld [vmem:[%s6 + $0x278] sm:$0xff]
      %v4639 = vld [vmem:[%s6 + $0x280] sm:$0xff]
      %v4640 = vld [vmem:[%s6 + $0x288] sm:$0xff]
      %v4641 = vld [vmem:[%s6 + $0x290] sm:$0xff]
      %v4642 = vld [vmem:[%s6 + $0x298] sm:$0xff]
      %v4643 = vld [vmem:[%s6 + $0x2a0] sm:$0xff]
      %v4644 = vld [vmem:[%s6 + $0x2a8] sm:$0xff]
      %v4645 = vld [vmem:[%s6 + $0x2b0] sm:$0xff]
      %v4646 = vld [vmem:[%s6 + $0x2b8] sm:$0xff]
      %v4647 = vld [vmem:[%s6 + $0x2c0] sm:$0xff]
      %v4648 = vld [vmem:[%s6 + $0x2c8] sm:$0xff]
      %v4649 = vld [vmem:[%s6 + $0x2d0] sm:$0xff]
      %v4650 = vld [vmem:[%s6 + $0x2d8] sm:$0xff]
      %v4651 = vld [vmem:[%s6 + $0x2e0] sm:$0xff]
      %v4652 = vld [vmem:[%s6 + $0x2e8] sm:$0xff]
      %v4653 = vld [vmem:[%s6 + $0x2f0] sm:$0xff]
      %v4654 = vld [vmem:[%s6 + $0x2f8] sm:$0xff]
      %v4655 = vld [vmem:[%s6 + $0x300] sm:$0xff]
      %v4656 = vld [vmem:[%s6 + $0x308] sm:$0xff]
      %v4657 = vld [vmem:[%s6 + $0x310] sm:$0xff]
      %v4658 = vld [vmem:[%s6 + $0x318] sm:$0xff]
      %v4659 = vld [vmem:[%s6 + $0x320] sm:$0xff]
      %v4660 = vld [vmem:[%s6 + $0x328] sm:$0xff]
      %v4661 = vld [vmem:[%s6 + $0x330] sm:$0xff]
      %v4662 = vld [vmem:[%s6 + $0x338] sm:$0xff]
      %v4663 = vld [vmem:[%s6 + $0x340] sm:$0xff]
      %v4664 = vld [vmem:[%s6 + $0x348] sm:$0xff]
      %v4665 = vld [vmem:[%s6 + $0x350] sm:$0xff]
      %v4666 = vld [vmem:[%s6 + $0x358] sm:$0xff]
      %v4667 = vld [vmem:[%s6 + $0x360] sm:$0xff]
      %v4668 = vld [vmem:[%s6 + $0x368] sm:$0xff]
      %v4669 = vld [vmem:[%s6 + $0x370] sm:$0xff]
      %v4670 = vld [vmem:[%s6 + $0x378] sm:$0xff]
      %v4671 = vld [vmem:[%s6 + $0x380] sm:$0xff]
      %v4672 = vld [vmem:[%s6 + $0x388] sm:$0xff]
      %v4673 = vld [vmem:[%s6 + $0x390] sm:$0xff]
      %v4674 = vld [vmem:[%s6 + $0x398] sm:$0xff]
      %v4675 = vld [vmem:[%s6 + $0x3a0] sm:$0xff]
      %v4676 = vld [vmem:[%s6 + $0x3a8] sm:$0xff]
      %v4677 = vld [vmem:[%s6 + $0x3b0] sm:$0xff]
      %v4678 = vld [vmem:[%s6 + $0x3b8] sm:$0xff]
      %v4679 = vld [vmem:[%s6 + $0x3c0] sm:$0xff]
      %v4680 = vld [vmem:[%s6 + $0x3c8] sm:$0xff]
      %v4681 = vld [vmem:[%s6 + $0x3d0] sm:$0xff]
      %v4682 = vld [vmem:[%s6 + $0x3d8] sm:$0xff]
      %v4683 = vld [vmem:[%s6 + $0x3e0] sm:$0xff]
      %v4684 = vld [vmem:[%s6 + $0x3e8] sm:$0xff]
      %v4685 = vld [vmem:[%s6 + $0x3f0] sm:$0xff]
      %v4686 = vld [vmem:[%s6 + $0x3f8] sm:$0xff]
      %v4815 = vunpack.c.l.b16 %v4559
      %v4816 = vunpack.c.h.b16 %v4559
      %v4817 = vunpack.c.l.b16 %v4560
      %v4818 = vunpack.c.h.b16 %v4560
      %v4819 = vunpack.c.l.b16 %v4561
      %v4820 = vunpack.c.h.b16 %v4561
      %v4821 = vunpack.c.l.b16 %v4562
      %v4822 = vunpack.c.h.b16 %v4562
      %v4823 = vunpack.c.l.b16 %v4563
      %v4824 = vunpack.c.h.b16 %v4563
      %v4825 = vunpack.c.l.b16 %v4564
      %v4826 = vunpack.c.h.b16 %v4564
      %v4827 = vunpack.c.l.b16 %v4565
      %v4828 = vunpack.c.h.b16 %v4565
      %v4829 = vunpack.c.l.b16 %v4566
      %v4830 = vunpack.c.h.b16 %v4566
      %v4831 = vunpack.c.l.b16 %v4567
      %v4832 = vunpack.c.h.b16 %v4567
      %v4833 = vunpack.c.l.b16 %v4568
      %v4834 = vunpack.c.h.b16 %v4568
      %v4835 = vunpack.c.l.b16 %v4569
      %v4836 = vunpack.c.h.b16 %v4569
      %v4837 = vunpack.c.l.b16 %v4570
      %v4838 = vunpack.c.h.b16 %v4570
      %v4839 = vunpack.c.l.b16 %v4571
      %v4840 = vunpack.c.h.b16 %v4571
      %v4841 = vunpack.c.l.b16 %v4572
      %v4842 = vunpack.c.h.b16 %v4572
      %v4843 = vunpack.c.l.b16 %v4573
      %v4844 = vunpack.c.h.b16 %v4573
      %v4845 = vunpack.c.l.b16 %v4574
      %v4846 = vunpack.c.h.b16 %v4574
      %v4847 = vunpack.c.l.b16 %v4575
      %v4848 = vunpack.c.h.b16 %v4575
      %v4849 = vunpack.c.l.b16 %v4576
      %v4850 = vunpack.c.h.b16 %v4576
      %v4851 = vunpack.c.l.b16 %v4577
      %v4852 = vunpack.c.h.b16 %v4577
      %v4853 = vunpack.c.l.b16 %v4578
      %v4854 = vunpack.c.h.b16 %v4578
      %v4855 = vunpack.c.l.b16 %v4579
      %v4856 = vunpack.c.h.b16 %v4579
      %v4857 = vunpack.c.l.b16 %v4580
      %v4858 = vunpack.c.h.b16 %v4580
      %v4859 = vunpack.c.l.b16 %v4581
      %v4860 = vunpack.c.h.b16 %v4581
      %v4861 = vunpack.c.l.b16 %v4582
      %v4862 = vunpack.c.h.b16 %v4582
      %v4863 = vunpack.c.l.b16 %v4583
      %v4864 = vunpack.c.h.b16 %v4583
      %v4865 = vunpack.c.l.b16 %v4584
      %v4866 = vunpack.c.h.b16 %v4584
      %v4867 = vunpack.c.l.b16 %v4585
      %v4868 = vunpack.c.h.b16 %v4585
      %v4869 = vunpack.c.l.b16 %v4586
      %v4870 = vunpack.c.h.b16 %v4586
      %v4871 = vunpack.c.l.b16 %v4587
      %v4872 = vunpack.c.h.b16 %v4587
      %v4873 = vunpack.c.l.b16 %v4588
      %v4874 = vunpack.c.h.b16 %v4588
      %v4875 = vunpack.c.l.b16 %v4589
      %v4876 = vunpack.c.h.b16 %v4589
      %v4877 = vunpack.c.l.b16 %v4590
      %v4878 = vunpack.c.h.b16 %v4590
      %v4879 = vunpack.c.l.b16 %v4591
      %v4880 = vunpack.c.h.b16 %v4591
      %v4881 = vunpack.c.l.b16 %v4592
      %v4882 = vunpack.c.h.b16 %v4592
      %v4883 = vunpack.c.l.b16 %v4593
      %v4884 = vunpack.c.h.b16 %v4593
      %v4885 = vunpack.c.l.b16 %v4594
      %v4886 = vunpack.c.h.b16 %v4594
      %v4887 = vunpack.c.l.b16 %v4595
      %v4888 = vunpack.c.h.b16 %v4595
      %v4889 = vunpack.c.l.b16 %v4596
      %v4890 = vunpack.c.h.b16 %v4596
      %v4891 = vunpack.c.l.b16 %v4597
      %v4892 = vunpack.c.h.b16 %v4597
      %v4893 = vunpack.c.l.b16 %v4598
      %v4894 = vunpack.c.h.b16 %v4598
      %v4895 = vunpack.c.l.b16 %v4599
      %v4896 = vunpack.c.h.b16 %v4599
      %v4897 = vunpack.c.l.b16 %v4600
      %v4898 = vunpack.c.h.b16 %v4600
      %v4899 = vunpack.c.l.b16 %v4601
      %v4900 = vunpack.c.h.b16 %v4601
      %v4901 = vunpack.c.l.b16 %v4602
      %v4902 = vunpack.c.h.b16 %v4602
      %v4903 = vunpack.c.l.b16 %v4603
      %v4904 = vunpack.c.h.b16 %v4603
      %v4905 = vunpack.c.l.b16 %v4604
      %v4906 = vunpack.c.h.b16 %v4604
      %v4907 = vunpack.c.l.b16 %v4605
      %v4908 = vunpack.c.h.b16 %v4605
      %v4909 = vunpack.c.l.b16 %v4606
      %v4910 = vunpack.c.h.b16 %v4606
      %v4911 = vunpack.c.l.b16 %v4607
      %v4912 = vunpack.c.h.b16 %v4607
      %v4913 = vunpack.c.l.b16 %v4608
      %v4914 = vunpack.c.h.b16 %v4608
      %v4915 = vunpack.c.l.b16 %v4609
      %v4916 = vunpack.c.h.b16 %v4609
      %v4917 = vunpack.c.l.b16 %v4610
      %v4918 = vunpack.c.h.b16 %v4610
      %v4919 = vunpack.c.l.b16 %v4611
      %v4920 = vunpack.c.h.b16 %v4611
      %v4921 = vunpack.c.l.b16 %v4612
      %v4922 = vunpack.c.h.b16 %v4612
      %v4923 = vunpack.c.l.b16 %v4613
      %v4924 = vunpack.c.h.b16 %v4613
      %v4925 = vunpack.c.l.b16 %v4614
      %v4926 = vunpack.c.h.b16 %v4614
      %v4927 = vunpack.c.l.b16 %v4615
      %v4928 = vunpack.c.h.b16 %v4615
      %v4929 = vunpack.c.l.b16 %v4616
      %v4930 = vunpack.c.h.b16 %v4616
      %v4931 = vunpack.c.l.b16 %v4617
      %v4932 = vunpack.c.h.b16 %v4617
      %v4933 = vunpack.c.l.b16 %v4618
      %v4934 = vunpack.c.h.b16 %v4618
      %v4935 = vunpack.c.l.b16 %v4619
      %v4936 = vunpack.c.h.b16 %v4619
      %v4937 = vunpack.c.l.b16 %v4620
      %v4938 = vunpack.c.h.b16 %v4620
      %v4939 = vunpack.c.l.b16 %v4621
      %v4940 = vunpack.c.h.b16 %v4621
      %v4941 = vunpack.c.l.b16 %v4622
      %v4942 = vunpack.c.h.b16 %v4622
      %v4943 = vunpack.c.l.b16 %v4623
      %v4944 = vunpack.c.h.b16 %v4623
      %v4945 = vunpack.c.l.b16 %v4624
      %v4946 = vunpack.c.h.b16 %v4624
      %v4947 = vunpack.c.l.b16 %v4625
      %v4948 = vunpack.c.h.b16 %v4625
      %v4949 = vunpack.c.l.b16 %v4626
      %v4950 = vunpack.c.h.b16 %v4626
      %v4951 = vunpack.c.l.b16 %v4627
      %v4952 = vunpack.c.h.b16 %v4627
      %v4953 = vunpack.c.l.b16 %v4628
      %v4954 = vunpack.c.h.b16 %v4628
      %v4955 = vunpack.c.l.b16 %v4629
      %v4956 = vunpack.c.h.b16 %v4629
      %v4957 = vunpack.c.l.b16 %v4630
      %v4958 = vunpack.c.h.b16 %v4630
      %v4959 = vunpack.c.l.b16 %v4631
      %v4960 = vunpack.c.h.b16 %v4631
      %v4961 = vunpack.c.l.b16 %v4632
      %v4962 = vunpack.c.h.b16 %v4632
      %v4963 = vunpack.c.l.b16 %v4633
      %v4964 = vunpack.c.h.b16 %v4633
      %v4965 = vunpack.c.l.b16 %v4634
      %v4966 = vunpack.c.h.b16 %v4634
      %v4967 = vunpack.c.l.b16 %v4635
      %v4968 = vunpack.c.h.b16 %v4635
      %v4969 = vunpack.c.l.b16 %v4636
      %v4970 = vunpack.c.h.b16 %v4636
      %v4971 = vunpack.c.l.b16 %v4637
      %v4972 = vunpack.c.h.b16 %v4637
      %v4973 = vunpack.c.l.b16 %v4638
      %v4974 = vunpack.c.h.b16 %v4638
      %v4975 = vunpack.c.l.b16 %v4639
      %v4976 = vunpack.c.h.b16 %v4639
      %v4977 = vunpack.c.l.b16 %v4640
      %v4978 = vunpack.c.h.b16 %v4640
      %v4979 = vunpack.c.l.b16 %v4641
      %v4980 = vunpack.c.h.b16 %v4641
      %v4981 = vunpack.c.l.b16 %v4642
      %v4982 = vunpack.c.h.b16 %v4642
      %v4983 = vunpack.c.l.b16 %v4643
      %v4984 = vunpack.c.h.b16 %v4643
      %v4985 = vunpack.c.l.b16 %v4644
      %v4986 = vunpack.c.h.b16 %v4644
      %v4987 = vunpack.c.l.b16 %v4645
      %v4988 = vunpack.c.h.b16 %v4645
      %v4989 = vunpack.c.l.b16 %v4646
      %v4990 = vunpack.c.h.b16 %v4646
      %v4991 = vunpack.c.l.b16 %v4647
      %v4992 = vunpack.c.h.b16 %v4647
      %v4993 = vunpack.c.l.b16 %v4648
      %v4994 = vunpack.c.h.b16 %v4648
      %v4995 = vunpack.c.l.b16 %v4649
      %v4996 = vunpack.c.h.b16 %v4649
      %v4997 = vunpack.c.l.b16 %v4650
      %v4998 = vunpack.c.h.b16 %v4650
      %v4999 = vunpack.c.l.b16 %v4651
      %v5000 = vunpack.c.h.b16 %v4651
      %v5001 = vunpack.c.l.b16 %v4652
      %v5002 = vunpack.c.h.b16 %v4652
      %v5003 = vunpack.c.l.b16 %v4653
      %v5004 = vunpack.c.h.b16 %v4653
      %v5005 = vunpack.c.l.b16 %v4654
      %v5006 = vunpack.c.h.b16 %v4654
      %v5007 = vunpack.c.l.b16 %v4655
      %v5008 = vunpack.c.h.b16 %v4655
      %v5009 = vunpack.c.l.b16 %v4656
      %v5010 = vunpack.c.h.b16 %v4656
      %v5011 = vunpack.c.l.b16 %v4657
      %v5012 = vunpack.c.h.b16 %v4657
      %v5013 = vunpack.c.l.b16 %v4658
      %v5014 = vunpack.c.h.b16 %v4658
      %v5015 = vunpack.c.l.b16 %v4659
      %v5016 = vunpack.c.h.b16 %v4659
      %v5017 = vunpack.c.l.b16 %v4660
      %v5018 = vunpack.c.h.b16 %v4660
      %v5019 = vunpack.c.l.b16 %v4661
      %v5020 = vunpack.c.h.b16 %v4661
      %v5021 = vunpack.c.l.b16 %v4662
      %v5022 = vunpack.c.h.b16 %v4662
      %v5023 = vunpack.c.l.b16 %v4663
      %v5024 = vunpack.c.h.b16 %v4663
      %v5025 = vunpack.c.l.b16 %v4664
      %v5026 = vunpack.c.h.b16 %v4664
      %v5027 = vunpack.c.l.b16 %v4665
      %v5028 = vunpack.c.h.b16 %v4665
      %v5029 = vunpack.c.l.b16 %v4666
      %v5030 = vunpack.c.h.b16 %v4666
      %v5031 = vunpack.c.l.b16 %v4667
      %v5032 = vunpack.c.h.b16 %v4667
      %v5033 = vunpack.c.l.b16 %v4668
      %v5034 = vunpack.c.h.b16 %v4668
      %v5035 = vunpack.c.l.b16 %v4669
      %v5036 = vunpack.c.h.b16 %v4669
      %v5037 = vunpack.c.l.b16 %v4670
      %v5038 = vunpack.c.h.b16 %v4670
      %v5039 = vunpack.c.l.b16 %v4671
      %v5040 = vunpack.c.h.b16 %v4671
      %v5041 = vunpack.c.l.b16 %v4672
      %v5042 = vunpack.c.h.b16 %v4672
      %v5043 = vunpack.c.l.b16 %v4673
      %v5044 = vunpack.c.h.b16 %v4673
      %v5045 = vunpack.c.l.b16 %v4674
      %v5046 = vunpack.c.h.b16 %v4674
      %v5047 = vunpack.c.l.b16 %v4675
      %v5048 = vunpack.c.h.b16 %v4675
      %v5049 = vunpack.c.l.b16 %v4676
      %v5050 = vunpack.c.h.b16 %v4676
      %v5051 = vunpack.c.l.b16 %v4677
      %v5052 = vunpack.c.h.b16 %v4677
      %v5053 = vunpack.c.l.b16 %v4678
      %v5054 = vunpack.c.h.b16 %v4678
      %v5055 = vunpack.c.l.b16 %v4679
      %v5056 = vunpack.c.h.b16 %v4679
      %v5057 = vunpack.c.l.b16 %v4680
      %v5058 = vunpack.c.h.b16 %v4680
      %v5059 = vunpack.c.l.b16 %v4681
      %v5060 = vunpack.c.h.b16 %v4681
      %v5061 = vunpack.c.l.b16 %v4682
      %v5062 = vunpack.c.h.b16 %v4682
      %v5063 = vunpack.c.l.b16 %v4683
      %v5064 = vunpack.c.h.b16 %v4683
      %v5065 = vunpack.c.l.b16 %v4684
      %v5066 = vunpack.c.h.b16 %v4684
      %v5067 = vunpack.c.l.b16 %v4685
      %v5068 = vunpack.c.h.b16 %v4685
      %v5069 = vunpack.c.l.b16 %v4686
      %v5070 = vunpack.c.h.b16 %v4686
      %v5071 = vpack.c.b16 %v4819, %v4815
      %v5072 = vpack.c.b16 %v4820, %v4816
      %v5073 = vpack.c.b16 %v4821, %v4817
      %v5074 = vpack.c.b16 %v4822, %v4818
      %v5075 = vpack.c.b16 %v4827, %v4823
      %v5076 = vpack.c.b16 %v4828, %v4824
      %v5077 = vpack.c.b16 %v4829, %v4825
      %v5078 = vpack.c.b16 %v4830, %v4826
      %v5079 = vpack.c.b16 %v4835, %v4831
      %v5080 = vpack.c.b16 %v4836, %v4832
      %v5081 = vpack.c.b16 %v4837, %v4833
      %v5082 = vpack.c.b16 %v4838, %v4834
      %v5083 = vpack.c.b16 %v4843, %v4839
      %v5084 = vpack.c.b16 %v4844, %v4840
      %v5085 = vpack.c.b16 %v4845, %v4841
      %v5086 = vpack.c.b16 %v4846, %v4842
      %v5087 = vpack.c.b16 %v4851, %v4847
      %v5088 = vpack.c.b16 %v4852, %v4848
      %v5089 = vpack.c.b16 %v4853, %v4849
      %v5090 = vpack.c.b16 %v4854, %v4850
      %v5091 = vpack.c.b16 %v4859, %v4855
      %v5092 = vpack.c.b16 %v4860, %v4856
      %v5093 = vpack.c.b16 %v4861, %v4857
      %v5094 = vpack.c.b16 %v4862, %v4858
      %v5095 = vpack.c.b16 %v4867, %v4863
      %v5096 = vpack.c.b16 %v4868, %v4864
      %v5097 = vpack.c.b16 %v4869, %v4865
      %v5098 = vpack.c.b16 %v4870, %v4866
      %v5099 = vpack.c.b16 %v4875, %v4871
      %v5100 = vpack.c.b16 %v4876, %v4872
      %v5101 = vpack.c.b16 %v4877, %v4873
      %v5102 = vpack.c.b16 %v4878, %v4874
      %v5103 = vpack.c.b16 %v4883, %v4879
      %v5104 = vpack.c.b16 %v4884, %v4880
      %v5105 = vpack.c.b16 %v4885, %v4881
      %v5106 = vpack.c.b16 %v4886, %v4882
      %v5107 = vpack.c.b16 %v4891, %v4887
      %v5108 = vpack.c.b16 %v4892, %v4888
      %v5109 = vpack.c.b16 %v4893, %v4889
      %v5110 = vpack.c.b16 %v4894, %v4890
      %v5111 = vpack.c.b16 %v4899, %v4895
      %v5112 = vpack.c.b16 %v4900, %v4896
      %v5113 = vpack.c.b16 %v4901, %v4897
      %v5114 = vpack.c.b16 %v4902, %v4898
      %v5115 = vpack.c.b16 %v4907, %v4903
      %v5116 = vpack.c.b16 %v4908, %v4904
      %v5117 = vpack.c.b16 %v4909, %v4905
      %v5118 = vpack.c.b16 %v4910, %v4906
      %v5119 = vpack.c.b16 %v4915, %v4911
      %v5120 = vpack.c.b16 %v4916, %v4912
      %v5121 = vpack.c.b16 %v4917, %v4913
      %v5122 = vpack.c.b16 %v4918, %v4914
      %v5123 = vpack.c.b16 %v4923, %v4919
      %v5124 = vpack.c.b16 %v4924, %v4920
      %v5125 = vpack.c.b16 %v4925, %v4921
      %v5126 = vpack.c.b16 %v4926, %v4922
      %v5127 = vpack.c.b16 %v4931, %v4927
      %v5128 = vpack.c.b16 %v4932, %v4928
      %v5129 = vpack.c.b16 %v4933, %v4929
      %v5130 = vpack.c.b16 %v4934, %v4930
      %v5131 = vpack.c.b16 %v4939, %v4935
      %v5132 = vpack.c.b16 %v4940, %v4936
      %v5133 = vpack.c.b16 %v4941, %v4937
      %v5134 = vpack.c.b16 %v4942, %v4938
      %v5135 = vpack.c.b16 %v4947, %v4943
      %v5136 = vpack.c.b16 %v4948, %v4944
      %v5137 = vpack.c.b16 %v4949, %v4945
      %v5138 = vpack.c.b16 %v4950, %v4946
      %v5139 = vpack.c.b16 %v4955, %v4951
      %v5140 = vpack.c.b16 %v4956, %v4952
      %v5141 = vpack.c.b16 %v4957, %v4953
      %v5142 = vpack.c.b16 %v4958, %v4954
      %v5143 = vpack.c.b16 %v4963, %v4959
      %v5144 = vpack.c.b16 %v4964, %v4960
      %v5145 = vpack.c.b16 %v4965, %v4961
      %v5146 = vpack.c.b16 %v4966, %v4962
      %v5147 = vpack.c.b16 %v4971, %v4967
      %v5148 = vpack.c.b16 %v4972, %v4968
      %v5149 = vpack.c.b16 %v4973, %v4969
      %v5150 = vpack.c.b16 %v4974, %v4970
      %v5151 = vpack.c.b16 %v4979, %v4975
      %v5152 = vpack.c.b16 %v4980, %v4976
      %v5153 = vpack.c.b16 %v4981, %v4977
      %v5154 = vpack.c.b16 %v4982, %v4978
      %v5155 = vpack.c.b16 %v4987, %v4983
      %v5156 = vpack.c.b16 %v4988, %v4984
      %v5157 = vpack.c.b16 %v4989, %v4985
      %v5158 = vpack.c.b16 %v4990, %v4986
      %v5159 = vpack.c.b16 %v4995, %v4991
      %v5160 = vpack.c.b16 %v4996, %v4992
      %v5161 = vpack.c.b16 %v4997, %v4993
      %v5162 = vpack.c.b16 %v4998, %v4994
      %v5163 = vpack.c.b16 %v5003, %v4999
      %v5164 = vpack.c.b16 %v5004, %v5000
      %v5165 = vpack.c.b16 %v5005, %v5001
      %v5166 = vpack.c.b16 %v5006, %v5002
      %v5167 = vpack.c.b16 %v5011, %v5007
      %v5168 = vpack.c.b16 %v5012, %v5008
      %v5169 = vpack.c.b16 %v5013, %v5009
      %v5170 = vpack.c.b16 %v5014, %v5010
      %v5171 = vpack.c.b16 %v5019, %v5015
      %v5172 = vpack.c.b16 %v5020, %v5016
      %v5173 = vpack.c.b16 %v5021, %v5017
      %v5174 = vpack.c.b16 %v5022, %v5018
      %v5175 = vpack.c.b16 %v5027, %v5023
      %v5176 = vpack.c.b16 %v5028, %v5024
      %v5177 = vpack.c.b16 %v5029, %v5025
      %v5178 = vpack.c.b16 %v5030, %v5026
      %v5179 = vpack.c.b16 %v5035, %v5031
      %v5180 = vpack.c.b16 %v5036, %v5032
      %v5181 = vpack.c.b16 %v5037, %v5033
      %v5182 = vpack.c.b16 %v5038, %v5034
      %v5183 = vpack.c.b16 %v5043, %v5039
      %v5184 = vpack.c.b16 %v5044, %v5040
      %v5185 = vpack.c.b16 %v5045, %v5041
      %v5186 = vpack.c.b16 %v5046, %v5042
      %v5187 = vpack.c.b16 %v5051, %v5047
      %v5188 = vpack.c.b16 %v5052, %v5048
      %v5189 = vpack.c.b16 %v5053, %v5049
      %v5190 = vpack.c.b16 %v5054, %v5050
      %v5191 = vpack.c.b16 %v5059, %v5055
      %v5192 = vpack.c.b16 %v5060, %v5056
      %v5193 = vpack.c.b16 %v5061, %v5057
      %v5194 = vpack.c.b16 %v5062, %v5058
      %v5195 = vpack.c.b16 %v5067, %v5063
      %v5196 = vpack.c.b16 %v5068, %v5064
      %v5197 = vpack.c.b16 %v5069, %v5065
      %v5198 = vpack.c.b16 %v5070, %v5066
      %5327 = vmatprep.subr.bf16.mxu0 %v5072
      %5328 = vmatpush1.bf16.msra.mxu0 %v5071
      %5329 = vmatprep.subr.bf16.mxu0 %v5076
      %5330 = vmatpush1.bf16.msra.mxu0 %v5075
      %5331 = vmatprep.subr.bf16.mxu0 %v5080
      %5332 = vmatpush1.bf16.msra.mxu0 %v5079
      %5333 = vmatprep.subr.bf16.mxu0 %v5084
      %5334 = vmatpush1.bf16.msra.mxu0 %v5083
      %5335 = vmatprep.subr.bf16.mxu0 %v5088
      %5336 = vmatpush1.bf16.msra.mxu0 %v5087
      %5337 = vmatprep.subr.bf16.mxu0 %v5092
      %5338 = vmatpush1.bf16.msra.mxu0 %v5091
      %5339 = vmatprep.subr.bf16.mxu0 %v5096
      %5340 = vmatpush1.bf16.msra.mxu0 %v5095
      %5341 = vmatprep.subr.bf16.mxu0 %v5100
      %5342 = vmatpush1.bf16.msra.mxu0 %v5099
      %5343 = vmatprep.subr.bf16.mxu0 %v5104
      %5344 = vmatpush1.bf16.msra.mxu0 %v5103
      %5345 = vmatprep.subr.bf16.mxu0 %v5108
      %5346 = vmatpush1.bf16.msra.mxu0 %v5107
      %5347 = vmatprep.subr.bf16.mxu0 %v5112
      %5348 = vmatpush1.bf16.msra.mxu0 %v5111
      %5349 = vmatprep.subr.bf16.mxu0 %v5116
      %5350 = vmatpush1.bf16.msra.mxu0 %v5115
      %5351 = vmatprep.subr.bf16.mxu0 %v5120
      %5352 = vmatpush1.bf16.msra.mxu0 %v5119
      %5353 = vmatprep.subr.bf16.mxu0 %v5124
      %5354 = vmatpush1.bf16.msra.mxu0 %v5123
      %5355 = vmatprep.subr.bf16.mxu0 %v5128
      %5356 = vmatpush1.bf16.msra.mxu0 %v5127
      %5357 = vmatprep.subr.bf16.mxu0 %v5132
      %5358 = vmatpush1.bf16.msra.mxu0 %v5131
      %5359 = vmatprep.mubr.bf16.mxu0 %v4556
      %5360 = vmatmul.mubr.bf16.gmra.mrb[0].mxu0 %v4555
      %v5361 = vpop.f32.mrb[0].mxu0
      %v5362 = vadd.f32 0.0, %v5361
      %v5363 = vpop.f32.mrb[0].mxu0
      %v5364 = vadd.f32 0.0, %v5363
      %v5365 = vpop.f32.mrb[0].mxu0
      %v5366 = vpop.f32.mrb[0].mxu0
      %5367 = vdwg.mxu0
      %5368 = vmatprep.subr.bf16.mxu0 %v5136
      %5369 = vmatpush1.bf16.msra.mxu0 %v5135
      %5370 = vmatprep.subr.bf16.mxu0 %v5140
      %5371 = vmatpush1.bf16.msra.mxu0 %v5139
      %5372 = vmatprep.subr.bf16.mxu0 %v5144
      %5373 = vmatpush1.bf16.msra.mxu0 %v5143
      %5374 = vmatprep.subr.bf16.mxu0 %v5148
      %5375 = vmatpush1.bf16.msra.mxu0 %v5147
      %5376 = vmatprep.subr.bf16.mxu0 %v5152
      %5377 = vmatpush1.bf16.msra.mxu0 %v5151
      %5378 = vmatprep.subr.bf16.mxu0 %v5156
      %5379 = vmatpush1.bf16.msra.mxu0 %v5155
      %5380 = vmatprep.subr.bf16.mxu0 %v5160
      %5381 = vmatpush1.bf16.msra.mxu0 %v5159
      %5382 = vmatprep.subr.bf16.mxu0 %v5164
      %5383 = vmatpush1.bf16.msra.mxu0 %v5163
      %5384 = vmatprep.subr.bf16.mxu0 %v5168
      %5385 = vmatpush1.bf16.msra.mxu0 %v5167
      %5386 = vmatprep.subr.bf16.mxu0 %v5172
      %5387 = vmatpush1.bf16.msra.mxu0 %v5171
      %5388 = vmatprep.subr.bf16.mxu0 %v5176
      %5389 = vmatpush1.bf16.msra.mxu0 %v5175
      %5390 = vmatprep.subr.bf16.mxu0 %v5180
      %5391 = vmatpush1.bf16.msra.mxu0 %v5179
      %5392 = vmatprep.subr.bf16.mxu0 %v5184
      %5393 = vmatpush1.bf16.msra.mxu0 %v5183
      %5394 = vmatprep.subr.bf16.mxu0 %v5188
      %5395 = vmatpush1.bf16.msra.mxu0 %v5187
      %5396 = vmatprep.subr.bf16.mxu0 %v5192
      %5397 = vmatpush1.bf16.msra.mxu0 %v5191
      %5398 = vmatprep.subr.bf16.mxu0 %v5196
      %5399 = vmatpush1.bf16.msra.mxu0 %v5195
      %5400 = vmatprep.mubr.bf16.mxu0 %v4558
      %5401 = vmatmul.mubr.bf16.gmra.mrb[0].mxu0 %v4557
      %v5402 = vpop.f32.mrb[0].mxu0
      %v5403 = vadd.f32 %v5362, %v5402
      %v5404 = vpop.f32.mrb[0].mxu0
      %v5405 = vadd.f32 %v5364, %v5404
      %v5406 = vpop.f32.mrb[0].mxu0
      %v5407 = vpop.f32.mrb[0].mxu0
      %5408 = vdwg.mxu0
      %5409 = vmatprep.subr.bf16.mxu0 %v5074
      %5410 = vmatpush1.bf16.msra.mxu0 %v5073
      %5411 = vmatprep.subr.bf16.mxu0 %v5078
      %5412 = vmatpush1.bf16.msra.mxu0 %v5077
      %5413 = vmatprep.subr.bf16.mxu0 %v5082
      %5414 = vmatpush1.bf16.msra.mxu0 %v5081
      %5415 = vmatprep.subr.bf16.mxu0 %v5086
      %5416 = vmatpush1.bf16.msra.mxu0 %v5085
      %5417 = vmatprep.subr.bf16.mxu0 %v5090
      %5418 = vmatpush1.bf16.msra.mxu0 %v5089
      %5419 = vmatprep.subr.bf16.mxu0 %v5094
      %5420 = vmatpush1.bf16.msra.mxu0 %v5093
      %5421 = vmatprep.subr.bf16.mxu0 %v5098
      %5422 = vmatpush1.bf16.msra.mxu0 %v5097
      %5423 = vmatprep.subr.bf16.mxu0 %v5102
      %5424 = vmatpush1.bf16.msra.mxu0 %v5101
      %5425 = vmatprep.subr.bf16.mxu0 %v5106
      %5426 = vmatpush1.bf16.msra.mxu0 %v5105
      %5427 = vmatprep.subr.bf16.mxu0 %v5110
      %5428 = vmatpush1.bf16.msra.mxu0 %v5109
      %5429 = vmatprep.subr.bf16.mxu0 %v5114
      %5430 = vmatpush1.bf16.msra.mxu0 %v5113
      %5431 = vmatprep.subr.bf16.mxu0 %v5118
      %5432 = vmatpush1.bf16.msra.mxu0 %v5117
      %5433 = vmatprep.subr.bf16.mxu0 %v5122
      %5434 = vmatpush1.bf16.msra.mxu0 %v5121
      %5435 = vmatprep.subr.bf16.mxu0 %v5126
      %5436 = vmatpush1.bf16.msra.mxu0 %v5125
      %5437 = vmatprep.subr.bf16.mxu0 %v5130
      %5438 = vmatpush1.bf16.msra.mxu0 %v5129
      %5439 = vmatprep.subr.bf16.mxu0 %v5134
      %5440 = vmatpush1.bf16.msra.mxu0 %v5133
      %5441 = vmatprep.mubr.bf16.mxu0 %v4556
      %5442 = vmatmul.mubr.bf16.gmra.mrb[0].mxu0 %v4555
      %v5443 = vpop.f32.mrb[0].mxu0
      %v5444 = vadd.f32 0.0, %v5443
      %v5445 = vpop.f32.mrb[0].mxu0
      %v5446 = vadd.f32 0.0, %v5445
      %v5447 = vpop.f32.mrb[0].mxu0
      %v5448 = vpop.f32.mrb[0].mxu0
      %5449 = vdwg.mxu0
      %5450 = vmatprep.subr.bf16.mxu0 %v5138
      %5451 = vmatpush1.bf16.msra.mxu0 %v5137
      %5452 = vmatprep.subr.bf16.mxu0 %v5142
      %5453 = vmatpush1.bf16.msra.mxu0 %v5141
      %5454 = vmatprep.subr.bf16.mxu0 %v5146
      %5455 = vmatpush1.bf16.msra.mxu0 %v5145
      %5456 = vmatprep.subr.bf16.mxu0 %v5150
      %5457 = vmatpush1.bf16.msra.mxu0 %v5149
      %5458 = vmatprep.subr.bf16.mxu0 %v5154
      %5459 = vmatpush1.bf16.msra.mxu0 %v5153
      %5460 = vmatprep.subr.bf16.mxu0 %v5158
      %5461 = vmatpush1.bf16.msra.mxu0 %v5157
      %5462 = vmatprep.subr.bf16.mxu0 %v5162
      %5463 = vmatpush1.bf16.msra.mxu0 %v5161
      %5464 = vmatprep.subr.bf16.mxu0 %v5166
      %5465 = vmatpush1.bf16.msra.mxu0 %v5165
      %5466 = vmatprep.subr.bf16.mxu0 %v5170
      %5467 = vmatpush1.bf16.msra.mxu0 %v5169
      %5468 = vmatprep.subr.bf16.mxu0 %v5174
      %5469 = vmatpush1.bf16.msra.mxu0 %v5173
      %5470 = vmatprep.subr.bf16.mxu0 %v5178
      %5471 = vmatpush1.bf16.msra.mxu0 %v5177
      %5472 = vmatprep.subr.bf16.mxu0 %v5182
      %5473 = vmatpush1.bf16.msra.mxu0 %v5181
      %5474 = vmatprep.subr.bf16.mxu0 %v5186
      %5475 = vmatpush1.bf16.msra.mxu0 %v5185
      %5476 = vmatprep.subr.bf16.mxu0 %v5190
      %5477 = vmatpush1.bf16.msra.mxu0 %v5189
      %5478 = vmatprep.subr.bf16.mxu0 %v5194
      %5479 = vmatpush1.bf16.msra.mxu0 %v5193
      %5480 = vmatprep.subr.bf16.mxu0 %v5198
      %5481 = vmatpush1.bf16.msra.mxu0 %v5197
      %5482 = vmatprep.mubr.bf16.mxu0 %v4558
      %5483 = vmatmul.mubr.bf16.gmra.mrb[0].mxu0 %v4557
      %v5484 = vpop.f32.mrb[0].mxu0
      %v5485 = vadd.f32 %v5444, %v5484
      %v5486 = vpop.f32.mrb[0].mxu0
      %v5487 = vadd.f32 %v5446, %v5486
      %v5488 = vpop.f32.mrb[0].mxu0
      %v5489 = vpop.f32.mrb[0].mxu0
      %5490 = vdwg.mxu0
      %v5491 = vadd.f32 %v2326, %v5403
      %v5492 = vadd.f32 %v2327, %v5405
      %v5493 = vadd.f32 %v2328, %v5485
      %v5494 = vadd.f32 %v2329, %v5487
      %v5495 = vld [vmem:[%s7] sm:$0xf]
      %v5497 = vlaneseq
      %v5498 = vshrl.u32 %v5497, 7
      %v5499 = vsub.s32 0, %v5498
      %v5500 = vrot.slane %v5495, %v5499
      %v5501 = vlaneseq
      %v5502 = vshrl.u32 %v5501, 7
      %v5503 = vsub.s32 1, %v5502
      %v5504 = vrot.slane %v5495, %v5503
      %v5505 = vlaneseq
      %v5506 = vshrl.u32 %v5505, 7
      %v5507 = vsub.s32 2, %v5506
      %v5508 = vrot.slane %v5495, %v5507
      %v5509 = vlaneseq
      %v5510 = vshrl.u32 %v5509, 7
      %v5511 = vsub.s32 3, %v5510
      %v5512 = vrot.slane %v5495, %v5511
      %v5517 = vadd.f32 %v5491, %v5500
      %v5518 = vadd.f32 %v5492, %v5504
      %v5519 = vadd.f32 %v5493, %v5508
      %v5520 = vadd.f32 %v5494, %v5512
      %5521 = vst [vmem:[%s327] sm:$0xff] %v5517
      %5522 = vst [vmem:[%s327 + $0x8] sm:$0xff] %v5518
      %5523 = vst [vmem:[%s327 + $0x10] sm:$0xff] %v5519
      %5524 = vst [vmem:[%s327 + $0x18] sm:$0xff] %v5520
      %p5525 = scmp.lt.s32.totalorder %s23, 1
      %s5526 = scalar_select %p5525, %s23, 1
      %p5527 = scmp.lt.s32.totalorder %s24, 0
      %s5528 = scalar_select %p5527, %s24, 0
      %s5529 = smul.addr %s5528, 4
      %s5530 = smul.addr %s5526, 4
      %s5531 = sadd.s32 %s5529, %s5530
      %s5532 = smul.addr %s5531, 8
      %s5533 = scalar_lea.vmem %s8, %s5532
      // Predicated region
      $region113: #{transformer_block.2} parent=51 // pred_check
        %p5534 = pneg %p224
      $region114: #{transformer_block.2} parent=51 // pred_check_branch
        %5536 = sbr.rel (%p5534) target = $region116
      $region115: #{transformer_block.2} parent=51 // pred_region
        _
      $region116: #{transformer_block.2} parent=51 // pred_fallthru
        _
    $region52: #{transformer_block.2} parent=5 // pred_fallthru
      _
    %p5537 = scmp.le.s32.totalorder 2, %s14
    // Predicated region
    $region117: #{transformer_block.2} parent=5 // pred_check
      %p5538 = pneg %p5537
    $region118: #{transformer_block.2} parent=5 // pred_check_branch
      %5540 = sbr.rel (%p5538) target = $region120
    $region119: #{transformer_block.2} parent=5 // pred_region
      %s5541 = ssub.s32 %s14, 2
      // Predicated region
      $region121: #{transformer_block.2} parent=119 // pred_check
        %p5542 = pneg %p230
      $region122: #{transformer_block.2} parent=119 // pred_check_branch
        %5544 = sbr.rel (%p5542) target = $region124
      $region123: #{transformer_block.2} parent=119 // pred_region
        %p5545 = scmp.lt.s32.totalorder %s25, 1
        %s5546 = scalar_select %p5545, %s25, 1
        %p5547 = scmp.lt.s32.totalorder %s26, 0
        %s5548 = scalar_select %p5547, %s26, 0
        %s5549 = smul.addr %s5548, 4
        %s5550 = smul.addr %s5546, 4
        %s5551 = sadd.s32 %s5549, %s5550
        %s5552 = smul.addr %s5551, 8
        %s5553 = scalar_lea.vmem %s8, %s5552
      $region124: #{transformer_block.2} parent=119 // pred_fallthru
        _
    $region120: #{transformer_block.2} parent=5 // pred_fallthru
      _
  $region6: #{transformer_block.2} parent=0 // loop_footer
    %s18 = sadd.s32 1, %s14
  $region7: #{transformer_block.2} parent=0 // loop_footer_branch
    %13 = sbr.rel target = $region3
  $region8: #{transformer_block.2} parent=0 // loop_exit
    _

// kernel: transformer_block.3
$region0: #{transformer_block.3}
  #allocation0 [shape = 'u32[]', space=smem, size = 0x4, offset = 0x4, fixed_abs, tag = 'smem constant byte address 0x4 - core index']
  #allocation1 [shape = 'u32[144,128]{1,0:T(1,128)}', space=vmem, size = 0x12000, scoped, tag = 'internal scratch']
  %s0 = inlined_call_operand.vmem [shape: f32[16,512], index: 0, kind: input, shape index: {}]
  %s1 = inlined_call_operand.vmem [shape: f32[1,512], index: 1, kind: input, shape index: {}]
  %s2 = inlined_call_operand.vmem [shape: f32[1,512], index: 2, kind: input, shape index: {}]
  %s3 = inlined_call_operand.vmem [shape: bf16[512,2048], index: 3, kind: input, shape index: {}]
  %s4 = inlined_call_operand.vmem [shape: f32[1,2048], index: 4, kind: input, shape index: {}]
  %s5 = inlined_call_operand.vmem [shape: bf16[2048,512], index: 5, kind: input, shape index: {}]
  %s6 = inlined_call_operand.vmem [shape: f32[1,512], index: 6, kind: input, shape index: {}]
  %s7 = inlined_call_operand.hbm [shape: f32[16,512], index: 7, kind: output, shape index: {}]
  %s8 = sld [smem:[#allocation0]]
  $region38: #{transformer_block.3} parent=0
    _
  %s10 = ssub.s32 1, %s8
  %s11 = scalar_select 0, %s10, %s8
  $region1: #{transformer_block.3} parent=0
    #allocation2 [shape = 'u8[32768]{0}', space=vmem, size = 0x8000, scoped, tag = 'output window, operand 0, single buffered']
    #allocation3 [shape = 's32[1]{0}', space=sflag, size = 0x4, scoped, tag = 'scoped memory for transformer_block.3']
    %12 = vsyncpa [#allocation3], 0
    // Predicated region
    $region2: #{transformer_block.3} parent=1 // pred_check
      _
    $region3: #{transformer_block.3} parent=1 // pred_check_branch
      %14 = sbr.rel (0) target = $region5
    $region4: #{transformer_block.3} parent=1 // pred_region
      _
    $region5: #{transformer_block.3} parent=1 // pred_fallthru
      _
    // Predicated region
    $region6: #{transformer_block.3} parent=1 // pred_check
      _
    $region7: #{transformer_block.3} parent=1 // pred_check_branch
      %16 = sbr.rel (0) target = $region9
    $region8: #{transformer_block.3} parent=1 // pred_region
      _
    $region9: #{transformer_block.3} parent=1 // pred_fallthru
      _
    // Predicated region
    $region10: #{transformer_block.3} parent=1 // pred_check
      _
    $region11: #{transformer_block.3} parent=1 // pred_check_branch
      %18 = sbr.rel (0) target = $region13
    $region12: #{transformer_block.3} parent=1 // pred_region
      _
    $region13: #{transformer_block.3} parent=1 // pred_fallthru
      _
    // Predicated region
    $region14: #{transformer_block.3} parent=1 // pred_check
      _
    $region15: #{transformer_block.3} parent=1 // pred_check_branch
      %20 = sbr.rel (0) target = $region17
    $region16: #{transformer_block.3} parent=1 // pred_region
      _
    $region17: #{transformer_block.3} parent=1 // pred_fallthru
      _
    // Predicated region
    $region18: #{transformer_block.3} parent=1 // pred_check
      _
    $region19: #{transformer_block.3} parent=1 // pred_check_branch
      %22 = sbr.rel (0) target = $region21
    $region20: #{transformer_block.3} parent=1 // pred_region
      _
    $region21: #{transformer_block.3} parent=1 // pred_fallthru
      _
    // Predicated region
    $region22: #{transformer_block.3} parent=1 // pred_check
      _
    $region23: #{transformer_block.3} parent=1 // pred_check_branch
      %24 = sbr.rel (0) target = $region25
    $region24: #{transformer_block.3} parent=1 // pred_region
      _
    $region25: #{transformer_block.3} parent=1 // pred_fallthru
      _
    // Predicated region
    $region26: #{transformer_block.3} parent=1 // pred_check
      _
    $region27: #{transformer_block.3} parent=1 // pred_check_branch
      %26 = sbr.rel (0) target = $region29
    $region28: #{transformer_block.3} parent=1 // pred_region
      _
    $region29: #{transformer_block.3} parent=1 // pred_fallthru
      _
    %v27 = vld [vmem:[%s0] sm:$0xff]
    %v28 = vld [vmem:[%s0 + $0x8] sm:$0xff]
    %v29 = vld [vmem:[%s0 + $0x10] sm:$0xff]
    %v30 = vld [vmem:[%s0 + $0x18] sm:$0xff]
    %v31 = vld [vmem:[%s0 + $0x20] sm:$0xff]
    %v32 = vld [vmem:[%s0 + $0x28] sm:$0xff]
    %v33 = vld [vmem:[%s0 + $0x30] sm:$0xff]
    %v34 = vld [vmem:[%s0 + $0x38] sm:$0xff]
    %v35 = vld [vmem:[%s1] sm:$0xf]
    %v36 = vld [vmem:[%s2] sm:$0xf]
    %v37 = vadd.f32 %v27, %v28
    %v38 = vadd.f32 %v37, %v29
    %v39 = vadd.f32 %v38, %v30
    %40 = vadd.xlane.f32.xlu0 %v39
    %v41 = vpop.xlane.xlu0 %40
    %v42 = vadd.f32 %v31, %v32
    %v43 = vadd.f32 %v42, %v33
    %v44 = vadd.f32 %v43, %v34
    %45 = vadd.xlane.f32.xlu0 %v44
    %v46 = vpop.xlane.xlu0 %45
    %v47 = vrcp.pop 512.0
    %v48 = vmul.f32 %v41, %v47
    %v49 = vmul.f32 %v46, %v47
    %v50 = vsub.f32 %v27, %v48
    %v51 = vsub.f32 %v28, %v48
    %v52 = vsub.f32 %v29, %v48
    %v53 = vsub.f32 %v30, %v48
    %v54 = vsub.f32 %v31, %v49
    %v55 = vsub.f32 %v32, %v49
    %v56 = vsub.f32 %v33, %v49
    %v57 = vsub.f32 %v34, %v49
    %v58 = vmul.f32 %v50, %v50
    %v59 = vmul.f32 %v51, %v51
    %v60 = vmul.f32 %v52, %v52
    %v61 = vmul.f32 %v53, %v53
    %v62 = vmul.f32 %v54, %v54
    %v63 = vmul.f32 %v55, %v55
    %v64 = vmul.f32 %v56, %v56
    %v65 = vmul.f32 %v57, %v57
    %v66 = vadd.f32 %v58, %v59
    %v67 = vadd.f32 %v66, %v60
    %v68 = vadd.f32 %v67, %v61
    %69 = vadd.xlane.f32.xlu0 %v68
    %v70 = vpop.xlane.xlu0 %69
    %v71 = vadd.f32 %v62, %v63
    %v72 = vadd.f32 %v71, %v64
    %v73 = vadd.f32 %v72, %v65
    %74 = vadd.xlane.f32.xlu0 %v73
    %v75 = vpop.xlane.xlu0 %74
    %v76 = vmul.f32 %v70, %v47
    %v77 = vmul.f32 %v75, %v47
    %v78 = vadd.f32 %v76, 1e-05
    %v79 = vadd.f32 %v77, 1e-05
    %v80 = vrsqrt.pop %v78
    %v81 = vrsqrt.pop %v79
    %v82 = vmul.f32 %v50, %v80
    %v83 = vmul.f32 %v51, %v80
    %v84 = vmul.f32 %v52, %v80
    %v85 = vmul.f32 %v53, %v80
    %v86 = vmul.f32 %v54, %v81
    %v87 = vmul.f32 %v55, %v81
    %v88 = vmul.f32 %v56, %v81
    %v89 = vmul.f32 %v57, %v81
    %v91 = vlaneseq
    %v92 = vshrl.u32 %v91, 7
    %v93 = vsub.s32 0, %v92
    %v94 = vrot.slane %v35, %v93
    %v95 = vlaneseq
    %v96 = vshrl.u32 %v95, 7
    %v97 = vsub.s32 1, %v96
    %v98 = vrot.slane %v35, %v97
    %v99 = vlaneseq
    %v100 = vshrl.u32 %v99, 7
    %v101 = vsub.s32 2, %v100
    %v102 = vrot.slane %v35, %v101
    %v103 = vlaneseq
    %v104 = vshrl.u32 %v103, 7
    %v105 = vsub.s32 3, %v104
    %v106 = vrot.slane %v35, %v105
    %v111 = vmul.f32 %v82, %v94
    %v112 = vmul.f32 %v83, %v98
    %v113 = vmul.f32 %v84, %v102
    %v114 = vmul.f32 %v85, %v106
    %v115 = vmul.f32 %v86, %v94
    %v116 = vmul.f32 %v87, %v98
    %v117 = vmul.f32 %v88, %v102
    %v118 = vmul.f32 %v89, %v106
    %v120 = vlaneseq
    %v121 = vshrl.u32 %v120, 7
    %v122 = vsub.s32 0, %v121
    %v123 = vrot.slane %v36, %v122
    %v124 = vlaneseq
    %v125 = vshrl.u32 %v124, 7
    %v126 = vsub.s32 1, %v125
    %v127 = vrot.slane %v36, %v126
    %v128 = vlaneseq
    %v129 = vshrl.u32 %v128, 7
    %v130 = vsub.s32 2, %v129
    %v131 = vrot.slane %v36, %v130
    %v132 = vlaneseq
    %v133 = vshrl.u32 %v132, 7
    %v134 = vsub.s32 3, %v133
    %v135 = vrot.slane %v36, %v134
    %v140 = vadd.f32 %v111, %v123
    %v141 = vadd.f32 %v112, %v127
    %v142 = vadd.f32 %v113, %v131
    %v143 = vadd.f32 %v114, %v135
    %v144 = vadd.f32 %v115, %v123
    %v145 = vadd.f32 %v116, %v127
    %v146 = vadd.f32 %v117, %v131
    %v147 = vadd.f32 %v118, %v135
    %v148 = vpack.c.bf16 %v144, %v140
    %v149 = vpack.c.bf16 %v145, %v141
    %v150 = vpack.c.bf16 %v146, %v142
    %v151 = vpack.c.bf16 %v147, %v143
    %v152 = vld [vmem:[%s3] sm:$0xff]
    %v153 = vld [vmem:[%s3 + $0x8] sm:$0xff]
    %v154 = vld [vmem:[%s3 + $0x10] sm:$0xff]
    %v155 = vld [vmem:[%s3 + $0x18] sm:$0xff]
    %v156 = vld [vmem:[%s3 + $0x20] sm:$0xff]
    %v157 = vld [vmem:[%s3 + $0x28] sm:$0xff]
    %v158 = vld [vmem:[%s3 + $0x30] sm:$0xff]
    %v159 = vld [vmem:[%s3 + $0x38] sm:$0xff]
    %v160 = vld [vmem:[%s3 + $0x40] sm:$0xff]
    %v161 = vld [vmem:[%s3 + $0x48] sm:$0xff]
    %v162 = vld [vmem:[%s3 + $0x50] sm:$0xff]
    %v163 = vld [vmem:[%s3 + $0x58] sm:$0xff]
    %v164 = vld [vmem:[%s3 + $0x60] sm:$0xff]
    %v165 = vld [vmem:[%s3 + $0x68] sm:$0xff]
    %v166 = vld [vmem:[%s3 + $0x70] sm:$0xff]
    %v167 = vld [vmem:[%s3 + $0x78] sm:$0xff]
    %v168 = vld [vmem:[%s3 + $0x80] sm:$0xff]
    %v169 = vld [vmem:[%s3 + $0x88] sm:$0xff]
    %v170 = vld [vmem:[%s3 + $0x90] sm:$0xff]
    %v171 = vld [vmem:[%s3 + $0x98] sm:$0xff]
    %v172 = vld [vmem:[%s3 + $0xa0] sm:$0xff]
    %v173 = vld [vmem:[%s3 + $0xa8] sm:$0xff]
    %v174 = vld [vmem:[%s3 + $0xb0] sm:$0xff]
    %v175 = vld [vmem:[%s3 + $0xb8] sm:$0xff]
    %v176 = vld [vmem:[%s3 + $0xc0] sm:$0xff]
    %v177 = vld [vmem:[%s3 + $0xc8] sm:$0xff]
    %v178 = vld [vmem:[%s3 + $0xd0] sm:$0xff]
    %v179 = vld [vmem:[%s3 + $0xd8] sm:$0xff]
    %v180 = vld [vmem:[%s3 + $0xe0] sm:$0xff]
    %v181 = vld [vmem:[%s3 + $0xe8] sm:$0xff]
    %v182 = vld [vmem:[%s3 + $0xf0] sm:$0xff]
    %v183 = vld [vmem:[%s3 + $0xf8] sm:$0xff]
    %v184 = vld [vmem:[%s3 + $0x100] sm:$0xff]
    %v185 = vld [vmem:[%s3 + $0x108] sm:$0xff]
    %v186 = vld [vmem:[%s3 + $0x110] sm:$0xff]
    %v187 = vld [vmem:[%s3 + $0x118] sm:$0xff]
    %v188 = vld [vmem:[%s3 + $0x120] sm:$0xff]
    %v189 = vld [vmem:[%s3 + $0x128] sm:$0xff]
    %v190 = vld [vmem:[%s3 + $0x130] sm:$0xff]
    %v191 = vld [vmem:[%s3 + $0x138] sm:$0xff]
    %v192 = vld [vmem:[%s3 + $0x140] sm:$0xff]
    %v193 = vld [vmem:[%s3 + $0x148] sm:$0xff]
    %v194 = vld [vmem:[%s3 + $0x150] sm:$0xff]
    %v195 = vld [vmem:[%s3 + $0x158] sm:$0xff]
    %v196 = vld [vmem:[%s3 + $0x160] sm:$0xff]
    %v197 = vld [vmem:[%s3 + $0x168] sm:$0xff]
    %v198 = vld [vmem:[%s3 + $0x170] sm:$0xff]
    %v199 = vld [vmem:[%s3 + $0x178] sm:$0xff]
    %v200 = vld [vmem:[%s3 + $0x180] sm:$0xff]
    %v201 = vld [vmem:[%s3 + $0x188] sm:$0xff]
    %v202 = vld [vmem:[%s3 + $0x190] sm:$0xff]
    %v203 = vld [vmem:[%s3 + $0x198] sm:$0xff]
    %v204 = vld [vmem:[%s3 + $0x1a0] sm:$0xff]
    %v205 = vld [vmem:[%s3 + $0x1a8] sm:$0xff]
    %v206 = vld [vmem:[%s3 + $0x1b0] sm:$0xff]
    %v207 = vld [vmem:[%s3 + $0x1b8] sm:$0xff]
    %v208 = vld [vmem:[%s3 + $0x1c0] sm:$0xff]
    %v209 = vld [vmem:[%s3 + $0x1c8] sm:$0xff]
    %v210 = vld [vmem:[%s3 + $0x1d0] sm:$0xff]
    %v211 = vld [vmem:[%s3 + $0x1d8] sm:$0xff]
    %v212 = vld [vmem:[%s3 + $0x1e0] sm:$0xff]
    %v213 = vld [vmem:[%s3 + $0x1e8] sm:$0xff]
    %v214 = vld [vmem:[%s3 + $0x1f0] sm:$0xff]
    %v215 = vld [vmem:[%s3 + $0x1f8] sm:$0xff]
    %v216 = vld [vmem:[%s3 + $0x200] sm:$0xff]
    %v217 = vld [vmem:[%s3 + $0x208] sm:$0xff]
    %v218 = vld [vmem:[%s3 + $0x210] sm:$0xff]
    %v219 = vld [vmem:[%s3 + $0x218] sm:$0xff]
    %v220 = vld [vmem:[%s3 + $0x220] sm:$0xff]
    %v221 = vld [vmem:[%s3 + $0x228] sm:$0xff]
    %v222 = vld [vmem:[%s3 + $0x230] sm:$0xff]
    %v223 = vld [vmem:[%s3 + $0x238] sm:$0xff]
    %v224 = vld [vmem:[%s3 + $0x240] sm:$0xff]
    %v225 = vld [vmem:[%s3 + $0x248] sm:$0xff]
    %v226 = vld [vmem:[%s3 + $0x250] sm:$0xff]
    %v227 = vld [vmem:[%s3 + $0x258] sm:$0xff]
    %v228 = vld [vmem:[%s3 + $0x260] sm:$0xff]
    %v229 = vld [vmem:[%s3 + $0x268] sm:$0xff]
    %v230 = vld [vmem:[%s3 + $0x270] sm:$0xff]
    %v231 = vld [vmem:[%s3 + $0x278] sm:$0xff]
    %v232 = vld [vmem:[%s3 + $0x280] sm:$0xff]
    %v233 = vld [vmem:[%s3 + $0x288] sm:$0xff]
    %v234 = vld [vmem:[%s3 + $0x290] sm:$0xff]
    %v235 = vld [vmem:[%s3 + $0x298] sm:$0xff]
    %v236 = vld [vmem:[%s3 + $0x2a0] sm:$0xff]
    %v237 = vld [vmem:[%s3 + $0x2a8] sm:$0xff]
    %v238 = vld [vmem:[%s3 + $0x2b0] sm:$0xff]
    %v239 = vld [vmem:[%s3 + $0x2b8] sm:$0xff]
    %v240 = vld [vmem:[%s3 + $0x2c0] sm:$0xff]
    %v241 = vld [vmem:[%s3 + $0x2c8] sm:$0xff]
    %v242 = vld [vmem:[%s3 + $0x2d0] sm:$0xff]
    %v243 = vld [vmem:[%s3 + $0x2d8] sm:$0xff]
    %v244 = vld [vmem:[%s3 + $0x2e0] sm:$0xff]
    %v245 = vld [vmem:[%s3 + $0x2e8] sm:$0xff]
    %v246 = vld [vmem:[%s3 + $0x2f0] sm:$0xff]
    %v247 = vld [vmem:[%s3 + $0x2f8] sm:$0xff]
    %v248 = vld [vmem:[%s3 + $0x300] sm:$0xff]
    %v249 = vld [vmem:[%s3 + $0x308] sm:$0xff]
    %v250 = vld [vmem:[%s3 + $0x310] sm:$0xff]
    %v251 = vld [vmem:[%s3 + $0x318] sm:$0xff]
    %v252 = vld [vmem:[%s3 + $0x320] sm:$0xff]
    %v253 = vld [vmem:[%s3 + $0x328] sm:$0xff]
    %v254 = vld [vmem:[%s3 + $0x330] sm:$0xff]
    %v255 = vld [vmem:[%s3 + $0x338] sm:$0xff]
    %v256 = vld [vmem:[%s3 + $0x340] sm:$0xff]
    %v257 = vld [vmem:[%s3 + $0x348] sm:$0xff]
    %v258 = vld [vmem:[%s3 + $0x350] sm:$0xff]
    %v259 = vld [vmem:[%s3 + $0x358] sm:$0xff]
    %v260 = vld [vmem:[%s3 + $0x360] sm:$0xff]
    %v261 = vld [vmem:[%s3 + $0x368] sm:$0xff]
    %v262 = vld [vmem:[%s3 + $0x370] sm:$0xff]
    %v263 = vld [vmem:[%s3 + $0x378] sm:$0xff]
    %v264 = vld [vmem:[%s3 + $0x380] sm:$0xff]
    %v265 = vld [vmem:[%s3 + $0x388] sm:$0xff]
    %v266 = vld [vmem:[%s3 + $0x390] sm:$0xff]
    %v267 = vld [vmem:[%s3 + $0x398] sm:$0xff]
    %v268 = vld [vmem:[%s3 + $0x3a0] sm:$0xff]
    %v269 = vld [vmem:[%s3 + $0x3a8] sm:$0xff]
    %v270 = vld [vmem:[%s3 + $0x3b0] sm:$0xff]
    %v271 = vld [vmem:[%s3 + $0x3b8] sm:$0xff]
    %v272 = vld [vmem:[%s3 + $0x3c0] sm:$0xff]
    %v273 = vld [vmem:[%s3 + $0x3c8] sm:$0xff]
    %v274 = vld [vmem:[%s3 + $0x3d0] sm:$0xff]
    %v275 = vld [vmem:[%s3 + $0x3d8] sm:$0xff]
    %v276 = vld [vmem:[%s3 + $0x3e0] sm:$0xff]
    %v277 = vld [vmem:[%s3 + $0x3e8] sm:$0xff]
    %v278 = vld [vmem:[%s3 + $0x3f0] sm:$0xff]
    %v279 = vld [vmem:[%s3 + $0x3f8] sm:$0xff]
    %v280 = vld [vmem:[%s3 + $0x400] sm:$0xff]
    %v281 = vld [vmem:[%s3 + $0x408] sm:$0xff]
    %v282 = vld [vmem:[%s3 + $0x410] sm:$0xff]
    %v283 = vld [vmem:[%s3 + $0x418] sm:$0xff]
    %v284 = vld [vmem:[%s3 + $0x420] sm:$0xff]
    %v285 = vld [vmem:[%s3 + $0x428] sm:$0xff]
    %v286 = vld [vmem:[%s3 + $0x430] sm:$0xff]
    %v287 = vld [vmem:[%s3 + $0x438] sm:$0xff]
    %v288 = vld [vmem:[%s3 + $0x440] sm:$0xff]
    %v289 = vld [vmem:[%s3 + $0x448] sm:$0xff]
    %v290 = vld [vmem:[%s3 + $0x450] sm:$0xff]
    %v291 = vld [vmem:[%s3 + $0x458] sm:$0xff]
    %v292 = vld [vmem:[%s3 + $0x460] sm:$0xff]
    %v293 = vld [vmem:[%s3 + $0x468] sm:$0xff]
    %v294 = vld [vmem:[%s3 + $0x470] sm:$0xff]
    %v295 = vld [vmem:[%s3 + $0x478] sm:$0xff]
    %v296 = vld [vmem:[%s3 + $0x480] sm:$0xff]
    %v297 = vld [vmem:[%s3 + $0x488] sm:$0xff]
    %v298 = vld [vmem:[%s3 + $0x490] sm:$0xff]
    %v299 = vld [vmem:[%s3 + $0x498] sm:$0xff]
    %v300 = vld [vmem:[%s3 + $0x4a0] sm:$0xff]
    %v301 = vld [vmem:[%s3 + $0x4a8] sm:$0xff]
    %v302 = vld [vmem:[%s3 + $0x4b0] sm:$0xff]
    %v303 = vld [vmem:[%s3 + $0x4b8] sm:$0xff]
    %v304 = vld [vmem:[%s3 + $0x4c0] sm:$0xff]
    %v305 = vld [vmem:[%s3 + $0x4c8] sm:$0xff]
    %v306 = vld [vmem:[%s3 + $0x4d0] sm:$0xff]
    %v307 = vld [vmem:[%s3 + $0x4d8] sm:$0xff]
    %v308 = vld [vmem:[%s3 + $0x4e0] sm:$0xff]
    %v309 = vld [vmem:[%s3 + $0x4e8] sm:$0xff]
    %v310 = vld [vmem:[%s3 + $0x4f0] sm:$0xff]
    %v311 = vld [vmem:[%s3 + $0x4f8] sm:$0xff]
    %v312 = vld [vmem:[%s3 + $0x500] sm:$0xff]
    %v313 = vld [vmem:[%s3 + $0x508] sm:$0xff]
    %v314 = vld [vmem:[%s3 + $0x510] sm:$0xff]
    %v315 = vld [vmem:[%s3 + $0x518] sm:$0xff]
    %v316 = vld [vmem:[%s3 + $0x520] sm:$0xff]
    %v317 = vld [vmem:[%s3 + $0x528] sm:$0xff]
    %v318 = vld [vmem:[%s3 + $0x530] sm:$0xff]
    %v319 = vld [vmem:[%s3 + $0x538] sm:$0xff]
    %v320 = vld [vmem:[%s3 + $0x540] sm:$0xff]
    %v321 = vld [vmem:[%s3 + $0x548] sm:$0xff]
    %v322 = vld [vmem:[%s3 + $0x550] sm:$0xff]
    %v323 = vld [vmem:[%s3 + $0x558] sm:$0xff]
    %v324 = vld [vmem:[%s3 + $0x560] sm:$0xff]
    %v325 = vld [vmem:[%s3 + $0x568] sm:$0xff]
    %v326 = vld [vmem:[%s3 + $0x570] sm:$0xff]
    %v327 = vld [vmem:[%s3 + $0x578] sm:$0xff]
    %v328 = vld [vmem:[%s3 + $0x580] sm:$0xff]
    %v329 = vld [vmem:[%s3 + $0x588] sm:$0xff]
    %v330 = vld [vmem:[%s3 + $0x590] sm:$0xff]
    %v331 = vld [vmem:[%s3 + $0x598] sm:$0xff]
    %v332 = vld [vmem:[%s3 + $0x5a0] sm:$0xff]
    %v333 = vld [vmem:[%s3 + $0x5a8] sm:$0xff]
    %v334 = vld [vmem:[%s3 + $0x5b0] sm:$0xff]
    %v335 = vld [vmem:[%s3 + $0x5b8] sm:$0xff]
    %v336 = vld [vmem:[%s3 + $0x5c0] sm:$0xff]
    %v337 = vld [vmem:[%s3 + $0x5c8] sm:$0xff]
    %v338 = vld [vmem:[%s3 + $0x5d0] sm:$0xff]
    %v339 = vld [vmem:[%s3 + $0x5d8] sm:$0xff]
    %v340 = vld [vmem:[%s3 + $0x5e0] sm:$0xff]
    %v341 = vld [vmem:[%s3 + $0x5e8] sm:$0xff]
    %v342 = vld [vmem:[%s3 + $0x5f0] sm:$0xff]
    %v343 = vld [vmem:[%s3 + $0x5f8] sm:$0xff]
    %v344 = vld [vmem:[%s3 + $0x600] sm:$0xff]
    %v345 = vld [vmem:[%s3 + $0x608] sm:$0xff]
    %v346 = vld [vmem:[%s3 + $0x610] sm:$0xff]
    %v347 = vld [vmem:[%s3 + $0x618] sm:$0xff]
    %v348 = vld [vmem:[%s3 + $0x620] sm:$0xff]
    %v349 = vld [vmem:[%s3 + $0x628] sm:$0xff]
    %v350 = vld [vmem:[%s3 + $0x630] sm:$0xff]
    %v351 = vld [vmem:[%s3 + $0x638] sm:$0xff]
    %v352 = vld [vmem:[%s3 + $0x640] sm:$0xff]
    %v353 = vld [vmem:[%s3 + $0x648] sm:$0xff]
    %v354 = vld [vmem:[%s3 + $0x650] sm:$0xff]
    %v355 = vld [vmem:[%s3 + $0x658] sm:$0xff]
    %v356 = vld [vmem:[%s3 + $0x660] sm:$0xff]
    %v357 = vld [vmem:[%s3 + $0x668] sm:$0xff]
    %v358 = vld [vmem:[%s3 + $0x670] sm:$0xff]
    %v359 = vld [vmem:[%s3 + $0x678] sm:$0xff]
    %v360 = vld [vmem:[%s3 + $0x680] sm:$0xff]
    %v361 = vld [vmem:[%s3 + $0x688] sm:$0xff]
    %v362 = vld [vmem:[%s3 + $0x690] sm:$0xff]
    %v363 = vld [vmem:[%s3 + $0x698] sm:$0xff]
    %v364 = vld [vmem:[%s3 + $0x6a0] sm:$0xff]
    %v365 = vld [vmem:[%s3 + $0x6a8] sm:$0xff]
    %v366 = vld [vmem:[%s3 + $0x6b0] sm:$0xff]
    %v367 = vld [vmem:[%s3 + $0x6b8] sm:$0xff]
    %v368 = vld [vmem:[%s3 + $0x6c0] sm:$0xff]
    %v369 = vld [vmem:[%s3 + $0x6c8] sm:$0xff]
    %v370 = vld [vmem:[%s3 + $0x6d0] sm:$0xff]
    %v371 = vld [vmem:[%s3 + $0x6d8] sm:$0xff]
    %v372 = vld [vmem:[%s3 + $0x6e0] sm:$0xff]
    %v373 = vld [vmem:[%s3 + $0x6e8] sm:$0xff]
    %v374 = vld [vmem:[%s3 + $0x6f0] sm:$0xff]
    %v375 = vld [vmem:[%s3 + $0x6f8] sm:$0xff]
    %v376 = vld [vmem:[%s3 + $0x700] sm:$0xff]
    %v377 = vld [vmem:[%s3 + $0x708] sm:$0xff]
    %v378 = vld [vmem:[%s3 + $0x710] sm:$0xff]
    %v379 = vld [vmem:[%s3 + $0x718] sm:$0xff]
    %v380 = vld [vmem:[%s3 + $0x720] sm:$0xff]
    %v381 = vld [vmem:[%s3 + $0x728] sm:$0xff]
    %v382 = vld [vmem:[%s3 + $0x730] sm:$0xff]
    %v383 = vld [vmem:[%s3 + $0x738] sm:$0xff]
    %v384 = vld [vmem:[%s3 + $0x740] sm:$0xff]
    %v385 = vld [vmem:[%s3 + $0x748] sm:$0xff]
    %v386 = vld [vmem:[%s3 + $0x750] sm:$0xff]
    %v387 = vld [vmem:[%s3 + $0x758] sm:$0xff]
    %v388 = vld [vmem:[%s3 + $0x760] sm:$0xff]
    %v389 = vld [vmem:[%s3 + $0x768] sm:$0xff]
    %v390 = vld [vmem:[%s3 + $0x770] sm:$0xff]
    %v391 = vld [vmem:[%s3 + $0x778] sm:$0xff]
    %v392 = vld [vmem:[%s3 + $0x780] sm:$0xff]
    %v393 = vld [vmem:[%s3 + $0x788] sm:$0xff]
    %v394 = vld [vmem:[%s3 + $0x790] sm:$0xff]
    %v395 = vld [vmem:[%s3 + $0x798] sm:$0xff]
    %v396 = vld [vmem:[%s3 + $0x7a0] sm:$0xff]
    %v397 = vld [vmem:[%s3 + $0x7a8] sm:$0xff]
    %v398 = vld [vmem:[%s3 + $0x7b0] sm:$0xff]
    %v399 = vld [vmem:[%s3 + $0x7b8] sm:$0xff]
    %v400 = vld [vmem:[%s3 + $0x7c0] sm:$0xff]
    %v401 = vld [vmem:[%s3 + $0x7c8] sm:$0xff]
    %v402 = vld [vmem:[%s3 + $0x7d0] sm:$0xff]
    %v403 = vld [vmem:[%s3 + $0x7d8] sm:$0xff]
    %v404 = vld [vmem:[%s3 + $0x7e0] sm:$0xff]
    %v405 = vld [vmem:[%s3 + $0x7e8] sm:$0xff]
    %v406 = vld [vmem:[%s3 + $0x7f0] sm:$0xff]
    %v407 = vld [vmem:[%s3 + $0x7f8] sm:$0xff]
    %v408 = vld [vmem:[%s3 + $0x800] sm:$0xff]
    %v409 = vld [vmem:[%s3 + $0x808] sm:$0xff]
    %v410 = vld [vmem:[%s3 + $0x810] sm:$0xff]
    %v411 = vld [vmem:[%s3 + $0x818] sm:$0xff]
    %v412 = vld [vmem:[%s3 + $0x820] sm:$0xff]
    %v413 = vld [vmem:[%s3 + $0x828] sm:$0xff]
    %v414 = vld [vmem:[%s3 + $0x830] sm:$0xff]
    %v415 = vld [vmem:[%s3 + $0x838] sm:$0xff]
    %v416 = vld [vmem:[%s3 + $0x840] sm:$0xff]
    %v417 = vld [vmem:[%s3 + $0x848] sm:$0xff]
    %v418 = vld [vmem:[%s3 + $0x850] sm:$0xff]
    %v419 = vld [vmem:[%s3 + $0x858] sm:$0xff]
    %v420 = vld [vmem:[%s3 + $0x860] sm:$0xff]
    %v421 = vld [vmem:[%s3 + $0x868] sm:$0xff]
    %v422 = vld [vmem:[%s3 + $0x870] sm:$0xff]
    %v423 = vld [vmem:[%s3 + $0x878] sm:$0xff]
    %v424 = vld [vmem:[%s3 + $0x880] sm:$0xff]
    %v425 = vld [vmem:[%s3 + $0x888] sm:$0xff]
    %v426 = vld [vmem:[%s3 + $0x890] sm:$0xff]
    %v427 = vld [vmem:[%s3 + $0x898] sm:$0xff]
    %v428 = vld [vmem:[%s3 + $0x8a0] sm:$0xff]
    %v429 = vld [vmem:[%s3 + $0x8a8] sm:$0xff]
    %v430 = vld [vmem:[%s3 + $0x8b0] sm:$0xff]
    %v431 = vld [vmem:[%s3 + $0x8b8] sm:$0xff]
    %v432 = vld [vmem:[%s3 + $0x8c0] sm:$0xff]
    %v433 = vld [vmem:[%s3 + $0x8c8] sm:$0xff]
    %v434 = vld [vmem:[%s3 + $0x8d0] sm:$0xff]
    %v435 = vld [vmem:[%s3 + $0x8d8] sm:$0xff]
    %v436 = vld [vmem:[%s3 + $0x8e0] sm:$0xff]
    %v437 = vld [vmem:[%s3 + $0x8e8] sm:$0xff]
    %v438 = vld [vmem:[%s3 + $0x8f0] sm:$0xff]
    %v439 = vld [vmem:[%s3 + $0x8f8] sm:$0xff]
    %v440 = vld [vmem:[%s3 + $0x900] sm:$0xff]
    %v441 = vld [vmem:[%s3 + $0x908] sm:$0xff]
    %v442 = vld [vmem:[%s3 + $0x910] sm:$0xff]
    %v443 = vld [vmem:[%s3 + $0x918] sm:$0xff]
    %v444 = vld [vmem:[%s3 + $0x920] sm:$0xff]
    %v445 = vld [vmem:[%s3 + $0x928] sm:$0xff]
    %v446 = vld [vmem:[%s3 + $0x930] sm:$0xff]
    %v447 = vld [vmem:[%s3 + $0x938] sm:$0xff]
    %v448 = vld [vmem:[%s3 + $0x940] sm:$0xff]
    %v449 = vld [vmem:[%s3 + $0x948] sm:$0xff]
    %v450 = vld [vmem:[%s3 + $0x950] sm:$0xff]
    %v451 = vld [vmem:[%s3 + $0x958] sm:$0xff]
    %v452 = vld [vmem:[%s3 + $0x960] sm:$0xff]
    %v453 = vld [vmem:[%s3 + $0x968] sm:$0xff]
    %v454 = vld [vmem:[%s3 + $0x970] sm:$0xff]
    %v455 = vld [vmem:[%s3 + $0x978] sm:$0xff]
    %v456 = vld [vmem:[%s3 + $0x980] sm:$0xff]
    %v457 = vld [vmem:[%s3 + $0x988] sm:$0xff]
    %v458 = vld [vmem:[%s3 + $0x990] sm:$0xff]
    %v459 = vld [vmem:[%s3 + $0x998] sm:$0xff]
    %v460 = vld [vmem:[%s3 + $0x9a0] sm:$0xff]
    %v461 = vld [vmem:[%s3 + $0x9a8] sm:$0xff]
    %v462 = vld [vmem:[%s3 + $0x9b0] sm:$0xff]
    %v463 = vld [vmem:[%s3 + $0x9b8] sm:$0xff]
    %v464 = vld [vmem:[%s3 + $0x9c0] sm:$0xff]
    %v465 = vld [vmem:[%s3 + $0x9c8] sm:$0xff]
    %v466 = vld [vmem:[%s3 + $0x9d0] sm:$0xff]
    %v467 = vld [vmem:[%s3 + $0x9d8] sm:$0xff]
    %v468 = vld [vmem:[%s3 + $0x9e0] sm:$0xff]
    %v469 = vld [vmem:[%s3 + $0x9e8] sm:$0xff]
    %v470 = vld [vmem:[%s3 + $0x9f0] sm:$0xff]
    %v471 = vld [vmem:[%s3 + $0x9f8] sm:$0xff]
    %v472 = vld [vmem:[%s3 + $0xa00] sm:$0xff]
    %v473 = vld [vmem:[%s3 + $0xa08] sm:$0xff]
    %v474 = vld [vmem:[%s3 + $0xa10] sm:$0xff]
    %v475 = vld [vmem:[%s3 + $0xa18] sm:$0xff]
    %v476 = vld [vmem:[%s3 + $0xa20] sm:$0xff]
    %v477 = vld [vmem:[%s3 + $0xa28] sm:$0xff]
    %v478 = vld [vmem:[%s3 + $0xa30] sm:$0xff]
    %v479 = vld [vmem:[%s3 + $0xa38] sm:$0xff]
    %v480 = vld [vmem:[%s3 + $0xa40] sm:$0xff]
    %v481 = vld [vmem:[%s3 + $0xa48] sm:$0xff]
    %v482 = vld [vmem:[%s3 + $0xa50] sm:$0xff]
    %v483 = vld [vmem:[%s3 + $0xa58] sm:$0xff]
    %v484 = vld [vmem:[%s3 + $0xa60] sm:$0xff]
    %v485 = vld [vmem:[%s3 + $0xa68] sm:$0xff]
    %v486 = vld [vmem:[%s3 + $0xa70] sm:$0xff]
    %v487 = vld [vmem:[%s3 + $0xa78] sm:$0xff]
    %v488 = vld [vmem:[%s3 + $0xa80] sm:$0xff]
    %v489 = vld [vmem:[%s3 + $0xa88] sm:$0xff]
    %v490 = vld [vmem:[%s3 + $0xa90] sm:$0xff]
    %v491 = vld [vmem:[%s3 + $0xa98] sm:$0xff]
    %v492 = vld [vmem:[%s3 + $0xaa0] sm:$0xff]
    %v493 = vld [vmem:[%s3 + $0xaa8] sm:$0xff]
    %v494 = vld [vmem:[%s3 + $0xab0] sm:$0xff]
    %v495 = vld [vmem:[%s3 + $0xab8] sm:$0xff]
    %v496 = vld [vmem:[%s3 + $0xac0] sm:$0xff]
    %v497 = vld [vmem:[%s3 + $0xac8] sm:$0xff]
    %v498 = vld [vmem:[%s3 + $0xad0] sm:$0xff]
    %v499 = vld [vmem:[%s3 + $0xad8] sm:$0xff]
    %v500 = vld [vmem:[%s3 + $0xae0] sm:$0xff]
    %v501 = vld [vmem:[%s3 + $0xae8] sm:$0xff]
    %v502 = vld [vmem:[%s3 + $0xaf0] sm:$0xff]
    %v503 = vld [vmem:[%s3 + $0xaf8] sm:$0xff]
    %v504 = vld [vmem:[%s3 + $0xb00] sm:$0xff]
    %v505 = vld [vmem:[%s3 + $0xb08] sm:$0xff]
    %v506 = vld [vmem:[%s3 + $0xb10] sm:$0xff]
    %v507 = vld [vmem:[%s3 + $0xb18] sm:$0xff]
    %v508 = vld [vmem:[%s3 + $0xb20] sm:$0xff]
    %v509 = vld [vmem:[%s3 + $0xb28] sm:$0xff]
    %v510 = vld [vmem:[%s3 + $0xb30] sm:$0xff]
    %v511 = vld [vmem:[%s3 + $0xb38] sm:$0xff]
    %v512 = vld [vmem:[%s3 + $0xb40] sm:$0xff]
    %v513 = vld [vmem:[%s3 + $0xb48] sm:$0xff]
    %v514 = vld [vmem:[%s3 + $0xb50] sm:$0xff]
    %v515 = vld [vmem:[%s3 + $0xb58] sm:$0xff]
    %v516 = vld [vmem:[%s3 + $0xb60] sm:$0xff]
    %v517 = vld [vmem:[%s3 + $0xb68] sm:$0xff]
    %v518 = vld [vmem:[%s3 + $0xb70] sm:$0xff]
    %v519 = vld [vmem:[%s3 + $0xb78] sm:$0xff]
    %v520 = vld [vmem:[%s3 + $0xb80] sm:$0xff]
    %v521 = vld [vmem:[%s3 + $0xb88] sm:$0xff]
    %v522 = vld [vmem:[%s3 + $0xb90] sm:$0xff]
    %v523 = vld [vmem:[%s3 + $0xb98] sm:$0xff]
    %v524 = vld [vmem:[%s3 + $0xba0] sm:$0xff]
    %v525 = vld [vmem:[%s3 + $0xba8] sm:$0xff]
    %v526 = vld [vmem:[%s3 + $0xbb0] sm:$0xff]
    %v527 = vld [vmem:[%s3 + $0xbb8] sm:$0xff]
    %v528 = vld [vmem:[%s3 + $0xbc0] sm:$0xff]
    %v529 = vld [vmem:[%s3 + $0xbc8] sm:$0xff]
    %v530 = vld [vmem:[%s3 + $0xbd0] sm:$0xff]
    %v531 = vld [vmem:[%s3 + $0xbd8] sm:$0xff]
    %v532 = vld [vmem:[%s3 + $0xbe0] sm:$0xff]
    %v533 = vld [vmem:[%s3 + $0xbe8] sm:$0xff]
    %v534 = vld [vmem:[%s3 + $0xbf0] sm:$0xff]
    %v535 = vld [vmem:[%s3 + $0xbf8] sm:$0xff]
    %v536 = vld [vmem:[%s3 + $0xc00] sm:$0xff]
    %v537 = vld [vmem:[%s3 + $0xc08] sm:$0xff]
    %v538 = vld [vmem:[%s3 + $0xc10] sm:$0xff]
    %v539 = vld [vmem:[%s3 + $0xc18] sm:$0xff]
    %v540 = vld [vmem:[%s3 + $0xc20] sm:$0xff]
    %v541 = vld [vmem:[%s3 + $0xc28] sm:$0xff]
    %v542 = vld [vmem:[%s3 + $0xc30] sm:$0xff]
    %v543 = vld [vmem:[%s3 + $0xc38] sm:$0xff]
    %v544 = vld [vmem:[%s3 + $0xc40] sm:$0xff]
    %v545 = vld [vmem:[%s3 + $0xc48] sm:$0xff]
    %v546 = vld [vmem:[%s3 + $0xc50] sm:$0xff]
    %v547 = vld [vmem:[%s3 + $0xc58] sm:$0xff]
    %v548 = vld [vmem:[%s3 + $0xc60] sm:$0xff]
    %v549 = vld [vmem:[%s3 + $0xc68] sm:$0xff]
    %v550 = vld [vmem:[%s3 + $0xc70] sm:$0xff]
    %v551 = vld [vmem:[%s3 + $0xc78] sm:$0xff]
    %v552 = vld [vmem:[%s3 + $0xc80] sm:$0xff]
    %v553 = vld [vmem:[%s3 + $0xc88] sm:$0xff]
    %v554 = vld [vmem:[%s3 + $0xc90] sm:$0xff]
    %v555 = vld [vmem:[%s3 + $0xc98] sm:$0xff]
    %v556 = vld [vmem:[%s3 + $0xca0] sm:$0xff]
    %v557 = vld [vmem:[%s3 + $0xca8] sm:$0xff]
    %v558 = vld [vmem:[%s3 + $0xcb0] sm:$0xff]
    %v559 = vld [vmem:[%s3 + $0xcb8] sm:$0xff]
    %v560 = vld [vmem:[%s3 + $0xcc0] sm:$0xff]
    %v561 = vld [vmem:[%s3 + $0xcc8] sm:$0xff]
    %v562 = vld [vmem:[%s3 + $0xcd0] sm:$0xff]
    %v563 = vld [vmem:[%s3 + $0xcd8] sm:$0xff]
    %v564 = vld [vmem:[%s3 + $0xce0] sm:$0xff]
    %v565 = vld [vmem:[%s3 + $0xce8] sm:$0xff]
    %v566 = vld [vmem:[%s3 + $0xcf0] sm:$0xff]
    %v567 = vld [vmem:[%s3 + $0xcf8] sm:$0xff]
    %v568 = vld [vmem:[%s3 + $0xd00] sm:$0xff]
    %v569 = vld [vmem:[%s3 + $0xd08] sm:$0xff]
    %v570 = vld [vmem:[%s3 + $0xd10] sm:$0xff]
    %v571 = vld [vmem:[%s3 + $0xd18] sm:$0xff]
    %v572 = vld [vmem:[%s3 + $0xd20] sm:$0xff]
    %v573 = vld [vmem:[%s3 + $0xd28] sm:$0xff]
    %v574 = vld [vmem:[%s3 + $0xd30] sm:$0xff]
    %v575 = vld [vmem:[%s3 + $0xd38] sm:$0xff]
    %v576 = vld [vmem:[%s3 + $0xd40] sm:$0xff]
    %v577 = vld [vmem:[%s3 + $0xd48] sm:$0xff]
    %v578 = vld [vmem:[%s3 + $0xd50] sm:$0xff]
    %v579 = vld [vmem:[%s3 + $0xd58] sm:$0xff]
    %v580 = vld [vmem:[%s3 + $0xd60] sm:$0xff]
    %v581 = vld [vmem:[%s3 + $0xd68] sm:$0xff]
    %v582 = vld [vmem:[%s3 + $0xd70] sm:$0xff]
    %v583 = vld [vmem:[%s3 + $0xd78] sm:$0xff]
    %v584 = vld [vmem:[%s3 + $0xd80] sm:$0xff]
    %v585 = vld [vmem:[%s3 + $0xd88] sm:$0xff]
    %v586 = vld [vmem:[%s3 + $0xd90] sm:$0xff]
    %v587 = vld [vmem:[%s3 + $0xd98] sm:$0xff]
    %v588 = vld [vmem:[%s3 + $0xda0] sm:$0xff]
    %v589 = vld [vmem:[%s3 + $0xda8] sm:$0xff]
    %v590 = vld [vmem:[%s3 + $0xdb0] sm:$0xff]
    %v591 = vld [vmem:[%s3 + $0xdb8] sm:$0xff]
    %v592 = vld [vmem:[%s3 + $0xdc0] sm:$0xff]
    %v593 = vld [vmem:[%s3 + $0xdc8] sm:$0xff]
    %v594 = vld [vmem:[%s3 + $0xdd0] sm:$0xff]
    %v595 = vld [vmem:[%s3 + $0xdd8] sm:$0xff]
    %v596 = vld [vmem:[%s3 + $0xde0] sm:$0xff]
    %v597 = vld [vmem:[%s3 + $0xde8] sm:$0xff]
    %v598 = vld [vmem:[%s3 + $0xdf0] sm:$0xff]
    %v599 = vld [vmem:[%s3 + $0xdf8] sm:$0xff]
    %v600 = vld [vmem:[%s3 + $0xe00] sm:$0xff]
    %v601 = vld [vmem:[%s3 + $0xe08] sm:$0xff]
    %v602 = vld [vmem:[%s3 + $0xe10] sm:$0xff]
    %v603 = vld [vmem:[%s3 + $0xe18] sm:$0xff]
    %v604 = vld [vmem:[%s3 + $0xe20] sm:$0xff]
    %v605 = vld [vmem:[%s3 + $0xe28] sm:$0xff]
    %v606 = vld [vmem:[%s3 + $0xe30] sm:$0xff]
    %v607 = vld [vmem:[%s3 + $0xe38] sm:$0xff]
    %v608 = vld [vmem:[%s3 + $0xe40] sm:$0xff]
    %v609 = vld [vmem:[%s3 + $0xe48] sm:$0xff]
    %v610 = vld [vmem:[%s3 + $0xe50] sm:$0xff]
    %v611 = vld [vmem:[%s3 + $0xe58] sm:$0xff]
    %v612 = vld [vmem:[%s3 + $0xe60] sm:$0xff]
    %v613 = vld [vmem:[%s3 + $0xe68] sm:$0xff]
    %v614 = vld [vmem:[%s3 + $0xe70] sm:$0xff]
    %v615 = vld [vmem:[%s3 + $0xe78] sm:$0xff]
    %v616 = vld [vmem:[%s3 + $0xe80] sm:$0xff]
    %v617 = vld [vmem:[%s3 + $0xe88] sm:$0xff]
    %v618 = vld [vmem:[%s3 + $0xe90] sm:$0xff]
    %v619 = vld [vmem:[%s3 + $0xe98] sm:$0xff]
    %v620 = vld [vmem:[%s3 + $0xea0] sm:$0xff]
    %v621 = vld [vmem:[%s3 + $0xea8] sm:$0xff]
    %v622 = vld [vmem:[%s3 + $0xeb0] sm:$0xff]
    %v623 = vld [vmem:[%s3 + $0xeb8] sm:$0xff]
    %v624 = vld [vmem:[%s3 + $0xec0] sm:$0xff]
    %v625 = vld [vmem:[%s3 + $0xec8] sm:$0xff]
    %v626 = vld [vmem:[%s3 + $0xed0] sm:$0xff]
    %v627 = vld [vmem:[%s3 + $0xed8] sm:$0xff]
    %v628 = vld [vmem:[%s3 + $0xee0] sm:$0xff]
    %v629 = vld [vmem:[%s3 + $0xee8] sm:$0xff]
    %v630 = vld [vmem:[%s3 + $0xef0] sm:$0xff]
    %v631 = vld [vmem:[%s3 + $0xef8] sm:$0xff]
    %v632 = vld [vmem:[%s3 + $0xf00] sm:$0xff]
    %v633 = vld [vmem:[%s3 + $0xf08] sm:$0xff]
    %v634 = vld [vmem:[%s3 + $0xf10] sm:$0xff]
    %v635 = vld [vmem:[%s3 + $0xf18] sm:$0xff]
    %v636 = vld [vmem:[%s3 + $0xf20] sm:$0xff]
    %v637 = vld [vmem:[%s3 + $0xf28] sm:$0xff]
    %v638 = vld [vmem:[%s3 + $0xf30] sm:$0xff]
    %v639 = vld [vmem:[%s3 + $0xf38] sm:$0xff]
    %v640 = vld [vmem:[%s3 + $0xf40] sm:$0xff]
    %v641 = vld [vmem:[%s3 + $0xf48] sm:$0xff]
    %v642 = vld [vmem:[%s3 + $0xf50] sm:$0xff]
    %v643 = vld [vmem:[%s3 + $0xf58] sm:$0xff]
    %v644 = vld [vmem:[%s3 + $0xf60] sm:$0xff]
    %v645 = vld [vmem:[%s3 + $0xf68] sm:$0xff]
    %v646 = vld [vmem:[%s3 + $0xf70] sm:$0xff]
    %v647 = vld [vmem:[%s3 + $0xf78] sm:$0xff]
    %v648 = vld [vmem:[%s3 + $0xf80] sm:$0xff]
    %v649 = vld [vmem:[%s3 + $0xf88] sm:$0xff]
    %v650 = vld [vmem:[%s3 + $0xf90] sm:$0xff]
    %v651 = vld [vmem:[%s3 + $0xf98] sm:$0xff]
    %v652 = vld [vmem:[%s3 + $0xfa0] sm:$0xff]
    %v653 = vld [vmem:[%s3 + $0xfa8] sm:$0xff]
    %v654 = vld [vmem:[%s3 + $0xfb0] sm:$0xff]
    %v655 = vld [vmem:[%s3 + $0xfb8] sm:$0xff]
    %v656 = vld [vmem:[%s3 + $0xfc0] sm:$0xff]
    %v657 = vld [vmem:[%s3 + $0xfc8] sm:$0xff]
    %v658 = vld [vmem:[%s3 + $0xfd0] sm:$0xff]
    %v659 = vld [vmem:[%s3 + $0xfd8] sm:$0xff]
    %v660 = vld [vmem:[%s3 + $0xfe0] sm:$0xff]
    %v661 = vld [vmem:[%s3 + $0xfe8] sm:$0xff]
    %v662 = vld [vmem:[%s3 + $0xff0] sm:$0xff]
    %v663 = vld [vmem:[%s3 + $0xff8] sm:$0xff]
    %v664 = vld [vmem:[%s4] sm:$0xff]
    %v665 = vld [vmem:[%s4 + $0x8] sm:$0xff]
    %v668 = vlaneseq
    %v669 = vshrl.u32 %v668, 7
    %v670 = vsub.s32 0, %v669
    %v671 = vrot.slane %v664, %v670
    %v672 = vlaneseq
    %v673 = vshrl.u32 %v672, 7
    %v674 = vsub.s32 1, %v673
    %v675 = vrot.slane %v664, %v674
    %v676 = vlaneseq
    %v677 = vshrl.u32 %v676, 7
    %v678 = vsub.s32 2, %v677
    %v679 = vrot.slane %v664, %v678
    %v680 = vlaneseq
    %v681 = vshrl.u32 %v680, 7
    %v682 = vsub.s32 3, %v681
    %v683 = vrot.slane %v664, %v682
    %v684 = vlaneseq
    %v685 = vshrl.u32 %v684, 7
    %v686 = vsub.s32 4, %v685
    %v687 = vrot.slane %v664, %v686
    %v688 = vlaneseq
    %v689 = vshrl.u32 %v688, 7
    %v690 = vsub.s32 5, %v689
    %v691 = vrot.slane %v664, %v690
    %v692 = vlaneseq
    %v693 = vshrl.u32 %v692, 7
    %v694 = vsub.s32 6, %v693
    %v695 = vrot.slane %v664, %v694
    %v696 = vlaneseq
    %v697 = vshrl.u32 %v696, 7
    %v698 = vsub.s32 7, %v697
    %v699 = vrot.slane %v664, %v698
    %v700 = vlaneseq
    %v701 = vshrl.u32 %v700, 7
    %v702 = vsub.s32 0, %v701
    %v703 = vrot.slane %v665, %v702
    %v704 = vlaneseq
    %v705 = vshrl.u32 %v704, 7
    %v706 = vsub.s32 1, %v705
    %v707 = vrot.slane %v665, %v706
    %v708 = vlaneseq
    %v709 = vshrl.u32 %v708, 7
    %v710 = vsub.s32 2, %v709
    %v711 = vrot.slane %v665, %v710
    %v712 = vlaneseq
    %v713 = vshrl.u32 %v712, 7
    %v714 = vsub.s32 3, %v713
    %v715 = vrot.slane %v665, %v714
    %v716 = vlaneseq
    %v717 = vshrl.u32 %v716, 7
    %v718 = vsub.s32 4, %v717
    %v719 = vrot.slane %v665, %v718
    %v720 = vlaneseq
    %v721 = vshrl.u32 %v720, 7
    %v722 = vsub.s32 5, %v721
    %v723 = vrot.slane %v665, %v722
    %v724 = vlaneseq
    %v725 = vshrl.u32 %v724, 7
    %v726 = vsub.s32 6, %v725
    %v727 = vrot.slane %v665, %v726
    %v728 = vlaneseq
    %v729 = vshrl.u32 %v728, 7
    %v730 = vsub.s32 7, %v729
    %v731 = vrot.slane %v665, %v730
    %v1260 = vunpack.c.l.b16 %v152
    %v1261 = vunpack.c.h.b16 %v152
    %v1262 = vunpack.c.l.b16 %v153
    %v1263 = vunpack.c.h.b16 %v153
    %v1264 = vunpack.c.l.b16 %v154
    %v1265 = vunpack.c.h.b16 %v154
    %v1266 = vunpack.c.l.b16 %v155
    %v1267 = vunpack.c.h.b16 %v155
    %v1268 = vunpack.c.l.b16 %v156
    %v1269 = vunpack.c.h.b16 %v156
    %v1270 = vunpack.c.l.b16 %v157
    %v1271 = vunpack.c.h.b16 %v157
    %v1272 = vunpack.c.l.b16 %v158
    %v1273 = vunpack.c.h.b16 %v158
    %v1274 = vunpack.c.l.b16 %v159
    %v1275 = vunpack.c.h.b16 %v159
    %v1276 = vunpack.c.l.b16 %v160
    %v1277 = vunpack.c.h.b16 %v160
    %v1278 = vunpack.c.l.b16 %v161
    %v1279 = vunpack.c.h.b16 %v161
    %v1280 = vunpack.c.l.b16 %v162
    %v1281 = vunpack.c.h.b16 %v162
    %v1282 = vunpack.c.l.b16 %v163
    %v1283 = vunpack.c.h.b16 %v163
    %v1284 = vunpack.c.l.b16 %v164
    %v1285 = vunpack.c.h.b16 %v164
    %v1286 = vunpack.c.l.b16 %v165
    %v1287 = vunpack.c.h.b16 %v165
    %v1288 = vunpack.c.l.b16 %v166
    %v1289 = vunpack.c.h.b16 %v166
    %v1290 = vunpack.c.l.b16 %v167
    %v1291 = vunpack.c.h.b16 %v167
    %v1292 = vunpack.c.l.b16 %v168
    %v1293 = vunpack.c.h.b16 %v168
    %v1294 = vunpack.c.l.b16 %v169
    %v1295 = vunpack.c.h.b16 %v169
    %v1296 = vunpack.c.l.b16 %v170
    %v1297 = vunpack.c.h.b16 %v170
    %v1298 = vunpack.c.l.b16 %v171
    %v1299 = vunpack.c.h.b16 %v171
    %v1300 = vunpack.c.l.b16 %v172
    %v1301 = vunpack.c.h.b16 %v172
    %v1302 = vunpack.c.l.b16 %v173
    %v1303 = vunpack.c.h.b16 %v173
    %v1304 = vunpack.c.l.b16 %v174
    %v1305 = vunpack.c.h.b16 %v174
    %v1306 = vunpack.c.l.b16 %v175
    %v1307 = vunpack.c.h.b16 %v175
    %v1308 = vunpack.c.l.b16 %v176
    %v1309 = vunpack.c.h.b16 %v176
    %v1310 = vunpack.c.l.b16 %v177
    %v1311 = vunpack.c.h.b16 %v177
    %v1312 = vunpack.c.l.b16 %v178
    %v1313 = vunpack.c.h.b16 %v178
    %v1314 = vunpack.c.l.b16 %v179
    %v1315 = vunpack.c.h.b16 %v179
    %v1316 = vunpack.c.l.b16 %v180
    %v1317 = vunpack.c.h.b16 %v180
    %v1318 = vunpack.c.l.b16 %v181
    %v1319 = vunpack.c.h.b16 %v181
    %v1320 = vunpack.c.l.b16 %v182
    %v1321 = vunpack.c.h.b16 %v182
    %v1322 = vunpack.c.l.b16 %v183
    %v1323 = vunpack.c.h.b16 %v183
    %v1324 = vunpack.c.l.b16 %v184
    %v1325 = vunpack.c.h.b16 %v184
    %v1326 = vunpack.c.l.b16 %v185
    %v1327 = vunpack.c.h.b16 %v185
    %v1328 = vunpack.c.l.b16 %v186
    %v1329 = vunpack.c.h.b16 %v186
    %v1330 = vunpack.c.l.b16 %v187
    %v1331 = vunpack.c.h.b16 %v187
    %v1332 = vunpack.c.l.b16 %v188
    %v1333 = vunpack.c.h.b16 %v188
    %v1334 = vunpack.c.l.b16 %v189
    %v1335 = vunpack.c.h.b16 %v189
    %v1336 = vunpack.c.l.b16 %v190
    %v1337 = vunpack.c.h.b16 %v190
    %v1338 = vunpack.c.l.b16 %v191
    %v1339 = vunpack.c.h.b16 %v191
    %v1340 = vunpack.c.l.b16 %v192
    %v1341 = vunpack.c.h.b16 %v192
    %v1342 = vunpack.c.l.b16 %v193
    %v1343 = vunpack.c.h.b16 %v193
    %v1344 = vunpack.c.l.b16 %v194
    %v1345 = vunpack.c.h.b16 %v194
    %v1346 = vunpack.c.l.b16 %v195
    %v1347 = vunpack.c.h.b16 %v195
    %v1348 = vunpack.c.l.b16 %v196
    %v1349 = vunpack.c.h.b16 %v196
    %v1350 = vunpack.c.l.b16 %v197
    %v1351 = vunpack.c.h.b16 %v197
    %v1352 = vunpack.c.l.b16 %v198
    %v1353 = vunpack.c.h.b16 %v198
    %v1354 = vunpack.c.l.b16 %v199
    %v1355 = vunpack.c.h.b16 %v199
    %v1356 = vunpack.c.l.b16 %v200
    %v1357 = vunpack.c.h.b16 %v200
    %v1358 = vunpack.c.l.b16 %v201
    %v1359 = vunpack.c.h.b16 %v201
    %v1360 = vunpack.c.l.b16 %v202
    %v1361 = vunpack.c.h.b16 %v202
    %v1362 = vunpack.c.l.b16 %v203
    %v1363 = vunpack.c.h.b16 %v203
    %v1364 = vunpack.c.l.b16 %v204
    %v1365 = vunpack.c.h.b16 %v204
    %v1366 = vunpack.c.l.b16 %v205
    %v1367 = vunpack.c.h.b16 %v205
    %v1368 = vunpack.c.l.b16 %v206
    %v1369 = vunpack.c.h.b16 %v206
    %v1370 = vunpack.c.l.b16 %v207
    %v1371 = vunpack.c.h.b16 %v207
    %v1372 = vunpack.c.l.b16 %v208
    %v1373 = vunpack.c.h.b16 %v208
    %v1374 = vunpack.c.l.b16 %v209
    %v1375 = vunpack.c.h.b16 %v209
    %v1376 = vunpack.c.l.b16 %v210
    %v1377 = vunpack.c.h.b16 %v210
    %v1378 = vunpack.c.l.b16 %v211
    %v1379 = vunpack.c.h.b16 %v211
    %v1380 = vunpack.c.l.b16 %v212
    %v1381 = vunpack.c.h.b16 %v212
    %v1382 = vunpack.c.l.b16 %v213
    %v1383 = vunpack.c.h.b16 %v213
    %v1384 = vunpack.c.l.b16 %v214
    %v1385 = vunpack.c.h.b16 %v214
    %v1386 = vunpack.c.l.b16 %v215
    %v1387 = vunpack.c.h.b16 %v215
    %v1388 = vunpack.c.l.b16 %v216
    %v1389 = vunpack.c.h.b16 %v216
    %v1390 = vunpack.c.l.b16 %v217
    %v1391 = vunpack.c.h.b16 %v217
    %v1392 = vunpack.c.l.b16 %v218
    %v1393 = vunpack.c.h.b16 %v218
    %v1394 = vunpack.c.l.b16 %v219
    %v1395 = vunpack.c.h.b16 %v219
    %v1396 = vunpack.c.l.b16 %v220
    %v1397 = vunpack.c.h.b16 %v220
    %v1398 = vunpack.c.l.b16 %v221
    %v1399 = vunpack.c.h.b16 %v221
    %v1400 = vunpack.c.l.b16 %v222
    %v1401 = vunpack.c.h.b16 %v222
    %v1402 = vunpack.c.l.b16 %v223
    %v1403 = vunpack.c.h.b16 %v223
    %v1404 = vunpack.c.l.b16 %v224
    %v1405 = vunpack.c.h.b16 %v224
    %v1406 = vunpack.c.l.b16 %v225
    %v1407 = vunpack.c.h.b16 %v225
    %v1408 = vunpack.c.l.b16 %v226
    %v1409 = vunpack.c.h.b16 %v226
    %v1410 = vunpack.c.l.b16 %v227
    %v1411 = vunpack.c.h.b16 %v227
    %v1412 = vunpack.c.l.b16 %v228
    %v1413 = vunpack.c.h.b16 %v228
    %v1414 = vunpack.c.l.b16 %v229
    %v1415 = vunpack.c.h.b16 %v229
    %v1416 = vunpack.c.l.b16 %v230
    %v1417 = vunpack.c.h.b16 %v230
    %v1418 = vunpack.c.l.b16 %v231
    %v1419 = vunpack.c.h.b16 %v231
    %v1420 = vunpack.c.l.b16 %v232
    %v1421 = vunpack.c.h.b16 %v232
    %v1422 = vunpack.c.l.b16 %v233
    %v1423 = vunpack.c.h.b16 %v233
    %v1424 = vunpack.c.l.b16 %v234
    %v1425 = vunpack.c.h.b16 %v234
    %v1426 = vunpack.c.l.b16 %v235
    %v1427 = vunpack.c.h.b16 %v235
    %v1428 = vunpack.c.l.b16 %v236
    %v1429 = vunpack.c.h.b16 %v236
    %v1430 = vunpack.c.l.b16 %v237
    %v1431 = vunpack.c.h.b16 %v237
    %v1432 = vunpack.c.l.b16 %v238
    %v1433 = vunpack.c.h.b16 %v238
    %v1434 = vunpack.c.l.b16 %v239
    %v1435 = vunpack.c.h.b16 %v239
    %v1436 = vunpack.c.l.b16 %v240
    %v1437 = vunpack.c.h.b16 %v240
    %v1438 = vunpack.c.l.b16 %v241
    %v1439 = vunpack.c.h.b16 %v241
    %v1440 = vunpack.c.l.b16 %v242
    %v1441 = vunpack.c.h.b16 %v242
    %v1442 = vunpack.c.l.b16 %v243
    %v1443 = vunpack.c.h.b16 %v243
    %v1444 = vunpack.c.l.b16 %v244
    %v1445 = vunpack.c.h.b16 %v244
    %v1446 = vunpack.c.l.b16 %v245
    %v1447 = vunpack.c.h.b16 %v245
    %v1448 = vunpack.c.l.b16 %v246
    %v1449 = vunpack.c.h.b16 %v246
    %v1450 = vunpack.c.l.b16 %v247
    %v1451 = vunpack.c.h.b16 %v247
    %v1452 = vunpack.c.l.b16 %v248
    %v1453 = vunpack.c.h.b16 %v248
    %v1454 = vunpack.c.l.b16 %v249
    %v1455 = vunpack.c.h.b16 %v249
    %v1456 = vunpack.c.l.b16 %v250
    %v1457 = vunpack.c.h.b16 %v250
    %v1458 = vunpack.c.l.b16 %v251
    %v1459 = vunpack.c.h.b16 %v251
    %v1460 = vunpack.c.l.b16 %v252
    %v1461 = vunpack.c.h.b16 %v252
    %v1462 = vunpack.c.l.b16 %v253
    %v1463 = vunpack.c.h.b16 %v253
    %v1464 = vunpack.c.l.b16 %v254
    %v1465 = vunpack.c.h.b16 %v254
    %v1466 = vunpack.c.l.b16 %v255
    %v1467 = vunpack.c.h.b16 %v255
    %v1468 = vunpack.c.l.b16 %v256
    %v1469 = vunpack.c.h.b16 %v256
    %v1470 = vunpack.c.l.b16 %v257
    %v1471 = vunpack.c.h.b16 %v257
    %v1472 = vunpack.c.l.b16 %v258
    %v1473 = vunpack.c.h.b16 %v258
    %v1474 = vunpack.c.l.b16 %v259
    %v1475 = vunpack.c.h.b16 %v259
    %v1476 = vunpack.c.l.b16 %v260
    %v1477 = vunpack.c.h.b16 %v260
    %v1478 = vunpack.c.l.b16 %v261
    %v1479 = vunpack.c.h.b16 %v261
    %v1480 = vunpack.c.l.b16 %v262
    %v1481 = vunpack.c.h.b16 %v262
    %v1482 = vunpack.c.l.b16 %v263
    %v1483 = vunpack.c.h.b16 %v263
    %v1484 = vunpack.c.l.b16 %v264
    %v1485 = vunpack.c.h.b16 %v264
    %v1486 = vunpack.c.l.b16 %v265
    %v1487 = vunpack.c.h.b16 %v265
    %v1488 = vunpack.c.l.b16 %v266
    %v1489 = vunpack.c.h.b16 %v266
    %v1490 = vunpack.c.l.b16 %v267
    %v1491 = vunpack.c.h.b16 %v267
    %v1492 = vunpack.c.l.b16 %v268
    %v1493 = vunpack.c.h.b16 %v268
    %v1494 = vunpack.c.l.b16 %v269
    %v1495 = vunpack.c.h.b16 %v269
    %v1496 = vunpack.c.l.b16 %v270
    %v1497 = vunpack.c.h.b16 %v270
    %v1498 = vunpack.c.l.b16 %v271
    %v1499 = vunpack.c.h.b16 %v271
    %v1500 = vunpack.c.l.b16 %v272
    %v1501 = vunpack.c.h.b16 %v272
    %v1502 = vunpack.c.l.b16 %v273
    %v1503 = vunpack.c.h.b16 %v273
    %v1504 = vunpack.c.l.b16 %v274
    %v1505 = vunpack.c.h.b16 %v274
    %v1506 = vunpack.c.l.b16 %v275
    %v1507 = vunpack.c.h.b16 %v275
    %v1508 = vunpack.c.l.b16 %v276
    %v1509 = vunpack.c.h.b16 %v276
    %v1510 = vunpack.c.l.b16 %v277
    %v1511 = vunpack.c.h.b16 %v277
    %v1512 = vunpack.c.l.b16 %v278
    %v1513 = vunpack.c.h.b16 %v278
    %v1514 = vunpack.c.l.b16 %v279
    %v1515 = vunpack.c.h.b16 %v279
    %v1516 = vunpack.c.l.b16 %v280
    %v1517 = vunpack.c.h.b16 %v280
    %v1518 = vunpack.c.l.b16 %v281
    %v1519 = vunpack.c.h.b16 %v281
    %v1520 = vunpack.c.l.b16 %v282
    %v1521 = vunpack.c.h.b16 %v282
    %v1522 = vunpack.c.l.b16 %v283
    %v1523 = vunpack.c.h.b16 %v283
    %v1524 = vunpack.c.l.b16 %v284
    %v1525 = vunpack.c.h.b16 %v284
    %v1526 = vunpack.c.l.b16 %v285
    %v1527 = vunpack.c.h.b16 %v285
    %v1528 = vunpack.c.l.b16 %v286
    %v1529 = vunpack.c.h.b16 %v286
    %v1530 = vunpack.c.l.b16 %v287
    %v1531 = vunpack.c.h.b16 %v287
    %v1532 = vunpack.c.l.b16 %v288
    %v1533 = vunpack.c.h.b16 %v288
    %v1534 = vunpack.c.l.b16 %v289
    %v1535 = vunpack.c.h.b16 %v289
    %v1536 = vunpack.c.l.b16 %v290
    %v1537 = vunpack.c.h.b16 %v290
    %v1538 = vunpack.c.l.b16 %v291
    %v1539 = vunpack.c.h.b16 %v291
    %v1540 = vunpack.c.l.b16 %v292
    %v1541 = vunpack.c.h.b16 %v292
    %v1542 = vunpack.c.l.b16 %v293
    %v1543 = vunpack.c.h.b16 %v293
    %v1544 = vunpack.c.l.b16 %v294
    %v1545 = vunpack.c.h.b16 %v294
    %v1546 = vunpack.c.l.b16 %v295
    %v1547 = vunpack.c.h.b16 %v295
    %v1548 = vunpack.c.l.b16 %v296
    %v1549 = vunpack.c.h.b16 %v296
    %v1550 = vunpack.c.l.b16 %v297
    %v1551 = vunpack.c.h.b16 %v297
    %v1552 = vunpack.c.l.b16 %v298
    %v1553 = vunpack.c.h.b16 %v298
    %v1554 = vunpack.c.l.b16 %v299
    %v1555 = vunpack.c.h.b16 %v299
    %v1556 = vunpack.c.l.b16 %v300
    %v1557 = vunpack.c.h.b16 %v300
    %v1558 = vunpack.c.l.b16 %v301
    %v1559 = vunpack.c.h.b16 %v301
    %v1560 = vunpack.c.l.b16 %v302
    %v1561 = vunpack.c.h.b16 %v302
    %v1562 = vunpack.c.l.b16 %v303
    %v1563 = vunpack.c.h.b16 %v303
    %v1564 = vunpack.c.l.b16 %v304
    %v1565 = vunpack.c.h.b16 %v304
    %v1566 = vunpack.c.l.b16 %v305
    %v1567 = vunpack.c.h.b16 %v305
    %v1568 = vunpack.c.l.b16 %v306
    %v1569 = vunpack.c.h.b16 %v306
    %v1570 = vunpack.c.l.b16 %v307
    %v1571 = vunpack.c.h.b16 %v307
    %v1572 = vunpack.c.l.b16 %v308
    %v1573 = vunpack.c.h.b16 %v308
    %v1574 = vunpack.c.l.b16 %v309
    %v1575 = vunpack.c.h.b16 %v309
    %v1576 = vunpack.c.l.b16 %v310
    %v1577 = vunpack.c.h.b16 %v310
    %v1578 = vunpack.c.l.b16 %v311
    %v1579 = vunpack.c.h.b16 %v311
    %v1580 = vunpack.c.l.b16 %v312
    %v1581 = vunpack.c.h.b16 %v312
    %v1582 = vunpack.c.l.b16 %v313
    %v1583 = vunpack.c.h.b16 %v313
    %v1584 = vunpack.c.l.b16 %v314
    %v1585 = vunpack.c.h.b16 %v314
    %v1586 = vunpack.c.l.b16 %v315
    %v1587 = vunpack.c.h.b16 %v315
    %v1588 = vunpack.c.l.b16 %v316
    %v1589 = vunpack.c.h.b16 %v316
    %v1590 = vunpack.c.l.b16 %v317
    %v1591 = vunpack.c.h.b16 %v317
    %v1592 = vunpack.c.l.b16 %v318
    %v1593 = vunpack.c.h.b16 %v318
    %v1594 = vunpack.c.l.b16 %v319
    %v1595 = vunpack.c.h.b16 %v319
    %v1596 = vunpack.c.l.b16 %v320
    %v1597 = vunpack.c.h.b16 %v320
    %v1598 = vunpack.c.l.b16 %v321
    %v1599 = vunpack.c.h.b16 %v321
    %v1600 = vunpack.c.l.b16 %v322
    %v1601 = vunpack.c.h.b16 %v322
    %v1602 = vunpack.c.l.b16 %v323
    %v1603 = vunpack.c.h.b16 %v323
    %v1604 = vunpack.c.l.b16 %v324
    %v1605 = vunpack.c.h.b16 %v324
    %v1606 = vunpack.c.l.b16 %v325
    %v1607 = vunpack.c.h.b16 %v325
    %v1608 = vunpack.c.l.b16 %v326
    %v1609 = vunpack.c.h.b16 %v326
    %v1610 = vunpack.c.l.b16 %v327
    %v1611 = vunpack.c.h.b16 %v327
    %v1612 = vunpack.c.l.b16 %v328
    %v1613 = vunpack.c.h.b16 %v328
    %v1614 = vunpack.c.l.b16 %v329
    %v1615 = vunpack.c.h.b16 %v329
    %v1616 = vunpack.c.l.b16 %v330
    %v1617 = vunpack.c.h.b16 %v330
    %v1618 = vunpack.c.l.b16 %v331
    %v1619 = vunpack.c.h.b16 %v331
    %v1620 = vunpack.c.l.b16 %v332
    %v1621 = vunpack.c.h.b16 %v332
    %v1622 = vunpack.c.l.b16 %v333
    %v1623 = vunpack.c.h.b16 %v333
    %v1624 = vunpack.c.l.b16 %v334
    %v1625 = vunpack.c.h.b16 %v334
    %v1626 = vunpack.c.l.b16 %v335
    %v1627 = vunpack.c.h.b16 %v335
    %v1628 = vunpack.c.l.b16 %v336
    %v1629 = vunpack.c.h.b16 %v336
    %v1630 = vunpack.c.l.b16 %v337
    %v1631 = vunpack.c.h.b16 %v337
    %v1632 = vunpack.c.l.b16 %v338
    %v1633 = vunpack.c.h.b16 %v338
    %v1634 = vunpack.c.l.b16 %v339
    %v1635 = vunpack.c.h.b16 %v339
    %v1636 = vunpack.c.l.b16 %v340
    %v1637 = vunpack.c.h.b16 %v340
    %v1638 = vunpack.c.l.b16 %v341
    %v1639 = vunpack.c.h.b16 %v341
    %v1640 = vunpack.c.l.b16 %v342
    %v1641 = vunpack.c.h.b16 %v342
    %v1642 = vunpack.c.l.b16 %v343
    %v1643 = vunpack.c.h.b16 %v343
    %v1644 = vunpack.c.l.b16 %v344
    %v1645 = vunpack.c.h.b16 %v344
    %v1646 = vunpack.c.l.b16 %v345
    %v1647 = vunpack.c.h.b16 %v345
    %v1648 = vunpack.c.l.b16 %v346
    %v1649 = vunpack.c.h.b16 %v346
    %v1650 = vunpack.c.l.b16 %v347
    %v1651 = vunpack.c.h.b16 %v347
    %v1652 = vunpack.c.l.b16 %v348
    %v1653 = vunpack.c.h.b16 %v348
    %v1654 = vunpack.c.l.b16 %v349
    %v1655 = vunpack.c.h.b16 %v349
    %v1656 = vunpack.c.l.b16 %v350
    %v1657 = vunpack.c.h.b16 %v350
    %v1658 = vunpack.c.l.b16 %v351
    %v1659 = vunpack.c.h.b16 %v351
    %v1660 = vunpack.c.l.b16 %v352
    %v1661 = vunpack.c.h.b16 %v352
    %v1662 = vunpack.c.l.b16 %v353
    %v1663 = vunpack.c.h.b16 %v353
    %v1664 = vunpack.c.l.b16 %v354
    %v1665 = vunpack.c.h.b16 %v354
    %v1666 = vunpack.c.l.b16 %v355
    %v1667 = vunpack.c.h.b16 %v355
    %v1668 = vunpack.c.l.b16 %v356
    %v1669 = vunpack.c.h.b16 %v356
    %v1670 = vunpack.c.l.b16 %v357
    %v1671 = vunpack.c.h.b16 %v357
    %v1672 = vunpack.c.l.b16 %v358
    %v1673 = vunpack.c.h.b16 %v358
    %v1674 = vunpack.c.l.b16 %v359
    %v1675 = vunpack.c.h.b16 %v359
    %v1676 = vunpack.c.l.b16 %v360
    %v1677 = vunpack.c.h.b16 %v360
    %v1678 = vunpack.c.l.b16 %v361
    %v1679 = vunpack.c.h.b16 %v361
    %v1680 = vunpack.c.l.b16 %v362
    %v1681 = vunpack.c.h.b16 %v362
    %v1682 = vunpack.c.l.b16 %v363
    %v1683 = vunpack.c.h.b16 %v363
    %v1684 = vunpack.c.l.b16 %v364
    %v1685 = vunpack.c.h.b16 %v364
    %v1686 = vunpack.c.l.b16 %v365
    %v1687 = vunpack.c.h.b16 %v365
    %v1688 = vunpack.c.l.b16 %v366
    %v1689 = vunpack.c.h.b16 %v366
    %v1690 = vunpack.c.l.b16 %v367
    %v1691 = vunpack.c.h.b16 %v367
    %v1692 = vunpack.c.l.b16 %v368
    %v1693 = vunpack.c.h.b16 %v368
    %v1694 = vunpack.c.l.b16 %v369
    %v1695 = vunpack.c.h.b16 %v369
    %v1696 = vunpack.c.l.b16 %v370
    %v1697 = vunpack.c.h.b16 %v370
    %v1698 = vunpack.c.l.b16 %v371
    %v1699 = vunpack.c.h.b16 %v371
    %v1700 = vunpack.c.l.b16 %v372
    %v1701 = vunpack.c.h.b16 %v372
    %v1702 = vunpack.c.l.b16 %v373
    %v1703 = vunpack.c.h.b16 %v373
    %v1704 = vunpack.c.l.b16 %v374
    %v1705 = vunpack.c.h.b16 %v374
    %v1706 = vunpack.c.l.b16 %v375
    %v1707 = vunpack.c.h.b16 %v375
    %v1708 = vunpack.c.l.b16 %v376
    %v1709 = vunpack.c.h.b16 %v376
    %v1710 = vunpack.c.l.b16 %v377
    %v1711 = vunpack.c.h.b16 %v377
    %v1712 = vunpack.c.l.b16 %v378
    %v1713 = vunpack.c.h.b16 %v378
    %v1714 = vunpack.c.l.b16 %v379
    %v1715 = vunpack.c.h.b16 %v379
    %v1716 = vunpack.c.l.b16 %v380
    %v1717 = vunpack.c.h.b16 %v380
    %v1718 = vunpack.c.l.b16 %v381
    %v1719 = vunpack.c.h.b16 %v381
    %v1720 = vunpack.c.l.b16 %v382
    %v1721 = vunpack.c.h.b16 %v382
    %v1722 = vunpack.c.l.b16 %v383
    %v1723 = vunpack.c.h.b16 %v383
    %v1724 = vunpack.c.l.b16 %v384
    %v1725 = vunpack.c.h.b16 %v384
    %v1726 = vunpack.c.l.b16 %v385
    %v1727 = vunpack.c.h.b16 %v385
    %v1728 = vunpack.c.l.b16 %v386
    %v1729 = vunpack.c.h.b16 %v386
    %v1730 = vunpack.c.l.b16 %v387
    %v1731 = vunpack.c.h.b16 %v387
    %v1732 = vunpack.c.l.b16 %v388
    %v1733 = vunpack.c.h.b16 %v388
    %v1734 = vunpack.c.l.b16 %v389
    %v1735 = vunpack.c.h.b16 %v389
    %v1736 = vunpack.c.l.b16 %v390
    %v1737 = vunpack.c.h.b16 %v390
    %v1738 = vunpack.c.l.b16 %v391
    %v1739 = vunpack.c.h.b16 %v391
    %v1740 = vunpack.c.l.b16 %v392
    %v1741 = vunpack.c.h.b16 %v392
    %v1742 = vunpack.c.l.b16 %v393
    %v1743 = vunpack.c.h.b16 %v393
    %v1744 = vunpack.c.l.b16 %v394
    %v1745 = vunpack.c.h.b16 %v394
    %v1746 = vunpack.c.l.b16 %v395
    %v1747 = vunpack.c.h.b16 %v395
    %v1748 = vunpack.c.l.b16 %v396
    %v1749 = vunpack.c.h.b16 %v396
    %v1750 = vunpack.c.l.b16 %v397
    %v1751 = vunpack.c.h.b16 %v397
    %v1752 = vunpack.c.l.b16 %v398
    %v1753 = vunpack.c.h.b16 %v398
    %v1754 = vunpack.c.l.b16 %v399
    %v1755 = vunpack.c.h.b16 %v399
    %v1756 = vunpack.c.l.b16 %v400
    %v1757 = vunpack.c.h.b16 %v400
    %v1758 = vunpack.c.l.b16 %v401
    %v1759 = vunpack.c.h.b16 %v401
    %v1760 = vunpack.c.l.b16 %v402
    %v1761 = vunpack.c.h.b16 %v402
    %v1762 = vunpack.c.l.b16 %v403
    %v1763 = vunpack.c.h.b16 %v403
    %v1764 = vunpack.c.l.b16 %v404
    %v1765 = vunpack.c.h.b16 %v404
    %v1766 = vunpack.c.l.b16 %v405
    %v1767 = vunpack.c.h.b16 %v405
    %v1768 = vunpack.c.l.b16 %v406
    %v1769 = vunpack.c.h.b16 %v406
    %v1770 = vunpack.c.l.b16 %v407
    %v1771 = vunpack.c.h.b16 %v407
    %v1772 = vunpack.c.l.b16 %v408
    %v1773 = vunpack.c.h.b16 %v408
    %v1774 = vunpack.c.l.b16 %v409
    %v1775 = vunpack.c.h.b16 %v409
    %v1776 = vunpack.c.l.b16 %v410
    %v1777 = vunpack.c.h.b16 %v410
    %v1778 = vunpack.c.l.b16 %v411
    %v1779 = vunpack.c.h.b16 %v411
    %v1780 = vunpack.c.l.b16 %v412
    %v1781 = vunpack.c.h.b16 %v412
    %v1782 = vunpack.c.l.b16 %v413
    %v1783 = vunpack.c.h.b16 %v413
    %v1784 = vunpack.c.l.b16 %v414
    %v1785 = vunpack.c.h.b16 %v414
    %v1786 = vunpack.c.l.b16 %v415
    %v1787 = vunpack.c.h.b16 %v415
    %v1788 = vunpack.c.l.b16 %v416
    %v1789 = vunpack.c.h.b16 %v416
    %v1790 = vunpack.c.l.b16 %v417
    %v1791 = vunpack.c.h.b16 %v417
    %v1792 = vunpack.c.l.b16 %v418
    %v1793 = vunpack.c.h.b16 %v418
    %v1794 = vunpack.c.l.b16 %v419
    %v1795 = vunpack.c.h.b16 %v419
    %v1796 = vunpack.c.l.b16 %v420
    %v1797 = vunpack.c.h.b16 %v420
    %v1798 = vunpack.c.l.b16 %v421
    %v1799 = vunpack.c.h.b16 %v421
    %v1800 = vunpack.c.l.b16 %v422
    %v1801 = vunpack.c.h.b16 %v422
    %v1802 = vunpack.c.l.b16 %v423
    %v1803 = vunpack.c.h.b16 %v423
    %v1804 = vunpack.c.l.b16 %v424
    %v1805 = vunpack.c.h.b16 %v424
    %v1806 = vunpack.c.l.b16 %v425
    %v1807 = vunpack.c.h.b16 %v425
    %v1808 = vunpack.c.l.b16 %v426
    %v1809 = vunpack.c.h.b16 %v426
    %v1810 = vunpack.c.l.b16 %v427
    %v1811 = vunpack.c.h.b16 %v427
    %v1812 = vunpack.c.l.b16 %v428
    %v1813 = vunpack.c.h.b16 %v428
    %v1814 = vunpack.c.l.b16 %v429
    %v1815 = vunpack.c.h.b16 %v429
    %v1816 = vunpack.c.l.b16 %v430
    %v1817 = vunpack.c.h.b16 %v430
    %v1818 = vunpack.c.l.b16 %v431
    %v1819 = vunpack.c.h.b16 %v431
    %v1820 = vunpack.c.l.b16 %v432
    %v1821 = vunpack.c.h.b16 %v432
    %v1822 = vunpack.c.l.b16 %v433
    %v1823 = vunpack.c.h.b16 %v433
    %v1824 = vunpack.c.l.b16 %v434
    %v1825 = vunpack.c.h.b16 %v434
    %v1826 = vunpack.c.l.b16 %v435
    %v1827 = vunpack.c.h.b16 %v435
    %v1828 = vunpack.c.l.b16 %v436
    %v1829 = vunpack.c.h.b16 %v436
    %v1830 = vunpack.c.l.b16 %v437
    %v1831 = vunpack.c.h.b16 %v437
    %v1832 = vunpack.c.l.b16 %v438
    %v1833 = vunpack.c.h.b16 %v438
    %v1834 = vunpack.c.l.b16 %v439
    %v1835 = vunpack.c.h.b16 %v439
    %v1836 = vunpack.c.l.b16 %v440
    %v1837 = vunpack.c.h.b16 %v440
    %v1838 = vunpack.c.l.b16 %v441
    %v1839 = vunpack.c.h.b16 %v441
    %v1840 = vunpack.c.l.b16 %v442
    %v1841 = vunpack.c.h.b16 %v442
    %v1842 = vunpack.c.l.b16 %v443
    %v1843 = vunpack.c.h.b16 %v443
    %v1844 = vunpack.c.l.b16 %v444
    %v1845 = vunpack.c.h.b16 %v444
    %v1846 = vunpack.c.l.b16 %v445
    %v1847 = vunpack.c.h.b16 %v445
    %v1848 = vunpack.c.l.b16 %v446
    %v1849 = vunpack.c.h.b16 %v446
    %v1850 = vunpack.c.l.b16 %v447
    %v1851 = vunpack.c.h.b16 %v447
    %v1852 = vunpack.c.l.b16 %v448
    %v1853 = vunpack.c.h.b16 %v448
    %v1854 = vunpack.c.l.b16 %v449
    %v1855 = vunpack.c.h.b16 %v449
    %v1856 = vunpack.c.l.b16 %v450
    %v1857 = vunpack.c.h.b16 %v450
    %v1858 = vunpack.c.l.b16 %v451
    %v1859 = vunpack.c.h.b16 %v451
    %v1860 = vunpack.c.l.b16 %v452
    %v1861 = vunpack.c.h.b16 %v452
    %v1862 = vunpack.c.l.b16 %v453
    %v1863 = vunpack.c.h.b16 %v453
    %v1864 = vunpack.c.l.b16 %v454
    %v1865 = vunpack.c.h.b16 %v454
    %v1866 = vunpack.c.l.b16 %v455
    %v1867 = vunpack.c.h.b16 %v455
    %v1868 = vunpack.c.l.b16 %v456
    %v1869 = vunpack.c.h.b16 %v456
    %v1870 = vunpack.c.l.b16 %v457
    %v1871 = vunpack.c.h.b16 %v457
    %v1872 = vunpack.c.l.b16 %v458
    %v1873 = vunpack.c.h.b16 %v458
    %v1874 = vunpack.c.l.b16 %v459
    %v1875 = vunpack.c.h.b16 %v459
    %v1876 = vunpack.c.l.b16 %v460
    %v1877 = vunpack.c.h.b16 %v460
    %v1878 = vunpack.c.l.b16 %v461
    %v1879 = vunpack.c.h.b16 %v461
    %v1880 = vunpack.c.l.b16 %v462
    %v1881 = vunpack.c.h.b16 %v462
    %v1882 = vunpack.c.l.b16 %v463
    %v1883 = vunpack.c.h.b16 %v463
    %v1884 = vunpack.c.l.b16 %v464
    %v1885 = vunpack.c.h.b16 %v464
    %v1886 = vunpack.c.l.b16 %v465
    %v1887 = vunpack.c.h.b16 %v465
    %v1888 = vunpack.c.l.b16 %v466
    %v1889 = vunpack.c.h.b16 %v466
    %v1890 = vunpack.c.l.b16 %v467
    %v1891 = vunpack.c.h.b16 %v467
    %v1892 = vunpack.c.l.b16 %v468
    %v1893 = vunpack.c.h.b16 %v468
    %v1894 = vunpack.c.l.b16 %v469
    %v1895 = vunpack.c.h.b16 %v469
    %v1896 = vunpack.c.l.b16 %v470
    %v1897 = vunpack.c.h.b16 %v470
    %v1898 = vunpack.c.l.b16 %v471
    %v1899 = vunpack.c.h.b16 %v471
    %v1900 = vunpack.c.l.b16 %v472
    %v1901 = vunpack.c.h.b16 %v472
    %v1902 = vunpack.c.l.b16 %v473
    %v1903 = vunpack.c.h.b16 %v473
    %v1904 = vunpack.c.l.b16 %v474
    %v1905 = vunpack.c.h.b16 %v474
    %v1906 = vunpack.c.l.b16 %v475
    %v1907 = vunpack.c.h.b16 %v475
    %v1908 = vunpack.c.l.b16 %v476
    %v1909 = vunpack.c.h.b16 %v476
    %v1910 = vunpack.c.l.b16 %v477
    %v1911 = vunpack.c.h.b16 %v477
    %v1912 = vunpack.c.l.b16 %v478
    %v1913 = vunpack.c.h.b16 %v478
    %v1914 = vunpack.c.l.b16 %v479
    %v1915 = vunpack.c.h.b16 %v479
    %v1916 = vunpack.c.l.b16 %v480
    %v1917 = vunpack.c.h.b16 %v480
    %v1918 = vunpack.c.l.b16 %v481
    %v1919 = vunpack.c.h.b16 %v481
    %v1920 = vunpack.c.l.b16 %v482
    %v1921 = vunpack.c.h.b16 %v482
    %v1922 = vunpack.c.l.b16 %v483
    %v1923 = vunpack.c.h.b16 %v483
    %v1924 = vunpack.c.l.b16 %v484
    %v1925 = vunpack.c.h.b16 %v484
    %v1926 = vunpack.c.l.b16 %v485
    %v1927 = vunpack.c.h.b16 %v485
    %v1928 = vunpack.c.l.b16 %v486
    %v1929 = vunpack.c.h.b16 %v486
    %v1930 = vunpack.c.l.b16 %v487
    %v1931 = vunpack.c.h.b16 %v487
    %v1932 = vunpack.c.l.b16 %v488
    %v1933 = vunpack.c.h.b16 %v488
    %v1934 = vunpack.c.l.b16 %v489
    %v1935 = vunpack.c.h.b16 %v489
    %v1936 = vunpack.c.l.b16 %v490
    %v1937 = vunpack.c.h.b16 %v490
    %v1938 = vunpack.c.l.b16 %v491
    %v1939 = vunpack.c.h.b16 %v491
    %v1940 = vunpack.c.l.b16 %v492
    %v1941 = vunpack.c.h.b16 %v492
    %v1942 = vunpack.c.l.b16 %v493
    %v1943 = vunpack.c.h.b16 %v493
    %v1944 = vunpack.c.l.b16 %v494
    %v1945 = vunpack.c.h.b16 %v494
    %v1946 = vunpack.c.l.b16 %v495
    %v1947 = vunpack.c.h.b16 %v495
    %v1948 = vunpack.c.l.b16 %v496
    %v1949 = vunpack.c.h.b16 %v496
    %v1950 = vunpack.c.l.b16 %v497
    %v1951 = vunpack.c.h.b16 %v497
    %v1952 = vunpack.c.l.b16 %v498
    %v1953 = vunpack.c.h.b16 %v498
    %v1954 = vunpack.c.l.b16 %v499
    %v1955 = vunpack.c.h.b16 %v499
    %v1956 = vunpack.c.l.b16 %v500
    %v1957 = vunpack.c.h.b16 %v500
    %v1958 = vunpack.c.l.b16 %v501
    %v1959 = vunpack.c.h.b16 %v501
    %v1960 = vunpack.c.l.b16 %v502
    %v1961 = vunpack.c.h.b16 %v502
    %v1962 = vunpack.c.l.b16 %v503
    %v1963 = vunpack.c.h.b16 %v503
    %v1964 = vunpack.c.l.b16 %v504
    %v1965 = vunpack.c.h.b16 %v504
    %v1966 = vunpack.c.l.b16 %v505
    %v1967 = vunpack.c.h.b16 %v505
    %v1968 = vunpack.c.l.b16 %v506
    %v1969 = vunpack.c.h.b16 %v506
    %v1970 = vunpack.c.l.b16 %v507
    %v1971 = vunpack.c.h.b16 %v507
    %v1972 = vunpack.c.l.b16 %v508
    %v1973 = vunpack.c.h.b16 %v508
    %v1974 = vunpack.c.l.b16 %v509
    %v1975 = vunpack.c.h.b16 %v509
    %v1976 = vunpack.c.l.b16 %v510
    %v1977 = vunpack.c.h.b16 %v510
    %v1978 = vunpack.c.l.b16 %v511
    %v1979 = vunpack.c.h.b16 %v511
    %v1980 = vunpack.c.l.b16 %v512
    %v1981 = vunpack.c.h.b16 %v512
    %v1982 = vunpack.c.l.b16 %v513
    %v1983 = vunpack.c.h.b16 %v513
    %v1984 = vunpack.c.l.b16 %v514
    %v1985 = vunpack.c.h.b16 %v514
    %v1986 = vunpack.c.l.b16 %v515
    %v1987 = vunpack.c.h.b16 %v515
    %v1988 = vunpack.c.l.b16 %v516
    %v1989 = vunpack.c.h.b16 %v516
    %v1990 = vunpack.c.l.b16 %v517
    %v1991 = vunpack.c.h.b16 %v517
    %v1992 = vunpack.c.l.b16 %v518
    %v1993 = vunpack.c.h.b16 %v518
    %v1994 = vunpack.c.l.b16 %v519
    %v1995 = vunpack.c.h.b16 %v519
    %v1996 = vunpack.c.l.b16 %v520
    %v1997 = vunpack.c.h.b16 %v520
    %v1998 = vunpack.c.l.b16 %v521
    %v1999 = vunpack.c.h.b16 %v521
    %v2000 = vunpack.c.l.b16 %v522
    %v2001 = vunpack.c.h.b16 %v522
    %v2002 = vunpack.c.l.b16 %v523
    %v2003 = vunpack.c.h.b16 %v523
    %v2004 = vunpack.c.l.b16 %v524
    %v2005 = vunpack.c.h.b16 %v524
    %v2006 = vunpack.c.l.b16 %v525
    %v2007 = vunpack.c.h.b16 %v525
    %v2008 = vunpack.c.l.b16 %v526
    %v2009 = vunpack.c.h.b16 %v526
    %v2010 = vunpack.c.l.b16 %v527
    %v2011 = vunpack.c.h.b16 %v527
    %v2012 = vunpack.c.l.b16 %v528
    %v2013 = vunpack.c.h.b16 %v528
    %v2014 = vunpack.c.l.b16 %v529
    %v2015 = vunpack.c.h.b16 %v529
    %v2016 = vunpack.c.l.b16 %v530
    %v2017 = vunpack.c.h.b16 %v530
    %v2018 = vunpack.c.l.b16 %v531
    %v2019 = vunpack.c.h.b16 %v531
    %v2020 = vunpack.c.l.b16 %v532
    %v2021 = vunpack.c.h.b16 %v532
    %v2022 = vunpack.c.l.b16 %v533
    %v2023 = vunpack.c.h.b16 %v533
    %v2024 = vunpack.c.l.b16 %v534
    %v2025 = vunpack.c.h.b16 %v534
    %v2026 = vunpack.c.l.b16 %v535
    %v2027 = vunpack.c.h.b16 %v535
    %v2028 = vunpack.c.l.b16 %v536
    %v2029 = vunpack.c.h.b16 %v536
    %v2030 = vunpack.c.l.b16 %v537
    %v2031 = vunpack.c.h.b16 %v537
    %v2032 = vunpack.c.l.b16 %v538
    %v2033 = vunpack.c.h.b16 %v538
    %v2034 = vunpack.c.l.b16 %v539
    %v2035 = vunpack.c.h.b16 %v539
    %v2036 = vunpack.c.l.b16 %v540
    %v2037 = vunpack.c.h.b16 %v540
    %v2038 = vunpack.c.l.b16 %v541
    %v2039 = vunpack.c.h.b16 %v541
    %v2040 = vunpack.c.l.b16 %v542
    %v2041 = vunpack.c.h.b16 %v542
    %v2042 = vunpack.c.l.b16 %v543
    %v2043 = vunpack.c.h.b16 %v543
    %v2044 = vunpack.c.l.b16 %v544
    %v2045 = vunpack.c.h.b16 %v544
    %v2046 = vunpack.c.l.b16 %v545
    %v2047 = vunpack.c.h.b16 %v545
    %v2048 = vunpack.c.l.b16 %v546
    %v2049 = vunpack.c.h.b16 %v546
    %v2050 = vunpack.c.l.b16 %v547
    %v2051 = vunpack.c.h.b16 %v547
    %v2052 = vunpack.c.l.b16 %v548
    %v2053 = vunpack.c.h.b16 %v548
    %v2054 = vunpack.c.l.b16 %v549
    %v2055 = vunpack.c.h.b16 %v549
    %v2056 = vunpack.c.l.b16 %v550
    %v2057 = vunpack.c.h.b16 %v550
    %v2058 = vunpack.c.l.b16 %v551
    %v2059 = vunpack.c.h.b16 %v551
    %v2060 = vunpack.c.l.b16 %v552
    %v2061 = vunpack.c.h.b16 %v552
    %v2062 = vunpack.c.l.b16 %v553
    %v2063 = vunpack.c.h.b16 %v553
    %v2064 = vunpack.c.l.b16 %v554
    %v2065 = vunpack.c.h.b16 %v554
    %v2066 = vunpack.c.l.b16 %v555
    %v2067 = vunpack.c.h.b16 %v555
    %v2068 = vunpack.c.l.b16 %v556
    %v2069 = vunpack.c.h.b16 %v556
    %v2070 = vunpack.c.l.b16 %v557
    %v2071 = vunpack.c.h.b16 %v557
    %v2072 = vunpack.c.l.b16 %v558
    %v2073 = vunpack.c.h.b16 %v558
    %v2074 = vunpack.c.l.b16 %v559
    %v2075 = vunpack.c.h.b16 %v559
    %v2076 = vunpack.c.l.b16 %v560
    %v2077 = vunpack.c.h.b16 %v560
    %v2078 = vunpack.c.l.b16 %v561
    %v2079 = vunpack.c.h.b16 %v561
    %v2080 = vunpack.c.l.b16 %v562
    %v2081 = vunpack.c.h.b16 %v562
    %v2082 = vunpack.c.l.b16 %v563
    %v2083 = vunpack.c.h.b16 %v563
    %v2084 = vunpack.c.l.b16 %v564
    %v2085 = vunpack.c.h.b16 %v564
    %v2086 = vunpack.c.l.b16 %v565
    %v2087 = vunpack.c.h.b16 %v565
    %v2088 = vunpack.c.l.b16 %v566
    %v2089 = vunpack.c.h.b16 %v566
    %v2090 = vunpack.c.l.b16 %v567
    %v2091 = vunpack.c.h.b16 %v567
    %v2092 = vunpack.c.l.b16 %v568
    %v2093 = vunpack.c.h.b16 %v568
    %v2094 = vunpack.c.l.b16 %v569
    %v2095 = vunpack.c.h.b16 %v569
    %v2096 = vunpack.c.l.b16 %v570
    %v2097 = vunpack.c.h.b16 %v570
    %v2098 = vunpack.c.l.b16 %v571
    %v2099 = vunpack.c.h.b16 %v571
    %v2100 = vunpack.c.l.b16 %v572
    %v2101 = vunpack.c.h.b16 %v572
    %v2102 = vunpack.c.l.b16 %v573
    %v2103 = vunpack.c.h.b16 %v573
    %v2104 = vunpack.c.l.b16 %v574
    %v2105 = vunpack.c.h.b16 %v574
    %v2106 = vunpack.c.l.b16 %v575
    %v2107 = vunpack.c.h.b16 %v575
    %v2108 = vunpack.c.l.b16 %v576
    %v2109 = vunpack.c.h.b16 %v576
    %v2110 = vunpack.c.l.b16 %v577
    %v2111 = vunpack.c.h.b16 %v577
    %v2112 = vunpack.c.l.b16 %v578
    %v2113 = vunpack.c.h.b16 %v578
    %v2114 = vunpack.c.l.b16 %v579
    %v2115 = vunpack.c.h.b16 %v579
    %v2116 = vunpack.c.l.b16 %v580
    %v2117 = vunpack.c.h.b16 %v580
    %v2118 = vunpack.c.l.b16 %v581
    %v2119 = vunpack.c.h.b16 %v581
    %v2120 = vunpack.c.l.b16 %v582
    %v2121 = vunpack.c.h.b16 %v582
    %v2122 = vunpack.c.l.b16 %v583
    %v2123 = vunpack.c.h.b16 %v583
    %v2124 = vunpack.c.l.b16 %v584
    %v2125 = vunpack.c.h.b16 %v584
    %v2126 = vunpack.c.l.b16 %v585
    %v2127 = vunpack.c.h.b16 %v585
    %v2128 = vunpack.c.l.b16 %v586
    %v2129 = vunpack.c.h.b16 %v586
    %v2130 = vunpack.c.l.b16 %v587
    %v2131 = vunpack.c.h.b16 %v587
    %v2132 = vunpack.c.l.b16 %v588
    %v2133 = vunpack.c.h.b16 %v588
    %v2134 = vunpack.c.l.b16 %v589
    %v2135 = vunpack.c.h.b16 %v589
    %v2136 = vunpack.c.l.b16 %v590
    %v2137 = vunpack.c.h.b16 %v590
    %v2138 = vunpack.c.l.b16 %v591
    %v2139 = vunpack.c.h.b16 %v591
    %v2140 = vunpack.c.l.b16 %v592
    %v2141 = vunpack.c.h.b16 %v592
    %v2142 = vunpack.c.l.b16 %v593
    %v2143 = vunpack.c.h.b16 %v593
    %v2144 = vunpack.c.l.b16 %v594
    %v2145 = vunpack.c.h.b16 %v594
    %v2146 = vunpack.c.l.b16 %v595
    %v2147 = vunpack.c.h.b16 %v595
    %v2148 = vunpack.c.l.b16 %v596
    %v2149 = vunpack.c.h.b16 %v596
    %v2150 = vunpack.c.l.b16 %v597
    %v2151 = vunpack.c.h.b16 %v597
    %v2152 = vunpack.c.l.b16 %v598
    %v2153 = vunpack.c.h.b16 %v598
    %v2154 = vunpack.c.l.b16 %v599
    %v2155 = vunpack.c.h.b16 %v599
    %v2156 = vunpack.c.l.b16 %v600
    %v2157 = vunpack.c.h.b16 %v600
    %v2158 = vunpack.c.l.b16 %v601
    %v2159 = vunpack.c.h.b16 %v601
    %v2160 = vunpack.c.l.b16 %v602
    %v2161 = vunpack.c.h.b16 %v602
    %v2162 = vunpack.c.l.b16 %v603
    %v2163 = vunpack.c.h.b16 %v603
    %v2164 = vunpack.c.l.b16 %v604
    %v2165 = vunpack.c.h.b16 %v604
    %v2166 = vunpack.c.l.b16 %v605
    %v2167 = vunpack.c.h.b16 %v605
    %v2168 = vunpack.c.l.b16 %v606
    %v2169 = vunpack.c.h.b16 %v606
    %v2170 = vunpack.c.l.b16 %v607
    %v2171 = vunpack.c.h.b16 %v607
    %v2172 = vunpack.c.l.b16 %v608
    %v2173 = vunpack.c.h.b16 %v608
    %v2174 = vunpack.c.l.b16 %v609
    %v2175 = vunpack.c.h.b16 %v609
    %v2176 = vunpack.c.l.b16 %v610
    %v2177 = vunpack.c.h.b16 %v610
    %v2178 = vunpack.c.l.b16 %v611
    %v2179 = vunpack.c.h.b16 %v611
    %v2180 = vunpack.c.l.b16 %v612
    %v2181 = vunpack.c.h.b16 %v612
    %v2182 = vunpack.c.l.b16 %v613
    %v2183 = vunpack.c.h.b16 %v613
    %v2184 = vunpack.c.l.b16 %v614
    %v2185 = vunpack.c.h.b16 %v614
    %v2186 = vunpack.c.l.b16 %v615
    %v2187 = vunpack.c.h.b16 %v615
    %v2188 = vunpack.c.l.b16 %v616
    %v2189 = vunpack.c.h.b16 %v616
    %v2190 = vunpack.c.l.b16 %v617
    %v2191 = vunpack.c.h.b16 %v617
    %v2192 = vunpack.c.l.b16 %v618
    %v2193 = vunpack.c.h.b16 %v618
    %v2194 = vunpack.c.l.b16 %v619
    %v2195 = vunpack.c.h.b16 %v619
    %v2196 = vunpack.c.l.b16 %v620
    %v2197 = vunpack.c.h.b16 %v620
    %v2198 = vunpack.c.l.b16 %v621
    %v2199 = vunpack.c.h.b16 %v621
    %v2200 = vunpack.c.l.b16 %v622
    %v2201 = vunpack.c.h.b16 %v622
    %v2202 = vunpack.c.l.b16 %v623
    %v2203 = vunpack.c.h.b16 %v623
    %v2204 = vunpack.c.l.b16 %v624
    %v2205 = vunpack.c.h.b16 %v624
    %v2206 = vunpack.c.l.b16 %v625
    %v2207 = vunpack.c.h.b16 %v625
    %v2208 = vunpack.c.l.b16 %v626
    %v2209 = vunpack.c.h.b16 %v626
    %v2210 = vunpack.c.l.b16 %v627
    %v2211 = vunpack.c.h.b16 %v627
    %v2212 = vunpack.c.l.b16 %v628
    %v2213 = vunpack.c.h.b16 %v628
    %v2214 = vunpack.c.l.b16 %v629
    %v2215 = vunpack.c.h.b16 %v629
    %v2216 = vunpack.c.l.b16 %v630
    %v2217 = vunpack.c.h.b16 %v630
    %v2218 = vunpack.c.l.b16 %v631
    %v2219 = vunpack.c.h.b16 %v631
    %v2220 = vunpack.c.l.b16 %v632
    %v2221 = vunpack.c.h.b16 %v632
    %v2222 = vunpack.c.l.b16 %v633
    %v2223 = vunpack.c.h.b16 %v633
    %v2224 = vunpack.c.l.b16 %v634
    %v2225 = vunpack.c.h.b16 %v634
    %v2226 = vunpack.c.l.b16 %v635
    %v2227 = vunpack.c.h.b16 %v635
    %v2228 = vunpack.c.l.b16 %v636
    %v2229 = vunpack.c.h.b16 %v636
    %v2230 = vunpack.c.l.b16 %v637
    %v2231 = vunpack.c.h.b16 %v637
    %v2232 = vunpack.c.l.b16 %v638
    %v2233 = vunpack.c.h.b16 %v638
    %v2234 = vunpack.c.l.b16 %v639
    %v2235 = vunpack.c.h.b16 %v639
    %v2236 = vunpack.c.l.b16 %v640
    %v2237 = vunpack.c.h.b16 %v640
    %v2238 = vunpack.c.l.b16 %v641
    %v2239 = vunpack.c.h.b16 %v641
    %v2240 = vunpack.c.l.b16 %v642
    %v2241 = vunpack.c.h.b16 %v642
    %v2242 = vunpack.c.l.b16 %v643
    %v2243 = vunpack.c.h.b16 %v643
    %v2244 = vunpack.c.l.b16 %v644
    %v2245 = vunpack.c.h.b16 %v644
    %v2246 = vunpack.c.l.b16 %v645
    %v2247 = vunpack.c.h.b16 %v645
    %v2248 = vunpack.c.l.b16 %v646
    %v2249 = vunpack.c.h.b16 %v646
    %v2250 = vunpack.c.l.b16 %v647
    %v2251 = vunpack.c.h.b16 %v647
    %v2252 = vunpack.c.l.b16 %v648
    %v2253 = vunpack.c.h.b16 %v648
    %v2254 = vunpack.c.l.b16 %v649
    %v2255 = vunpack.c.h.b16 %v649
    %v2256 = vunpack.c.l.b16 %v650
    %v2257 = vunpack.c.h.b16 %v650
    %v2258 = vunpack.c.l.b16 %v651
    %v2259 = vunpack.c.h.b16 %v651
    %v2260 = vunpack.c.l.b16 %v652
    %v2261 = vunpack.c.h.b16 %v652
    %v2262 = vunpack.c.l.b16 %v653
    %v2263 = vunpack.c.h.b16 %v653
    %v2264 = vunpack.c.l.b16 %v654
    %v2265 = vunpack.c.h.b16 %v654
    %v2266 = vunpack.c.l.b16 %v655
    %v2267 = vunpack.c.h.b16 %v655
    %v2268 = vunpack.c.l.b16 %v656
    %v2269 = vunpack.c.h.b16 %v656
    %v2270 = vunpack.c.l.b16 %v657
    %v2271 = vunpack.c.h.b16 %v657
    %v2272 = vunpack.c.l.b16 %v658
    %v2273 = vunpack.c.h.b16 %v658
    %v2274 = vunpack.c.l.b16 %v659
    %v2275 = vunpack.c.h.b16 %v659
    %v2276 = vunpack.c.l.b16 %v660
    %v2277 = vunpack.c.h.b16 %v660
    %v2278 = vunpack.c.l.b16 %v661
    %v2279 = vunpack.c.h.b16 %v661
    %v2280 = vunpack.c.l.b16 %v662
    %v2281 = vunpack.c.h.b16 %v662
    %v2282 = vunpack.c.l.b16 %v663
    %v2283 = vunpack.c.h.b16 %v663
    %v2284 = vpack.c.b16 %v1276, %v1260
    %v2285 = vpack.c.b16 %v1277, %v1261
    %v2286 = vpack.c.b16 %v1278, %v1262
    %v2287 = vpack.c.b16 %v1279, %v1263
    %v2288 = vpack.c.b16 %v1280, %v1264
    %v2289 = vpack.c.b16 %v1281, %v1265
    %v2290 = vpack.c.b16 %v1282, %v1266
    %v2291 = vpack.c.b16 %v1283, %v1267
    %v2292 = vpack.c.b16 %v1284, %v1268
    %v2293 = vpack.c.b16 %v1285, %v1269
    %v2294 = vpack.c.b16 %v1286, %v1270
    %v2295 = vpack.c.b16 %v1287, %v1271
    %v2296 = vpack.c.b16 %v1288, %v1272
    %v2297 = vpack.c.b16 %v1289, %v1273
    %v2298 = vpack.c.b16 %v1290, %v1274
    %v2299 = vpack.c.b16 %v1291, %v1275
    %v2300 = vpack.c.b16 %v1308, %v1292
    %v2301 = vpack.c.b16 %v1309, %v1293
    %v2302 = vpack.c.b16 %v1310, %v1294
    %v2303 = vpack.c.b16 %v1311, %v1295
    %v2304 = vpack.c.b16 %v1312, %v1296
    %v2305 = vpack.c.b16 %v1313, %v1297
    %v2306 = vpack.c.b16 %v1314, %v1298
    %v2307 = vpack.c.b16 %v1315, %v1299
    %v2308 = vpack.c.b16 %v1316, %v1300
    %v2309 = vpack.c.b16 %v1317, %v1301
    %v2310 = vpack.c.b16 %v1318, %v1302
    %v2311 = vpack.c.b16 %v1319, %v1303
    %v2312 = vpack.c.b16 %v1320, %v1304
    %v2313 = vpack.c.b16 %v1321, %v1305
    %v2314 = vpack.c.b16 %v1322, %v1306
    %v2315 = vpack.c.b16 %v1323, %v1307
    %v2316 = vpack.c.b16 %v1340, %v1324
    %v2317 = vpack.c.b16 %v1341, %v1325
    %v2318 = vpack.c.b16 %v1342, %v1326
    %v2319 = vpack.c.b16 %v1343, %v1327
    %v2320 = vpack.c.b16 %v1344, %v1328
    %v2321 = vpack.c.b16 %v1345, %v1329
    %v2322 = vpack.c.b16 %v1346, %v1330
    %v2323 = vpack.c.b16 %v1347, %v1331
    %v2324 = vpack.c.b16 %v1348, %v1332
    %v2325 = vpack.c.b16 %v1349, %v1333
    %v2326 = vpack.c.b16 %v1350, %v1334
    %v2327 = vpack.c.b16 %v1351, %v1335
    %v2328 = vpack.c.b16 %v1352, %v1336
    %v2329 = vpack.c.b16 %v1353, %v1337
    %v2330 = vpack.c.b16 %v1354, %v1338
    %v2331 = vpack.c.b16 %v1355, %v1339
    %v2332 = vpack.c.b16 %v1372, %v1356
    %v2333 = vpack.c.b16 %v1373, %v1357
    %v2334 = vpack.c.b16 %v1374, %v1358
    %v2335 = vpack.c.b16 %v1375, %v1359
    %v2336 = vpack.c.b16 %v1376, %v1360
    %v2337 = vpack.c.b16 %v1377, %v1361
    %v2338 = vpack.c.b16 %v1378, %v1362
    %v2339 = vpack.c.b16 %v1379, %v1363
    %v2340 = vpack.c.b16 %v1380, %v1364
    %v2341 = vpack.c.b16 %v1381, %v1365
    %v2342 = vpack.c.b16 %v1382, %v1366
    %v2343 = vpack.c.b16 %v1383, %v1367
    %v2344 = vpack.c.b16 %v1384, %v1368
    %v2345 = vpack.c.b16 %v1385, %v1369
    %v2346 = vpack.c.b16 %v1386, %v1370
    %v2347 = vpack.c.b16 %v1387, %v1371
    %v2348 = vpack.c.b16 %v1404, %v1388
    %v2349 = vpack.c.b16 %v1405, %v1389
    %v2350 = vpack.c.b16 %v1406, %v1390
    %v2351 = vpack.c.b16 %v1407, %v1391
    %v2352 = vpack.c.b16 %v1408, %v1392
    %v2353 = vpack.c.b16 %v1409, %v1393
    %v2354 = vpack.c.b16 %v1410, %v1394
    %v2355 = vpack.c.b16 %v1411, %v1395
    %v2356 = vpack.c.b16 %v1412, %v1396
    %v2357 = vpack.c.b16 %v1413, %v1397
    %v2358 = vpack.c.b16 %v1414, %v1398
    %v2359 = vpack.c.b16 %v1415, %v1399
    %v2360 = vpack.c.b16 %v1416, %v1400
    %v2361 = vpack.c.b16 %v1417, %v1401
    %v2362 = vpack.c.b16 %v1418, %v1402
    %v2363 = vpack.c.b16 %v1419, %v1403
    %v2364 = vpack.c.b16 %v1436, %v1420
    %v2365 = vpack.c.b16 %v1437, %v1421
    %v2366 = vpack.c.b16 %v1438, %v1422
    %v2367 = vpack.c.b16 %v1439, %v1423
    %v2368 = vpack.c.b16 %v1440, %v1424
    %v2369 = vpack.c.b16 %v1441, %v1425
    %v2370 = vpack.c.b16 %v1442, %v1426
    %v2371 = vpack.c.b16 %v1443, %v1427
    %v2372 = vpack.c.b16 %v1444, %v1428
    %v2373 = vpack.c.b16 %v1445, %v1429
    %v2374 = vpack.c.b16 %v1446, %v1430
    %v2375 = vpack.c.b16 %v1447, %v1431
    %v2376 = vpack.c.b16 %v1448, %v1432
    %v2377 = vpack.c.b16 %v1449, %v1433
    %v2378 = vpack.c.b16 %v1450, %v1434
    %v2379 = vpack.c.b16 %v1451, %v1435
    %v2380 = vpack.c.b16 %v1468, %v1452
    %v2381 = vpack.c.b16 %v1469, %v1453
    %v2382 = vpack.c.b16 %v1470, %v1454
    %v2383 = vpack.c.b16 %v1471, %v1455
    %v2384 = vpack.c.b16 %v1472, %v1456
    %v2385 = vpack.c.b16 %v1473, %v1457
    %v2386 = vpack.c.b16 %v1474, %v1458
    %v2387 = vpack.c.b16 %v1475, %v1459
    %v2388 = vpack.c.b16 %v1476, %v1460
    %v2389 = vpack.c.b16 %v1477, %v1461
    %v2390 = vpack.c.b16 %v1478, %v1462
    %v2391 = vpack.c.b16 %v1479, %v1463
    %v2392 = vpack.c.b16 %v1480, %v1464
    %v2393 = vpack.c.b16 %v1481, %v1465
    %v2394 = vpack.c.b16 %v1482, %v1466
    %v2395 = vpack.c.b16 %v1483, %v1467
    %v2396 = vpack.c.b16 %v1500, %v1484
    %v2397 = vpack.c.b16 %v1501, %v1485
    %v2398 = vpack.c.b16 %v1502, %v1486
    %v2399 = vpack.c.b16 %v1503, %v1487
    %v2400 = vpack.c.b16 %v1504, %v1488
    %v2401 = vpack.c.b16 %v1505, %v1489
    %v2402 = vpack.c.b16 %v1506, %v1490
    %v2403 = vpack.c.b16 %v1507, %v1491
    %v2404 = vpack.c.b16 %v1508, %v1492
    %v2405 = vpack.c.b16 %v1509, %v1493
    %v2406 = vpack.c.b16 %v1510, %v1494
    %v2407 = vpack.c.b16 %v1511, %v1495
    %v2408 = vpack.c.b16 %v1512, %v1496
    %v2409 = vpack.c.b16 %v1513, %v1497
    %v2410 = vpack.c.b16 %v1514, %v1498
    %v2411 = vpack.c.b16 %v1515, %v1499
    %v2412 = vpack.c.b16 %v1532, %v1516
    %v2413 = vpack.c.b16 %v1533, %v1517
    %v2414 = vpack.c.b16 %v1534, %v1518
    %v2415 = vpack.c.b16 %v1535, %v1519
    %v2416 = vpack.c.b16 %v1536, %v1520
    %v2417 = vpack.c.b16 %v1537, %v1521
    %v2418 = vpack.c.b16 %v1538, %v1522
    %v2419 = vpack.c.b16 %v1539, %v1523
    %v2420 = vpack.c.b16 %v1540, %v1524
    %v2421 = vpack.c.b16 %v1541, %v1525
    %v2422 = vpack.c.b16 %v1542, %v1526
    %v2423 = vpack.c.b16 %v1543, %v1527
    %v2424 = vpack.c.b16 %v1544, %v1528
    %v2425 = vpack.c.b16 %v1545, %v1529
    %v2426 = vpack.c.b16 %v1546, %v1530
    %v2427 = vpack.c.b16 %v1547, %v1531
    %v2428 = vpack.c.b16 %v1564, %v1548
    %v2429 = vpack.c.b16 %v1565, %v1549
    %v2430 = vpack.c.b16 %v1566, %v1550
    %v2431 = vpack.c.b16 %v1567, %v1551
    %v2432 = vpack.c.b16 %v1568, %v1552
    %v2433 = vpack.c.b16 %v1569, %v1553
    %v2434 = vpack.c.b16 %v1570, %v1554
    %v2435 = vpack.c.b16 %v1571, %v1555
    %v2436 = vpack.c.b16 %v1572, %v1556
    %v2437 = vpack.c.b16 %v1573, %v1557
    %v2438 = vpack.c.b16 %v1574, %v1558
    %v2439 = vpack.c.b16 %v1575, %v1559
    %v2440 = vpack.c.b16 %v1576, %v1560
    %v2441 = vpack.c.b16 %v1577, %v1561
    %v2442 = vpack.c.b16 %v1578, %v1562
    %v2443 = vpack.c.b16 %v1579, %v1563
    %v2444 = vpack.c.b16 %v1596, %v1580
    %v2445 = vpack.c.b16 %v1597, %v1581
    %v2446 = vpack.c.b16 %v1598, %v1582
    %v2447 = vpack.c.b16 %v1599, %v1583
    %v2448 = vpack.c.b16 %v1600, %v1584
    %v2449 = vpack.c.b16 %v1601, %v1585
    %v2450 = vpack.c.b16 %v1602, %v1586
    %v2451 = vpack.c.b16 %v1603, %v1587
    %v2452 = vpack.c.b16 %v1604, %v1588
    %v2453 = vpack.c.b16 %v1605, %v1589
    %v2454 = vpack.c.b16 %v1606, %v1590
    %v2455 = vpack.c.b16 %v1607, %v1591
    %v2456 = vpack.c.b16 %v1608, %v1592
    %v2457 = vpack.c.b16 %v1609, %v1593
    %v2458 = vpack.c.b16 %v1610, %v1594
    %v2459 = vpack.c.b16 %v1611, %v1595
    %v2460 = vpack.c.b16 %v1628, %v1612
    %v2461 = vpack.c.b16 %v1629, %v1613
    %v2462 = vpack.c.b16 %v1630, %v1614
    %v2463 = vpack.c.b16 %v1631, %v1615
    %v2464 = vpack.c.b16 %v1632, %v1616
    %v2465 = vpack.c.b16 %v1633, %v1617
    %v2466 = vpack.c.b16 %v1634, %v1618
    %v2467 = vpack.c.b16 %v1635, %v1619
    %v2468 = vpack.c.b16 %v1636, %v1620
    %v2469 = vpack.c.b16 %v1637, %v1621
    %v2470 = vpack.c.b16 %v1638, %v1622
    %v2471 = vpack.c.b16 %v1639, %v1623
    %v2472 = vpack.c.b16 %v1640, %v1624
    %v2473 = vpack.c.b16 %v1641, %v1625
    %v2474 = vpack.c.b16 %v1642, %v1626
    %v2475 = vpack.c.b16 %v1643, %v1627
    %v2476 = vpack.c.b16 %v1660, %v1644
    %v2477 = vpack.c.b16 %v1661, %v1645
    %v2478 = vpack.c.b16 %v1662, %v1646
    %v2479 = vpack.c.b16 %v1663, %v1647
    %v2480 = vpack.c.b16 %v1664, %v1648
    %v2481 = vpack.c.b16 %v1665, %v1649
    %v2482 = vpack.c.b16 %v1666, %v1650
    %v2483 = vpack.c.b16 %v1667, %v1651
    %v2484 = vpack.c.b16 %v1668, %v1652
    %v2485 = vpack.c.b16 %v1669, %v1653
    %v2486 = vpack.c.b16 %v1670, %v1654
    %v2487 = vpack.c.b16 %v1671, %v1655
    %v2488 = vpack.c.b16 %v1672, %v1656
    %v2489 = vpack.c.b16 %v1673, %v1657
    %v2490 = vpack.c.b16 %v1674, %v1658
    %v2491 = vpack.c.b16 %v1675, %v1659
    %v2492 = vpack.c.b16 %v1692, %v1676
    %v2493 = vpack.c.b16 %v1693, %v1677
    %v2494 = vpack.c.b16 %v1694, %v1678
    %v2495 = vpack.c.b16 %v1695, %v1679
    %v2496 = vpack.c.b16 %v1696, %v1680
    %v2497 = vpack.c.b16 %v1697, %v1681
    %v2498 = vpack.c.b16 %v1698, %v1682
    %v2499 = vpack.c.b16 %v1699, %v1683
    %v2500 = vpack.c.b16 %v1700, %v1684
    %v2501 = vpack.c.b16 %v1701, %v1685
    %v2502 = vpack.c.b16 %v1702, %v1686
    %v2503 = vpack.c.b16 %v1703, %v1687
    %v2504 = vpack.c.b16 %v1704, %v1688
    %v2505 = vpack.c.b16 %v1705, %v1689
    %v2506 = vpack.c.b16 %v1706, %v1690
    %v2507 = vpack.c.b16 %v1707, %v1691
    %v2508 = vpack.c.b16 %v1724, %v1708
    %v2509 = vpack.c.b16 %v1725, %v1709
    %v2510 = vpack.c.b16 %v1726, %v1710
    %v2511 = vpack.c.b16 %v1727, %v1711
    %v2512 = vpack.c.b16 %v1728, %v1712
    %v2513 = vpack.c.b16 %v1729, %v1713
    %v2514 = vpack.c.b16 %v1730, %v1714
    %v2515 = vpack.c.b16 %v1731, %v1715
    %v2516 = vpack.c.b16 %v1732, %v1716
    %v2517 = vpack.c.b16 %v1733, %v1717
    %v2518 = vpack.c.b16 %v1734, %v1718
    %v2519 = vpack.c.b16 %v1735, %v1719
    %v2520 = vpack.c.b16 %v1736, %v1720
    %v2521 = vpack.c.b16 %v1737, %v1721
    %v2522 = vpack.c.b16 %v1738, %v1722
    %v2523 = vpack.c.b16 %v1739, %v1723
    %v2524 = vpack.c.b16 %v1756, %v1740
    %v2525 = vpack.c.b16 %v1757, %v1741
    %v2526 = vpack.c.b16 %v1758, %v1742
    %v2527 = vpack.c.b16 %v1759, %v1743
    %v2528 = vpack.c.b16 %v1760, %v1744
    %v2529 = vpack.c.b16 %v1761, %v1745
    %v2530 = vpack.c.b16 %v1762, %v1746
    %v2531 = vpack.c.b16 %v1763, %v1747
    %v2532 = vpack.c.b16 %v1764, %v1748
    %v2533 = vpack.c.b16 %v1765, %v1749
    %v2534 = vpack.c.b16 %v1766, %v1750
    %v2535 = vpack.c.b16 %v1767, %v1751
    %v2536 = vpack.c.b16 %v1768, %v1752
    %v2537 = vpack.c.b16 %v1769, %v1753
    %v2538 = vpack.c.b16 %v1770, %v1754
    %v2539 = vpack.c.b16 %v1771, %v1755
    %v2540 = vpack.c.b16 %v1788, %v1772
    %v2541 = vpack.c.b16 %v1789, %v1773
    %v2542 = vpack.c.b16 %v1790, %v1774
    %v2543 = vpack.c.b16 %v1791, %v1775
    %v2544 = vpack.c.b16 %v1792, %v1776
    %v2545 = vpack.c.b16 %v1793, %v1777
    %v2546 = vpack.c.b16 %v1794, %v1778
    %v2547 = vpack.c.b16 %v1795, %v1779
    %v2548 = vpack.c.b16 %v1796, %v1780
    %v2549 = vpack.c.b16 %v1797, %v1781
    %v2550 = vpack.c.b16 %v1798, %v1782
    %v2551 = vpack.c.b16 %v1799, %v1783
    %v2552 = vpack.c.b16 %v1800, %v1784
    %v2553 = vpack.c.b16 %v1801, %v1785
    %v2554 = vpack.c.b16 %v1802, %v1786
    %v2555 = vpack.c.b16 %v1803, %v1787
    %v2556 = vpack.c.b16 %v1820, %v1804
    %v2557 = vpack.c.b16 %v1821, %v1805
    %v2558 = vpack.c.b16 %v1822, %v1806
    %v2559 = vpack.c.b16 %v1823, %v1807
    %v2560 = vpack.c.b16 %v1824, %v1808
    %v2561 = vpack.c.b16 %v1825, %v1809
    %v2562 = vpack.c.b16 %v1826, %v1810
    %v2563 = vpack.c.b16 %v1827, %v1811
    %v2564 = vpack.c.b16 %v1828, %v1812
    %v2565 = vpack.c.b16 %v1829, %v1813
    %v2566 = vpack.c.b16 %v1830, %v1814
    %v2567 = vpack.c.b16 %v1831, %v1815
    %v2568 = vpack.c.b16 %v1832, %v1816
    %v2569 = vpack.c.b16 %v1833, %v1817
    %v2570 = vpack.c.b16 %v1834, %v1818
    %v2571 = vpack.c.b16 %v1835, %v1819
    %v2572 = vpack.c.b16 %v1852, %v1836
    %v2573 = vpack.c.b16 %v1853, %v1837
    %v2574 = vpack.c.b16 %v1854, %v1838
    %v2575 = vpack.c.b16 %v1855, %v1839
    %v2576 = vpack.c.b16 %v1856, %v1840
    %v2577 = vpack.c.b16 %v1857, %v1841
    %v2578 = vpack.c.b16 %v1858, %v1842
    %v2579 = vpack.c.b16 %v1859, %v1843
    %v2580 = vpack.c.b16 %v1860, %v1844
    %v2581 = vpack.c.b16 %v1861, %v1845
    %v2582 = vpack.c.b16 %v1862, %v1846
    %v2583 = vpack.c.b16 %v1863, %v1847
    %v2584 = vpack.c.b16 %v1864, %v1848
    %v2585 = vpack.c.b16 %v1865, %v1849
    %v2586 = vpack.c.b16 %v1866, %v1850
    %v2587 = vpack.c.b16 %v1867, %v1851
    %v2588 = vpack.c.b16 %v1884, %v1868
    %v2589 = vpack.c.b16 %v1885, %v1869
    %v2590 = vpack.c.b16 %v1886, %v1870
    %v2591 = vpack.c.b16 %v1887, %v1871
    %v2592 = vpack.c.b16 %v1888, %v1872
    %v2593 = vpack.c.b16 %v1889, %v1873
    %v2594 = vpack.c.b16 %v1890, %v1874
    %v2595 = vpack.c.b16 %v1891, %v1875
    %v2596 = vpack.c.b16 %v1892, %v1876
    %v2597 = vpack.c.b16 %v1893, %v1877
    %v2598 = vpack.c.b16 %v1894, %v1878
    %v2599 = vpack.c.b16 %v1895, %v1879
    %v2600 = vpack.c.b16 %v1896, %v1880
    %v2601 = vpack.c.b16 %v1897, %v1881
    %v2602 = vpack.c.b16 %v1898, %v1882
    %v2603 = vpack.c.b16 %v1899, %v1883
    %v2604 = vpack.c.b16 %v1916, %v1900
    %v2605 = vpack.c.b16 %v1917, %v1901
    %v2606 = vpack.c.b16 %v1918, %v1902
    %v2607 = vpack.c.b16 %v1919, %v1903
    %v2608 = vpack.c.b16 %v1920, %v1904
    %v2609 = vpack.c.b16 %v1921, %v1905
    %v2610 = vpack.c.b16 %v1922, %v1906
    %v2611 = vpack.c.b16 %v1923, %v1907
    %v2612 = vpack.c.b16 %v1924, %v1908
    %v2613 = vpack.c.b16 %v1925, %v1909
    %v2614 = vpack.c.b16 %v1926, %v1910
    %v2615 = vpack.c.b16 %v1927, %v1911
    %v2616 = vpack.c.b16 %v1928, %v1912
    %v2617 = vpack.c.b16 %v1929, %v1913
    %v2618 = vpack.c.b16 %v1930, %v1914
    %v2619 = vpack.c.b16 %v1931, %v1915
    %v2620 = vpack.c.b16 %v1948, %v1932
    %v2621 = vpack.c.b16 %v1949, %v1933
    %v2622 = vpack.c.b16 %v1950, %v1934
    %v2623 = vpack.c.b16 %v1951, %v1935
    %v2624 = vpack.c.b16 %v1952, %v1936
    %v2625 = vpack.c.b16 %v1953, %v1937
    %v2626 = vpack.c.b16 %v1954, %v1938
    %v2627 = vpack.c.b16 %v1955, %v1939
    %v2628 = vpack.c.b16 %v1956, %v1940
    %v2629 = vpack.c.b16 %v1957, %v1941
    %v2630 = vpack.c.b16 %v1958, %v1942
    %v2631 = vpack.c.b16 %v1959, %v1943
    %v2632 = vpack.c.b16 %v1960, %v1944
    %v2633 = vpack.c.b16 %v1961, %v1945
    %v2634 = vpack.c.b16 %v1962, %v1946
    %v2635 = vpack.c.b16 %v1963, %v1947
    %v2636 = vpack.c.b16 %v1980, %v1964
    %v2637 = vpack.c.b16 %v1981, %v1965
    %v2638 = vpack.c.b16 %v1982, %v1966
    %v2639 = vpack.c.b16 %v1983, %v1967
    %v2640 = vpack.c.b16 %v1984, %v1968
    %v2641 = vpack.c.b16 %v1985, %v1969
    %v2642 = vpack.c.b16 %v1986, %v1970
    %v2643 = vpack.c.b16 %v1987, %v1971
    %v2644 = vpack.c.b16 %v1988, %v1972
    %v2645 = vpack.c.b16 %v1989, %v1973
    %v2646 = vpack.c.b16 %v1990, %v1974
    %v2647 = vpack.c.b16 %v1991, %v1975
    %v2648 = vpack.c.b16 %v1992, %v1976
    %v2649 = vpack.c.b16 %v1993, %v1977
    %v2650 = vpack.c.b16 %v1994, %v1978
    %v2651 = vpack.c.b16 %v1995, %v1979
    %v2652 = vpack.c.b16 %v2012, %v1996
    %v2653 = vpack.c.b16 %v2013, %v1997
    %v2654 = vpack.c.b16 %v2014, %v1998
    %v2655 = vpack.c.b16 %v2015, %v1999
    %v2656 = vpack.c.b16 %v2016, %v2000
    %v2657 = vpack.c.b16 %v2017, %v2001
    %v2658 = vpack.c.b16 %v2018, %v2002
    %v2659 = vpack.c.b16 %v2019, %v2003
    %v2660 = vpack.c.b16 %v2020, %v2004
    %v2661 = vpack.c.b16 %v2021, %v2005
    %v2662 = vpack.c.b16 %v2022, %v2006
    %v2663 = vpack.c.b16 %v2023, %v2007
    %v2664 = vpack.c.b16 %v2024, %v2008
    %v2665 = vpack.c.b16 %v2025, %v2009
    %v2666 = vpack.c.b16 %v2026, %v2010
    %v2667 = vpack.c.b16 %v2027, %v2011
    %v2668 = vpack.c.b16 %v2044, %v2028
    %v2669 = vpack.c.b16 %v2045, %v2029
    %v2670 = vpack.c.b16 %v2046, %v2030
    %v2671 = vpack.c.b16 %v2047, %v2031
    %v2672 = vpack.c.b16 %v2048, %v2032
    %v2673 = vpack.c.b16 %v2049, %v2033
    %v2674 = vpack.c.b16 %v2050, %v2034
    %v2675 = vpack.c.b16 %v2051, %v2035
    %v2676 = vpack.c.b16 %v2052, %v2036
    %v2677 = vpack.c.b16 %v2053, %v2037
    %v2678 = vpack.c.b16 %v2054, %v2038
    %v2679 = vpack.c.b16 %v2055, %v2039
    %v2680 = vpack.c.b16 %v2056, %v2040
    %v2681 = vpack.c.b16 %v2057, %v2041
    %v2682 = vpack.c.b16 %v2058, %v2042
    %v2683 = vpack.c.b16 %v2059, %v2043
    %v2684 = vpack.c.b16 %v2076, %v2060
    %v2685 = vpack.c.b16 %v2077, %v2061
    %v2686 = vpack.c.b16 %v2078, %v2062
    %v2687 = vpack.c.b16 %v2079, %v2063
    %v2688 = vpack.c.b16 %v2080, %v2064
    %v2689 = vpack.c.b16 %v2081, %v2065
    %v2690 = vpack.c.b16 %v2082, %v2066
    %v2691 = vpack.c.b16 %v2083, %v2067
    %v2692 = vpack.c.b16 %v2084, %v2068
    %v2693 = vpack.c.b16 %v2085, %v2069
    %v2694 = vpack.c.b16 %v2086, %v2070
    %v2695 = vpack.c.b16 %v2087, %v2071
    %v2696 = vpack.c.b16 %v2088, %v2072
    %v2697 = vpack.c.b16 %v2089, %v2073
    %v2698 = vpack.c.b16 %v2090, %v2074
    %v2699 = vpack.c.b16 %v2091, %v2075
    %v2700 = vpack.c.b16 %v2108, %v2092
    %v2701 = vpack.c.b16 %v2109, %v2093
    %v2702 = vpack.c.b16 %v2110, %v2094
    %v2703 = vpack.c.b16 %v2111, %v2095
    %v2704 = vpack.c.b16 %v2112, %v2096
    %v2705 = vpack.c.b16 %v2113, %v2097
    %v2706 = vpack.c.b16 %v2114, %v2098
    %v2707 = vpack.c.b16 %v2115, %v2099
    %v2708 = vpack.c.b16 %v2116, %v2100
    %v2709 = vpack.c.b16 %v2117, %v2101
    %v2710 = vpack.c.b16 %v2118, %v2102
    %v2711 = vpack.c.b16 %v2119, %v2103
    %v2712 = vpack.c.b16 %v2120, %v2104
    %v2713 = vpack.c.b16 %v2121, %v2105
    %v2714 = vpack.c.b16 %v2122, %v2106
    %v2715 = vpack.c.b16 %v2123, %v2107
    %v2716 = vpack.c.b16 %v2140, %v2124
    %v2717 = vpack.c.b16 %v2141, %v2125
    %v2718 = vpack.c.b16 %v2142, %v2126
    %v2719 = vpack.c.b16 %v2143, %v2127
    %v2720 = vpack.c.b16 %v2144, %v2128
    %v2721 = vpack.c.b16 %v2145, %v2129
    %v2722 = vpack.c.b16 %v2146, %v2130
    %v2723 = vpack.c.b16 %v2147, %v2131
    %v2724 = vpack.c.b16 %v2148, %v2132
    %v2725 = vpack.c.b16 %v2149, %v2133
    %v2726 = vpack.c.b16 %v2150, %v2134
    %v2727 = vpack.c.b16 %v2151, %v2135
    %v2728 = vpack.c.b16 %v2152, %v2136
    %v2729 = vpack.c.b16 %v2153, %v2137
    %v2730 = vpack.c.b16 %v2154, %v2138
    %v2731 = vpack.c.b16 %v2155, %v2139
    %v2732 = vpack.c.b16 %v2172, %v2156
    %v2733 = vpack.c.b16 %v2173, %v2157
    %v2734 = vpack.c.b16 %v2174, %v2158
    %v2735 = vpack.c.b16 %v2175, %v2159
    %v2736 = vpack.c.b16 %v2176, %v2160
    %v2737 = vpack.c.b16 %v2177, %v2161
    %v2738 = vpack.c.b16 %v2178, %v2162
    %v2739 = vpack.c.b16 %v2179, %v2163
    %v2740 = vpack.c.b16 %v2180, %v2164
    %v2741 = vpack.c.b16 %v2181, %v2165
    %v2742 = vpack.c.b16 %v2182, %v2166
    %v2743 = vpack.c.b16 %v2183, %v2167
    %v2744 = vpack.c.b16 %v2184, %v2168
    %v2745 = vpack.c.b16 %v2185, %v2169
    %v2746 = vpack.c.b16 %v2186, %v2170
    %v2747 = vpack.c.b16 %v2187, %v2171
    %v2748 = vpack.c.b16 %v2204, %v2188
    %v2749 = vpack.c.b16 %v2205, %v2189
    %v2750 = vpack.c.b16 %v2206, %v2190
    %v2751 = vpack.c.b16 %v2207, %v2191
    %v2752 = vpack.c.b16 %v2208, %v2192
    %v2753 = vpack.c.b16 %v2209, %v2193
    %v2754 = vpack.c.b16 %v2210, %v2194
    %v2755 = vpack.c.b16 %v2211, %v2195
    %v2756 = vpack.c.b16 %v2212, %v2196
    %v2757 = vpack.c.b16 %v2213, %v2197
    %v2758 = vpack.c.b16 %v2214, %v2198
    %v2759 = vpack.c.b16 %v2215, %v2199
    %v2760 = vpack.c.b16 %v2216, %v2200
    %v2761 = vpack.c.b16 %v2217, %v2201
    %v2762 = vpack.c.b16 %v2218, %v2202
    %v2763 = vpack.c.b16 %v2219, %v2203
    %v2764 = vpack.c.b16 %v2236, %v2220
    %v2765 = vpack.c.b16 %v2237, %v2221
    %v2766 = vpack.c.b16 %v2238, %v2222
    %v2767 = vpack.c.b16 %v2239, %v2223
    %v2768 = vpack.c.b16 %v2240, %v2224
    %v2769 = vpack.c.b16 %v2241, %v2225
    %v2770 = vpack.c.b16 %v2242, %v2226
    %v2771 = vpack.c.b16 %v2243, %v2227
    %v2772 = vpack.c.b16 %v2244, %v2228
    %v2773 = vpack.c.b16 %v2245, %v2229
    %v2774 = vpack.c.b16 %v2246, %v2230
    %v2775 = vpack.c.b16 %v2247, %v2231
    %v2776 = vpack.c.b16 %v2248, %v2232
    %v2777 = vpack.c.b16 %v2249, %v2233
    %v2778 = vpack.c.b16 %v2250, %v2234
    %v2779 = vpack.c.b16 %v2251, %v2235
    %v2780 = vpack.c.b16 %v2268, %v2252
    %v2781 = vpack.c.b16 %v2269, %v2253
    %v2782 = vpack.c.b16 %v2270, %v2254
    %v2783 = vpack.c.b16 %v2271, %v2255
    %v2784 = vpack.c.b16 %v2272, %v2256
    %v2785 = vpack.c.b16 %v2273, %v2257
    %v2786 = vpack.c.b16 %v2274, %v2258
    %v2787 = vpack.c.b16 %v2275, %v2259
    %v2788 = vpack.c.b16 %v2276, %v2260
    %v2789 = vpack.c.b16 %v2277, %v2261
    %v2790 = vpack.c.b16 %v2278, %v2262
    %v2791 = vpack.c.b16 %v2279, %v2263
    %v2792 = vpack.c.b16 %v2280, %v2264
    %v2793 = vpack.c.b16 %v2281, %v2265
    %v2794 = vpack.c.b16 %v2282, %v2266
    %v2795 = vpack.c.b16 %v2283, %v2267
    %3308 = vmatprep.subr.bf16.mxu0 %v2285
    %3309 = vmatpush1.bf16.msra.mxu0 %v2284
    %3310 = vmatprep.subr.bf16.mxu0 %v2301
    %3311 = vmatpush1.bf16.msra.mxu0 %v2300
    %3312 = vmatprep.subr.bf16.mxu0 %v2317
    %3313 = vmatpush1.bf16.msra.mxu0 %v2316
    %3314 = vmatprep.subr.bf16.mxu0 %v2333
    %3315 = vmatpush1.bf16.msra.mxu0 %v2332
    %3316 = vmatprep.subr.bf16.mxu0 %v2349
    %3317 = vmatpush1.bf16.msra.mxu0 %v2348
    %3318 = vmatprep.subr.bf16.mxu0 %v2365
    %3319 = vmatpush1.bf16.msra.mxu0 %v2364
    %3320 = vmatprep.subr.bf16.mxu0 %v2381
    %3321 = vmatpush1.bf16.msra.mxu0 %v2380
    %3322 = vmatprep.subr.bf16.mxu0 %v2397
    %3323 = vmatpush1.bf16.msra.mxu0 %v2396
    %3324 = vmatprep.subr.bf16.mxu0 %v2413
    %3325 = vmatpush1.bf16.msra.mxu0 %v2412
    %3326 = vmatprep.subr.bf16.mxu0 %v2429
    %3327 = vmatpush1.bf16.msra.mxu0 %v2428
    %3328 = vmatprep.subr.bf16.mxu0 %v2445
    %3329 = vmatpush1.bf16.msra.mxu0 %v2444
    %3330 = vmatprep.subr.bf16.mxu0 %v2461
    %3331 = vmatpush1.bf16.msra.mxu0 %v2460
    %3332 = vmatprep.subr.bf16.mxu0 %v2477
    %3333 = vmatpush1.bf16.msra.mxu0 %v2476
    %3334 = vmatprep.subr.bf16.mxu0 %v2493
    %3335 = vmatpush1.bf16.msra.mxu0 %v2492
    %3336 = vmatprep.subr.bf16.mxu0 %v2509
    %3337 = vmatpush1.bf16.msra.mxu0 %v2508
    %3338 = vmatprep.subr.bf16.mxu0 %v2525
    %3339 = vmatpush1.bf16.msra.mxu0 %v2524
    %3340 = vmatprep.mubr.bf16.mxu0 %v149
    %3341 = vmatmul.mubr.bf16.gmra.mrb[0].mxu0 %v148
    %v3342 = vpop.f32.mrb[0].mxu0
    %v3343 = vadd.f32 %v671, %v3342
    %v3344 = vpop.f32.mrb[0].mxu0
    %v3345 = vadd.f32 %v675, %v3344
    %v3346 = vpop.f32.mrb[0].mxu0
    %v3347 = vadd.f32 %v671, %v3346
    %v3348 = vpop.f32.mrb[0].mxu0
    %v3349 = vadd.f32 %v675, %v3348
    %3350 = vdwg.mxu0
    %3351 = vmatprep.subr.bf16.mxu0 %v2541
    %3352 = vmatpush1.bf16.msra.mxu0 %v2540
    %3353 = vmatprep.subr.bf16.mxu0 %v2557
    %3354 = vmatpush1.bf16.msra.mxu0 %v2556
    %3355 = vmatprep.subr.bf16.mxu0 %v2573
    %3356 = vmatpush1.bf16.msra.mxu0 %v2572
    %3357 = vmatprep.subr.bf16.mxu0 %v2589
    %3358 = vmatpush1.bf16.msra.mxu0 %v2588
    %3359 = vmatprep.subr.bf16.mxu0 %v2605
    %3360 = vmatpush1.bf16.msra.mxu0 %v2604
    %3361 = vmatprep.subr.bf16.mxu0 %v2621
    %3362 = vmatpush1.bf16.msra.mxu0 %v2620
    %3363 = vmatprep.subr.bf16.mxu0 %v2637
    %3364 = vmatpush1.bf16.msra.mxu0 %v2636
    %3365 = vmatprep.subr.bf16.mxu0 %v2653
    %3366 = vmatpush1.bf16.msra.mxu0 %v2652
    %3367 = vmatprep.subr.bf16.mxu0 %v2669
    %3368 = vmatpush1.bf16.msra.mxu0 %v2668
    %3369 = vmatprep.subr.bf16.mxu0 %v2685
    %3370 = vmatpush1.bf16.msra.mxu0 %v2684
    %3371 = vmatprep.subr.bf16.mxu0 %v2701
    %3372 = vmatpush1.bf16.msra.mxu0 %v2700
    %3373 = vmatprep.subr.bf16.mxu0 %v2717
    %3374 = vmatpush1.bf16.msra.mxu0 %v2716
    %3375 = vmatprep.subr.bf16.mxu0 %v2733
    %3376 = vmatpush1.bf16.msra.mxu0 %v2732
    %3377 = vmatprep.subr.bf16.mxu0 %v2749
    %3378 = vmatpush1.bf16.msra.mxu0 %v2748
    %3379 = vmatprep.subr.bf16.mxu0 %v2765
    %3380 = vmatpush1.bf16.msra.mxu0 %v2764
    %3381 = vmatprep.subr.bf16.mxu0 %v2781
    %3382 = vmatpush1.bf16.msra.mxu0 %v2780
    %3383 = vmatprep.mubr.bf16.mxu0 %v151
    %3384 = vmatmul.mubr.bf16.gmra.mrb[0].mxu0 %v150
    %v3385 = vpop.f32.mrb[0].mxu0
    %v3386 = vadd.f32 %v3343, %v3385
    %v3387 = vpop.f32.mrb[0].mxu0
    %v3388 = vadd.f32 %v3345, %v3387
    %v3389 = vpop.f32.mrb[0].mxu0
    %v3390 = vadd.f32 %v3347, %v3389
    %v3391 = vpop.f32.mrb[0].mxu0
    %v3392 = vadd.f32 %v3349, %v3391
    %3393 = vdwg.mxu0
    %3394 = vmatprep.subr.bf16.mxu0 %v2287
    %3395 = vmatpush1.bf16.msra.mxu0 %v2286
    %3396 = vmatprep.subr.bf16.mxu0 %v2303
    %3397 = vmatpush1.bf16.msra.mxu0 %v2302
    %3398 = vmatprep.subr.bf16.mxu0 %v2319
    %3399 = vmatpush1.bf16.msra.mxu0 %v2318
    %3400 = vmatprep.subr.bf16.mxu0 %v2335
    %3401 = vmatpush1.bf16.msra.mxu0 %v2334
    %3402 = vmatprep.subr.bf16.mxu0 %v2351
    %3403 = vmatpush1.bf16.msra.mxu0 %v2350
    %3404 = vmatprep.subr.bf16.mxu0 %v2367
    %3405 = vmatpush1.bf16.msra.mxu0 %v2366
    %3406 = vmatprep.subr.bf16.mxu0 %v2383
    %3407 = vmatpush1.bf16.msra.mxu0 %v2382
    %3408 = vmatprep.subr.bf16.mxu0 %v2399
    %3409 = vmatpush1.bf16.msra.mxu0 %v2398
    %3410 = vmatprep.subr.bf16.mxu0 %v2415
    %3411 = vmatpush1.bf16.msra.mxu0 %v2414
    %3412 = vmatprep.subr.bf16.mxu0 %v2431
    %3413 = vmatpush1.bf16.msra.mxu0 %v2430
    %3414 = vmatprep.subr.bf16.mxu0 %v2447
    %3415 = vmatpush1.bf16.msra.mxu0 %v2446
    %3416 = vmatprep.subr.bf16.mxu0 %v2463
    %3417 = vmatpush1.bf16.msra.mxu0 %v2462
    %3418 = vmatprep.subr.bf16.mxu0 %v2479
    %3419 = vmatpush1.bf16.msra.mxu0 %v2478
    %3420 = vmatprep.subr.bf16.mxu0 %v2495
    %3421 = vmatpush1.bf16.msra.mxu0 %v2494
    %3422 = vmatprep.subr.bf16.mxu0 %v2511
    %3423 = vmatpush1.bf16.msra.mxu0 %v2510
    %3424 = vmatprep.subr.bf16.mxu0 %v2527
    %3425 = vmatpush1.bf16.msra.mxu0 %v2526
    %3426 = vmatprep.mubr.bf16.mxu0 %v149
    %3427 = vmatmul.mubr.bf16.gmra.mrb[0].mxu0 %v148
    %v3428 = vpop.f32.mrb[0].mxu0
    %v3429 = vadd.f32 %v679, %v3428
    %v3430 = vpop.f32.mrb[0].mxu0
    %v3431 = vadd.f32 %v683, %v3430
    %v3432 = vpop.f32.mrb[0].mxu0
    %v3433 = vadd.f32 %v679, %v3432
    %v3434 = vpop.f32.mrb[0].mxu0
    %v3435 = vadd.f32 %v683, %v3434
    %3436 = vdwg.mxu0
    %3437 = vmatprep.subr.bf16.mxu0 %v2543
    %3438 = vmatpush1.bf16.msra.mxu0 %v2542
    %3439 = vmatprep.subr.bf16.mxu0 %v2559
    %3440 = vmatpush1.bf16.msra.mxu0 %v2558
    %3441 = vmatprep.subr.bf16.mxu0 %v2575
    %3442 = vmatpush1.bf16.msra.mxu0 %v2574
    %3443 = vmatprep.subr.bf16.mxu0 %v2591
    %3444 = vmatpush1.bf16.msra.mxu0 %v2590
    %3445 = vmatprep.subr.bf16.mxu0 %v2607
    %3446 = vmatpush1.bf16.msra.mxu0 %v2606
    %3447 = vmatprep.subr.bf16.mxu0 %v2623
    %3448 = vmatpush1.bf16.msra.mxu0 %v2622
    %3449 = vmatprep.subr.bf16.mxu0 %v2639
    %3450 = vmatpush1.bf16.msra.mxu0 %v2638
    %3451 = vmatprep.subr.bf16.mxu0 %v2655
    %3452 = vmatpush1.bf16.msra.mxu0 %v2654
    %3453 = vmatprep.subr.bf16.mxu0 %v2671
    %3454 = vmatpush1.bf16.msra.mxu0 %v2670
    %3455 = vmatprep.subr.bf16.mxu0 %v2687
    %3456 = vmatpush1.bf16.msra.mxu0 %v2686
    %3457 = vmatprep.subr.bf16.mxu0 %v2703
    %3458 = vmatpush1.bf16.msra.mxu0 %v2702
    %3459 = vmatprep.subr.bf16.mxu0 %v2719
    %3460 = vmatpush1.bf16.msra.mxu0 %v2718
    %3461 = vmatprep.subr.bf16.mxu0 %v2735
    %3462 = vmatpush1.bf16.msra.mxu0 %v2734
    %3463 = vmatprep.subr.bf16.mxu0 %v2751
    %3464 = vmatpush1.bf16.msra.mxu0 %v2750
    %3465 = vmatprep.subr.bf16.mxu0 %v2767
    %3466 = vmatpush1.bf16.msra.mxu0 %v2766
    %3467 = vmatprep.subr.bf16.mxu0 %v2783
    %3468 = vmatpush1.bf16.msra.mxu0 %v2782
    %3469 = vmatprep.mubr.bf16.mxu0 %v151
    %3470 = vmatmul.mubr.bf16.gmra.mrb[0].mxu0 %v150
    %v3471 = vpop.f32.mrb[0].mxu0
    %v3472 = vadd.f32 %v3429, %v3471
    %v3473 = vpop.f32.mrb[0].mxu0
    %v3474 = vadd.f32 %v3431, %v3473
    %v3475 = vpop.f32.mrb[0].mxu0
    %v3476 = vadd.f32 %v3433, %v3475
    %v3477 = vpop.f32.mrb[0].mxu0
    %v3478 = vadd.f32 %v3435, %v3477
    %3479 = vdwg.mxu0
    %3480 = vmatprep.subr.bf16.mxu0 %v2289
    %3481 = vmatpush1.bf16.msra.mxu0 %v2288
    %3482 = vmatprep.subr.bf16.mxu0 %v2305
    %3483 = vmatpush1.bf16.msra.mxu0 %v2304
    %3484 = vmatprep.subr.bf16.mxu0 %v2321
    %3485 = vmatpush1.bf16.msra.mxu0 %v2320
    %3486 = vmatprep.subr.bf16.mxu0 %v2337
    %3487 = vmatpush1.bf16.msra.mxu0 %v2336
    %3488 = vmatprep.subr.bf16.mxu0 %v2353
    %3489 = vmatpush1.bf16.msra.mxu0 %v2352
    %3490 = vmatprep.subr.bf16.mxu0 %v2369
    %3491 = vmatpush1.bf16.msra.mxu0 %v2368
    %3492 = vmatprep.subr.bf16.mxu0 %v2385
    %3493 = vmatpush1.bf16.msra.mxu0 %v2384
    %3494 = vmatprep.subr.bf16.mxu0 %v2401
    %3495 = vmatpush1.bf16.msra.mxu0 %v2400
    %3496 = vmatprep.subr.bf16.mxu0 %v2417
    %3497 = vmatpush1.bf16.msra.mxu0 %v2416
    %3498 = vmatprep.subr.bf16.mxu0 %v2433
    %3499 = vmatpush1.bf16.msra.mxu0 %v2432
    %3500 = vmatprep.subr.bf16.mxu0 %v2449
    %3501 = vmatpush1.bf16.msra.mxu0 %v2448
    %3502 = vmatprep.subr.bf16.mxu0 %v2465
    %3503 = vmatpush1.bf16.msra.mxu0 %v2464
    %3504 = vmatprep.subr.bf16.mxu0 %v2481
    %3505 = vmatpush1.bf16.msra.mxu0 %v2480
    %3506 = vmatprep.subr.bf16.mxu0 %v2497
    %3507 = vmatpush1.bf16.msra.mxu0 %v2496
    %3508 = vmatprep.subr.bf16.mxu0 %v2513
    %3509 = vmatpush1.bf16.msra.mxu0 %v2512
    %3510 = vmatprep.subr.bf16.mxu0 %v2529
    %3511 = vmatpush1.bf16.msra.mxu0 %v2528
    %3512 = vmatprep.mubr.bf16.mxu0 %v149
    %3513 = vmatmul.mubr.bf16.gmra.mrb[0].mxu0 %v148
    %v3514 = vpop.f32.mrb[0].mxu0
    %v3515 = vadd.f32 %v687, %v3514
    %v3516 = vpop.f32.mrb[0].mxu0
    %v3517 = vadd.f32 %v691, %v3516
    %v3518 = vpop.f32.mrb[0].mxu0
    %v3519 = vadd.f32 %v687, %v3518
    %v3520 = vpop.f32.mrb[0].mxu0
    %v3521 = vadd.f32 %v691, %v3520
    %3522 = vdwg.mxu0
    %3523 = vmatprep.subr.bf16.mxu0 %v2545
    %3524 = vmatpush1.bf16.msra.mxu0 %v2544
    %3525 = vmatprep.subr.bf16.mxu0 %v2561
    %3526 = vmatpush1.bf16.msra.mxu0 %v2560
    %3527 = vmatprep.subr.bf16.mxu0 %v2577
    %3528 = vmatpush1.bf16.msra.mxu0 %v2576
    %3529 = vmatprep.subr.bf16.mxu0 %v2593
    %3530 = vmatpush1.bf16.msra.mxu0 %v2592
    %3531 = vmatprep.subr.bf16.mxu0 %v2609
    %3532 = vmatpush1.bf16.msra.mxu0 %v2608
    %3533 = vmatprep.subr.bf16.mxu0 %v2625
    %3534 = vmatpush1.bf16.msra.mxu0 %v2624
    %3535 = vmatprep.subr.bf16.mxu0 %v2641
    %3536 = vmatpush1.bf16.msra.mxu0 %v2640
    %3537 = vmatprep.subr.bf16.mxu0 %v2657
    %3538 = vmatpush1.bf16.msra.mxu0 %v2656
    %3539 = vmatprep.subr.bf16.mxu0 %v2673
    %3540 = vmatpush1.bf16.msra.mxu0 %v2672
    %3541 = vmatprep.subr.bf16.mxu0 %v2689
    %3542 = vmatpush1.bf16.msra.mxu0 %v2688
    %3543 = vmatprep.subr.bf16.mxu0 %v2705
    %3544 = vmatpush1.bf16.msra.mxu0 %v2704
    %3545 = vmatprep.subr.bf16.mxu0 %v2721
    %3546 = vmatpush1.bf16.msra.mxu0 %v2720
    %3547 = vmatprep.subr.bf16.mxu0 %v2737
    %3548 = vmatpush1.bf16.msra.mxu0 %v2736
    %3549 = vmatprep.subr.bf16.mxu0 %v2753
    %3550 = vmatpush1.bf16.msra.mxu0 %v2752
    %3551 = vmatprep.subr.bf16.mxu0 %v2769
    %3552 = vmatpush1.bf16.msra.mxu0 %v2768
    %3553 = vmatprep.subr.bf16.mxu0 %v2785
    %3554 = vmatpush1.bf16.msra.mxu0 %v2784
    %3555 = vmatprep.mubr.bf16.mxu0 %v151
    %3556 = vmatmul.mubr.bf16.gmra.mrb[0].mxu0 %v150
    %v3557 = vpop.f32.mrb[0].mxu0
    %v3558 = vadd.f32 %v3515, %v3557
    %v3559 = vpop.f32.mrb[0].mxu0
    %v3560 = vadd.f32 %v3517, %v3559
    %v3561 = vpop.f32.mrb[0].mxu0
    %v3562 = vadd.f32 %v3519, %v3561
    %v3563 = vpop.f32.mrb[0].mxu0
    %v3564 = vadd.f32 %v3521, %v3563
    %3565 = vdwg.mxu0
    %3566 = vmatprep.subr.bf16.mxu0 %v2291
    %3567 = vmatpush1.bf16.msra.mxu0 %v2290
    %3568 = vmatprep.subr.bf16.mxu0 %v2307
    %3569 = vmatpush1.bf16.msra.mxu0 %v2306
    %3570 = vmatprep.subr.bf16.mxu0 %v2323
    %3571 = vmatpush1.bf16.msra.mxu0 %v2322
    %3572 = vmatprep.subr.bf16.mxu0 %v2339
    %3573 = vmatpush1.bf16.msra.mxu0 %v2338
    %3574 = vmatprep.subr.bf16.mxu0 %v2355
    %3575 = vmatpush1.bf16.msra.mxu0 %v2354
    %3576 = vmatprep.subr.bf16.mxu0 %v2371
    %3577 = vmatpush1.bf16.msra.mxu0 %v2370
    %3578 = vmatprep.subr.bf16.mxu0 %v2387
    %3579 = vmatpush1.bf16.msra.mxu0 %v2386
    %3580 = vmatprep.subr.bf16.mxu0 %v2403
    %3581 = vmatpush1.bf16.msra.mxu0 %v2402
    %3582 = vmatprep.subr.bf16.mxu0 %v2419
    %3583 = vmatpush1.bf16.msra.mxu0 %v2418
    %3584 = vmatprep.subr.bf16.mxu0 %v2435
    %3585 = vmatpush1.bf16.msra.mxu0 %v2434
    %3586 = vmatprep.subr.bf16.mxu0 %v2451
    %3587 = vmatpush1.bf16.msra.mxu0 %v2450
    %3588 = vmatprep.subr.bf16.mxu0 %v2467
    %3589 = vmatpush1.bf16.msra.mxu0 %v2466
    %3590 = vmatprep.subr.bf16.mxu0 %v2483
    %3591 = vmatpush1.bf16.msra.mxu0 %v2482
    %3592 = vmatprep.subr.bf16.mxu0 %v2499
    %3593 = vmatpush1.bf16.msra.mxu0 %v2498
    %3594 = vmatprep.subr.bf16.mxu0 %v2515
    %3595 = vmatpush1.bf16.msra.mxu0 %v2514
    %3596 = vmatprep.subr.bf16.mxu0 %v2531
    %3597 = vmatpush1.bf16.msra.mxu0 %v2530
    %3598 = vmatprep.mubr.bf16.mxu0 %v149
    %3599 = vmatmul.mubr.bf16.gmra.mrb[0].mxu0 %v148
    %v3600 = vpop.f32.mrb[0].mxu0
    %v3601 = vadd.f32 %v695, %v3600
    %v3602 = vpop.f32.mrb[0].mxu0
    %v3603 = vadd.f32 %v699, %v3602
    %v3604 = vpop.f32.mrb[0].mxu0
    %v3605 = vadd.f32 %v695, %v3604
    %v3606 = vpop.f32.mrb[0].mxu0
    %v3607 = vadd.f32 %v699, %v3606
    %3608 = vdwg.mxu0
    %3609 = vmatprep.subr.bf16.mxu0 %v2547
    %3610 = vmatpush1.bf16.msra.mxu0 %v2546
    %3611 = vmatprep.subr.bf16.mxu0 %v2563
    %3612 = vmatpush1.bf16.msra.mxu0 %v2562
    %3613 = vmatprep.subr.bf16.mxu0 %v2579
    %3614 = vmatpush1.bf16.msra.mxu0 %v2578
    %3615 = vmatprep.subr.bf16.mxu0 %v2595
    %3616 = vmatpush1.bf16.msra.mxu0 %v2594
    %3617 = vmatprep.subr.bf16.mxu0 %v2611
    %3618 = vmatpush1.bf16.msra.mxu0 %v2610
    %3619 = vmatprep.subr.bf16.mxu0 %v2627
    %3620 = vmatpush1.bf16.msra.mxu0 %v2626
    %3621 = vmatprep.subr.bf16.mxu0 %v2643
    %3622 = vmatpush1.bf16.msra.mxu0 %v2642
    %3623 = vmatprep.subr.bf16.mxu0 %v2659
    %3624 = vmatpush1.bf16.msra.mxu0 %v2658
    %3625 = vmatprep.subr.bf16.mxu0 %v2675
    %3626 = vmatpush1.bf16.msra.mxu0 %v2674
    %3627 = vmatprep.subr.bf16.mxu0 %v2691
    %3628 = vmatpush1.bf16.msra.mxu0 %v2690
    %3629 = vmatprep.subr.bf16.mxu0 %v2707
    %3630 = vmatpush1.bf16.msra.mxu0 %v2706
    %3631 = vmatprep.subr.bf16.mxu0 %v2723
    %3632 = vmatpush1.bf16.msra.mxu0 %v2722
    %3633 = vmatprep.subr.bf16.mxu0 %v2739
    %3634 = vmatpush1.bf16.msra.mxu0 %v2738
    %3635 = vmatprep.subr.bf16.mxu0 %v2755
    %3636 = vmatpush1.bf16.msra.mxu0 %v2754
    %3637 = vmatprep.subr.bf16.mxu0 %v2771
    %3638 = vmatpush1.bf16.msra.mxu0 %v2770
    %3639 = vmatprep.subr.bf16.mxu0 %v2787
    %3640 = vmatpush1.bf16.msra.mxu0 %v2786
    %3641 = vmatprep.mubr.bf16.mxu0 %v151
    %3642 = vmatmul.mubr.bf16.gmra.mrb[0].mxu0 %v150
    %v3643 = vpop.f32.mrb[0].mxu0
    %v3644 = vadd.f32 %v3601, %v3643
    %v3645 = vpop.f32.mrb[0].mxu0
    %v3646 = vadd.f32 %v3603, %v3645
    %v3647 = vpop.f32.mrb[0].mxu0
    %v3648 = vadd.f32 %v3605, %v3647
    %v3649 = vpop.f32.mrb[0].mxu0
    %v3650 = vadd.f32 %v3607, %v3649
    %3651 = vdwg.mxu0
    %3652 = vmatprep.subr.bf16.mxu0 %v2293
    %3653 = vmatpush1.bf16.msra.mxu0 %v2292
    %3654 = vmatprep.subr.bf16.mxu0 %v2309
    %3655 = vmatpush1.bf16.msra.mxu0 %v2308
    %3656 = vmatprep.subr.bf16.mxu0 %v2325
    %3657 = vmatpush1.bf16.msra.mxu0 %v2324
    %3658 = vmatprep.subr.bf16.mxu0 %v2341
    %3659 = vmatpush1.bf16.msra.mxu0 %v2340
    %3660 = vmatprep.subr.bf16.mxu0 %v2357
    %3661 = vmatpush1.bf16.msra.mxu0 %v2356
    %3662 = vmatprep.subr.bf16.mxu0 %v2373
    %3663 = vmatpush1.bf16.msra.mxu0 %v2372
    %3664 = vmatprep.subr.bf16.mxu0 %v2389
    %3665 = vmatpush1.bf16.msra.mxu0 %v2388
    %3666 = vmatprep.subr.bf16.mxu0 %v2405
    %3667 = vmatpush1.bf16.msra.mxu0 %v2404
    %3668 = vmatprep.subr.bf16.mxu0 %v2421
    %3669 = vmatpush1.bf16.msra.mxu0 %v2420
    %3670 = vmatprep.subr.bf16.mxu0 %v2437
    %3671 = vmatpush1.bf16.msra.mxu0 %v2436
    %3672 = vmatprep.subr.bf16.mxu0 %v2453
    %3673 = vmatpush1.bf16.msra.mxu0 %v2452
    %3674 = vmatprep.subr.bf16.mxu0 %v2469
    %3675 = vmatpush1.bf16.msra.mxu0 %v2468
    %3676 = vmatprep.subr.bf16.mxu0 %v2485
    %3677 = vmatpush1.bf16.msra.mxu0 %v2484
    %3678 = vmatprep.subr.bf16.mxu0 %v2501
    %3679 = vmatpush1.bf16.msra.mxu0 %v2500
    %3680 = vmatprep.subr.bf16.mxu0 %v2517
    %3681 = vmatpush1.bf16.msra.mxu0 %v2516
    %3682 = vmatprep.subr.bf16.mxu0 %v2533
    %3683 = vmatpush1.bf16.msra.mxu0 %v2532
    %3684 = vmatprep.mubr.bf16.mxu0 %v149
    %3685 = vmatmul.mubr.bf16.gmra.mrb[0].mxu0 %v148
    %v3686 = vpop.f32.mrb[0].mxu0
    %v3687 = vadd.f32 %v703, %v3686
    %v3688 = vpop.f32.mrb[0].mxu0
    %v3689 = vadd.f32 %v707, %v3688
    %v3690 = vpop.f32.mrb[0].mxu0
    %v3691 = vadd.f32 %v703, %v3690
    %v3692 = vpop.f32.mrb[0].mxu0
    %v3693 = vadd.f32 %v707, %v3692
    %3694 = vdwg.mxu0
    %3695 = vmatprep.subr.bf16.mxu0 %v2549
    %3696 = vmatpush1.bf16.msra.mxu0 %v2548
    %3697 = vmatprep.subr.bf16.mxu0 %v2565
    %3698 = vmatpush1.bf16.msra.mxu0 %v2564
    %3699 = vmatprep.subr.bf16.mxu0 %v2581
    %3700 = vmatpush1.bf16.msra.mxu0 %v2580
    %3701 = vmatprep.subr.bf16.mxu0 %v2597
    %3702 = vmatpush1.bf16.msra.mxu0 %v2596
    %3703 = vmatprep.subr.bf16.mxu0 %v2613
    %3704 = vmatpush1.bf16.msra.mxu0 %v2612
    %3705 = vmatprep.subr.bf16.mxu0 %v2629
    %3706 = vmatpush1.bf16.msra.mxu0 %v2628
    %3707 = vmatprep.subr.bf16.mxu0 %v2645
    %3708 = vmatpush1.bf16.msra.mxu0 %v2644
    %3709 = vmatprep.subr.bf16.mxu0 %v2661
    %3710 = vmatpush1.bf16.msra.mxu0 %v2660
    %3711 = vmatprep.subr.bf16.mxu0 %v2677
    %3712 = vmatpush1.bf16.msra.mxu0 %v2676
    %3713 = vmatprep.subr.bf16.mxu0 %v2693
    %3714 = vmatpush1.bf16.msra.mxu0 %v2692
    %3715 = vmatprep.subr.bf16.mxu0 %v2709
    %3716 = vmatpush1.bf16.msra.mxu0 %v2708
    %3717 = vmatprep.subr.bf16.mxu0 %v2725
    %3718 = vmatpush1.bf16.msra.mxu0 %v2724
    %3719 = vmatprep.subr.bf16.mxu0 %v2741
    %3720 = vmatpush1.bf16.msra.mxu0 %v2740
    %3721 = vmatprep.subr.bf16.mxu0 %v2757
    %3722 = vmatpush1.bf16.msra.mxu0 %v2756
    %3723 = vmatprep.subr.bf16.mxu0 %v2773
    %3724 = vmatpush1.bf16.msra.mxu0 %v2772
    %3725 = vmatprep.subr.bf16.mxu0 %v2789
    %3726 = vmatpush1.bf16.msra.mxu0 %v2788
    %3727 = vmatprep.mubr.bf16.mxu0 %v151
    %3728 = vmatmul.mubr.bf16.gmra.mrb[0].mxu0 %v150
    %v3729 = vpop.f32.mrb[0].mxu0
    %v3730 = vadd.f32 %v3687, %v3729
    %v3731 = vpop.f32.mrb[0].mxu0
    %v3732 = vadd.f32 %v3689, %v3731
    %v3733 = vpop.f32.mrb[0].mxu0
    %v3734 = vadd.f32 %v3691, %v3733
    %v3735 = vpop.f32.mrb[0].mxu0
    %v3736 = vadd.f32 %v3693, %v3735
    %3737 = vdwg.mxu0
    %3738 = vmatprep.subr.bf16.mxu0 %v2295
    %3739 = vmatpush1.bf16.msra.mxu0 %v2294
    %3740 = vmatprep.subr.bf16.mxu0 %v2311
    %3741 = vmatpush1.bf16.msra.mxu0 %v2310
    %3742 = vmatprep.subr.bf16.mxu0 %v2327
    %3743 = vmatpush1.bf16.msra.mxu0 %v2326
    %3744 = vmatprep.subr.bf16.mxu0 %v2343
    %3745 = vmatpush1.bf16.msra.mxu0 %v2342
    %3746 = vmatprep.subr.bf16.mxu0 %v2359
    %3747 = vmatpush1.bf16.msra.mxu0 %v2358
    %3748 = vmatprep.subr.bf16.mxu0 %v2375
    %3749 = vmatpush1.bf16.msra.mxu0 %v2374
    %3750 = vmatprep.subr.bf16.mxu0 %v2391
    %3751 = vmatpush1.bf16.msra.mxu0 %v2390
    %3752 = vmatprep.subr.bf16.mxu0 %v2407
    %3753 = vmatpush1.bf16.msra.mxu0 %v2406
    %3754 = vmatprep.subr.bf16.mxu0 %v2423
    %3755 = vmatpush1.bf16.msra.mxu0 %v2422
    %3756 = vmatprep.subr.bf16.mxu0 %v2439
    %3757 = vmatpush1.bf16.msra.mxu0 %v2438
    %3758 = vmatprep.subr.bf16.mxu0 %v2455
    %3759 = vmatpush1.bf16.msra.mxu0 %v2454
    %3760 = vmatprep.subr.bf16.mxu0 %v2471
    %3761 = vmatpush1.bf16.msra.mxu0 %v2470
    %3762 = vmatprep.subr.bf16.mxu0 %v2487
    %3763 = vmatpush1.bf16.msra.mxu0 %v2486
    %3764 = vmatprep.subr.bf16.mxu0 %v2503
    %3765 = vmatpush1.bf16.msra.mxu0 %v2502
    %3766 = vmatprep.subr.bf16.mxu0 %v2519
    %3767 = vmatpush1.bf16.msra.mxu0 %v2518
    %3768 = vmatprep.subr.bf16.mxu0 %v2535
    %3769 = vmatpush1.bf16.msra.mxu0 %v2534
    %3770 = vmatprep.mubr.bf16.mxu0 %v149
    %3771 = vmatmul.mubr.bf16.gmra.mrb[0].mxu0 %v148
    %v3772 = vpop.f32.mrb[0].mxu0
    %v3773 = vadd.f32 %v711, %v3772
    %v3774 = vpop.f32.mrb[0].mxu0
    %v3775 = vadd.f32 %v715, %v3774
    %v3776 = vpop.f32.mrb[0].mxu0
    %v3777 = vadd.f32 %v711, %v3776
    %v3778 = vpop.f32.mrb[0].mxu0
    %v3779 = vadd.f32 %v715, %v3778
    %3780 = vdwg.mxu0
    %3781 = vmatprep.subr.bf16.mxu0 %v2551
    %3782 = vmatpush1.bf16.msra.mxu0 %v2550
    %3783 = vmatprep.subr.bf16.mxu0 %v2567
    %3784 = vmatpush1.bf16.msra.mxu0 %v2566
    %3785 = vmatprep.subr.bf16.mxu0 %v2583
    %3786 = vmatpush1.bf16.msra.mxu0 %v2582
    %3787 = vmatprep.subr.bf16.mxu0 %v2599
    %3788 = vmatpush1.bf16.msra.mxu0 %v2598
    %3789 = vmatprep.subr.bf16.mxu0 %v2615
    %3790 = vmatpush1.bf16.msra.mxu0 %v2614
    %3791 = vmatprep.subr.bf16.mxu0 %v2631
    %3792 = vmatpush1.bf16.msra.mxu0 %v2630
    %3793 = vmatprep.subr.bf16.mxu0 %v2647
    %3794 = vmatpush1.bf16.msra.mxu0 %v2646
    %3795 = vmatprep.subr.bf16.mxu0 %v2663
    %3796 = vmatpush1.bf16.msra.mxu0 %v2662
    %3797 = vmatprep.subr.bf16.mxu0 %v2679
    %3798 = vmatpush1.bf16.msra.mxu0 %v2678
    %3799 = vmatprep.subr.bf16.mxu0 %v2695
    %3800 = vmatpush1.bf16.msra.mxu0 %v2694
    %3801 = vmatprep.subr.bf16.mxu0 %v2711
    %3802 = vmatpush1.bf16.msra.mxu0 %v2710
    %3803 = vmatprep.subr.bf16.mxu0 %v2727
    %3804 = vmatpush1.bf16.msra.mxu0 %v2726
    %3805 = vmatprep.subr.bf16.mxu0 %v2743
    %3806 = vmatpush1.bf16.msra.mxu0 %v2742
    %3807 = vmatprep.subr.bf16.mxu0 %v2759
    %3808 = vmatpush1.bf16.msra.mxu0 %v2758
    %3809 = vmatprep.subr.bf16.mxu0 %v2775
    %3810 = vmatpush1.bf16.msra.mxu0 %v2774
    %3811 = vmatprep.subr.bf16.mxu0 %v2791
    %3812 = vmatpush1.bf16.msra.mxu0 %v2790
    %3813 = vmatprep.mubr.bf16.mxu0 %v151
    %3814 = vmatmul.mubr.bf16.gmra.mrb[0].mxu0 %v150
    %v3815 = vpop.f32.mrb[0].mxu0
    %v3816 = vadd.f32 %v3773, %v3815
    %v3817 = vpop.f32.mrb[0].mxu0
    %v3818 = vadd.f32 %v3775, %v3817
    %v3819 = vpop.f32.mrb[0].mxu0
    %v3820 = vadd.f32 %v3777, %v3819
    %v3821 = vpop.f32.mrb[0].mxu0
    %v3822 = vadd.f32 %v3779, %v3821
    %3823 = vdwg.mxu0
    %3824 = vmatprep.subr.bf16.mxu0 %v2297
    %3825 = vmatpush1.bf16.msra.mxu0 %v2296
    %3826 = vmatprep.subr.bf16.mxu0 %v2313
    %3827 = vmatpush1.bf16.msra.mxu0 %v2312
    %3828 = vmatprep.subr.bf16.mxu0 %v2329
    %3829 = vmatpush1.bf16.msra.mxu0 %v2328
    %3830 = vmatprep.subr.bf16.mxu0 %v2345
    %3831 = vmatpush1.bf16.msra.mxu0 %v2344
    %3832 = vmatprep.subr.bf16.mxu0 %v2361
    %3833 = vmatpush1.bf16.msra.mxu0 %v2360
    %3834 = vmatprep.subr.bf16.mxu0 %v2377
    %3835 = vmatpush1.bf16.msra.mxu0 %v2376
    %3836 = vmatprep.subr.bf16.mxu0 %v2393
    %3837 = vmatpush1.bf16.msra.mxu0 %v2392
    %3838 = vmatprep.subr.bf16.mxu0 %v2409
    %3839 = vmatpush1.bf16.msra.mxu0 %v2408
    %3840 = vmatprep.subr.bf16.mxu0 %v2425
    %3841 = vmatpush1.bf16.msra.mxu0 %v2424
    %3842 = vmatprep.subr.bf16.mxu0 %v2441
    %3843 = vmatpush1.bf16.msra.mxu0 %v2440
    %3844 = vmatprep.subr.bf16.mxu0 %v2457
    %3845 = vmatpush1.bf16.msra.mxu0 %v2456
    %3846 = vmatprep.subr.bf16.mxu0 %v2473
    %3847 = vmatpush1.bf16.msra.mxu0 %v2472
    %3848 = vmatprep.subr.bf16.mxu0 %v2489
    %3849 = vmatpush1.bf16.msra.mxu0 %v2488
    %3850 = vmatprep.subr.bf16.mxu0 %v2505
    %3851 = vmatpush1.bf16.msra.mxu0 %v2504
    %3852 = vmatprep.subr.bf16.mxu0 %v2521
    %3853 = vmatpush1.bf16.msra.mxu0 %v2520
    %3854 = vmatprep.subr.bf16.mxu0 %v2537
    %3855 = vmatpush1.bf16.msra.mxu0 %v2536
    %3856 = vmatprep.mubr.bf16.mxu0 %v149
    %3857 = vmatmul.mubr.bf16.gmra.mrb[0].mxu0 %v148
    %v3858 = vpop.f32.mrb[0].mxu0
    %v3859 = vadd.f32 %v719, %v3858
    %v3860 = vpop.f32.mrb[0].mxu0
    %v3861 = vadd.f32 %v723, %v3860
    %v3862 = vpop.f32.mrb[0].mxu0
    %v3863 = vadd.f32 %v719, %v3862
    %v3864 = vpop.f32.mrb[0].mxu0
    %v3865 = vadd.f32 %v723, %v3864
    %3866 = vdwg.mxu0
    %3867 = vmatprep.subr.bf16.mxu0 %v2553
    %3868 = vmatpush1.bf16.msra.mxu0 %v2552
    %3869 = vmatprep.subr.bf16.mxu0 %v2569
    %3870 = vmatpush1.bf16.msra.mxu0 %v2568
    %3871 = vmatprep.subr.bf16.mxu0 %v2585
    %3872 = vmatpush1.bf16.msra.mxu0 %v2584
    %3873 = vmatprep.subr.bf16.mxu0 %v2601
    %3874 = vmatpush1.bf16.msra.mxu0 %v2600
    %3875 = vmatprep.subr.bf16.mxu0 %v2617
    %3876 = vmatpush1.bf16.msra.mxu0 %v2616
    %3877 = vmatprep.subr.bf16.mxu0 %v2633
    %3878 = vmatpush1.bf16.msra.mxu0 %v2632
    %3879 = vmatprep.subr.bf16.mxu0 %v2649
    %3880 = vmatpush1.bf16.msra.mxu0 %v2648
    %3881 = vmatprep.subr.bf16.mxu0 %v2665
    %3882 = vmatpush1.bf16.msra.mxu0 %v2664
    %3883 = vmatprep.subr.bf16.mxu0 %v2681
    %3884 = vmatpush1.bf16.msra.mxu0 %v2680
    %3885 = vmatprep.subr.bf16.mxu0 %v2697
    %3886 = vmatpush1.bf16.msra.mxu0 %v2696
    %3887 = vmatprep.subr.bf16.mxu0 %v2713
    %3888 = vmatpush1.bf16.msra.mxu0 %v2712
    %3889 = vmatprep.subr.bf16.mxu0 %v2729
    %3890 = vmatpush1.bf16.msra.mxu0 %v2728
    %3891 = vmatprep.subr.bf16.mxu0 %v2745
    %3892 = vmatpush1.bf16.msra.mxu0 %v2744
    %3893 = vmatprep.subr.bf16.mxu0 %v2761
    %3894 = vmatpush1.bf16.msra.mxu0 %v2760
    %3895 = vmatprep.subr.bf16.mxu0 %v2777
    %3896 = vmatpush1.bf16.msra.mxu0 %v2776
    %3897 = vmatprep.subr.bf16.mxu0 %v2793
    %3898 = vmatpush1.bf16.msra.mxu0 %v2792
    %3899 = vmatprep.mubr.bf16.mxu0 %v151
    %3900 = vmatmul.mubr.bf16.gmra.mrb[0].mxu0 %v150
    %v3901 = vpop.f32.mrb[0].mxu0
    %v3902 = vadd.f32 %v3859, %v3901
    %v3903 = vpop.f32.mrb[0].mxu0
    %v3904 = vadd.f32 %v3861, %v3903
    %v3905 = vpop.f32.mrb[0].mxu0
    %v3906 = vadd.f32 %v3863, %v3905
    %v3907 = vpop.f32.mrb[0].mxu0
    %v3908 = vadd.f32 %v3865, %v3907
    %3909 = vdwg.mxu0
    %3910 = vmatprep.subr.bf16.mxu0 %v2299
    %3911 = vmatpush1.bf16.msra.mxu0 %v2298
    %3912 = vmatprep.subr.bf16.mxu0 %v2315
    %3913 = vmatpush1.bf16.msra.mxu0 %v2314
    %3914 = vmatprep.subr.bf16.mxu0 %v2331
    %3915 = vmatpush1.bf16.msra.mxu0 %v2330
    %3916 = vmatprep.subr.bf16.mxu0 %v2347
    %3917 = vmatpush1.bf16.msra.mxu0 %v2346
    %3918 = vmatprep.subr.bf16.mxu0 %v2363
    %3919 = vmatpush1.bf16.msra.mxu0 %v2362
    %3920 = vmatprep.subr.bf16.mxu0 %v2379
    %3921 = vmatpush1.bf16.msra.mxu0 %v2378
    %3922 = vmatprep.subr.bf16.mxu0 %v2395
    %3923 = vmatpush1.bf16.msra.mxu0 %v2394
    %3924 = vmatprep.subr.bf16.mxu0 %v2411
    %3925 = vmatpush1.bf16.msra.mxu0 %v2410
    %3926 = vmatprep.subr.bf16.mxu0 %v2427
    %3927 = vmatpush1.bf16.msra.mxu0 %v2426
    %3928 = vmatprep.subr.bf16.mxu0 %v2443
    %3929 = vmatpush1.bf16.msra.mxu0 %v2442
    %3930 = vmatprep.subr.bf16.mxu0 %v2459
    %3931 = vmatpush1.bf16.msra.mxu0 %v2458
    %3932 = vmatprep.subr.bf16.mxu0 %v2475
    %3933 = vmatpush1.bf16.msra.mxu0 %v2474
    %3934 = vmatprep.subr.bf16.mxu0 %v2491
    %3935 = vmatpush1.bf16.msra.mxu0 %v2490
    %3936 = vmatprep.subr.bf16.mxu0 %v2507
    %3937 = vmatpush1.bf16.msra.mxu0 %v2506
    %3938 = vmatprep.subr.bf16.mxu0 %v2523
    %3939 = vmatpush1.bf16.msra.mxu0 %v2522
    %3940 = vmatprep.subr.bf16.mxu0 %v2539
    %3941 = vmatpush1.bf16.msra.mxu0 %v2538
    %3942 = vmatprep.mubr.bf16.mxu0 %v149
    %3943 = vmatmul.mubr.bf16.gmra.mrb[0].mxu0 %v148
    %v3944 = vpop.f32.mrb[0].mxu0
    %v3945 = vadd.f32 %v727, %v3944
    %v3946 = vpop.f32.mrb[0].mxu0
    %v3947 = vadd.f32 %v731, %v3946
    %v3948 = vpop.f32.mrb[0].mxu0
    %v3949 = vadd.f32 %v727, %v3948
    %v3950 = vpop.f32.mrb[0].mxu0
    %v3951 = vadd.f32 %v731, %v3950
    %3952 = vdwg.mxu0
    %3953 = vmatprep.subr.bf16.mxu0 %v2555
    %3954 = vmatpush1.bf16.msra.mxu0 %v2554
    %3955 = vmatprep.subr.bf16.mxu0 %v2571
    %3956 = vmatpush1.bf16.msra.mxu0 %v2570
    %3957 = vmatprep.subr.bf16.mxu0 %v2587
    %3958 = vmatpush1.bf16.msra.mxu0 %v2586
    %3959 = vmatprep.subr.bf16.mxu0 %v2603
    %3960 = vmatpush1.bf16.msra.mxu0 %v2602
    %3961 = vmatprep.subr.bf16.mxu0 %v2619
    %3962 = vmatpush1.bf16.msra.mxu0 %v2618
    %3963 = vmatprep.subr.bf16.mxu0 %v2635
    %3964 = vmatpush1.bf16.msra.mxu0 %v2634
    %3965 = vmatprep.subr.bf16.mxu0 %v2651
    %3966 = vmatpush1.bf16.msra.mxu0 %v2650
    %3967 = vmatprep.subr.bf16.mxu0 %v2667
    %3968 = vmatpush1.bf16.msra.mxu0 %v2666
    %3969 = vmatprep.subr.bf16.mxu0 %v2683
    %3970 = vmatpush1.bf16.msra.mxu0 %v2682
    %3971 = vmatprep.subr.bf16.mxu0 %v2699
    %3972 = vmatpush1.bf16.msra.mxu0 %v2698
    %3973 = vmatprep.subr.bf16.mxu0 %v2715
    %3974 = vmatpush1.bf16.msra.mxu0 %v2714
    %3975 = vmatprep.subr.bf16.mxu0 %v2731
    %3976 = vmatpush1.bf16.msra.mxu0 %v2730
    %3977 = vmatprep.subr.bf16.mxu0 %v2747
    %3978 = vmatpush1.bf16.msra.mxu0 %v2746
    %3979 = vmatprep.subr.bf16.mxu0 %v2763
    %3980 = vmatpush1.bf16.msra.mxu0 %v2762
    %3981 = vmatprep.subr.bf16.mxu0 %v2779
    %3982 = vmatpush1.bf16.msra.mxu0 %v2778
    %3983 = vmatprep.subr.bf16.mxu0 %v2795
    %3984 = vmatpush1.bf16.msra.mxu0 %v2794
    %3985 = vmatprep.mubr.bf16.mxu0 %v151
    %3986 = vmatmul.mubr.bf16.gmra.mrb[0].mxu0 %v150
    %v3987 = vpop.f32.mrb[0].mxu0
    %v3988 = vadd.f32 %v3945, %v3987
    %v3989 = vpop.f32.mrb[0].mxu0
    %v3990 = vadd.f32 %v3947, %v3989
    %v3991 = vpop.f32.mrb[0].mxu0
    %v3992 = vadd.f32 %v3949, %v3991
    %v3993 = vpop.f32.mrb[0].mxu0
    %v3994 = vadd.f32 %v3951, %v3993
    %3995 = vdwg.mxu0
    %v3996 = vmax.f32 %v3386, 0.0
    %v3997 = vmax.f32 %v3388, 0.0
    %v3998 = vmax.f32 %v3472, 0.0
    %v3999 = vmax.f32 %v3474, 0.0
    %v4000 = vmax.f32 %v3558, 0.0
    %v4001 = vmax.f32 %v3560, 0.0
    %v4002 = vmax.f32 %v3644, 0.0
    %v4003 = vmax.f32 %v3646, 0.0
    %v4004 = vmax.f32 %v3730, 0.0
    %v4005 = vmax.f32 %v3732, 0.0
    %v4006 = vmax.f32 %v3816, 0.0
    %v4007 = vmax.f32 %v3818, 0.0
    %v4008 = vmax.f32 %v3902, 0.0
    %v4009 = vmax.f32 %v3904, 0.0
    %v4010 = vmax.f32 %v3988, 0.0
    %v4011 = vmax.f32 %v3990, 0.0
    %v4012 = vmax.f32 %v3390, 0.0
    %v4013 = vmax.f32 %v3392, 0.0
    %v4014 = vmax.f32 %v3476, 0.0
    %v4015 = vmax.f32 %v3478, 0.0
    %v4016 = vmax.f32 %v3562, 0.0
    %v4017 = vmax.f32 %v3564, 0.0
    %v4018 = vmax.f32 %v3648, 0.0
    %v4019 = vmax.f32 %v3650, 0.0
    %v4020 = vmax.f32 %v3734, 0.0
    %v4021 = vmax.f32 %v3736, 0.0
    %v4022 = vmax.f32 %v3820, 0.0
    %v4023 = vmax.f32 %v3822, 0.0
    %v4024 = vmax.f32 %v3906, 0.0
    %v4025 = vmax.f32 %v3908, 0.0
    %v4026 = vmax.f32 %v3992, 0.0
    %v4027 = vmax.f32 %v3994, 0.0
    %v4028 = vpack.c.bf16 %v4012, %v3996
    %v4029 = vpack.c.bf16 %v4013, %v3997
    %v4030 = vpack.c.bf16 %v4014, %v3998
    %v4031 = vpack.c.bf16 %v4015, %v3999
    %v4032 = vpack.c.bf16 %v4016, %v4000
    %v4033 = vpack.c.bf16 %v4017, %v4001
    %v4034 = vpack.c.bf16 %v4018, %v4002
    %v4035 = vpack.c.bf16 %v4019, %v4003
    %v4036 = vpack.c.bf16 %v4020, %v4004
    %v4037 = vpack.c.bf16 %v4021, %v4005
    %v4038 = vpack.c.bf16 %v4022, %v4006
    %v4039 = vpack.c.bf16 %v4023, %v4007
    %v4040 = vpack.c.bf16 %v4024, %v4008
    %v4041 = vpack.c.bf16 %v4025, %v4009
    %v4042 = vpack.c.bf16 %v4026, %v4010
    %v4043 = vpack.c.bf16 %v4027, %v4011
    %v4044 = vld [vmem:[%s5] sm:$0xff]
    %v4045 = vld [vmem:[%s5 + $0x8] sm:$0xff]
    %v4046 = vld [vmem:[%s5 + $0x10] sm:$0xff]
    %v4047 = vld [vmem:[%s5 + $0x18] sm:$0xff]
    %v4048 = vld [vmem:[%s5 + $0x20] sm:$0xff]
    %v4049 = vld [vmem:[%s5 + $0x28] sm:$0xff]
    %v4050 = vld [vmem:[%s5 + $0x30] sm:$0xff]
    %v4051 = vld [vmem:[%s5 + $0x38] sm:$0xff]
    %v4052 = vld [vmem:[%s5 + $0x40] sm:$0xff]
    %v4053 = vld [vmem:[%s5 + $0x48] sm:$0xff]
    %v4054 = vld [vmem:[%s5 + $0x50] sm:$0xff]
    %v4055 = vld [vmem:[%s5 + $0x58] sm:$0xff]
    %v4056 = vld [vmem:[%s5 + $0x60] sm:$0xff]
    %v4057 = vld [vmem:[%s5 + $0x68] sm:$0xff]
    %v4058 = vld [vmem:[%s5 + $0x70] sm:$0xff]
    %v4059 = vld [vmem:[%s5 + $0x78] sm:$0xff]
    %v4060 = vld [vmem:[%s5 + $0x80] sm:$0xff]
    %v4061 = vld [vmem:[%s5 + $0x88] sm:$0xff]
    %v4062 = vld [vmem:[%s5 + $0x90] sm:$0xff]
    %v4063 = vld [vmem:[%s5 + $0x98] sm:$0xff]
    %v4064 = vld [vmem:[%s5 + $0xa0] sm:$0xff]
    %v4065 = vld [vmem:[%s5 + $0xa8] sm:$0xff]
    %v4066 = vld [vmem:[%s5 + $0xb0] sm:$0xff]
    %v4067 = vld [vmem:[%s5 + $0xb8] sm:$0xff]
    %v4068 = vld [vmem:[%s5 + $0xc0] sm:$0xff]
    %v4069 = vld [vmem:[%s5 + $0xc8] sm:$0xff]
    %v4070 = vld [vmem:[%s5 + $0xd0] sm:$0xff]
    %v4071 = vld [vmem:[%s5 + $0xd8] sm:$0xff]
    %v4072 = vld [vmem:[%s5 + $0xe0] sm:$0xff]
    %v4073 = vld [vmem:[%s5 + $0xe8] sm:$0xff]
    %v4074 = vld [vmem:[%s5 + $0xf0] sm:$0xff]
    %v4075 = vld [vmem:[%s5 + $0xf8] sm:$0xff]
    %v4076 = vld [vmem:[%s5 + $0x100] sm:$0xff]
    %v4077 = vld [vmem:[%s5 + $0x108] sm:$0xff]
    %v4078 = vld [vmem:[%s5 + $0x110] sm:$0xff]
    %v4079 = vld [vmem:[%s5 + $0x118] sm:$0xff]
    %v4080 = vld [vmem:[%s5 + $0x120] sm:$0xff]
    %v4081 = vld [vmem:[%s5 + $0x128] sm:$0xff]
    %v4082 = vld [vmem:[%s5 + $0x130] sm:$0xff]
    %v4083 = vld [vmem:[%s5 + $0x138] sm:$0xff]
    %v4084 = vld [vmem:[%s5 + $0x140] sm:$0xff]
    %v4085 = vld [vmem:[%s5 + $0x148] sm:$0xff]
    %v4086 = vld [vmem:[%s5 + $0x150] sm:$0xff]
    %v4087 = vld [vmem:[%s5 + $0x158] sm:$0xff]
    %v4088 = vld [vmem:[%s5 + $0x160] sm:$0xff]
    %v4089 = vld [vmem:[%s5 + $0x168] sm:$0xff]
    %v4090 = vld [vmem:[%s5 + $0x170] sm:$0xff]
    %v4091 = vld [vmem:[%s5 + $0x178] sm:$0xff]
    %v4092 = vld [vmem:[%s5 + $0x180] sm:$0xff]
    %v4093 = vld [vmem:[%s5 + $0x188] sm:$0xff]
    %v4094 = vld [vmem:[%s5 + $0x190] sm:$0xff]
    %v4095 = vld [vmem:[%s5 + $0x198] sm:$0xff]
    %v4096 = vld [vmem:[%s5 + $0x1a0] sm:$0xff]
    %v4097 = vld [vmem:[%s5 + $0x1a8] sm:$0xff]
    %v4098 = vld [vmem:[%s5 + $0x1b0] sm:$0xff]
    %v4099 = vld [vmem:[%s5 + $0x1b8] sm:$0xff]
    %v4100 = vld [vmem:[%s5 + $0x1c0] sm:$0xff]
    %v4101 = vld [vmem:[%s5 + $0x1c8] sm:$0xff]
    %v4102 = vld [vmem:[%s5 + $0x1d0] sm:$0xff]
    %v4103 = vld [vmem:[%s5 + $0x1d8] sm:$0xff]
    %v4104 = vld [vmem:[%s5 + $0x1e0] sm:$0xff]
    %v4105 = vld [vmem:[%s5 + $0x1e8] sm:$0xff]
    %v4106 = vld [vmem:[%s5 + $0x1f0] sm:$0xff]
    %v4107 = vld [vmem:[%s5 + $0x1f8] sm:$0xff]
    %v4108 = vld [vmem:[%s5 + $0x200] sm:$0xff]
    %v4109 = vld [vmem:[%s5 + $0x208] sm:$0xff]
    %v4110 = vld [vmem:[%s5 + $0x210] sm:$0xff]
    %v4111 = vld [vmem:[%s5 + $0x218] sm:$0xff]
    %v4112 = vld [vmem:[%s5 + $0x220] sm:$0xff]
    %v4113 = vld [vmem:[%s5 + $0x228] sm:$0xff]
    %v4114 = vld [vmem:[%s5 + $0x230] sm:$0xff]
    %v4115 = vld [vmem:[%s5 + $0x238] sm:$0xff]
    %v4116 = vld [vmem:[%s5 + $0x240] sm:$0xff]
    %v4117 = vld [vmem:[%s5 + $0x248] sm:$0xff]
    %v4118 = vld [vmem:[%s5 + $0x250] sm:$0xff]
    %v4119 = vld [vmem:[%s5 + $0x258] sm:$0xff]
    %v4120 = vld [vmem:[%s5 + $0x260] sm:$0xff]
    %v4121 = vld [vmem:[%s5 + $0x268] sm:$0xff]
    %v4122 = vld [vmem:[%s5 + $0x270] sm:$0xff]
    %v4123 = vld [vmem:[%s5 + $0x278] sm:$0xff]
    %v4124 = vld [vmem:[%s5 + $0x280] sm:$0xff]
    %v4125 = vld [vmem:[%s5 + $0x288] sm:$0xff]
    %v4126 = vld [vmem:[%s5 + $0x290] sm:$0xff]
    %v4127 = vld [vmem:[%s5 + $0x298] sm:$0xff]
    %v4128 = vld [vmem:[%s5 + $0x2a0] sm:$0xff]
    %v4129 = vld [vmem:[%s5 + $0x2a8] sm:$0xff]
    %v4130 = vld [vmem:[%s5 + $0x2b0] sm:$0xff]
    %v4131 = vld [vmem:[%s5 + $0x2b8] sm:$0xff]
    %v4132 = vld [vmem:[%s5 + $0x2c0] sm:$0xff]
    %v4133 = vld [vmem:[%s5 + $0x2c8] sm:$0xff]
    %v4134 = vld [vmem:[%s5 + $0x2d0] sm:$0xff]
    %v4135 = vld [vmem:[%s5 + $0x2d8] sm:$0xff]
    %v4136 = vld [vmem:[%s5 + $0x2e0] sm:$0xff]
    %v4137 = vld [vmem:[%s5 + $0x2e8] sm:$0xff]
    %v4138 = vld [vmem:[%s5 + $0x2f0] sm:$0xff]
    %v4139 = vld [vmem:[%s5 + $0x2f8] sm:$0xff]
    %v4140 = vld [vmem:[%s5 + $0x300] sm:$0xff]
    %v4141 = vld [vmem:[%s5 + $0x308] sm:$0xff]
    %v4142 = vld [vmem:[%s5 + $0x310] sm:$0xff]
    %v4143 = vld [vmem:[%s5 + $0x318] sm:$0xff]
    %v4144 = vld [vmem:[%s5 + $0x320] sm:$0xff]
    %v4145 = vld [vmem:[%s5 + $0x328] sm:$0xff]
    %v4146 = vld [vmem:[%s5 + $0x330] sm:$0xff]
    %v4147 = vld [vmem:[%s5 + $0x338] sm:$0xff]
    %v4148 = vld [vmem:[%s5 + $0x340] sm:$0xff]
    %v4149 = vld [vmem:[%s5 + $0x348] sm:$0xff]
    %v4150 = vld [vmem:[%s5 + $0x350] sm:$0xff]
    %v4151 = vld [vmem:[%s5 + $0x358] sm:$0xff]
    %v4152 = vld [vmem:[%s5 + $0x360] sm:$0xff]
    %v4153 = vld [vmem:[%s5 + $0x368] sm:$0xff]
    %v4154 = vld [vmem:[%s5 + $0x370] sm:$0xff]
    %v4155 = vld [vmem:[%s5 + $0x378] sm:$0xff]
    %v4156 = vld [vmem:[%s5 + $0x380] sm:$0xff]
    %v4157 = vld [vmem:[%s5 + $0x388] sm:$0xff]
    %v4158 = vld [vmem:[%s5 + $0x390] sm:$0xff]
    %v4159 = vld [vmem:[%s5 + $0x398] sm:$0xff]
    %v4160 = vld [vmem:[%s5 + $0x3a0] sm:$0xff]
    %v4161 = vld [vmem:[%s5 + $0x3a8] sm:$0xff]
    %v4162 = vld [vmem:[%s5 + $0x3b0] sm:$0xff]
    %v4163 = vld [vmem:[%s5 + $0x3b8] sm:$0xff]
    %v4164 = vld [vmem:[%s5 + $0x3c0] sm:$0xff]
    %v4165 = vld [vmem:[%s5 + $0x3c8] sm:$0xff]
    %v4166 = vld [vmem:[%s5 + $0x3d0] sm:$0xff]
    %v4167 = vld [vmem:[%s5 + $0x3d8] sm:$0xff]
    %v4168 = vld [vmem:[%s5 + $0x3e0] sm:$0xff]
    %v4169 = vld [vmem:[%s5 + $0x3e8] sm:$0xff]
    %v4170 = vld [vmem:[%s5 + $0x3f0] sm:$0xff]
    %v4171 = vld [vmem:[%s5 + $0x3f8] sm:$0xff]
    %v4172 = vld [vmem:[%s5 + $0x400] sm:$0xff]
    %v4173 = vld [vmem:[%s5 + $0x408] sm:$0xff]
    %v4174 = vld [vmem:[%s5 + $0x410] sm:$0xff]
    %v4175 = vld [vmem:[%s5 + $0x418] sm:$0xff]
    %v4176 = vld [vmem:[%s5 + $0x420] sm:$0xff]
    %v4177 = vld [vmem:[%s5 + $0x428] sm:$0xff]
    %v4178 = vld [vmem:[%s5 + $0x430] sm:$0xff]
    %v4179 = vld [vmem:[%s5 + $0x438] sm:$0xff]
    %v4180 = vld [vmem:[%s5 + $0x440] sm:$0xff]
    %v4181 = vld [vmem:[%s5 + $0x448] sm:$0xff]
    %v4182 = vld [vmem:[%s5 + $0x450] sm:$0xff]
    %v4183 = vld [vmem:[%s5 + $0x458] sm:$0xff]
    %v4184 = vld [vmem:[%s5 + $0x460] sm:$0xff]
    %v4185 = vld [vmem:[%s5 + $0x468] sm:$0xff]
    %v4186 = vld [vmem:[%s5 + $0x470] sm:$0xff]
    %v4187 = vld [vmem:[%s5 + $0x478] sm:$0xff]
    %v4188 = vld [vmem:[%s5 + $0x480] sm:$0xff]
    %v4189 = vld [vmem:[%s5 + $0x488] sm:$0xff]
    %v4190 = vld [vmem:[%s5 + $0x490] sm:$0xff]
    %v4191 = vld [vmem:[%s5 + $0x498] sm:$0xff]
    %v4192 = vld [vmem:[%s5 + $0x4a0] sm:$0xff]
    %v4193 = vld [vmem:[%s5 + $0x4a8] sm:$0xff]
    %v4194 = vld [vmem:[%s5 + $0x4b0] sm:$0xff]
    %v4195 = vld [vmem:[%s5 + $0x4b8] sm:$0xff]
    %v4196 = vld [vmem:[%s5 + $0x4c0] sm:$0xff]
    %v4197 = vld [vmem:[%s5 + $0x4c8] sm:$0xff]
    %v4198 = vld [vmem:[%s5 + $0x4d0] sm:$0xff]
    %v4199 = vld [vmem:[%s5 + $0x4d8] sm:$0xff]
    %v4200 = vld [vmem:[%s5 + $0x4e0] sm:$0xff]
    %v4201 = vld [vmem:[%s5 + $0x4e8] sm:$0xff]
    %v4202 = vld [vmem:[%s5 + $0x4f0] sm:$0xff]
    %v4203 = vld [vmem:[%s5 + $0x4f8] sm:$0xff]
    %v4204 = vld [vmem:[%s5 + $0x500] sm:$0xff]
    %v4205 = vld [vmem:[%s5 + $0x508] sm:$0xff]
    %v4206 = vld [vmem:[%s5 + $0x510] sm:$0xff]
    %v4207 = vld [vmem:[%s5 + $0x518] sm:$0xff]
    %v4208 = vld [vmem:[%s5 + $0x520] sm:$0xff]
    %v4209 = vld [vmem:[%s5 + $0x528] sm:$0xff]
    %v4210 = vld [vmem:[%s5 + $0x530] sm:$0xff]
    %v4211 = vld [vmem:[%s5 + $0x538] sm:$0xff]
    %v4212 = vld [vmem:[%s5 + $0x540] sm:$0xff]
    %v4213 = vld [vmem:[%s5 + $0x548] sm:$0xff]
    %v4214 = vld [vmem:[%s5 + $0x550] sm:$0xff]
    %v4215 = vld [vmem:[%s5 + $0x558] sm:$0xff]
    %v4216 = vld [vmem:[%s5 + $0x560] sm:$0xff]
    %v4217 = vld [vmem:[%s5 + $0x568] sm:$0xff]
    %v4218 = vld [vmem:[%s5 + $0x570] sm:$0xff]
    %v4219 = vld [vmem:[%s5 + $0x578] sm:$0xff]
    %v4220 = vld [vmem:[%s5 + $0x580] sm:$0xff]
    %v4221 = vld [vmem:[%s5 + $0x588] sm:$0xff]
    %v4222 = vld [vmem:[%s5 + $0x590] sm:$0xff]
    %v4223 = vld [vmem:[%s5 + $0x598] sm:$0xff]
    %v4224 = vld [vmem:[%s5 + $0x5a0] sm:$0xff]
    %v4225 = vld [vmem:[%s5 + $0x5a8] sm:$0xff]
    %v4226 = vld [vmem:[%s5 + $0x5b0] sm:$0xff]
    %v4227 = vld [vmem:[%s5 + $0x5b8] sm:$0xff]
    %v4228 = vld [vmem:[%s5 + $0x5c0] sm:$0xff]
    %v4229 = vld [vmem:[%s5 + $0x5c8] sm:$0xff]
    %v4230 = vld [vmem:[%s5 + $0x5d0] sm:$0xff]
    %v4231 = vld [vmem:[%s5 + $0x5d8] sm:$0xff]
    %v4232 = vld [vmem:[%s5 + $0x5e0] sm:$0xff]
    %v4233 = vld [vmem:[%s5 + $0x5e8] sm:$0xff]
    %v4234 = vld [vmem:[%s5 + $0x5f0] sm:$0xff]
    %v4235 = vld [vmem:[%s5 + $0x5f8] sm:$0xff]
    %v4236 = vld [vmem:[%s5 + $0x600] sm:$0xff]
    %v4237 = vld [vmem:[%s5 + $0x608] sm:$0xff]
    %v4238 = vld [vmem:[%s5 + $0x610] sm:$0xff]
    %v4239 = vld [vmem:[%s5 + $0x618] sm:$0xff]
    %v4240 = vld [vmem:[%s5 + $0x620] sm:$0xff]
    %v4241 = vld [vmem:[%s5 + $0x628] sm:$0xff]
    %v4242 = vld [vmem:[%s5 + $0x630] sm:$0xff]
    %v4243 = vld [vmem:[%s5 + $0x638] sm:$0xff]
    %v4244 = vld [vmem:[%s5 + $0x640] sm:$0xff]
    %v4245 = vld [vmem:[%s5 + $0x648] sm:$0xff]
    %v4246 = vld [vmem:[%s5 + $0x650] sm:$0xff]
    %v4247 = vld [vmem:[%s5 + $0x658] sm:$0xff]
    %v4248 = vld [vmem:[%s5 + $0x660] sm:$0xff]
    %v4249 = vld [vmem:[%s5 + $0x668] sm:$0xff]
    %v4250 = vld [vmem:[%s5 + $0x670] sm:$0xff]
    %v4251 = vld [vmem:[%s5 + $0x678] sm:$0xff]
    %v4252 = vld [vmem:[%s5 + $0x680] sm:$0xff]
    %v4253 = vld [vmem:[%s5 + $0x688] sm:$0xff]
    %v4254 = vld [vmem:[%s5 + $0x690] sm:$0xff]
    %v4255 = vld [vmem:[%s5 + $0x698] sm:$0xff]
    %v4256 = vld [vmem:[%s5 + $0x6a0] sm:$0xff]
    %v4257 = vld [vmem:[%s5 + $0x6a8] sm:$0xff]
    %v4258 = vld [vmem:[%s5 + $0x6b0] sm:$0xff]
    %v4259 = vld [vmem:[%s5 + $0x6b8] sm:$0xff]
    %v4260 = vld [vmem:[%s5 + $0x6c0] sm:$0xff]
    %v4261 = vld [vmem:[%s5 + $0x6c8] sm:$0xff]
    %v4262 = vld [vmem:[%s5 + $0x6d0] sm:$0xff]
    %v4263 = vld [vmem:[%s5 + $0x6d8] sm:$0xff]
    %v4264 = vld [vmem:[%s5 + $0x6e0] sm:$0xff]
    %v4265 = vld [vmem:[%s5 + $0x6e8] sm:$0xff]
    %v4266 = vld [vmem:[%s5 + $0x6f0] sm:$0xff]
    %v4267 = vld [vmem:[%s5 + $0x6f8] sm:$0xff]
    %v4268 = vld [vmem:[%s5 + $0x700] sm:$0xff]
    %v4269 = vld [vmem:[%s5 + $0x708] sm:$0xff]
    %v4270 = vld [vmem:[%s5 + $0x710] sm:$0xff]
    %v4271 = vld [vmem:[%s5 + $0x718] sm:$0xff]
    %v4272 = vld [vmem:[%s5 + $0x720] sm:$0xff]
    %v4273 = vld [vmem:[%s5 + $0x728] sm:$0xff]
    %v4274 = vld [vmem:[%s5 + $0x730] sm:$0xff]
    %v4275 = vld [vmem:[%s5 + $0x738] sm:$0xff]
    %v4276 = vld [vmem:[%s5 + $0x740] sm:$0xff]
    %v4277 = vld [vmem:[%s5 + $0x748] sm:$0xff]
    %v4278 = vld [vmem:[%s5 + $0x750] sm:$0xff]
    %v4279 = vld [vmem:[%s5 + $0x758] sm:$0xff]
    %v4280 = vld [vmem:[%s5 + $0x760] sm:$0xff]
    %v4281 = vld [vmem:[%s5 + $0x768] sm:$0xff]
    %v4282 = vld [vmem:[%s5 + $0x770] sm:$0xff]
    %v4283 = vld [vmem:[%s5 + $0x778] sm:$0xff]
    %v4284 = vld [vmem:[%s5 + $0x780] sm:$0xff]
    %v4285 = vld [vmem:[%s5 + $0x788] sm:$0xff]
    %v4286 = vld [vmem:[%s5 + $0x790] sm:$0xff]
    %v4287 = vld [vmem:[%s5 + $0x798] sm:$0xff]
    %v4288 = vld [vmem:[%s5 + $0x7a0] sm:$0xff]
    %v4289 = vld [vmem:[%s5 + $0x7a8] sm:$0xff]
    %v4290 = vld [vmem:[%s5 + $0x7b0] sm:$0xff]
    %v4291 = vld [vmem:[%s5 + $0x7b8] sm:$0xff]
    %v4292 = vld [vmem:[%s5 + $0x7c0] sm:$0xff]
    %v4293 = vld [vmem:[%s5 + $0x7c8] sm:$0xff]
    %v4294 = vld [vmem:[%s5 + $0x7d0] sm:$0xff]
    %v4295 = vld [vmem:[%s5 + $0x7d8] sm:$0xff]
    %v4296 = vld [vmem:[%s5 + $0x7e0] sm:$0xff]
    %v4297 = vld [vmem:[%s5 + $0x7e8] sm:$0xff]
    %v4298 = vld [vmem:[%s5 + $0x7f0] sm:$0xff]
    %v4299 = vld [vmem:[%s5 + $0x7f8] sm:$0xff]
    %v4300 = vld [vmem:[%s5 + $0x800] sm:$0xff]
    %v4301 = vld [vmem:[%s5 + $0x808] sm:$0xff]
    %v4302 = vld [vmem:[%s5 + $0x810] sm:$0xff]
    %v4303 = vld [vmem:[%s5 + $0x818] sm:$0xff]
    %v4304 = vld [vmem:[%s5 + $0x820] sm:$0xff]
    %v4305 = vld [vmem:[%s5 + $0x828] sm:$0xff]
    %v4306 = vld [vmem:[%s5 + $0x830] sm:$0xff]
    %v4307 = vld [vmem:[%s5 + $0x838] sm:$0xff]
    %v4308 = vld [vmem:[%s5 + $0x840] sm:$0xff]
    %v4309 = vld [vmem:[%s5 + $0x848] sm:$0xff]
    %v4310 = vld [vmem:[%s5 + $0x850] sm:$0xff]
    %v4311 = vld [vmem:[%s5 + $0x858] sm:$0xff]
    %v4312 = vld [vmem:[%s5 + $0x860] sm:$0xff]
    %v4313 = vld [vmem:[%s5 + $0x868] sm:$0xff]
    %v4314 = vld [vmem:[%s5 + $0x870] sm:$0xff]
    %v4315 = vld [vmem:[%s5 + $0x878] sm:$0xff]
    %v4316 = vld [vmem:[%s5 + $0x880] sm:$0xff]
    %v4317 = vld [vmem:[%s5 + $0x888] sm:$0xff]
    %v4318 = vld [vmem:[%s5 + $0x890] sm:$0xff]
    %v4319 = vld [vmem:[%s5 + $0x898] sm:$0xff]
    %v4320 = vld [vmem:[%s5 + $0x8a0] sm:$0xff]
    %v4321 = vld [vmem:[%s5 + $0x8a8] sm:$0xff]
    %v4322 = vld [vmem:[%s5 + $0x8b0] sm:$0xff]
    %v4323 = vld [vmem:[%s5 + $0x8b8] sm:$0xff]
    %v4324 = vld [vmem:[%s5 + $0x8c0] sm:$0xff]
    %v4325 = vld [vmem:[%s5 + $0x8c8] sm:$0xff]
    %v4326 = vld [vmem:[%s5 + $0x8d0] sm:$0xff]
    %v4327 = vld [vmem:[%s5 + $0x8d8] sm:$0xff]
    %v4328 = vld [vmem:[%s5 + $0x8e0] sm:$0xff]
    %v4329 = vld [vmem:[%s5 + $0x8e8] sm:$0xff]
    %v4330 = vld [vmem:[%s5 + $0x8f0] sm:$0xff]
    %v4331 = vld [vmem:[%s5 + $0x8f8] sm:$0xff]
    %v4332 = vld [vmem:[%s5 + $0x900] sm:$0xff]
    %v4333 = vld [vmem:[%s5 + $0x908] sm:$0xff]
    %v4334 = vld [vmem:[%s5 + $0x910] sm:$0xff]
    %v4335 = vld [vmem:[%s5 + $0x918] sm:$0xff]
    %v4336 = vld [vmem:[%s5 + $0x920] sm:$0xff]
    %v4337 = vld [vmem:[%s5 + $0x928] sm:$0xff]
    %v4338 = vld [vmem:[%s5 + $0x930] sm:$0xff]
    %v4339 = vld [vmem:[%s5 + $0x938] sm:$0xff]
    %v4340 = vld [vmem:[%s5 + $0x940] sm:$0xff]
    %v4341 = vld [vmem:[%s5 + $0x948] sm:$0xff]
    %v4342 = vld [vmem:[%s5 + $0x950] sm:$0xff]
    %v4343 = vld [vmem:[%s5 + $0x958] sm:$0xff]
    %v4344 = vld [vmem:[%s5 + $0x960] sm:$0xff]
    %v4345 = vld [vmem:[%s5 + $0x968] sm:$0xff]
    %v4346 = vld [vmem:[%s5 + $0x970] sm:$0xff]
    %v4347 = vld [vmem:[%s5 + $0x978] sm:$0xff]
    %v4348 = vld [vmem:[%s5 + $0x980] sm:$0xff]
    %v4349 = vld [vmem:[%s5 + $0x988] sm:$0xff]
    %v4350 = vld [vmem:[%s5 + $0x990] sm:$0xff]
    %v4351 = vld [vmem:[%s5 + $0x998] sm:$0xff]
    %v4352 = vld [vmem:[%s5 + $0x9a0] sm:$0xff]
    %v4353 = vld [vmem:[%s5 + $0x9a8] sm:$0xff]
    %v4354 = vld [vmem:[%s5 + $0x9b0] sm:$0xff]
    %v4355 = vld [vmem:[%s5 + $0x9b8] sm:$0xff]
    %v4356 = vld [vmem:[%s5 + $0x9c0] sm:$0xff]
    %v4357 = vld [vmem:[%s5 + $0x9c8] sm:$0xff]
    %v4358 = vld [vmem:[%s5 + $0x9d0] sm:$0xff]
    %v4359 = vld [vmem:[%s5 + $0x9d8] sm:$0xff]
    %v4360 = vld [vmem:[%s5 + $0x9e0] sm:$0xff]
    %v4361 = vld [vmem:[%s5 + $0x9e8] sm:$0xff]
    %v4362 = vld [vmem:[%s5 + $0x9f0] sm:$0xff]
    %v4363 = vld [vmem:[%s5 + $0x9f8] sm:$0xff]
    %v4364 = vld [vmem:[%s5 + $0xa00] sm:$0xff]
    %v4365 = vld [vmem:[%s5 + $0xa08] sm:$0xff]
    %v4366 = vld [vmem:[%s5 + $0xa10] sm:$0xff]
    %v4367 = vld [vmem:[%s5 + $0xa18] sm:$0xff]
    %v4368 = vld [vmem:[%s5 + $0xa20] sm:$0xff]
    %v4369 = vld [vmem:[%s5 + $0xa28] sm:$0xff]
    %v4370 = vld [vmem:[%s5 + $0xa30] sm:$0xff]
    %v4371 = vld [vmem:[%s5 + $0xa38] sm:$0xff]
    %v4372 = vld [vmem:[%s5 + $0xa40] sm:$0xff]
    %v4373 = vld [vmem:[%s5 + $0xa48] sm:$0xff]
    %v4374 = vld [vmem:[%s5 + $0xa50] sm:$0xff]
    %v4375 = vld [vmem:[%s5 + $0xa58] sm:$0xff]
    %v4376 = vld [vmem:[%s5 + $0xa60] sm:$0xff]
    %v4377 = vld [vmem:[%s5 + $0xa68] sm:$0xff]
    %v4378 = vld [vmem:[%s5 + $0xa70] sm:$0xff]
    %v4379 = vld [vmem:[%s5 + $0xa78] sm:$0xff]
    %v4380 = vld [vmem:[%s5 + $0xa80] sm:$0xff]
    %v4381 = vld [vmem:[%s5 + $0xa88] sm:$0xff]
    %v4382 = vld [vmem:[%s5 + $0xa90] sm:$0xff]
    %v4383 = vld [vmem:[%s5 + $0xa98] sm:$0xff]
    %v4384 = vld [vmem:[%s5 + $0xaa0] sm:$0xff]
    %v4385 = vld [vmem:[%s5 + $0xaa8] sm:$0xff]
    %v4386 = vld [vmem:[%s5 + $0xab0] sm:$0xff]
    %v4387 = vld [vmem:[%s5 + $0xab8] sm:$0xff]
    %v4388 = vld [vmem:[%s5 + $0xac0] sm:$0xff]
    %v4389 = vld [vmem:[%s5 + $0xac8] sm:$0xff]
    %v4390 = vld [vmem:[%s5 + $0xad0] sm:$0xff]
    %v4391 = vld [vmem:[%s5 + $0xad8] sm:$0xff]
    %v4392 = vld [vmem:[%s5 + $0xae0] sm:$0xff]
    %v4393 = vld [vmem:[%s5 + $0xae8] sm:$0xff]
    %v4394 = vld [vmem:[%s5 + $0xaf0] sm:$0xff]
    %v4395 = vld [vmem:[%s5 + $0xaf8] sm:$0xff]
    %v4396 = vld [vmem:[%s5 + $0xb00] sm:$0xff]
    %v4397 = vld [vmem:[%s5 + $0xb08] sm:$0xff]
    %v4398 = vld [vmem:[%s5 + $0xb10] sm:$0xff]
    %v4399 = vld [vmem:[%s5 + $0xb18] sm:$0xff]
    %v4400 = vld [vmem:[%s5 + $0xb20] sm:$0xff]
    %v4401 = vld [vmem:[%s5 + $0xb28] sm:$0xff]
    %v4402 = vld [vmem:[%s5 + $0xb30] sm:$0xff]
    %v4403 = vld [vmem:[%s5 + $0xb38] sm:$0xff]
    %v4404 = vld [vmem:[%s5 + $0xb40] sm:$0xff]
    %v4405 = vld [vmem:[%s5 + $0xb48] sm:$0xff]
    %v4406 = vld [vmem:[%s5 + $0xb50] sm:$0xff]
    %v4407 = vld [vmem:[%s5 + $0xb58] sm:$0xff]
    %v4408 = vld [vmem:[%s5 + $0xb60] sm:$0xff]
    %v4409 = vld [vmem:[%s5 + $0xb68] sm:$0xff]
    %v4410 = vld [vmem:[%s5 + $0xb70] sm:$0xff]
    %v4411 = vld [vmem:[%s5 + $0xb78] sm:$0xff]
    %v4412 = vld [vmem:[%s5 + $0xb80] sm:$0xff]
    %v4413 = vld [vmem:[%s5 + $0xb88] sm:$0xff]
    %v4414 = vld [vmem:[%s5 + $0xb90] sm:$0xff]
    %v4415 = vld [vmem:[%s5 + $0xb98] sm:$0xff]
    %v4416 = vld [vmem:[%s5 + $0xba0] sm:$0xff]
    %v4417 = vld [vmem:[%s5 + $0xba8] sm:$0xff]
    %v4418 = vld [vmem:[%s5 + $0xbb0] sm:$0xff]
    %v4419 = vld [vmem:[%s5 + $0xbb8] sm:$0xff]
    %v4420 = vld [vmem:[%s5 + $0xbc0] sm:$0xff]
    %v4421 = vld [vmem:[%s5 + $0xbc8] sm:$0xff]
    %v4422 = vld [vmem:[%s5 + $0xbd0] sm:$0xff]
    %v4423 = vld [vmem:[%s5 + $0xbd8] sm:$0xff]
    %v4424 = vld [vmem:[%s5 + $0xbe0] sm:$0xff]
    %v4425 = vld [vmem:[%s5 + $0xbe8] sm:$0xff]
    %v4426 = vld [vmem:[%s5 + $0xbf0] sm:$0xff]
    %v4427 = vld [vmem:[%s5 + $0xbf8] sm:$0xff]
    %v4428 = vld [vmem:[%s5 + $0xc00] sm:$0xff]
    %v4429 = vld [vmem:[%s5 + $0xc08] sm:$0xff]
    %v4430 = vld [vmem:[%s5 + $0xc10] sm:$0xff]
    %v4431 = vld [vmem:[%s5 + $0xc18] sm:$0xff]
    %v4432 = vld [vmem:[%s5 + $0xc20] sm:$0xff]
    %v4433 = vld [vmem:[%s5 + $0xc28] sm:$0xff]
    %v4434 = vld [vmem:[%s5 + $0xc30] sm:$0xff]
    %v4435 = vld [vmem:[%s5 + $0xc38] sm:$0xff]
    %v4436 = vld [vmem:[%s5 + $0xc40] sm:$0xff]
    %v4437 = vld [vmem:[%s5 + $0xc48] sm:$0xff]
    %v4438 = vld [vmem:[%s5 + $0xc50] sm:$0xff]
    %v4439 = vld [vmem:[%s5 + $0xc58] sm:$0xff]
    %v4440 = vld [vmem:[%s5 + $0xc60] sm:$0xff]
    %v4441 = vld [vmem:[%s5 + $0xc68] sm:$0xff]
    %v4442 = vld [vmem:[%s5 + $0xc70] sm:$0xff]
    %v4443 = vld [vmem:[%s5 + $0xc78] sm:$0xff]
    %v4444 = vld [vmem:[%s5 + $0xc80] sm:$0xff]
    %v4445 = vld [vmem:[%s5 + $0xc88] sm:$0xff]
    %v4446 = vld [vmem:[%s5 + $0xc90] sm:$0xff]
    %v4447 = vld [vmem:[%s5 + $0xc98] sm:$0xff]
    %v4448 = vld [vmem:[%s5 + $0xca0] sm:$0xff]
    %v4449 = vld [vmem:[%s5 + $0xca8] sm:$0xff]
    %v4450 = vld [vmem:[%s5 + $0xcb0] sm:$0xff]
    %v4451 = vld [vmem:[%s5 + $0xcb8] sm:$0xff]
    %v4452 = vld [vmem:[%s5 + $0xcc0] sm:$0xff]
    %v4453 = vld [vmem:[%s5 + $0xcc8] sm:$0xff]
    %v4454 = vld [vmem:[%s5 + $0xcd0] sm:$0xff]
    %v4455 = vld [vmem:[%s5 + $0xcd8] sm:$0xff]
    %v4456 = vld [vmem:[%s5 + $0xce0] sm:$0xff]
    %v4457 = vld [vmem:[%s5 + $0xce8] sm:$0xff]
    %v4458 = vld [vmem:[%s5 + $0xcf0] sm:$0xff]
    %v4459 = vld [vmem:[%s5 + $0xcf8] sm:$0xff]
    %v4460 = vld [vmem:[%s5 + $0xd00] sm:$0xff]
    %v4461 = vld [vmem:[%s5 + $0xd08] sm:$0xff]
    %v4462 = vld [vmem:[%s5 + $0xd10] sm:$0xff]
    %v4463 = vld [vmem:[%s5 + $0xd18] sm:$0xff]
    %v4464 = vld [vmem:[%s5 + $0xd20] sm:$0xff]
    %v4465 = vld [vmem:[%s5 + $0xd28] sm:$0xff]
    %v4466 = vld [vmem:[%s5 + $0xd30] sm:$0xff]
    %v4467 = vld [vmem:[%s5 + $0xd38] sm:$0xff]
    %v4468 = vld [vmem:[%s5 + $0xd40] sm:$0xff]
    %v4469 = vld [vmem:[%s5 + $0xd48] sm:$0xff]
    %v4470 = vld [vmem:[%s5 + $0xd50] sm:$0xff]
    %v4471 = vld [vmem:[%s5 + $0xd58] sm:$0xff]
    %v4472 = vld [vmem:[%s5 + $0xd60] sm:$0xff]
    %v4473 = vld [vmem:[%s5 + $0xd68] sm:$0xff]
    %v4474 = vld [vmem:[%s5 + $0xd70] sm:$0xff]
    %v4475 = vld [vmem:[%s5 + $0xd78] sm:$0xff]
    %v4476 = vld [vmem:[%s5 + $0xd80] sm:$0xff]
    %v4477 = vld [vmem:[%s5 + $0xd88] sm:$0xff]
    %v4478 = vld [vmem:[%s5 + $0xd90] sm:$0xff]
    %v4479 = vld [vmem:[%s5 + $0xd98] sm:$0xff]
    %v4480 = vld [vmem:[%s5 + $0xda0] sm:$0xff]
    %v4481 = vld [vmem:[%s5 + $0xda8] sm:$0xff]
    %v4482 = vld [vmem:[%s5 + $0xdb0] sm:$0xff]
    %v4483 = vld [vmem:[%s5 + $0xdb8] sm:$0xff]
    %v4484 = vld [vmem:[%s5 + $0xdc0] sm:$0xff]
    %v4485 = vld [vmem:[%s5 + $0xdc8] sm:$0xff]
    %v4486 = vld [vmem:[%s5 + $0xdd0] sm:$0xff]
    %v4487 = vld [vmem:[%s5 + $0xdd8] sm:$0xff]
    %v4488 = vld [vmem:[%s5 + $0xde0] sm:$0xff]
    %v4489 = vld [vmem:[%s5 + $0xde8] sm:$0xff]
    %v4490 = vld [vmem:[%s5 + $0xdf0] sm:$0xff]
    %v4491 = vld [vmem:[%s5 + $0xdf8] sm:$0xff]
    %v4492 = vld [vmem:[%s5 + $0xe00] sm:$0xff]
    %v4493 = vld [vmem:[%s5 + $0xe08] sm:$0xff]
    %v4494 = vld [vmem:[%s5 + $0xe10] sm:$0xff]
    %v4495 = vld [vmem:[%s5 + $0xe18] sm:$0xff]
    %v4496 = vld [vmem:[%s5 + $0xe20] sm:$0xff]
    %v4497 = vld [vmem:[%s5 + $0xe28] sm:$0xff]
    %v4498 = vld [vmem:[%s5 + $0xe30] sm:$0xff]
    %v4499 = vld [vmem:[%s5 + $0xe38] sm:$0xff]
    %v4500 = vld [vmem:[%s5 + $0xe40] sm:$0xff]
    %v4501 = vld [vmem:[%s5 + $0xe48] sm:$0xff]
    %v4502 = vld [vmem:[%s5 + $0xe50] sm:$0xff]
    %v4503 = vld [vmem:[%s5 + $0xe58] sm:$0xff]
    %v4504 = vld [vmem:[%s5 + $0xe60] sm:$0xff]
    %v4505 = vld [vmem:[%s5 + $0xe68] sm:$0xff]
    %v4506 = vld [vmem:[%s5 + $0xe70] sm:$0xff]
    %v4507 = vld [vmem:[%s5 + $0xe78] sm:$0xff]
    %v4508 = vld [vmem:[%s5 + $0xe80] sm:$0xff]
    %v4509 = vld [vmem:[%s5 + $0xe88] sm:$0xff]
    %v4510 = vld [vmem:[%s5 + $0xe90] sm:$0xff]
    %v4511 = vld [vmem:[%s5 + $0xe98] sm:$0xff]
    %v4512 = vld [vmem:[%s5 + $0xea0] sm:$0xff]
    %v4513 = vld [vmem:[%s5 + $0xea8] sm:$0xff]
    %v4514 = vld [vmem:[%s5 + $0xeb0] sm:$0xff]
    %v4515 = vld [vmem:[%s5 + $0xeb8] sm:$0xff]
    %v4516 = vld [vmem:[%s5 + $0xec0] sm:$0xff]
    %v4517 = vld [vmem:[%s5 + $0xec8] sm:$0xff]
    %v4518 = vld [vmem:[%s5 + $0xed0] sm:$0xff]
    %v4519 = vld [vmem:[%s5 + $0xed8] sm:$0xff]
    %v4520 = vld [vmem:[%s5 + $0xee0] sm:$0xff]
    %v4521 = vld [vmem:[%s5 + $0xee8] sm:$0xff]
    %v4522 = vld [vmem:[%s5 + $0xef0] sm:$0xff]
    %v4523 = vld [vmem:[%s5 + $0xef8] sm:$0xff]
    %v4524 = vld [vmem:[%s5 + $0xf00] sm:$0xff]
    %v4525 = vld [vmem:[%s5 + $0xf08] sm:$0xff]
    %v4526 = vld [vmem:[%s5 + $0xf10] sm:$0xff]
    %v4527 = vld [vmem:[%s5 + $0xf18] sm:$0xff]
    %v4528 = vld [vmem:[%s5 + $0xf20] sm:$0xff]
    %v4529 = vld [vmem:[%s5 + $0xf28] sm:$0xff]
    %v4530 = vld [vmem:[%s5 + $0xf30] sm:$0xff]
    %v4531 = vld [vmem:[%s5 + $0xf38] sm:$0xff]
    %v4532 = vld [vmem:[%s5 + $0xf40] sm:$0xff]
    %v4533 = vld [vmem:[%s5 + $0xf48] sm:$0xff]
    %v4534 = vld [vmem:[%s5 + $0xf50] sm:$0xff]
    %v4535 = vld [vmem:[%s5 + $0xf58] sm:$0xff]
    %v4536 = vld [vmem:[%s5 + $0xf60] sm:$0xff]
    %v4537 = vld [vmem:[%s5 + $0xf68] sm:$0xff]
    %v4538 = vld [vmem:[%s5 + $0xf70] sm:$0xff]
    %v4539 = vld [vmem:[%s5 + $0xf78] sm:$0xff]
    %v4540 = vld [vmem:[%s5 + $0xf80] sm:$0xff]
    %v4541 = vld [vmem:[%s5 + $0xf88] sm:$0xff]
    %v4542 = vld [vmem:[%s5 + $0xf90] sm:$0xff]
    %v4543 = vld [vmem:[%s5 + $0xf98] sm:$0xff]
    %v4544 = vld [vmem:[%s5 + $0xfa0] sm:$0xff]
    %v4545 = vld [vmem:[%s5 + $0xfa8] sm:$0xff]
    %v4546 = vld [vmem:[%s5 + $0xfb0] sm:$0xff]
    %v4547 = vld [vmem:[%s5 + $0xfb8] sm:$0xff]
    %v4548 = vld [vmem:[%s5 + $0xfc0] sm:$0xff]
    %v4549 = vld [vmem:[%s5 + $0xfc8] sm:$0xff]
    %v4550 = vld [vmem:[%s5 + $0xfd0] sm:$0xff]
    %v4551 = vld [vmem:[%s5 + $0xfd8] sm:$0xff]
    %v4552 = vld [vmem:[%s5 + $0xfe0] sm:$0xff]
    %v4553 = vld [vmem:[%s5 + $0xfe8] sm:$0xff]
    %v4554 = vld [vmem:[%s5 + $0xff0] sm:$0xff]
    %v4555 = vld [vmem:[%s5 + $0xff8] sm:$0xff]
    %v4556 = vld [vmem:[%s6] sm:$0xf]
    %v4558 = vlaneseq
    %v4559 = vshrl.u32 %v4558, 7
    %v4560 = vsub.s32 0, %v4559
    %v4561 = vrot.slane %v4556, %v4560
    %v4562 = vlaneseq
    %v4563 = vshrl.u32 %v4562, 7
    %v4564 = vsub.s32 1, %v4563
    %v4565 = vrot.slane %v4556, %v4564
    %v4566 = vlaneseq
    %v4567 = vshrl.u32 %v4566, 7
    %v4568 = vsub.s32 2, %v4567
    %v4569 = vrot.slane %v4556, %v4568
    %v4570 = vlaneseq
    %v4571 = vshrl.u32 %v4570, 7
    %v4572 = vsub.s32 3, %v4571
    %v4573 = vrot.slane %v4556, %v4572
    %v5090 = vunpack.c.l.b16 %v4044
    %v5091 = vunpack.c.h.b16 %v4044
    %v5092 = vunpack.c.l.b16 %v4045
    %v5093 = vunpack.c.h.b16 %v4045
    %v5094 = vunpack.c.l.b16 %v4046
    %v5095 = vunpack.c.h.b16 %v4046
    %v5096 = vunpack.c.l.b16 %v4047
    %v5097 = vunpack.c.h.b16 %v4047
    %v5098 = vunpack.c.l.b16 %v4048
    %v5099 = vunpack.c.h.b16 %v4048
    %v5100 = vunpack.c.l.b16 %v4049
    %v5101 = vunpack.c.h.b16 %v4049
    %v5102 = vunpack.c.l.b16 %v4050
    %v5103 = vunpack.c.h.b16 %v4050
    %v5104 = vunpack.c.l.b16 %v4051
    %v5105 = vunpack.c.h.b16 %v4051
    %v5106 = vunpack.c.l.b16 %v4052
    %v5107 = vunpack.c.h.b16 %v4052
    %v5108 = vunpack.c.l.b16 %v4053
    %v5109 = vunpack.c.h.b16 %v4053
    %v5110 = vunpack.c.l.b16 %v4054
    %v5111 = vunpack.c.h.b16 %v4054
    %v5112 = vunpack.c.l.b16 %v4055
    %v5113 = vunpack.c.h.b16 %v4055
    %v5114 = vunpack.c.l.b16 %v4056
    %v5115 = vunpack.c.h.b16 %v4056
    %v5116 = vunpack.c.l.b16 %v4057
    %v5117 = vunpack.c.h.b16 %v4057
    %v5118 = vunpack.c.l.b16 %v4058
    %v5119 = vunpack.c.h.b16 %v4058
    %v5120 = vunpack.c.l.b16 %v4059
    %v5121 = vunpack.c.h.b16 %v4059
    %v5122 = vunpack.c.l.b16 %v4060
    %v5123 = vunpack.c.h.b16 %v4060
    %v5124 = vunpack.c.l.b16 %v4061
    %v5125 = vunpack.c.h.b16 %v4061
    %v5126 = vunpack.c.l.b16 %v4062
    %v5127 = vunpack.c.h.b16 %v4062
    %v5128 = vunpack.c.l.b16 %v4063
    %v5129 = vunpack.c.h.b16 %v4063
    %v5130 = vunpack.c.l.b16 %v4064
    %v5131 = vunpack.c.h.b16 %v4064
    %v5132 = vunpack.c.l.b16 %v4065
    %v5133 = vunpack.c.h.b16 %v4065
    %v5134 = vunpack.c.l.b16 %v4066
    %v5135 = vunpack.c.h.b16 %v4066
    %v5136 = vunpack.c.l.b16 %v4067
    %v5137 = vunpack.c.h.b16 %v4067
    %v5138 = vunpack.c.l.b16 %v4068
    %v5139 = vunpack.c.h.b16 %v4068
    %v5140 = vunpack.c.l.b16 %v4069
    %v5141 = vunpack.c.h.b16 %v4069
    %v5142 = vunpack.c.l.b16 %v4070
    %v5143 = vunpack.c.h.b16 %v4070
    %v5144 = vunpack.c.l.b16 %v4071
    %v5145 = vunpack.c.h.b16 %v4071
    %v5146 = vunpack.c.l.b16 %v4072
    %v5147 = vunpack.c.h.b16 %v4072
    %v5148 = vunpack.c.l.b16 %v4073
    %v5149 = vunpack.c.h.b16 %v4073
    %v5150 = vunpack.c.l.b16 %v4074
    %v5151 = vunpack.c.h.b16 %v4074
    %v5152 = vunpack.c.l.b16 %v4075
    %v5153 = vunpack.c.h.b16 %v4075
    %v5154 = vunpack.c.l.b16 %v4076
    %v5155 = vunpack.c.h.b16 %v4076
    %v5156 = vunpack.c.l.b16 %v4077
    %v5157 = vunpack.c.h.b16 %v4077
    %v5158 = vunpack.c.l.b16 %v4078
    %v5159 = vunpack.c.h.b16 %v4078
    %v5160 = vunpack.c.l.b16 %v4079
    %v5161 = vunpack.c.h.b16 %v4079
    %v5162 = vunpack.c.l.b16 %v4080
    %v5163 = vunpack.c.h.b16 %v4080
    %v5164 = vunpack.c.l.b16 %v4081
    %v5165 = vunpack.c.h.b16 %v4081
    %v5166 = vunpack.c.l.b16 %v4082
    %v5167 = vunpack.c.h.b16 %v4082
    %v5168 = vunpack.c.l.b16 %v4083
    %v5169 = vunpack.c.h.b16 %v4083
    %v5170 = vunpack.c.l.b16 %v4084
    %v5171 = vunpack.c.h.b16 %v4084
    %v5172 = vunpack.c.l.b16 %v4085
    %v5173 = vunpack.c.h.b16 %v4085
    %v5174 = vunpack.c.l.b16 %v4086
    %v5175 = vunpack.c.h.b16 %v4086
    %v5176 = vunpack.c.l.b16 %v4087
    %v5177 = vunpack.c.h.b16 %v4087
    %v5178 = vunpack.c.l.b16 %v4088
    %v5179 = vunpack.c.h.b16 %v4088
    %v5180 = vunpack.c.l.b16 %v4089
    %v5181 = vunpack.c.h.b16 %v4089
    %v5182 = vunpack.c.l.b16 %v4090
    %v5183 = vunpack.c.h.b16 %v4090
    %v5184 = vunpack.c.l.b16 %v4091
    %v5185 = vunpack.c.h.b16 %v4091
    %v5186 = vunpack.c.l.b16 %v4092
    %v5187 = vunpack.c.h.b16 %v4092
    %v5188 = vunpack.c.l.b16 %v4093
    %v5189 = vunpack.c.h.b16 %v4093
    %v5190 = vunpack.c.l.b16 %v4094
    %v5191 = vunpack.c.h.b16 %v4094
    %v5192 = vunpack.c.l.b16 %v4095
    %v5193 = vunpack.c.h.b16 %v4095
    %v5194 = vunpack.c.l.b16 %v4096
    %v5195 = vunpack.c.h.b16 %v4096
    %v5196 = vunpack.c.l.b16 %v4097
    %v5197 = vunpack.c.h.b16 %v4097
    %v5198 = vunpack.c.l.b16 %v4098
    %v5199 = vunpack.c.h.b16 %v4098
    %v5200 = vunpack.c.l.b16 %v4099
    %v5201 = vunpack.c.h.b16 %v4099
    %v5202 = vunpack.c.l.b16 %v4100
    %v5203 = vunpack.c.h.b16 %v4100
    %v5204 = vunpack.c.l.b16 %v4101
    %v5205 = vunpack.c.h.b16 %v4101
    %v5206 = vunpack.c.l.b16 %v4102
    %v5207 = vunpack.c.h.b16 %v4102
    %v5208 = vunpack.c.l.b16 %v4103
    %v5209 = vunpack.c.h.b16 %v4103
    %v5210 = vunpack.c.l.b16 %v4104
    %v5211 = vunpack.c.h.b16 %v4104
    %v5212 = vunpack.c.l.b16 %v4105
    %v5213 = vunpack.c.h.b16 %v4105
    %v5214 = vunpack.c.l.b16 %v4106
    %v5215 = vunpack.c.h.b16 %v4106
    %v5216 = vunpack.c.l.b16 %v4107
    %v5217 = vunpack.c.h.b16 %v4107
    %v5218 = vunpack.c.l.b16 %v4108
    %v5219 = vunpack.c.h.b16 %v4108
    %v5220 = vunpack.c.l.b16 %v4109
    %v5221 = vunpack.c.h.b16 %v4109
    %v5222 = vunpack.c.l.b16 %v4110
    %v5223 = vunpack.c.h.b16 %v4110
    %v5224 = vunpack.c.l.b16 %v4111
    %v5225 = vunpack.c.h.b16 %v4111
    %v5226 = vunpack.c.l.b16 %v4112
    %v5227 = vunpack.c.h.b16 %v4112
    %v5228 = vunpack.c.l.b16 %v4113
    %v5229 = vunpack.c.h.b16 %v4113
    %v5230 = vunpack.c.l.b16 %v4114
    %v5231 = vunpack.c.h.b16 %v4114
    %v5232 = vunpack.c.l.b16 %v4115
    %v5233 = vunpack.c.h.b16 %v4115
    %v5234 = vunpack.c.l.b16 %v4116
    %v5235 = vunpack.c.h.b16 %v4116
    %v5236 = vunpack.c.l.b16 %v4117
    %v5237 = vunpack.c.h.b16 %v4117
    %v5238 = vunpack.c.l.b16 %v4118
    %v5239 = vunpack.c.h.b16 %v4118
    %v5240 = vunpack.c.l.b16 %v4119
    %v5241 = vunpack.c.h.b16 %v4119
    %v5242 = vunpack.c.l.b16 %v4120
    %v5243 = vunpack.c.h.b16 %v4120
    %v5244 = vunpack.c.l.b16 %v4121
    %v5245 = vunpack.c.h.b16 %v4121
    %v5246 = vunpack.c.l.b16 %v4122
    %v5247 = vunpack.c.h.b16 %v4122
    %v5248 = vunpack.c.l.b16 %v4123
    %v5249 = vunpack.c.h.b16 %v4123
    %v5250 = vunpack.c.l.b16 %v4124
    %v5251 = vunpack.c.h.b16 %v4124
    %v5252 = vunpack.c.l.b16 %v4125
    %v5253 = vunpack.c.h.b16 %v4125
    %v5254 = vunpack.c.l.b16 %v4126
    %v5255 = vunpack.c.h.b16 %v4126
    %v5256 = vunpack.c.l.b16 %v4127
    %v5257 = vunpack.c.h.b16 %v4127
    %v5258 = vunpack.c.l.b16 %v4128
    %v5259 = vunpack.c.h.b16 %v4128
    %v5260 = vunpack.c.l.b16 %v4129
    %v5261 = vunpack.c.h.b16 %v4129
    %v5262 = vunpack.c.l.b16 %v4130
    %v5263 = vunpack.c.h.b16 %v4130
    %v5264 = vunpack.c.l.b16 %v4131
    %v5265 = vunpack.c.h.b16 %v4131
    %v5266 = vunpack.c.l.b16 %v4132
    %v5267 = vunpack.c.h.b16 %v4132
    %v5268 = vunpack.c.l.b16 %v4133
    %v5269 = vunpack.c.h.b16 %v4133
    %v5270 = vunpack.c.l.b16 %v4134
    %v5271 = vunpack.c.h.b16 %v4134
    %v5272 = vunpack.c.l.b16 %v4135
    %v5273 = vunpack.c.h.b16 %v4135
    %v5274 = vunpack.c.l.b16 %v4136
    %v5275 = vunpack.c.h.b16 %v4136
    %v5276 = vunpack.c.l.b16 %v4137
    %v5277 = vunpack.c.h.b16 %v4137
    %v5278 = vunpack.c.l.b16 %v4138
    %v5279 = vunpack.c.h.b16 %v4138
    %v5280 = vunpack.c.l.b16 %v4139
    %v5281 = vunpack.c.h.b16 %v4139
    %v5282 = vunpack.c.l.b16 %v4140
    %v5283 = vunpack.c.h.b16 %v4140
    %v5284 = vunpack.c.l.b16 %v4141
    %v5285 = vunpack.c.h.b16 %v4141
    %v5286 = vunpack.c.l.b16 %v4142
    %v5287 = vunpack.c.h.b16 %v4142
    %v5288 = vunpack.c.l.b16 %v4143
    %v5289 = vunpack.c.h.b16 %v4143
    %v5290 = vunpack.c.l.b16 %v4144
    %v5291 = vunpack.c.h.b16 %v4144
    %v5292 = vunpack.c.l.b16 %v4145
    %v5293 = vunpack.c.h.b16 %v4145
    %v5294 = vunpack.c.l.b16 %v4146
    %v5295 = vunpack.c.h.b16 %v4146
    %v5296 = vunpack.c.l.b16 %v4147
    %v5297 = vunpack.c.h.b16 %v4147
    %v5298 = vunpack.c.l.b16 %v4148
    %v5299 = vunpack.c.h.b16 %v4148
    %v5300 = vunpack.c.l.b16 %v4149
    %v5301 = vunpack.c.h.b16 %v4149
    %v5302 = vunpack.c.l.b16 %v4150
    %v5303 = vunpack.c.h.b16 %v4150
    %v5304 = vunpack.c.l.b16 %v4151
    %v5305 = vunpack.c.h.b16 %v4151
    %v5306 = vunpack.c.l.b16 %v4152
    %v5307 = vunpack.c.h.b16 %v4152
    %v5308 = vunpack.c.l.b16 %v4153
    %v5309 = vunpack.c.h.b16 %v4153
    %v5310 = vunpack.c.l.b16 %v4154
    %v5311 = vunpack.c.h.b16 %v4154
    %v5312 = vunpack.c.l.b16 %v4155
    %v5313 = vunpack.c.h.b16 %v4155
    %v5314 = vunpack.c.l.b16 %v4156
    %v5315 = vunpack.c.h.b16 %v4156
    %v5316 = vunpack.c.l.b16 %v4157
    %v5317 = vunpack.c.h.b16 %v4157
    %v5318 = vunpack.c.l.b16 %v4158
    %v5319 = vunpack.c.h.b16 %v4158
    %v5320 = vunpack.c.l.b16 %v4159
    %v5321 = vunpack.c.h.b16 %v4159
    %v5322 = vunpack.c.l.b16 %v4160
    %v5323 = vunpack.c.h.b16 %v4160
    %v5324 = vunpack.c.l.b16 %v4161
    %v5325 = vunpack.c.h.b16 %v4161
    %v5326 = vunpack.c.l.b16 %v4162
    %v5327 = vunpack.c.h.b16 %v4162
    %v5328 = vunpack.c.l.b16 %v4163
    %v5329 = vunpack.c.h.b16 %v4163
    %v5330 = vunpack.c.l.b16 %v4164
    %v5331 = vunpack.c.h.b16 %v4164
    %v5332 = vunpack.c.l.b16 %v4165
    %v5333 = vunpack.c.h.b16 %v4165
    %v5334 = vunpack.c.l.b16 %v4166
    %v5335 = vunpack.c.h.b16 %v4166
    %v5336 = vunpack.c.l.b16 %v4167
    %v5337 = vunpack.c.h.b16 %v4167
    %v5338 = vunpack.c.l.b16 %v4168
    %v5339 = vunpack.c.h.b16 %v4168
    %v5340 = vunpack.c.l.b16 %v4169
    %v5341 = vunpack.c.h.b16 %v4169
    %v5342 = vunpack.c.l.b16 %v4170
    %v5343 = vunpack.c.h.b16 %v4170
    %v5344 = vunpack.c.l.b16 %v4171
    %v5345 = vunpack.c.h.b16 %v4171
    %v5346 = vunpack.c.l.b16 %v4172
    %v5347 = vunpack.c.h.b16 %v4172
    %v5348 = vunpack.c.l.b16 %v4173
    %v5349 = vunpack.c.h.b16 %v4173
    %v5350 = vunpack.c.l.b16 %v4174
    %v5351 = vunpack.c.h.b16 %v4174
    %v5352 = vunpack.c.l.b16 %v4175
    %v5353 = vunpack.c.h.b16 %v4175
    %v5354 = vunpack.c.l.b16 %v4176
    %v5355 = vunpack.c.h.b16 %v4176
    %v5356 = vunpack.c.l.b16 %v4177
    %v5357 = vunpack.c.h.b16 %v4177
    %v5358 = vunpack.c.l.b16 %v4178
    %v5359 = vunpack.c.h.b16 %v4178
    %v5360 = vunpack.c.l.b16 %v4179
    %v5361 = vunpack.c.h.b16 %v4179
    %v5362 = vunpack.c.l.b16 %v4180
    %v5363 = vunpack.c.h.b16 %v4180
    %v5364 = vunpack.c.l.b16 %v4181
    %v5365 = vunpack.c.h.b16 %v4181
    %v5366 = vunpack.c.l.b16 %v4182
    %v5367 = vunpack.c.h.b16 %v4182
    %v5368 = vunpack.c.l.b16 %v4183
    %v5369 = vunpack.c.h.b16 %v4183
    %v5370 = vunpack.c.l.b16 %v4184
    %v5371 = vunpack.c.h.b16 %v4184
    %v5372 = vunpack.c.l.b16 %v4185
    %v5373 = vunpack.c.h.b16 %v4185
    %v5374 = vunpack.c.l.b16 %v4186
    %v5375 = vunpack.c.h.b16 %v4186
    %v5376 = vunpack.c.l.b16 %v4187
    %v5377 = vunpack.c.h.b16 %v4187
    %v5378 = vunpack.c.l.b16 %v4188
    %v5379 = vunpack.c.h.b16 %v4188
    %v5380 = vunpack.c.l.b16 %v4189
    %v5381 = vunpack.c.h.b16 %v4189
    %v5382 = vunpack.c.l.b16 %v4190
    %v5383 = vunpack.c.h.b16 %v4190
    %v5384 = vunpack.c.l.b16 %v4191
    %v5385 = vunpack.c.h.b16 %v4191
    %v5386 = vunpack.c.l.b16 %v4192
    %v5387 = vunpack.c.h.b16 %v4192
    %v5388 = vunpack.c.l.b16 %v4193
    %v5389 = vunpack.c.h.b16 %v4193
    %v5390 = vunpack.c.l.b16 %v4194
    %v5391 = vunpack.c.h.b16 %v4194
    %v5392 = vunpack.c.l.b16 %v4195
    %v5393 = vunpack.c.h.b16 %v4195
    %v5394 = vunpack.c.l.b16 %v4196
    %v5395 = vunpack.c.h.b16 %v4196
    %v5396 = vunpack.c.l.b16 %v4197
    %v5397 = vunpack.c.h.b16 %v4197
    %v5398 = vunpack.c.l.b16 %v4198
    %v5399 = vunpack.c.h.b16 %v4198
    %v5400 = vunpack.c.l.b16 %v4199
    %v5401 = vunpack.c.h.b16 %v4199
    %v5402 = vunpack.c.l.b16 %v4200
    %v5403 = vunpack.c.h.b16 %v4200
    %v5404 = vunpack.c.l.b16 %v4201
    %v5405 = vunpack.c.h.b16 %v4201
    %v5406 = vunpack.c.l.b16 %v4202
    %v5407 = vunpack.c.h.b16 %v4202
    %v5408 = vunpack.c.l.b16 %v4203
    %v5409 = vunpack.c.h.b16 %v4203
    %v5410 = vunpack.c.l.b16 %v4204
    %v5411 = vunpack.c.h.b16 %v4204
    %v5412 = vunpack.c.l.b16 %v4205
    %v5413 = vunpack.c.h.b16 %v4205
    %v5414 = vunpack.c.l.b16 %v4206
    %v5415 = vunpack.c.h.b16 %v4206
    %v5416 = vunpack.c.l.b16 %v4207
    %v5417 = vunpack.c.h.b16 %v4207
    %v5418 = vunpack.c.l.b16 %v4208
    %v5419 = vunpack.c.h.b16 %v4208
    %v5420 = vunpack.c.l.b16 %v4209
    %v5421 = vunpack.c.h.b16 %v4209
    %v5422 = vunpack.c.l.b16 %v4210
    %v5423 = vunpack.c.h.b16 %v4210
    %v5424 = vunpack.c.l.b16 %v4211
    %v5425 = vunpack.c.h.b16 %v4211
    %v5426 = vunpack.c.l.b16 %v4212
    %v5427 = vunpack.c.h.b16 %v4212
    %v5428 = vunpack.c.l.b16 %v4213
    %v5429 = vunpack.c.h.b16 %v4213
    %v5430 = vunpack.c.l.b16 %v4214
    %v5431 = vunpack.c.h.b16 %v4214
    %v5432 = vunpack.c.l.b16 %v4215
    %v5433 = vunpack.c.h.b16 %v4215
    %v5434 = vunpack.c.l.b16 %v4216
    %v5435 = vunpack.c.h.b16 %v4216
    %v5436 = vunpack.c.l.b16 %v4217
    %v5437 = vunpack.c.h.b16 %v4217
    %v5438 = vunpack.c.l.b16 %v4218
    %v5439 = vunpack.c.h.b16 %v4218
    %v5440 = vunpack.c.l.b16 %v4219
    %v5441 = vunpack.c.h.b16 %v4219
    %v5442 = vunpack.c.l.b16 %v4220
    %v5443 = vunpack.c.h.b16 %v4220
    %v5444 = vunpack.c.l.b16 %v4221
    %v5445 = vunpack.c.h.b16 %v4221
    %v5446 = vunpack.c.l.b16 %v4222
    %v5447 = vunpack.c.h.b16 %v4222
    %v5448 = vunpack.c.l.b16 %v4223
    %v5449 = vunpack.c.h.b16 %v4223
    %v5450 = vunpack.c.l.b16 %v4224
    %v5451 = vunpack.c.h.b16 %v4224
    %v5452 = vunpack.c.l.b16 %v4225
    %v5453 = vunpack.c.h.b16 %v4225
    %v5454 = vunpack.c.l.b16 %v4226
    %v5455 = vunpack.c.h.b16 %v4226
    %v5456 = vunpack.c.l.b16 %v4227
    %v5457 = vunpack.c.h.b16 %v4227
    %v5458 = vunpack.c.l.b16 %v4228
    %v5459 = vunpack.c.h.b16 %v4228
    %v5460 = vunpack.c.l.b16 %v4229
    %v5461 = vunpack.c.h.b16 %v4229
    %v5462 = vunpack.c.l.b16 %v4230
    %v5463 = vunpack.c.h.b16 %v4230
    %v5464 = vunpack.c.l.b16 %v4231
    %v5465 = vunpack.c.h.b16 %v4231
    %v5466 = vunpack.c.l.b16 %v4232
    %v5467 = vunpack.c.h.b16 %v4232
    %v5468 = vunpack.c.l.b16 %v4233
    %v5469 = vunpack.c.h.b16 %v4233
    %v5470 = vunpack.c.l.b16 %v4234
    %v5471 = vunpack.c.h.b16 %v4234
    %v5472 = vunpack.c.l.b16 %v4235
    %v5473 = vunpack.c.h.b16 %v4235
    %v5474 = vunpack.c.l.b16 %v4236
    %v5475 = vunpack.c.h.b16 %v4236
    %v5476 = vunpack.c.l.b16 %v4237
    %v5477 = vunpack.c.h.b16 %v4237
    %v5478 = vunpack.c.l.b16 %v4238
    %v5479 = vunpack.c.h.b16 %v4238
    %v5480 = vunpack.c.l.b16 %v4239
    %v5481 = vunpack.c.h.b16 %v4239
    %v5482 = vunpack.c.l.b16 %v4240
    %v5483 = vunpack.c.h.b16 %v4240
    %v5484 = vunpack.c.l.b16 %v4241
    %v5485 = vunpack.c.h.b16 %v4241
    %v5486 = vunpack.c.l.b16 %v4242
    %v5487 = vunpack.c.h.b16 %v4242
    %v5488 = vunpack.c.l.b16 %v4243
    %v5489 = vunpack.c.h.b16 %v4243
    %v5490 = vunpack.c.l.b16 %v4244
    %v5491 = vunpack.c.h.b16 %v4244
    %v5492 = vunpack.c.l.b16 %v4245
    %v5493 = vunpack.c.h.b16 %v4245
    %v5494 = vunpack.c.l.b16 %v4246
    %v5495 = vunpack.c.h.b16 %v4246
    %v5496 = vunpack.c.l.b16 %v4247
    %v5497 = vunpack.c.h.b16 %v4247
    %v5498 = vunpack.c.l.b16 %v4248
    %v5499 = vunpack.c.h.b16 %v4248
    %v5500 = vunpack.c.l.b16 %v4249
    %v5501 = vunpack.c.h.b16 %v4249
    %v5502 = vunpack.c.l.b16 %v4250
    %v5503 = vunpack.c.h.b16 %v4250
    %v5504 = vunpack.c.l.b16 %v4251
    %v5505 = vunpack.c.h.b16 %v4251
    %v5506 = vunpack.c.l.b16 %v4252
    %v5507 = vunpack.c.h.b16 %v4252
    %v5508 = vunpack.c.l.b16 %v4253
    %v5509 = vunpack.c.h.b16 %v4253
    %v5510 = vunpack.c.l.b16 %v4254
    %v5511 = vunpack.c.h.b16 %v4254
    %v5512 = vunpack.c.l.b16 %v4255
    %v5513 = vunpack.c.h.b16 %v4255
    %v5514 = vunpack.c.l.b16 %v4256
    %v5515 = vunpack.c.h.b16 %v4256
    %v5516 = vunpack.c.l.b16 %v4257
    %v5517 = vunpack.c.h.b16 %v4257
    %v5518 = vunpack.c.l.b16 %v4258
    %v5519 = vunpack.c.h.b16 %v4258
    %v5520 = vunpack.c.l.b16 %v4259
    %v5521 = vunpack.c.h.b16 %v4259
    %v5522 = vunpack.c.l.b16 %v4260
    %v5523 = vunpack.c.h.b16 %v4260
    %v5524 = vunpack.c.l.b16 %v4261
    %v5525 = vunpack.c.h.b16 %v4261
    %v5526 = vunpack.c.l.b16 %v4262
    %v5527 = vunpack.c.h.b16 %v4262
    %v5528 = vunpack.c.l.b16 %v4263
    %v5529 = vunpack.c.h.b16 %v4263
    %v5530 = vunpack.c.l.b16 %v4264
    %v5531 = vunpack.c.h.b16 %v4264
    %v5532 = vunpack.c.l.b16 %v4265
    %v5533 = vunpack.c.h.b16 %v4265
    %v5534 = vunpack.c.l.b16 %v4266
    %v5535 = vunpack.c.h.b16 %v4266
    %v5536 = vunpack.c.l.b16 %v4267
    %v5537 = vunpack.c.h.b16 %v4267
    %v5538 = vunpack.c.l.b16 %v4268
    %v5539 = vunpack.c.h.b16 %v4268
    %v5540 = vunpack.c.l.b16 %v4269
    %v5541 = vunpack.c.h.b16 %v4269
    %v5542 = vunpack.c.l.b16 %v4270
    %v5543 = vunpack.c.h.b16 %v4270
    %v5544 = vunpack.c.l.b16 %v4271
    %v5545 = vunpack.c.h.b16 %v4271
    %v5546 = vunpack.c.l.b16 %v4272
    %v5547 = vunpack.c.h.b16 %v4272
    %v5548 = vunpack.c.l.b16 %v4273
    %v5549 = vunpack.c.h.b16 %v4273
    %v5550 = vunpack.c.l.b16 %v4274
    %v5551 = vunpack.c.h.b16 %v4274
    %v5552 = vunpack.c.l.b16 %v4275
    %v5553 = vunpack.c.h.b16 %v4275
    %v5554 = vunpack.c.l.b16 %v4276
    %v5555 = vunpack.c.h.b16 %v4276
    %v5556 = vunpack.c.l.b16 %v4277
    %v5557 = vunpack.c.h.b16 %v4277
    %v5558 = vunpack.c.l.b16 %v4278
    %v5559 = vunpack.c.h.b16 %v4278
    %v5560 = vunpack.c.l.b16 %v4279
    %v5561 = vunpack.c.h.b16 %v4279
    %v5562 = vunpack.c.l.b16 %v4280
    %v5563 = vunpack.c.h.b16 %v4280
    %v5564 = vunpack.c.l.b16 %v4281
    %v5565 = vunpack.c.h.b16 %v4281
    %v5566 = vunpack.c.l.b16 %v4282
    %v5567 = vunpack.c.h.b16 %v4282
    %v5568 = vunpack.c.l.b16 %v4283
    %v5569 = vunpack.c.h.b16 %v4283
    %v5570 = vunpack.c.l.b16 %v4284
    %v5571 = vunpack.c.h.b16 %v4284
    %v5572 = vunpack.c.l.b16 %v4285
    %v5573 = vunpack.c.h.b16 %v4285
    %v5574 = vunpack.c.l.b16 %v4286
    %v5575 = vunpack.c.h.b16 %v4286
    %v5576 = vunpack.c.l.b16 %v4287
    %v5577 = vunpack.c.h.b16 %v4287
    %v5578 = vunpack.c.l.b16 %v4288
    %v5579 = vunpack.c.h.b16 %v4288
    %v5580 = vunpack.c.l.b16 %v4289
    %v5581 = vunpack.c.h.b16 %v4289
    %v5582 = vunpack.c.l.b16 %v4290
    %v5583 = vunpack.c.h.b16 %v4290
    %v5584 = vunpack.c.l.b16 %v4291
    %v5585 = vunpack.c.h.b16 %v4291
    %v5586 = vunpack.c.l.b16 %v4292
    %v5587 = vunpack.c.h.b16 %v4292
    %v5588 = vunpack.c.l.b16 %v4293
    %v5589 = vunpack.c.h.b16 %v4293
    %v5590 = vunpack.c.l.b16 %v4294
    %v5591 = vunpack.c.h.b16 %v4294
    %v5592 = vunpack.c.l.b16 %v4295
    %v5593 = vunpack.c.h.b16 %v4295
    %v5594 = vunpack.c.l.b16 %v4296
    %v5595 = vunpack.c.h.b16 %v4296
    %v5596 = vunpack.c.l.b16 %v4297
    %v5597 = vunpack.c.h.b16 %v4297
    %v5598 = vunpack.c.l.b16 %v4298
    %v5599 = vunpack.c.h.b16 %v4298
    %v5600 = vunpack.c.l.b16 %v4299
    %v5601 = vunpack.c.h.b16 %v4299
    %v5602 = vunpack.c.l.b16 %v4300
    %v5603 = vunpack.c.h.b16 %v4300
    %v5604 = vunpack.c.l.b16 %v4301
    %v5605 = vunpack.c.h.b16 %v4301
    %v5606 = vunpack.c.l.b16 %v4302
    %v5607 = vunpack.c.h.b16 %v4302
    %v5608 = vunpack.c.l.b16 %v4303
    %v5609 = vunpack.c.h.b16 %v4303
    %v5610 = vunpack.c.l.b16 %v4304
    %v5611 = vunpack.c.h.b16 %v4304
    %v5612 = vunpack.c.l.b16 %v4305
    %v5613 = vunpack.c.h.b16 %v4305
    %v5614 = vunpack.c.l.b16 %v4306
    %v5615 = vunpack.c.h.b16 %v4306
    %v5616 = vunpack.c.l.b16 %v4307
    %v5617 = vunpack.c.h.b16 %v4307
    %v5618 = vunpack.c.l.b16 %v4308
    %v5619 = vunpack.c.h.b16 %v4308
    %v5620 = vunpack.c.l.b16 %v4309
    %v5621 = vunpack.c.h.b16 %v4309
    %v5622 = vunpack.c.l.b16 %v4310
    %v5623 = vunpack.c.h.b16 %v4310
    %v5624 = vunpack.c.l.b16 %v4311
    %v5625 = vunpack.c.h.b16 %v4311
    %v5626 = vunpack.c.l.b16 %v4312
    %v5627 = vunpack.c.h.b16 %v4312
    %v5628 = vunpack.c.l.b16 %v4313
    %v5629 = vunpack.c.h.b16 %v4313
    %v5630 = vunpack.c.l.b16 %v4314
    %v5631 = vunpack.c.h.b16 %v4314
    %v5632 = vunpack.c.l.b16 %v4315
    %v5633 = vunpack.c.h.b16 %v4315
    %v5634 = vunpack.c.l.b16 %v4316
    %v5635 = vunpack.c.h.b16 %v4316
    %v5636 = vunpack.c.l.b16 %v4317
    %v5637 = vunpack.c.h.b16 %v4317
    %v5638 = vunpack.c.l.b16 %v4318
    %v5639 = vunpack.c.h.b16 %v4318
    %v5640 = vunpack.c.l.b16 %v4319
    %v5641 = vunpack.c.h.b16 %v4319
    %v5642 = vunpack.c.l.b16 %v4320
    %v5643 = vunpack.c.h.b16 %v4320
    %v5644 = vunpack.c.l.b16 %v4321
    %v5645 = vunpack.c.h.b16 %v4321
    %v5646 = vunpack.c.l.b16 %v4322
    %v5647 = vunpack.c.h.b16 %v4322
    %v5648 = vunpack.c.l.b16 %v4323
    %v5649 = vunpack.c.h.b16 %v4323
    %v5650 = vunpack.c.l.b16 %v4324
    %v5651 = vunpack.c.h.b16 %v4324
    %v5652 = vunpack.c.l.b16 %v4325
    %v5653 = vunpack.c.h.b16 %v4325
    %v5654 = vunpack.c.l.b16 %v4326
    %v5655 = vunpack.c.h.b16 %v4326
    %v5656 = vunpack.c.l.b16 %v4327
    %v5657 = vunpack.c.h.b16 %v4327
    %v5658 = vunpack.c.l.b16 %v4328
    %v5659 = vunpack.c.h.b16 %v4328
    %v5660 = vunpack.c.l.b16 %v4329
    %v5661 = vunpack.c.h.b16 %v4329
    %v5662 = vunpack.c.l.b16 %v4330
    %v5663 = vunpack.c.h.b16 %v4330
    %v5664 = vunpack.c.l.b16 %v4331
    %v5665 = vunpack.c.h.b16 %v4331
    %v5666 = vunpack.c.l.b16 %v4332
    %v5667 = vunpack.c.h.b16 %v4332
    %v5668 = vunpack.c.l.b16 %v4333
    %v5669 = vunpack.c.h.b16 %v4333
    %v5670 = vunpack.c.l.b16 %v4334
    %v5671 = vunpack.c.h.b16 %v4334
    %v5672 = vunpack.c.l.b16 %v4335
    %v5673 = vunpack.c.h.b16 %v4335
    %v5674 = vunpack.c.l.b16 %v4336
    %v5675 = vunpack.c.h.b16 %v4336
    %v5676 = vunpack.c.l.b16 %v4337
    %v5677 = vunpack.c.h.b16 %v4337
    %v5678 = vunpack.c.l.b16 %v4338
    %v5679 = vunpack.c.h.b16 %v4338
    %v5680 = vunpack.c.l.b16 %v4339
    %v5681 = vunpack.c.h.b16 %v4339
    %v5682 = vunpack.c.l.b16 %v4340
    %v5683 = vunpack.c.h.b16 %v4340
    %v5684 = vunpack.c.l.b16 %v4341
    %v5685 = vunpack.c.h.b16 %v4341
    %v5686 = vunpack.c.l.b16 %v4342
    %v5687 = vunpack.c.h.b16 %v4342
    %v5688 = vunpack.c.l.b16 %v4343
    %v5689 = vunpack.c.h.b16 %v4343
    %v5690 = vunpack.c.l.b16 %v4344
    %v5691 = vunpack.c.h.b16 %v4344
    %v5692 = vunpack.c.l.b16 %v4345
    %v5693 = vunpack.c.h.b16 %v4345
    %v5694 = vunpack.c.l.b16 %v4346
    %v5695 = vunpack.c.h.b16 %v4346
    %v5696 = vunpack.c.l.b16 %v4347
    %v5697 = vunpack.c.h.b16 %v4347
    %v5698 = vunpack.c.l.b16 %v4348
    %v5699 = vunpack.c.h.b16 %v4348
    %v5700 = vunpack.c.l.b16 %v4349
    %v5701 = vunpack.c.h.b16 %v4349
    %v5702 = vunpack.c.l.b16 %v4350
    %v5703 = vunpack.c.h.b16 %v4350
    %v5704 = vunpack.c.l.b16 %v4351
    %v5705 = vunpack.c.h.b16 %v4351
    %v5706 = vunpack.c.l.b16 %v4352
    %v5707 = vunpack.c.h.b16 %v4352
    %v5708 = vunpack.c.l.b16 %v4353
    %v5709 = vunpack.c.h.b16 %v4353
    %v5710 = vunpack.c.l.b16 %v4354
    %v5711 = vunpack.c.h.b16 %v4354
    %v5712 = vunpack.c.l.b16 %v4355
    %v5713 = vunpack.c.h.b16 %v4355
    %v5714 = vunpack.c.l.b16 %v4356
    %v5715 = vunpack.c.h.b16 %v4356
    %v5716 = vunpack.c.l.b16 %v4357
    %v5717 = vunpack.c.h.b16 %v4357
    %v5718 = vunpack.c.l.b16 %v4358
    %v5719 = vunpack.c.h.b16 %v4358
    %v5720 = vunpack.c.l.b16 %v4359
    %v5721 = vunpack.c.h.b16 %v4359
    %v5722 = vunpack.c.l.b16 %v4360
    %v5723 = vunpack.c.h.b16 %v4360
    %v5724 = vunpack.c.l.b16 %v4361
    %v5725 = vunpack.c.h.b16 %v4361
    %v5726 = vunpack.c.l.b16 %v4362
    %v5727 = vunpack.c.h.b16 %v4362
    %v5728 = vunpack.c.l.b16 %v4363
    %v5729 = vunpack.c.h.b16 %v4363
    %v5730 = vunpack.c.l.b16 %v4364
    %v5731 = vunpack.c.h.b16 %v4364
    %v5732 = vunpack.c.l.b16 %v4365
    %v5733 = vunpack.c.h.b16 %v4365
    %v5734 = vunpack.c.l.b16 %v4366
    %v5735 = vunpack.c.h.b16 %v4366
    %v5736 = vunpack.c.l.b16 %v4367
    %v5737 = vunpack.c.h.b16 %v4367
    %v5738 = vunpack.c.l.b16 %v4368
    %v5739 = vunpack.c.h.b16 %v4368
    %v5740 = vunpack.c.l.b16 %v4369
    %v5741 = vunpack.c.h.b16 %v4369
    %v5742 = vunpack.c.l.b16 %v4370
    %v5743 = vunpack.c.h.b16 %v4370
    %v5744 = vunpack.c.l.b16 %v4371
    %v5745 = vunpack.c.h.b16 %v4371
    %v5746 = vunpack.c.l.b16 %v4372
    %v5747 = vunpack.c.h.b16 %v4372
    %v5748 = vunpack.c.l.b16 %v4373
    %v5749 = vunpack.c.h.b16 %v4373
    %v5750 = vunpack.c.l.b16 %v4374
    %v5751 = vunpack.c.h.b16 %v4374
    %v5752 = vunpack.c.l.b16 %v4375
    %v5753 = vunpack.c.h.b16 %v4375
    %v5754 = vunpack.c.l.b16 %v4376
    %v5755 = vunpack.c.h.b16 %v4376
    %v5756 = vunpack.c.l.b16 %v4377
    %v5757 = vunpack.c.h.b16 %v4377
    %v5758 = vunpack.c.l.b16 %v4378
    %v5759 = vunpack.c.h.b16 %v4378
    %v5760 = vunpack.c.l.b16 %v4379
    %v5761 = vunpack.c.h.b16 %v4379
    %v5762 = vunpack.c.l.b16 %v4380
    %v5763 = vunpack.c.h.b16 %v4380
    %v5764 = vunpack.c.l.b16 %v4381
    %v5765 = vunpack.c.h.b16 %v4381
    %v5766 = vunpack.c.l.b16 %v4382
    %v5767 = vunpack.c.h.b16 %v4382
    %v5768 = vunpack.c.l.b16 %v4383
    %v5769 = vunpack.c.h.b16 %v4383
    %v5770 = vunpack.c.l.b16 %v4384
    %v5771 = vunpack.c.h.b16 %v4384
    %v5772 = vunpack.c.l.b16 %v4385
    %v5773 = vunpack.c.h.b16 %v4385
    %v5774 = vunpack.c.l.b16 %v4386
    %v5775 = vunpack.c.h.b16 %v4386
    %v5776 = vunpack.c.l.b16 %v4387
    %v5777 = vunpack.c.h.b16 %v4387
    %v5778 = vunpack.c.l.b16 %v4388
    %v5779 = vunpack.c.h.b16 %v4388
    %v5780 = vunpack.c.l.b16 %v4389
    %v5781 = vunpack.c.h.b16 %v4389
    %v5782 = vunpack.c.l.b16 %v4390
    %v5783 = vunpack.c.h.b16 %v4390
    %v5784 = vunpack.c.l.b16 %v4391
    %v5785 = vunpack.c.h.b16 %v4391
    %v5786 = vunpack.c.l.b16 %v4392
    %v5787 = vunpack.c.h.b16 %v4392
    %v5788 = vunpack.c.l.b16 %v4393
    %v5789 = vunpack.c.h.b16 %v4393
    %v5790 = vunpack.c.l.b16 %v4394
    %v5791 = vunpack.c.h.b16 %v4394
    %v5792 = vunpack.c.l.b16 %v4395
    %v5793 = vunpack.c.h.b16 %v4395
    %v5794 = vunpack.c.l.b16 %v4396
    %v5795 = vunpack.c.h.b16 %v4396
    %v5796 = vunpack.c.l.b16 %v4397
    %v5797 = vunpack.c.h.b16 %v4397
    %v5798 = vunpack.c.l.b16 %v4398
    %v5799 = vunpack.c.h.b16 %v4398
    %v5800 = vunpack.c.l.b16 %v4399
    %v5801 = vunpack.c.h.b16 %v4399
    %v5802 = vunpack.c.l.b16 %v4400
    %v5803 = vunpack.c.h.b16 %v4400
    %v5804 = vunpack.c.l.b16 %v4401
    %v5805 = vunpack.c.h.b16 %v4401
    %v5806 = vunpack.c.l.b16 %v4402
    %v5807 = vunpack.c.h.b16 %v4402
    %v5808 = vunpack.c.l.b16 %v4403
    %v5809 = vunpack.c.h.b16 %v4403
    %v5810 = vunpack.c.l.b16 %v4404
    %v5811 = vunpack.c.h.b16 %v4404
    %v5812 = vunpack.c.l.b16 %v4405
    %v5813 = vunpack.c.h.b16 %v4405
    %v5814 = vunpack.c.l.b16 %v4406
    %v5815 = vunpack.c.h.b16 %v4406
    %v5816 = vunpack.c.l.b16 %v4407
    %v5817 = vunpack.c.h.b16 %v4407
    %v5818 = vunpack.c.l.b16 %v4408
    %v5819 = vunpack.c.h.b16 %v4408
    %v5820 = vunpack.c.l.b16 %v4409
    %v5821 = vunpack.c.h.b16 %v4409
    %v5822 = vunpack.c.l.b16 %v4410
    %v5823 = vunpack.c.h.b16 %v4410
    %v5824 = vunpack.c.l.b16 %v4411
    %v5825 = vunpack.c.h.b16 %v4411
    %v5826 = vunpack.c.l.b16 %v4412
    %v5827 = vunpack.c.h.b16 %v4412
    %v5828 = vunpack.c.l.b16 %v4413
    %v5829 = vunpack.c.h.b16 %v4413
    %v5830 = vunpack.c.l.b16 %v4414
    %v5831 = vunpack.c.h.b16 %v4414
    %v5832 = vunpack.c.l.b16 %v4415
    %v5833 = vunpack.c.h.b16 %v4415
    %v5834 = vunpack.c.l.b16 %v4416
    %v5835 = vunpack.c.h.b16 %v4416
    %v5836 = vunpack.c.l.b16 %v4417
    %v5837 = vunpack.c.h.b16 %v4417
    %v5838 = vunpack.c.l.b16 %v4418
    %v5839 = vunpack.c.h.b16 %v4418
    %v5840 = vunpack.c.l.b16 %v4419
    %v5841 = vunpack.c.h.b16 %v4419
    %v5842 = vunpack.c.l.b16 %v4420
    %v5843 = vunpack.c.h.b16 %v4420
    %v5844 = vunpack.c.l.b16 %v4421
    %v5845 = vunpack.c.h.b16 %v4421
    %v5846 = vunpack.c.l.b16 %v4422
    %v5847 = vunpack.c.h.b16 %v4422
    %v5848 = vunpack.c.l.b16 %v4423
    %v5849 = vunpack.c.h.b16 %v4423
    %v5850 = vunpack.c.l.b16 %v4424
    %v5851 = vunpack.c.h.b16 %v4424
    %v5852 = vunpack.c.l.b16 %v4425
    %v5853 = vunpack.c.h.b16 %v4425
    %v5854 = vunpack.c.l.b16 %v4426
    %v5855 = vunpack.c.h.b16 %v4426
    %v5856 = vunpack.c.l.b16 %v4427
    %v5857 = vunpack.c.h.b16 %v4427
    %v5858 = vunpack.c.l.b16 %v4428
    %v5859 = vunpack.c.h.b16 %v4428
    %v5860 = vunpack.c.l.b16 %v4429
    %v5861 = vunpack.c.h.b16 %v4429
    %v5862 = vunpack.c.l.b16 %v4430
    %v5863 = vunpack.c.h.b16 %v4430
    %v5864 = vunpack.c.l.b16 %v4431
    %v5865 = vunpack.c.h.b16 %v4431
    %v5866 = vunpack.c.l.b16 %v4432
    %v5867 = vunpack.c.h.b16 %v4432
    %v5868 = vunpack.c.l.b16 %v4433
    %v5869 = vunpack.c.h.b16 %v4433
    %v5870 = vunpack.c.l.b16 %v4434
    %v5871 = vunpack.c.h.b16 %v4434
    %v5872 = vunpack.c.l.b16 %v4435
    %v5873 = vunpack.c.h.b16 %v4435
    %v5874 = vunpack.c.l.b16 %v4436
    %v5875 = vunpack.c.h.b16 %v4436
    %v5876 = vunpack.c.l.b16 %v4437
    %v5877 = vunpack.c.h.b16 %v4437
    %v5878 = vunpack.c.l.b16 %v4438
    %v5879 = vunpack.c.h.b16 %v4438
    %v5880 = vunpack.c.l.b16 %v4439
    %v5881 = vunpack.c.h.b16 %v4439
    %v5882 = vunpack.c.l.b16 %v4440
    %v5883 = vunpack.c.h.b16 %v4440
    %v5884 = vunpack.c.l.b16 %v4441
    %v5885 = vunpack.c.h.b16 %v4441
    %v5886 = vunpack.c.l.b16 %v4442
    %v5887 = vunpack.c.h.b16 %v4442
    %v5888 = vunpack.c.l.b16 %v4443
    %v5889 = vunpack.c.h.b16 %v4443
    %v5890 = vunpack.c.l.b16 %v4444
    %v5891 = vunpack.c.h.b16 %v4444
    %v5892 = vunpack.c.l.b16 %v4445
    %v5893 = vunpack.c.h.b16 %v4445
    %v5894 = vunpack.c.l.b16 %v4446
    %v5895 = vunpack.c.h.b16 %v4446
    %v5896 = vunpack.c.l.b16 %v4447
    %v5897 = vunpack.c.h.b16 %v4447
    %v5898 = vunpack.c.l.b16 %v4448
    %v5899 = vunpack.c.h.b16 %v4448
    %v5900 = vunpack.c.l.b16 %v4449
    %v5901 = vunpack.c.h.b16 %v4449
    %v5902 = vunpack.c.l.b16 %v4450
    %v5903 = vunpack.c.h.b16 %v4450
    %v5904 = vunpack.c.l.b16 %v4451
    %v5905 = vunpack.c.h.b16 %v4451
    %v5906 = vunpack.c.l.b16 %v4452
    %v5907 = vunpack.c.h.b16 %v4452
    %v5908 = vunpack.c.l.b16 %v4453
    %v5909 = vunpack.c.h.b16 %v4453
    %v5910 = vunpack.c.l.b16 %v4454
    %v5911 = vunpack.c.h.b16 %v4454
    %v5912 = vunpack.c.l.b16 %v4455
    %v5913 = vunpack.c.h.b16 %v4455
    %v5914 = vunpack.c.l.b16 %v4456
    %v5915 = vunpack.c.h.b16 %v4456
    %v5916 = vunpack.c.l.b16 %v4457
    %v5917 = vunpack.c.h.b16 %v4457
    %v5918 = vunpack.c.l.b16 %v4458
    %v5919 = vunpack.c.h.b16 %v4458
    %v5920 = vunpack.c.l.b16 %v4459
    %v5921 = vunpack.c.h.b16 %v4459
    %v5922 = vunpack.c.l.b16 %v4460
    %v5923 = vunpack.c.h.b16 %v4460
    %v5924 = vunpack.c.l.b16 %v4461
    %v5925 = vunpack.c.h.b16 %v4461
    %v5926 = vunpack.c.l.b16 %v4462
    %v5927 = vunpack.c.h.b16 %v4462
    %v5928 = vunpack.c.l.b16 %v4463
    %v5929 = vunpack.c.h.b16 %v4463
    %v5930 = vunpack.c.l.b16 %v4464
    %v5931 = vunpack.c.h.b16 %v4464
    %v5932 = vunpack.c.l.b16 %v4465
    %v5933 = vunpack.c.h.b16 %v4465
    %v5934 = vunpack.c.l.b16 %v4466
    %v5935 = vunpack.c.h.b16 %v4466
    %v5936 = vunpack.c.l.b16 %v4467
    %v5937 = vunpack.c.h.b16 %v4467
    %v5938 = vunpack.c.l.b16 %v4468
    %v5939 = vunpack.c.h.b16 %v4468
    %v5940 = vunpack.c.l.b16 %v4469
    %v5941 = vunpack.c.h.b16 %v4469
    %v5942 = vunpack.c.l.b16 %v4470
    %v5943 = vunpack.c.h.b16 %v4470
    %v5944 = vunpack.c.l.b16 %v4471
    %v5945 = vunpack.c.h.b16 %v4471
    %v5946 = vunpack.c.l.b16 %v4472
    %v5947 = vunpack.c.h.b16 %v4472
    %v5948 = vunpack.c.l.b16 %v4473
    %v5949 = vunpack.c.h.b16 %v4473
    %v5950 = vunpack.c.l.b16 %v4474
    %v5951 = vunpack.c.h.b16 %v4474
    %v5952 = vunpack.c.l.b16 %v4475
    %v5953 = vunpack.c.h.b16 %v4475
    %v5954 = vunpack.c.l.b16 %v4476
    %v5955 = vunpack.c.h.b16 %v4476
    %v5956 = vunpack.c.l.b16 %v4477
    %v5957 = vunpack.c.h.b16 %v4477
    %v5958 = vunpack.c.l.b16 %v4478
    %v5959 = vunpack.c.h.b16 %v4478
    %v5960 = vunpack.c.l.b16 %v4479
    %v5961 = vunpack.c.h.b16 %v4479
    %v5962 = vunpack.c.l.b16 %v4480
    %v5963 = vunpack.c.h.b16 %v4480
    %v5964 = vunpack.c.l.b16 %v4481
    %v5965 = vunpack.c.h.b16 %v4481
    %v5966 = vunpack.c.l.b16 %v4482
    %v5967 = vunpack.c.h.b16 %v4482
    %v5968 = vunpack.c.l.b16 %v4483
    %v5969 = vunpack.c.h.b16 %v4483
    %v5970 = vunpack.c.l.b16 %v4484
    %v5971 = vunpack.c.h.b16 %v4484
    %v5972 = vunpack.c.l.b16 %v4485
    %v5973 = vunpack.c.h.b16 %v4485
    %v5974 = vunpack.c.l.b16 %v4486
    %v5975 = vunpack.c.h.b16 %v4486
    %v5976 = vunpack.c.l.b16 %v4487
    %v5977 = vunpack.c.h.b16 %v4487
    %v5978 = vunpack.c.l.b16 %v4488
    %v5979 = vunpack.c.h.b16 %v4488
    %v5980 = vunpack.c.l.b16 %v4489
    %v5981 = vunpack.c.h.b16 %v4489
    %v5982 = vunpack.c.l.b16 %v4490
    %v5983 = vunpack.c.h.b16 %v4490
    %v5984 = vunpack.c.l.b16 %v4491
    %v5985 = vunpack.c.h.b16 %v4491
    %v5986 = vunpack.c.l.b16 %v4492
    %v5987 = vunpack.c.h.b16 %v4492
    %v5988 = vunpack.c.l.b16 %v4493
    %v5989 = vunpack.c.h.b16 %v4493
    %v5990 = vunpack.c.l.b16 %v4494
    %v5991 = vunpack.c.h.b16 %v4494
    %v5992 = vunpack.c.l.b16 %v4495
    %v5993 = vunpack.c.h.b16 %v4495
    %v5994 = vunpack.c.l.b16 %v4496
    %v5995 = vunpack.c.h.b16 %v4496
    %v5996 = vunpack.c.l.b16 %v4497
    %v5997 = vunpack.c.h.b16 %v4497
    %v5998 = vunpack.c.l.b16 %v4498
    %v5999 = vunpack.c.h.b16 %v4498
    %v6000 = vunpack.c.l.b16 %v4499
    %v6001 = vunpack.c.h.b16 %v4499
    %v6002 = vunpack.c.l.b16 %v4500
    %v6003 = vunpack.c.h.b16 %v4500
    %v6004 = vunpack.c.l.b16 %v4501
    %v6005 = vunpack.c.h.b16 %v4501
    %v6006 = vunpack.c.l.b16 %v4502
    %v6007 = vunpack.c.h.b16 %v4502
    %v6008 = vunpack.c.l.b16 %v4503
    %v6009 = vunpack.c.h.b16 %v4503
    %v6010 = vunpack.c.l.b16 %v4504
    %v6011 = vunpack.c.h.b16 %v4504
    %v6012 = vunpack.c.l.b16 %v4505
    %v6013 = vunpack.c.h.b16 %v4505
    %v6014 = vunpack.c.l.b16 %v4506
    %v6015 = vunpack.c.h.b16 %v4506
    %v6016 = vunpack.c.l.b16 %v4507
    %v6017 = vunpack.c.h.b16 %v4507
    %v6018 = vunpack.c.l.b16 %v4508
    %v6019 = vunpack.c.h.b16 %v4508
    %v6020 = vunpack.c.l.b16 %v4509
    %v6021 = vunpack.c.h.b16 %v4509
    %v6022 = vunpack.c.l.b16 %v4510
    %v6023 = vunpack.c.h.b16 %v4510
    %v6024 = vunpack.c.l.b16 %v4511
    %v6025 = vunpack.c.h.b16 %v4511
    %v6026 = vunpack.c.l.b16 %v4512
    %v6027 = vunpack.c.h.b16 %v4512
    %v6028 = vunpack.c.l.b16 %v4513
    %v6029 = vunpack.c.h.b16 %v4513
    %v6030 = vunpack.c.l.b16 %v4514
    %v6031 = vunpack.c.h.b16 %v4514
    %v6032 = vunpack.c.l.b16 %v4515
    %v6033 = vunpack.c.h.b16 %v4515
    %v6034 = vunpack.c.l.b16 %v4516
    %v6035 = vunpack.c.h.b16 %v4516
    %v6036 = vunpack.c.l.b16 %v4517
    %v6037 = vunpack.c.h.b16 %v4517
    %v6038 = vunpack.c.l.b16 %v4518
    %v6039 = vunpack.c.h.b16 %v4518
    %v6040 = vunpack.c.l.b16 %v4519
    %v6041 = vunpack.c.h.b16 %v4519
    %v6042 = vunpack.c.l.b16 %v4520
    %v6043 = vunpack.c.h.b16 %v4520
    %v6044 = vunpack.c.l.b16 %v4521
    %v6045 = vunpack.c.h.b16 %v4521
    %v6046 = vunpack.c.l.b16 %v4522
    %v6047 = vunpack.c.h.b16 %v4522
    %v6048 = vunpack.c.l.b16 %v4523
    %v6049 = vunpack.c.h.b16 %v4523
    %v6050 = vunpack.c.l.b16 %v4524
    %v6051 = vunpack.c.h.b16 %v4524
    %v6052 = vunpack.c.l.b16 %v4525
    %v6053 = vunpack.c.h.b16 %v4525
    %v6054 = vunpack.c.l.b16 %v4526
    %v6055 = vunpack.c.h.b16 %v4526
    %v6056 = vunpack.c.l.b16 %v4527
    %v6057 = vunpack.c.h.b16 %v4527
    %v6058 = vunpack.c.l.b16 %v4528
    %v6059 = vunpack.c.h.b16 %v4528
    %v6060 = vunpack.c.l.b16 %v4529
    %v6061 = vunpack.c.h.b16 %v4529
    %v6062 = vunpack.c.l.b16 %v4530
    %v6063 = vunpack.c.h.b16 %v4530
    %v6064 = vunpack.c.l.b16 %v4531
    %v6065 = vunpack.c.h.b16 %v4531
    %v6066 = vunpack.c.l.b16 %v4532
    %v6067 = vunpack.c.h.b16 %v4532
    %v6068 = vunpack.c.l.b16 %v4533
    %v6069 = vunpack.c.h.b16 %v4533
    %v6070 = vunpack.c.l.b16 %v4534
    %v6071 = vunpack.c.h.b16 %v4534
    %v6072 = vunpack.c.l.b16 %v4535
    %v6073 = vunpack.c.h.b16 %v4535
    %v6074 = vunpack.c.l.b16 %v4536
    %v6075 = vunpack.c.h.b16 %v4536
    %v6076 = vunpack.c.l.b16 %v4537
    %v6077 = vunpack.c.h.b16 %v4537
    %v6078 = vunpack.c.l.b16 %v4538
    %v6079 = vunpack.c.h.b16 %v4538
    %v6080 = vunpack.c.l.b16 %v4539
    %v6081 = vunpack.c.h.b16 %v4539
    %v6082 = vunpack.c.l.b16 %v4540
    %v6083 = vunpack.c.h.b16 %v4540
    %v6084 = vunpack.c.l.b16 %v4541
    %v6085 = vunpack.c.h.b16 %v4541
    %v6086 = vunpack.c.l.b16 %v4542
    %v6087 = vunpack.c.h.b16 %v4542
    %v6088 = vunpack.c.l.b16 %v4543
    %v6089 = vunpack.c.h.b16 %v4543
    %v6090 = vunpack.c.l.b16 %v4544
    %v6091 = vunpack.c.h.b16 %v4544
    %v6092 = vunpack.c.l.b16 %v4545
    %v6093 = vunpack.c.h.b16 %v4545
    %v6094 = vunpack.c.l.b16 %v4546
    %v6095 = vunpack.c.h.b16 %v4546
    %v6096 = vunpack.c.l.b16 %v4547
    %v6097 = vunpack.c.h.b16 %v4547
    %v6098 = vunpack.c.l.b16 %v4548
    %v6099 = vunpack.c.h.b16 %v4548
    %v6100 = vunpack.c.l.b16 %v4549
    %v6101 = vunpack.c.h.b16 %v4549
    %v6102 = vunpack.c.l.b16 %v4550
    %v6103 = vunpack.c.h.b16 %v4550
    %v6104 = vunpack.c.l.b16 %v4551
    %v6105 = vunpack.c.h.b16 %v4551
    %v6106 = vunpack.c.l.b16 %v4552
    %v6107 = vunpack.c.h.b16 %v4552
    %v6108 = vunpack.c.l.b16 %v4553
    %v6109 = vunpack.c.h.b16 %v4553
    %v6110 = vunpack.c.l.b16 %v4554
    %v6111 = vunpack.c.h.b16 %v4554
    %v6112 = vunpack.c.l.b16 %v4555
    %v6113 = vunpack.c.h.b16 %v4555
    %v6114 = vpack.c.b16 %v5094, %v5090
    %v6115 = vpack.c.b16 %v5095, %v5091
    %v6116 = vpack.c.b16 %v5096, %v5092
    %v6117 = vpack.c.b16 %v5097, %v5093
    %v6118 = vpack.c.b16 %v5102, %v5098
    %v6119 = vpack.c.b16 %v5103, %v5099
    %v6120 = vpack.c.b16 %v5104, %v5100
    %v6121 = vpack.c.b16 %v5105, %v5101
    %v6122 = vpack.c.b16 %v5110, %v5106
    %v6123 = vpack.c.b16 %v5111, %v5107
    %v6124 = vpack.c.b16 %v5112, %v5108
    %v6125 = vpack.c.b16 %v5113, %v5109
    %v6126 = vpack.c.b16 %v5118, %v5114
    %v6127 = vpack.c.b16 %v5119, %v5115
    %v6128 = vpack.c.b16 %v5120, %v5116
    %v6129 = vpack.c.b16 %v5121, %v5117
    %v6130 = vpack.c.b16 %v5126, %v5122
    %v6131 = vpack.c.b16 %v5127, %v5123
    %v6132 = vpack.c.b16 %v5128, %v5124
    %v6133 = vpack.c.b16 %v5129, %v5125
    %v6134 = vpack.c.b16 %v5134, %v5130
    %v6135 = vpack.c.b16 %v5135, %v5131
    %v6136 = vpack.c.b16 %v5136, %v5132
    %v6137 = vpack.c.b16 %v5137, %v5133
    %v6138 = vpack.c.b16 %v5142, %v5138
    %v6139 = vpack.c.b16 %v5143, %v5139
    %v6140 = vpack.c.b16 %v5144, %v5140
    %v6141 = vpack.c.b16 %v5145, %v5141
    %v6142 = vpack.c.b16 %v5150, %v5146
    %v6143 = vpack.c.b16 %v5151, %v5147
    %v6144 = vpack.c.b16 %v5152, %v5148
    %v6145 = vpack.c.b16 %v5153, %v5149
    %v6146 = vpack.c.b16 %v5158, %v5154
    %v6147 = vpack.c.b16 %v5159, %v5155
    %v6148 = vpack.c.b16 %v5160, %v5156
    %v6149 = vpack.c.b16 %v5161, %v5157
    %v6150 = vpack.c.b16 %v5166, %v5162
    %v6151 = vpack.c.b16 %v5167, %v5163
    %v6152 = vpack.c.b16 %v5168, %v5164
    %v6153 = vpack.c.b16 %v5169, %v5165
    %v6154 = vpack.c.b16 %v5174, %v5170
    %v6155 = vpack.c.b16 %v5175, %v5171
    %v6156 = vpack.c.b16 %v5176, %v5172
    %v6157 = vpack.c.b16 %v5177, %v5173
    %v6158 = vpack.c.b16 %v5182, %v5178
    %v6159 = vpack.c.b16 %v5183, %v5179
    %v6160 = vpack.c.b16 %v5184, %v5180
    %v6161 = vpack.c.b16 %v5185, %v5181
    %v6162 = vpack.c.b16 %v5190, %v5186
    %v6163 = vpack.c.b16 %v5191, %v5187
    %v6164 = vpack.c.b16 %v5192, %v5188
    %v6165 = vpack.c.b16 %v5193, %v5189
    %v6166 = vpack.c.b16 %v5198, %v5194
    %v6167 = vpack.c.b16 %v5199, %v5195
    %v6168 = vpack.c.b16 %v5200, %v5196
    %v6169 = vpack.c.b16 %v5201, %v5197
    %v6170 = vpack.c.b16 %v5206, %v5202
    %v6171 = vpack.c.b16 %v5207, %v5203
    %v6172 = vpack.c.b16 %v5208, %v5204
    %v6173 = vpack.c.b16 %v5209, %v5205
    %v6174 = vpack.c.b16 %v5214, %v5210
    %v6175 = vpack.c.b16 %v5215, %v5211
    %v6176 = vpack.c.b16 %v5216, %v5212
    %v6177 = vpack.c.b16 %v5217, %v5213
    %v6178 = vpack.c.b16 %v5222, %v5218
    %v6179 = vpack.c.b16 %v5223, %v5219
    %v6180 = vpack.c.b16 %v5224, %v5220
    %v6181 = vpack.c.b16 %v5225, %v5221
    %v6182 = vpack.c.b16 %v5230, %v5226
    %v6183 = vpack.c.b16 %v5231, %v5227
    %v6184 = vpack.c.b16 %v5232, %v5228
    %v6185 = vpack.c.b16 %v5233, %v5229
    %v6186 = vpack.c.b16 %v5238, %v5234
    %v6187 = vpack.c.b16 %v5239, %v5235
    %v6188 = vpack.c.b16 %v5240, %v5236
    %v6189 = vpack.c.b16 %v5241, %v5237
    %v6190 = vpack.c.b16 %v5246, %v5242
    %v6191 = vpack.c.b16 %v5247, %v5243
    %v6192 = vpack.c.b16 %v5248, %v5244
    %v6193 = vpack.c.b16 %v5249, %v5245
    %v6194 = vpack.c.b16 %v5254, %v5250
    %v6195 = vpack.c.b16 %v5255, %v5251
    %v6196 = vpack.c.b16 %v5256, %v5252
    %v6197 = vpack.c.b16 %v5257, %v5253
    %v6198 = vpack.c.b16 %v5262, %v5258
    %v6199 = vpack.c.b16 %v5263, %v5259
    %v6200 = vpack.c.b16 %v5264, %v5260
    %v6201 = vpack.c.b16 %v5265, %v5261
    %v6202 = vpack.c.b16 %v5270, %v5266
    %v6203 = vpack.c.b16 %v5271, %v5267
    %v6204 = vpack.c.b16 %v5272, %v5268
    %v6205 = vpack.c.b16 %v5273, %v5269
    %v6206 = vpack.c.b16 %v5278, %v5274
    %v6207 = vpack.c.b16 %v5279, %v5275
    %v6208 = vpack.c.b16 %v5280, %v5276
    %v6209 = vpack.c.b16 %v5281, %v5277
    %v6210 = vpack.c.b16 %v5286, %v5282
    %v6211 = vpack.c.b16 %v5287, %v5283
    %v6212 = vpack.c.b16 %v5288, %v5284
    %v6213 = vpack.c.b16 %v5289, %v5285
    %v6214 = vpack.c.b16 %v5294, %v5290
    %v6215 = vpack.c.b16 %v5295, %v5291
    %v6216 = vpack.c.b16 %v5296, %v5292
    %v6217 = vpack.c.b16 %v5297, %v5293
    %v6218 = vpack.c.b16 %v5302, %v5298
    %v6219 = vpack.c.b16 %v5303, %v5299
    %v6220 = vpack.c.b16 %v5304, %v5300
    %v6221 = vpack.c.b16 %v5305, %v5301
    %v6222 = vpack.c.b16 %v5310, %v5306
    %v6223 = vpack.c.b16 %v5311, %v5307
    %v6224 = vpack.c.b16 %v5312, %v5308
    %v6225 = vpack.c.b16 %v5313, %v5309
    %v6226 = vpack.c.b16 %v5318, %v5314
    %v6227 = vpack.c.b16 %v5319, %v5315
    %v6228 = vpack.c.b16 %v5320, %v5316
    %v6229 = vpack.c.b16 %v5321, %v5317
    %v6230 = vpack.c.b16 %v5326, %v5322
    %v6231 = vpack.c.b16 %v5327, %v5323
    %v6232 = vpack.c.b16 %v5328, %v5324
    %v6233 = vpack.c.b16 %v5329, %v5325
    %v6234 = vpack.c.b16 %v5334, %v5330
    %v6235 = vpack.c.b16 %v5335, %v5331
    %v6236 = vpack.c.b16 %v5336, %v5332
    %v6237 = vpack.c.b16 %v5337, %v5333
    %v6238 = vpack.c.b16 %v5342, %v5338
    %v6239 = vpack.c.b16 %v5343, %v5339
    %v6240 = vpack.c.b16 %v5344, %v5340
    %v6241 = vpack.c.b16 %v5345, %v5341
    %v6242 = vpack.c.b16 %v5350, %v5346
    %v6243 = vpack.c.b16 %v5351, %v5347
    %v6244 = vpack.c.b16 %v5352, %v5348
    %v6245 = vpack.c.b16 %v5353, %v5349
    %v6246 = vpack.c.b16 %v5358, %v5354
    %v6247 = vpack.c.b16 %v5359, %v5355
    %v6248 = vpack.c.b16 %v5360, %v5356
    %v6249 = vpack.c.b16 %v5361, %v5357
    %v6250 = vpack.c.b16 %v5366, %v5362
    %v6251 = vpack.c.b16 %v5367, %v5363
    %v6252 = vpack.c.b16 %v5368, %v5364
    %v6253 = vpack.c.b16 %v5369, %v5365
    %v6254 = vpack.c.b16 %v5374, %v5370
    %v6255 = vpack.c.b16 %v5375, %v5371
    %v6256 = vpack.c.b16 %v5376, %v5372
    %v6257 = vpack.c.b16 %v5377, %v5373
    %v6258 = vpack.c.b16 %v5382, %v5378
    %v6259 = vpack.c.b16 %v5383, %v5379
    %v6260 = vpack.c.b16 %v5384, %v5380
    %v6261 = vpack.c.b16 %v5385, %v5381
    %v6262 = vpack.c.b16 %v5390, %v5386
    %v6263 = vpack.c.b16 %v5391, %v5387
    %v6264 = vpack.c.b16 %v5392, %v5388
    %v6265 = vpack.c.b16 %v5393, %v5389
    %v6266 = vpack.c.b16 %v5398, %v5394
    %v6267 = vpack.c.b16 %v5399, %v5395
    %v6268 = vpack.c.b16 %v5400, %v5396
    %v6269 = vpack.c.b16 %v5401, %v5397
    %v6270 = vpack.c.b16 %v5406, %v5402
    %v6271 = vpack.c.b16 %v5407, %v5403
    %v6272 = vpack.c.b16 %v5408, %v5404
    %v6273 = vpack.c.b16 %v5409, %v5405
    %v6274 = vpack.c.b16 %v5414, %v5410
    %v6275 = vpack.c.b16 %v5415, %v5411
    %v6276 = vpack.c.b16 %v5416, %v5412
    %v6277 = vpack.c.b16 %v5417, %v5413
    %v6278 = vpack.c.b16 %v5422, %v5418
    %v6279 = vpack.c.b16 %v5423, %v5419
    %v6280 = vpack.c.b16 %v5424, %v5420
    %v6281 = vpack.c.b16 %v5425, %v5421
    %v6282 = vpack.c.b16 %v5430, %v5426
    %v6283 = vpack.c.b16 %v5431, %v5427
    %v6284 = vpack.c.b16 %v5432, %v5428
    %v6285 = vpack.c.b16 %v5433, %v5429
    %v6286 = vpack.c.b16 %v5438, %v5434
    %v6287 = vpack.c.b16 %v5439, %v5435
    %v6288 = vpack.c.b16 %v5440, %v5436
    %v6289 = vpack.c.b16 %v5441, %v5437
    %v6290 = vpack.c.b16 %v5446, %v5442
    %v6291 = vpack.c.b16 %v5447, %v5443
    %v6292 = vpack.c.b16 %v5448, %v5444
    %v6293 = vpack.c.b16 %v5449, %v5445
    %v6294 = vpack.c.b16 %v5454, %v5450
    %v6295 = vpack.c.b16 %v5455, %v5451
    %v6296 = vpack.c.b16 %v5456, %v5452
    %v6297 = vpack.c.b16 %v5457, %v5453
    %v6298 = vpack.c.b16 %v5462, %v5458
    %v6299 = vpack.c.b16 %v5463, %v5459
    %v6300 = vpack.c.b16 %v5464, %v5460
    %v6301 = vpack.c.b16 %v5465, %v5461
    %v6302 = vpack.c.b16 %v5470, %v5466
    %v6303 = vpack.c.b16 %v5471, %v5467
    %v6304 = vpack.c.b16 %v5472, %v5468
    %v6305 = vpack.c.b16 %v5473, %v5469
    %v6306 = vpack.c.b16 %v5478, %v5474
    %v6307 = vpack.c.b16 %v5479, %v5475
    %v6308 = vpack.c.b16 %v5480, %v5476
    %v6309 = vpack.c.b16 %v5481, %v5477
    %v6310 = vpack.c.b16 %v5486, %v5482
    %v6311 = vpack.c.b16 %v5487, %v5483
    %v6312 = vpack.c.b16 %v5488, %v5484
    %v6313 = vpack.c.b16 %v5489, %v5485
    %v6314 = vpack.c.b16 %v5494, %v5490
    %v6315 = vpack.c.b16 %v5495, %v5491
    %v6316 = vpack.c.b16 %v5496, %v5492
    %v6317 = vpack.c.b16 %v5497, %v5493
    %v6318 = vpack.c.b16 %v5502, %v5498
    %v6319 = vpack.c.b16 %v5503, %v5499
    %v6320 = vpack.c.b16 %v5504, %v5500
    %v6321 = vpack.c.b16 %v5505, %v5501
    %v6322 = vpack.c.b16 %v5510, %v5506
    %v6323 = vpack.c.b16 %v5511, %v5507
    %v6324 = vpack.c.b16 %v5512, %v5508
    %v6325 = vpack.c.b16 %v5513, %v5509
    %v6326 = vpack.c.b16 %v5518, %v5514
    %v6327 = vpack.c.b16 %v5519, %v5515
    %v6328 = vpack.c.b16 %v5520, %v5516
    %v6329 = vpack.c.b16 %v5521, %v5517
    %v6330 = vpack.c.b16 %v5526, %v5522
    %v6331 = vpack.c.b16 %v5527, %v5523
    %v6332 = vpack.c.b16 %v5528, %v5524
    %v6333 = vpack.c.b16 %v5529, %v5525
    %v6334 = vpack.c.b16 %v5534, %v5530
    %v6335 = vpack.c.b16 %v5535, %v5531
    %v6336 = vpack.c.b16 %v5536, %v5532
    %v6337 = vpack.c.b16 %v5537, %v5533
    %v6338 = vpack.c.b16 %v5542, %v5538
    %v6339 = vpack.c.b16 %v5543, %v5539
    %v6340 = vpack.c.b16 %v5544, %v5540
    %v6341 = vpack.c.b16 %v5545, %v5541
    %v6342 = vpack.c.b16 %v5550, %v5546
    %v6343 = vpack.c.b16 %v5551, %v5547
    %v6344 = vpack.c.b16 %v5552, %v5548
    %v6345 = vpack.c.b16 %v5553, %v5549
    %v6346 = vpack.c.b16 %v5558, %v5554
    %v6347 = vpack.c.b16 %v5559, %v5555
    %v6348 = vpack.c.b16 %v5560, %v5556
    %v6349 = vpack.c.b16 %v5561, %v5557
    %v6350 = vpack.c.b16 %v5566, %v5562
    %v6351 = vpack.c.b16 %v5567, %v5563
    %v6352 = vpack.c.b16 %v5568, %v5564
    %v6353 = vpack.c.b16 %v5569, %v5565
    %v6354 = vpack.c.b16 %v5574, %v5570
    %v6355 = vpack.c.b16 %v5575, %v5571
    %v6356 = vpack.c.b16 %v5576, %v5572
    %v6357 = vpack.c.b16 %v5577, %v5573
    %v6358 = vpack.c.b16 %v5582, %v5578
    %v6359 = vpack.c.b16 %v5583, %v5579
    %v6360 = vpack.c.b16 %v5584, %v5580
    %v6361 = vpack.c.b16 %v5585, %v5581
    %v6362 = vpack.c.b16 %v5590, %v5586
    %v6363 = vpack.c.b16 %v5591, %v5587
    %v6364 = vpack.c.b16 %v5592, %v5588
    %v6365 = vpack.c.b16 %v5593, %v5589
    %v6366 = vpack.c.b16 %v5598, %v5594
    %v6367 = vpack.c.b16 %v5599, %v5595
    %v6368 = vpack.c.b16 %v5600, %v5596
    %v6369 = vpack.c.b16 %v5601, %v5597
    %v6370 = vpack.c.b16 %v5606, %v5602
    %v6371 = vpack.c.b16 %v5607, %v5603
    %v6372 = vpack.c.b16 %v5608, %v5604
    %v6373 = vpack.c.b16 %v5609, %v5605
    %v6374 = vpack.c.b16 %v5614, %v5610
    %v6375 = vpack.c.b16 %v5615, %v5611
    %v6376 = vpack.c.b16 %v5616, %v5612
    %v6377 = vpack.c.b16 %v5617, %v5613
    %v6378 = vpack.c.b16 %v5622, %v5618
    %v6379 = vpack.c.b16 %v5623, %v5619
    %v6380 = vpack.c.b16 %v5624, %v5620
    %v6381 = vpack.c.b16 %v5625, %v5621
    %v6382 = vpack.c.b16 %v5630, %v5626
    %v6383 = vpack.c.b16 %v5631, %v5627
    %v6384 = vpack.c.b16 %v5632, %v5628
    %v6385 = vpack.c.b16 %v5633, %v5629
    %v6386 = vpack.c.b16 %v5638, %v5634
    %v6387 = vpack.c.b16 %v5639, %v5635
    %v6388 = vpack.c.b16 %v5640, %v5636
    %v6389 = vpack.c.b16 %v5641, %v5637
    %v6390 = vpack.c.b16 %v5646, %v5642
    %v6391 = vpack.c.b16 %v5647, %v5643
    %v6392 = vpack.c.b16 %v5648, %v5644
    %v6393 = vpack.c.b16 %v5649, %v5645
    %v6394 = vpack.c.b16 %v5654, %v5650
    %v6395 = vpack.c.b16 %v5655, %v5651
    %v6396 = vpack.c.b16 %v5656, %v5652
    %v6397 = vpack.c.b16 %v5657, %v5653
    %v6398 = vpack.c.b16 %v5662, %v5658
    %v6399 = vpack.c.b16 %v5663, %v5659
    %v6400 = vpack.c.b16 %v5664, %v5660
    %v6401 = vpack.c.b16 %v5665, %v5661
    %v6402 = vpack.c.b16 %v5670, %v5666
    %v6403 = vpack.c.b16 %v5671, %v5667
    %v6404 = vpack.c.b16 %v5672, %v5668
    %v6405 = vpack.c.b16 %v5673, %v5669
    %v6406 = vpack.c.b16 %v5678, %v5674
    %v6407 = vpack.c.b16 %v5679, %v5675
    %v6408 = vpack.c.b16 %v5680, %v5676
    %v6409 = vpack.c.b16 %v5681, %v5677
    %v6410 = vpack.c.b16 %v5686, %v5682
    %v6411 = vpack.c.b16 %v5687, %v5683
    %v6412 = vpack.c.b16 %v5688, %v5684
    %v6413 = vpack.c.b16 %v5689, %v5685
    %v6414 = vpack.c.b16 %v5694, %v5690
    %v6415 = vpack.c.b16 %v5695, %v5691
    %v6416 = vpack.c.b16 %v5696, %v5692
    %v6417 = vpack.c.b16 %v5697, %v5693
    %v6418 = vpack.c.b16 %v5702, %v5698
    %v6419 = vpack.c.b16 %v5703, %v5699
    %v6420 = vpack.c.b16 %v5704, %v5700
    %v6421 = vpack.c.b16 %v5705, %v5701
    %v6422 = vpack.c.b16 %v5710, %v5706
    %v6423 = vpack.c.b16 %v5711, %v5707
    %v6424 = vpack.c.b16 %v5712, %v5708
    %v6425 = vpack.c.b16 %v5713, %v5709
    %v6426 = vpack.c.b16 %v5718, %v5714
    %v6427 = vpack.c.b16 %v5719, %v5715
    %v6428 = vpack.c.b16 %v5720, %v5716
    %v6429 = vpack.c.b16 %v5721, %v5717
    %v6430 = vpack.c.b16 %v5726, %v5722
    %v6431 = vpack.c.b16 %v5727, %v5723
    %v6432 = vpack.c.b16 %v5728, %v5724
    %v6433 = vpack.c.b16 %v5729, %v5725
    %v6434 = vpack.c.b16 %v5734, %v5730
    %v6435 = vpack.c.b16 %v5735, %v5731
    %v6436 = vpack.c.b16 %v5736, %v5732
    %v6437 = vpack.c.b16 %v5737, %v5733
    %v6438 = vpack.c.b16 %v5742, %v5738
    %v6439 = vpack.c.b16 %v5743, %v5739
    %v6440 = vpack.c.b16 %v5744, %v5740
    %v6441 = vpack.c.b16 %v5745, %v5741
    %v6442 = vpack.c.b16 %v5750, %v5746
    %v6443 = vpack.c.b16 %v5751, %v5747
    %v6444 = vpack.c.b16 %v5752, %v5748
    %v6445 = vpack.c.b16 %v5753, %v5749
    %v6446 = vpack.c.b16 %v5758, %v5754
    %v6447 = vpack.c.b16 %v5759, %v5755
    %v6448 = vpack.c.b16 %v5760, %v5756
    %v6449 = vpack.c.b16 %v5761, %v5757
    %v6450 = vpack.c.b16 %v5766, %v5762
    %v6451 = vpack.c.b16 %v5767, %v5763
    %v6452 = vpack.c.b16 %v5768, %v5764
    %v6453 = vpack.c.b16 %v5769, %v5765
    %v6454 = vpack.c.b16 %v5774, %v5770
    %v6455 = vpack.c.b16 %v5775, %v5771
    %v6456 = vpack.c.b16 %v5776, %v5772
    %v6457 = vpack.c.b16 %v5777, %v5773
    %v6458 = vpack.c.b16 %v5782, %v5778
    %v6459 = vpack.c.b16 %v5783, %v5779
    %v6460 = vpack.c.b16 %v5784, %v5780
    %v6461 = vpack.c.b16 %v5785, %v5781
    %v6462 = vpack.c.b16 %v5790, %v5786
    %v6463 = vpack.c.b16 %v5791, %v5787
    %v6464 = vpack.c.b16 %v5792, %v5788
    %v6465 = vpack.c.b16 %v5793, %v5789
    %v6466 = vpack.c.b16 %v5798, %v5794
    %v6467 = vpack.c.b16 %v5799, %v5795
    %v6468 = vpack.c.b16 %v5800, %v5796
    %v6469 = vpack.c.b16 %v5801, %v5797
    %v6470 = vpack.c.b16 %v5806, %v5802
    %v6471 = vpack.c.b16 %v5807, %v5803
    %v6472 = vpack.c.b16 %v5808, %v5804
    %v6473 = vpack.c.b16 %v5809, %v5805
    %v6474 = vpack.c.b16 %v5814, %v5810
    %v6475 = vpack.c.b16 %v5815, %v5811
    %v6476 = vpack.c.b16 %v5816, %v5812
    %v6477 = vpack.c.b16 %v5817, %v5813
    %v6478 = vpack.c.b16 %v5822, %v5818
    %v6479 = vpack.c.b16 %v5823, %v5819
    %v6480 = vpack.c.b16 %v5824, %v5820
    %v6481 = vpack.c.b16 %v5825, %v5821
    %v6482 = vpack.c.b16 %v5830, %v5826
    %v6483 = vpack.c.b16 %v5831, %v5827
    %v6484 = vpack.c.b16 %v5832, %v5828
    %v6485 = vpack.c.b16 %v5833, %v5829
    %v6486 = vpack.c.b16 %v5838, %v5834
    %v6487 = vpack.c.b16 %v5839, %v5835
    %v6488 = vpack.c.b16 %v5840, %v5836
    %v6489 = vpack.c.b16 %v5841, %v5837
    %v6490 = vpack.c.b16 %v5846, %v5842
    %v6491 = vpack.c.b16 %v5847, %v5843
    %v6492 = vpack.c.b16 %v5848, %v5844
    %v6493 = vpack.c.b16 %v5849, %v5845
    %v6494 = vpack.c.b16 %v5854, %v5850
    %v6495 = vpack.c.b16 %v5855, %v5851
    %v6496 = vpack.c.b16 %v5856, %v5852
    %v6497 = vpack.c.b16 %v5857, %v5853
    %v6498 = vpack.c.b16 %v5862, %v5858
    %v6499 = vpack.c.b16 %v5863, %v5859
    %v6500 = vpack.c.b16 %v5864, %v5860
    %v6501 = vpack.c.b16 %v5865, %v5861
    %v6502 = vpack.c.b16 %v5870, %v5866
    %v6503 = vpack.c.b16 %v5871, %v5867
    %v6504 = vpack.c.b16 %v5872, %v5868
    %v6505 = vpack.c.b16 %v5873, %v5869
    %v6506 = vpack.c.b16 %v5878, %v5874
    %v6507 = vpack.c.b16 %v5879, %v5875
    %v6508 = vpack.c.b16 %v5880, %v5876
    %v6509 = vpack.c.b16 %v5881, %v5877
    %v6510 = vpack.c.b16 %v5886, %v5882
    %v6511 = vpack.c.b16 %v5887, %v5883
    %v6512 = vpack.c.b16 %v5888, %v5884
    %v6513 = vpack.c.b16 %v5889, %v5885
    %v6514 = vpack.c.b16 %v5894, %v5890
    %v6515 = vpack.c.b16 %v5895, %v5891
    %v6516 = vpack.c.b16 %v5896, %v5892
    %v6517 = vpack.c.b16 %v5897, %v5893
    %v6518 = vpack.c.b16 %v5902, %v5898
    %v6519 = vpack.c.b16 %v5903, %v5899
    %v6520 = vpack.c.b16 %v5904, %v5900
    %v6521 = vpack.c.b16 %v5905, %v5901
    %v6522 = vpack.c.b16 %v5910, %v5906
    %v6523 = vpack.c.b16 %v5911, %v5907
    %v6524 = vpack.c.b16 %v5912, %v5908
    %v6525 = vpack.c.b16 %v5913, %v5909
    %v6526 = vpack.c.b16 %v5918, %v5914
    %v6527 = vpack.c.b16 %v5919, %v5915
    %v6528 = vpack.c.b16 %v5920, %v5916
    %v6529 = vpack.c.b16 %v5921, %v5917
    %v6530 = vpack.c.b16 %v5926, %v5922
    %v6531 = vpack.c.b16 %v5927, %v5923
    %v6532 = vpack.c.b16 %v5928, %v5924
    %v6533 = vpack.c.b16 %v5929, %v5925
    %v6534 = vpack.c.b16 %v5934, %v5930
    %v6535 = vpack.c.b16 %v5935, %v5931
    %v6536 = vpack.c.b16 %v5936, %v5932
    %v6537 = vpack.c.b16 %v5937, %v5933
    %v6538 = vpack.c.b16 %v5942, %v5938
    %v6539 = vpack.c.b16 %v5943, %v5939
    %v6540 = vpack.c.b16 %v5944, %v5940
    %v6541 = vpack.c.b16 %v5945, %v5941
    %v6542 = vpack.c.b16 %v5950, %v5946
    %v6543 = vpack.c.b16 %v5951, %v5947
    %v6544 = vpack.c.b16 %v5952, %v5948
    %v6545 = vpack.c.b16 %v5953, %v5949
    %v6546 = vpack.c.b16 %v5958, %v5954
    %v6547 = vpack.c.b16 %v5959, %v5955
    %v6548 = vpack.c.b16 %v5960, %v5956
    %v6549 = vpack.c.b16 %v5961, %v5957
    %v6550 = vpack.c.b16 %v5966, %v5962
    %v6551 = vpack.c.b16 %v5967, %v5963
    %v6552 = vpack.c.b16 %v5968, %v5964
    %v6553 = vpack.c.b16 %v5969, %v5965
    %v6554 = vpack.c.b16 %v5974, %v5970
    %v6555 = vpack.c.b16 %v5975, %v5971
    %v6556 = vpack.c.b16 %v5976, %v5972
    %v6557 = vpack.c.b16 %v5977, %v5973
    %v6558 = vpack.c.b16 %v5982, %v5978
    %v6559 = vpack.c.b16 %v5983, %v5979
    %v6560 = vpack.c.b16 %v5984, %v5980
    %v6561 = vpack.c.b16 %v5985, %v5981
    %v6562 = vpack.c.b16 %v5990, %v5986
    %v6563 = vpack.c.b16 %v5991, %v5987
    %v6564 = vpack.c.b16 %v5992, %v5988
    %v6565 = vpack.c.b16 %v5993, %v5989
    %v6566 = vpack.c.b16 %v5998, %v5994
    %v6567 = vpack.c.b16 %v5999, %v5995
    %v6568 = vpack.c.b16 %v6000, %v5996
    %v6569 = vpack.c.b16 %v6001, %v5997
    %v6570 = vpack.c.b16 %v6006, %v6002
    %v6571 = vpack.c.b16 %v6007, %v6003
    %v6572 = vpack.c.b16 %v6008, %v6004
    %v6573 = vpack.c.b16 %v6009, %v6005
    %v6574 = vpack.c.b16 %v6014, %v6010
    %v6575 = vpack.c.b16 %v6015, %v6011
    %v6576 = vpack.c.b16 %v6016, %v6012
    %v6577 = vpack.c.b16 %v6017, %v6013
    %v6578 = vpack.c.b16 %v6022, %v6018
    %v6579 = vpack.c.b16 %v6023, %v6019
    %v6580 = vpack.c.b16 %v6024, %v6020
    %v6581 = vpack.c.b16 %v6025, %v6021
    %v6582 = vpack.c.b16 %v6030, %v6026
    %v6583 = vpack.c.b16 %v6031, %v6027
    %v6584 = vpack.c.b16 %v6032, %v6028
    %v6585 = vpack.c.b16 %v6033, %v6029
    %v6586 = vpack.c.b16 %v6038, %v6034
    %v6587 = vpack.c.b16 %v6039, %v6035
    %v6588 = vpack.c.b16 %v6040, %v6036
    %v6589 = vpack.c.b16 %v6041, %v6037
    %v6590 = vpack.c.b16 %v6046, %v6042
    %v6591 = vpack.c.b16 %v6047, %v6043
    %v6592 = vpack.c.b16 %v6048, %v6044
    %v6593 = vpack.c.b16 %v6049, %v6045
    %v6594 = vpack.c.b16 %v6054, %v6050
    %v6595 = vpack.c.b16 %v6055, %v6051
    %v6596 = vpack.c.b16 %v6056, %v6052
    %v6597 = vpack.c.b16 %v6057, %v6053
    %v6598 = vpack.c.b16 %v6062, %v6058
    %v6599 = vpack.c.b16 %v6063, %v6059
    %v6600 = vpack.c.b16 %v6064, %v6060
    %v6601 = vpack.c.b16 %v6065, %v6061
    %v6602 = vpack.c.b16 %v6070, %v6066
    %v6603 = vpack.c.b16 %v6071, %v6067
    %v6604 = vpack.c.b16 %v6072, %v6068
    %v6605 = vpack.c.b16 %v6073, %v6069
    %v6606 = vpack.c.b16 %v6078, %v6074
    %v6607 = vpack.c.b16 %v6079, %v6075
    %v6608 = vpack.c.b16 %v6080, %v6076
    %v6609 = vpack.c.b16 %v6081, %v6077
    %v6610 = vpack.c.b16 %v6086, %v6082
    %v6611 = vpack.c.b16 %v6087, %v6083
    %v6612 = vpack.c.b16 %v6088, %v6084
    %v6613 = vpack.c.b16 %v6089, %v6085
    %v6614 = vpack.c.b16 %v6094, %v6090
    %v6615 = vpack.c.b16 %v6095, %v6091
    %v6616 = vpack.c.b16 %v6096, %v6092
    %v6617 = vpack.c.b16 %v6097, %v6093
    %v6618 = vpack.c.b16 %v6102, %v6098
    %v6619 = vpack.c.b16 %v6103, %v6099
    %v6620 = vpack.c.b16 %v6104, %v6100
    %v6621 = vpack.c.b16 %v6105, %v6101
    %v6622 = vpack.c.b16 %v6110, %v6106
    %v6623 = vpack.c.b16 %v6111, %v6107
    %v6624 = vpack.c.b16 %v6112, %v6108
    %v6625 = vpack.c.b16 %v6113, %v6109
    %7138 = vmatprep.subr.bf16.mxu0 %v6115
    %7139 = vmatpush1.bf16.msra.mxu0 %v6114
    %7140 = vmatprep.subr.bf16.mxu0 %v6119
    %7141 = vmatpush1.bf16.msra.mxu0 %v6118
    %7142 = vmatprep.subr.bf16.mxu0 %v6123
    %7143 = vmatpush1.bf16.msra.mxu0 %v6122
    %7144 = vmatprep.subr.bf16.mxu0 %v6127
    %7145 = vmatpush1.bf16.msra.mxu0 %v6126
    %7146 = vmatprep.subr.bf16.mxu0 %v6131
    %7147 = vmatpush1.bf16.msra.mxu0 %v6130
    %7148 = vmatprep.subr.bf16.mxu0 %v6135
    %7149 = vmatpush1.bf16.msra.mxu0 %v6134
    %7150 = vmatprep.subr.bf16.mxu0 %v6139
    %7151 = vmatpush1.bf16.msra.mxu0 %v6138
    %7152 = vmatprep.subr.bf16.mxu0 %v6143
    %7153 = vmatpush1.bf16.msra.mxu0 %v6142
    %7154 = vmatprep.subr.bf16.mxu0 %v6147
    %7155 = vmatpush1.bf16.msra.mxu0 %v6146
    %7156 = vmatprep.subr.bf16.mxu0 %v6151
    %7157 = vmatpush1.bf16.msra.mxu0 %v6150
    %7158 = vmatprep.subr.bf16.mxu0 %v6155
    %7159 = vmatpush1.bf16.msra.mxu0 %v6154
    %7160 = vmatprep.subr.bf16.mxu0 %v6159
    %7161 = vmatpush1.bf16.msra.mxu0 %v6158
    %7162 = vmatprep.subr.bf16.mxu0 %v6163
    %7163 = vmatpush1.bf16.msra.mxu0 %v6162
    %7164 = vmatprep.subr.bf16.mxu0 %v6167
    %7165 = vmatpush1.bf16.msra.mxu0 %v6166
    %7166 = vmatprep.subr.bf16.mxu0 %v6171
    %7167 = vmatpush1.bf16.msra.mxu0 %v6170
    %7168 = vmatprep.subr.bf16.mxu0 %v6175
    %7169 = vmatpush1.bf16.msra.mxu0 %v6174
    %7170 = vmatprep.mubr.bf16.mxu0 %v4029
    %7171 = vmatmul.mubr.bf16.gmra.mrb[0].mxu0 %v4028
    %v7172 = vpop.f32.mrb[0].mxu0
    %v7173 = vadd.f32 %v4561, %v7172
    %v7174 = vpop.f32.mrb[0].mxu0
    %v7175 = vadd.f32 %v4565, %v7174
    %v7176 = vpop.f32.mrb[0].mxu0
    %v7177 = vadd.f32 %v4561, %v7176
    %v7178 = vpop.f32.mrb[0].mxu0
    %v7179 = vadd.f32 %v4565, %v7178
    %7180 = vdwg.mxu0
    %7181 = vmatprep.subr.bf16.mxu0 %v6179
    %7182 = vmatpush1.bf16.msra.mxu0 %v6178
    %7183 = vmatprep.subr.bf16.mxu0 %v6183
    %7184 = vmatpush1.bf16.msra.mxu0 %v6182
    %7185 = vmatprep.subr.bf16.mxu0 %v6187
    %7186 = vmatpush1.bf16.msra.mxu0 %v6186
    %7187 = vmatprep.subr.bf16.mxu0 %v6191
    %7188 = vmatpush1.bf16.msra.mxu0 %v6190
    %7189 = vmatprep.subr.bf16.mxu0 %v6195
    %7190 = vmatpush1.bf16.msra.mxu0 %v6194
    %7191 = vmatprep.subr.bf16.mxu0 %v6199
    %7192 = vmatpush1.bf16.msra.mxu0 %v6198
    %7193 = vmatprep.subr.bf16.mxu0 %v6203
    %7194 = vmatpush1.bf16.msra.mxu0 %v6202
    %7195 = vmatprep.subr.bf16.mxu0 %v6207
    %7196 = vmatpush1.bf16.msra.mxu0 %v6206
    %7197 = vmatprep.subr.bf16.mxu0 %v6211
    %7198 = vmatpush1.bf16.msra.mxu0 %v6210
    %7199 = vmatprep.subr.bf16.mxu0 %v6215
    %7200 = vmatpush1.bf16.msra.mxu0 %v6214
    %7201 = vmatprep.subr.bf16.mxu0 %v6219
    %7202 = vmatpush1.bf16.msra.mxu0 %v6218
    %7203 = vmatprep.subr.bf16.mxu0 %v6223
    %7204 = vmatpush1.bf16.msra.mxu0 %v6222
    %7205 = vmatprep.subr.bf16.mxu0 %v6227
    %7206 = vmatpush1.bf16.msra.mxu0 %v6226
    %7207 = vmatprep.subr.bf16.mxu0 %v6231
    %7208 = vmatpush1.bf16.msra.mxu0 %v6230
    %7209 = vmatprep.subr.bf16.mxu0 %v6235
    %7210 = vmatpush1.bf16.msra.mxu0 %v6234
    %7211 = vmatprep.subr.bf16.mxu0 %v6239
    %7212 = vmatpush1.bf16.msra.mxu0 %v6238
    %7213 = vmatprep.mubr.bf16.mxu0 %v4031
    %7214 = vmatmul.mubr.bf16.gmra.mrb[0].mxu0 %v4030
    %v7215 = vpop.f32.mrb[0].mxu0
    %v7216 = vadd.f32 %v7173, %v7215
    %v7217 = vpop.f32.mrb[0].mxu0
    %v7218 = vadd.f32 %v7175, %v7217
    %v7219 = vpop.f32.mrb[0].mxu0
    %v7220 = vadd.f32 %v7177, %v7219
    %v7221 = vpop.f32.mrb[0].mxu0
    %v7222 = vadd.f32 %v7179, %v7221
    %7223 = vdwg.mxu0
    %7224 = vmatprep.subr.bf16.mxu0 %v6243
    %7225 = vmatpush1.bf16.msra.mxu0 %v6242
    %7226 = vmatprep.subr.bf16.mxu0 %v6247
    %7227 = vmatpush1.bf16.msra.mxu0 %v6246
    %7228 = vmatprep.subr.bf16.mxu0 %v6251
    %7229 = vmatpush1.bf16.msra.mxu0 %v6250
    %7230 = vmatprep.subr.bf16.mxu0 %v6255
    %7231 = vmatpush1.bf16.msra.mxu0 %v6254
    %7232 = vmatprep.subr.bf16.mxu0 %v6259
    %7233 = vmatpush1.bf16.msra.mxu0 %v6258
    %7234 = vmatprep.subr.bf16.mxu0 %v6263
    %7235 = vmatpush1.bf16.msra.mxu0 %v6262
    %7236 = vmatprep.subr.bf16.mxu0 %v6267
    %7237 = vmatpush1.bf16.msra.mxu0 %v6266
    %7238 = vmatprep.subr.bf16.mxu0 %v6271
    %7239 = vmatpush1.bf16.msra.mxu0 %v6270
    %7240 = vmatprep.subr.bf16.mxu0 %v6275
    %7241 = vmatpush1.bf16.msra.mxu0 %v6274
    %7242 = vmatprep.subr.bf16.mxu0 %v6279
    %7243 = vmatpush1.bf16.msra.mxu0 %v6278
    %7244 = vmatprep.subr.bf16.mxu0 %v6283
    %7245 = vmatpush1.bf16.msra.mxu0 %v6282
    %7246 = vmatprep.subr.bf16.mxu0 %v6287
    %7247 = vmatpush1.bf16.msra.mxu0 %v6286
    %7248 = vmatprep.subr.bf16.mxu0 %v6291
    %7249 = vmatpush1.bf16.msra.mxu0 %v6290
    %7250 = vmatprep.subr.bf16.mxu0 %v6295
    %7251 = vmatpush1.bf16.msra.mxu0 %v6294
    %7252 = vmatprep.subr.bf16.mxu0 %v6299
    %7253 = vmatpush1.bf16.msra.mxu0 %v6298
    %7254 = vmatprep.subr.bf16.mxu0 %v6303
    %7255 = vmatpush1.bf16.msra.mxu0 %v6302
    %7256 = vmatprep.mubr.bf16.mxu0 %v4033
    %7257 = vmatmul.mubr.bf16.gmra.mrb[0].mxu0 %v4032
    %v7258 = vpop.f32.mrb[0].mxu0
    %v7259 = vadd.f32 %v7216, %v7258
    %v7260 = vpop.f32.mrb[0].mxu0
    %v7261 = vadd.f32 %v7218, %v7260
    %v7262 = vpop.f32.mrb[0].mxu0
    %v7263 = vadd.f32 %v7220, %v7262
    %v7264 = vpop.f32.mrb[0].mxu0
    %v7265 = vadd.f32 %v7222, %v7264
    %7266 = vdwg.mxu0
    %7267 = vmatprep.subr.bf16.mxu0 %v6307
    %7268 = vmatpush1.bf16.msra.mxu0 %v6306
    %7269 = vmatprep.subr.bf16.mxu0 %v6311
    %7270 = vmatpush1.bf16.msra.mxu0 %v6310
    %7271 = vmatprep.subr.bf16.mxu0 %v6315
    %7272 = vmatpush1.bf16.msra.mxu0 %v6314
    %7273 = vmatprep.subr.bf16.mxu0 %v6319
    %7274 = vmatpush1.bf16.msra.mxu0 %v6318
    %7275 = vmatprep.subr.bf16.mxu0 %v6323
    %7276 = vmatpush1.bf16.msra.mxu0 %v6322
    %7277 = vmatprep.subr.bf16.mxu0 %v6327
    %7278 = vmatpush1.bf16.msra.mxu0 %v6326
    %7279 = vmatprep.subr.bf16.mxu0 %v6331
    %7280 = vmatpush1.bf16.msra.mxu0 %v6330
    %7281 = vmatprep.subr.bf16.mxu0 %v6335
    %7282 = vmatpush1.bf16.msra.mxu0 %v6334
    %7283 = vmatprep.subr.bf16.mxu0 %v6339
    %7284 = vmatpush1.bf16.msra.mxu0 %v6338
    %7285 = vmatprep.subr.bf16.mxu0 %v6343
    %7286 = vmatpush1.bf16.msra.mxu0 %v6342
    %7287 = vmatprep.subr.bf16.mxu0 %v6347
    %7288 = vmatpush1.bf16.msra.mxu0 %v6346
    %7289 = vmatprep.subr.bf16.mxu0 %v6351
    %7290 = vmatpush1.bf16.msra.mxu0 %v6350
    %7291 = vmatprep.subr.bf16.mxu0 %v6355
    %7292 = vmatpush1.bf16.msra.mxu0 %v6354
    %7293 = vmatprep.subr.bf16.mxu0 %v6359
    %7294 = vmatpush1.bf16.msra.mxu0 %v6358
    %7295 = vmatprep.subr.bf16.mxu0 %v6363
    %7296 = vmatpush1.bf16.msra.mxu0 %v6362
    %7297 = vmatprep.subr.bf16.mxu0 %v6367
    %7298 = vmatpush1.bf16.msra.mxu0 %v6366
    %7299 = vmatprep.mubr.bf16.mxu0 %v4035
    %7300 = vmatmul.mubr.bf16.gmra.mrb[0].mxu0 %v4034
    %v7301 = vpop.f32.mrb[0].mxu0
    %v7302 = vadd.f32 %v7259, %v7301
    %v7303 = vpop.f32.mrb[0].mxu0
    %v7304 = vadd.f32 %v7261, %v7303
    %v7305 = vpop.f32.mrb[0].mxu0
    %v7306 = vadd.f32 %v7263, %v7305
    %v7307 = vpop.f32.mrb[0].mxu0
    %v7308 = vadd.f32 %v7265, %v7307
    %7309 = vdwg.mxu0
    %7310 = vmatprep.subr.bf16.mxu0 %v6371
    %7311 = vmatpush1.bf16.msra.mxu0 %v6370
    %7312 = vmatprep.subr.bf16.mxu0 %v6375
    %7313 = vmatpush1.bf16.msra.mxu0 %v6374
    %7314 = vmatprep.subr.bf16.mxu0 %v6379
    %7315 = vmatpush1.bf16.msra.mxu0 %v6378
    %7316 = vmatprep.subr.bf16.mxu0 %v6383
    %7317 = vmatpush1.bf16.msra.mxu0 %v6382
    %7318 = vmatprep.subr.bf16.mxu0 %v6387
    %7319 = vmatpush1.bf16.msra.mxu0 %v6386
    %7320 = vmatprep.subr.bf16.mxu0 %v6391
    %7321 = vmatpush1.bf16.msra.mxu0 %v6390
    %7322 = vmatprep.subr.bf16.mxu0 %v6395
    %7323 = vmatpush1.bf16.msra.mxu0 %v6394
    %7324 = vmatprep.subr.bf16.mxu0 %v6399
    %7325 = vmatpush1.bf16.msra.mxu0 %v6398
    %7326 = vmatprep.subr.bf16.mxu0 %v6403
    %7327 = vmatpush1.bf16.msra.mxu0 %v6402
    %7328 = vmatprep.subr.bf16.mxu0 %v6407
    %7329 = vmatpush1.bf16.msra.mxu0 %v6406
    %7330 = vmatprep.subr.bf16.mxu0 %v6411
    %7331 = vmatpush1.bf16.msra.mxu0 %v6410
    %7332 = vmatprep.subr.bf16.mxu0 %v6415
    %7333 = vmatpush1.bf16.msra.mxu0 %v6414
    %7334 = vmatprep.subr.bf16.mxu0 %v6419
    %7335 = vmatpush1.bf16.msra.mxu0 %v6418
    %7336 = vmatprep.subr.bf16.mxu0 %v6423
    %7337 = vmatpush1.bf16.msra.mxu0 %v6422
    %7338 = vmatprep.subr.bf16.mxu0 %v6427
    %7339 = vmatpush1.bf16.msra.mxu0 %v6426
    %7340 = vmatprep.subr.bf16.mxu0 %v6431
    %7341 = vmatpush1.bf16.msra.mxu0 %v6430
    %7342 = vmatprep.mubr.bf16.mxu0 %v4037
    %7343 = vmatmul.mubr.bf16.gmra.mrb[0].mxu0 %v4036
    %v7344 = vpop.f32.mrb[0].mxu0
    %v7345 = vadd.f32 %v7302, %v7344
    %v7346 = vpop.f32.mrb[0].mxu0
    %v7347 = vadd.f32 %v7304, %v7346
    %v7348 = vpop.f32.mrb[0].mxu0
    %v7349 = vadd.f32 %v7306, %v7348
    %v7350 = vpop.f32.mrb[0].mxu0
    %v7351 = vadd.f32 %v7308, %v7350
    %7352 = vdwg.mxu0
    %7353 = vmatprep.subr.bf16.mxu0 %v6435
    %7354 = vmatpush1.bf16.msra.mxu0 %v6434
    %7355 = vmatprep.subr.bf16.mxu0 %v6439
    %7356 = vmatpush1.bf16.msra.mxu0 %v6438
    %7357 = vmatprep.subr.bf16.mxu0 %v6443
    %7358 = vmatpush1.bf16.msra.mxu0 %v6442
    %7359 = vmatprep.subr.bf16.mxu0 %v6447
    %7360 = vmatpush1.bf16.msra.mxu0 %v6446
    %7361 = vmatprep.subr.bf16.mxu0 %v6451
    %7362 = vmatpush1.bf16.msra.mxu0 %v6450
    %7363 = vmatprep.subr.bf16.mxu0 %v6455
    %7364 = vmatpush1.bf16.msra.mxu0 %v6454
    %7365 = vmatprep.subr.bf16.mxu0 %v6459
    %7366 = vmatpush1.bf16.msra.mxu0 %v6458
    %7367 = vmatprep.subr.bf16.mxu0 %v6463
    %7368 = vmatpush1.bf16.msra.mxu0 %v6462
    %7369 = vmatprep.subr.bf16.mxu0 %v6467
    %7370 = vmatpush1.bf16.msra.mxu0 %v6466
    %7371 = vmatprep.subr.bf16.mxu0 %v6471
    %7372 = vmatpush1.bf16.msra.mxu0 %v6470
    %7373 = vmatprep.subr.bf16.mxu0 %v6475
    %7374 = vmatpush1.bf16.msra.mxu0 %v6474
    %7375 = vmatprep.subr.bf16.mxu0 %v6479
    %7376 = vmatpush1.bf16.msra.mxu0 %v6478
    %7377 = vmatprep.subr.bf16.mxu0 %v6483
    %7378 = vmatpush1.bf16.msra.mxu0 %v6482
    %7379 = vmatprep.subr.bf16.mxu0 %v6487
    %7380 = vmatpush1.bf16.msra.mxu0 %v6486
    %7381 = vmatprep.subr.bf16.mxu0 %v6491
    %7382 = vmatpush1.bf16.msra.mxu0 %v6490
    %7383 = vmatprep.subr.bf16.mxu0 %v6495
    %7384 = vmatpush1.bf16.msra.mxu0 %v6494
    %7385 = vmatprep.mubr.bf16.mxu0 %v4039
    %7386 = vmatmul.mubr.bf16.gmra.mrb[0].mxu0 %v4038
    %v7387 = vpop.f32.mrb[0].mxu0
    %v7388 = vadd.f32 %v7345, %v7387
    %v7389 = vpop.f32.mrb[0].mxu0
    %v7390 = vadd.f32 %v7347, %v7389
    %v7391 = vpop.f32.mrb[0].mxu0
    %v7392 = vadd.f32 %v7349, %v7391
    %v7393 = vpop.f32.mrb[0].mxu0
    %v7394 = vadd.f32 %v7351, %v7393
    %7395 = vdwg.mxu0
    %7396 = vmatprep.subr.bf16.mxu0 %v6499
    %7397 = vmatpush1.bf16.msra.mxu0 %v6498
    %7398 = vmatprep.subr.bf16.mxu0 %v6503
    %7399 = vmatpush1.bf16.msra.mxu0 %v6502
    %7400 = vmatprep.subr.bf16.mxu0 %v6507
    %7401 = vmatpush1.bf16.msra.mxu0 %v6506
    %7402 = vmatprep.subr.bf16.mxu0 %v6511
    %7403 = vmatpush1.bf16.msra.mxu0 %v6510
    %7404 = vmatprep.subr.bf16.mxu0 %v6515
    %7405 = vmatpush1.bf16.msra.mxu0 %v6514
    %7406 = vmatprep.subr.bf16.mxu0 %v6519
    %7407 = vmatpush1.bf16.msra.mxu0 %v6518
    %7408 = vmatprep.subr.bf16.mxu0 %v6523
    %7409 = vmatpush1.bf16.msra.mxu0 %v6522
    %7410 = vmatprep.subr.bf16.mxu0 %v6527
    %7411 = vmatpush1.bf16.msra.mxu0 %v6526
    %7412 = vmatprep.subr.bf16.mxu0 %v6531
    %7413 = vmatpush1.bf16.msra.mxu0 %v6530
    %7414 = vmatprep.subr.bf16.mxu0 %v6535
    %7415 = vmatpush1.bf16.msra.mxu0 %v6534
    %7416 = vmatprep.subr.bf16.mxu0 %v6539
    %7417 = vmatpush1.bf16.msra.mxu0 %v6538
    %7418 = vmatprep.subr.bf16.mxu0 %v6543
    %7419 = vmatpush1.bf16.msra.mxu0 %v6542
    %7420 = vmatprep.subr.bf16.mxu0 %v6547
    %7421 = vmatpush1.bf16.msra.mxu0 %v6546
    %7422 = vmatprep.subr.bf16.mxu0 %v6551
    %7423 = vmatpush1.bf16.msra.mxu0 %v6550
    %7424 = vmatprep.subr.bf16.mxu0 %v6555
    %7425 = vmatpush1.bf16.msra.mxu0 %v6554
    %7426 = vmatprep.subr.bf16.mxu0 %v6559
    %7427 = vmatpush1.bf16.msra.mxu0 %v6558
    %7428 = vmatprep.mubr.bf16.mxu0 %v4041
    %7429 = vmatmul.mubr.bf16.gmra.mrb[0].mxu0 %v4040
    %v7430 = vpop.f32.mrb[0].mxu0
    %v7431 = vadd.f32 %v7388, %v7430
    %v7432 = vpop.f32.mrb[0].mxu0
    %v7433 = vadd.f32 %v7390, %v7432
    %v7434 = vpop.f32.mrb[0].mxu0
    %v7435 = vadd.f32 %v7392, %v7434
    %v7436 = vpop.f32.mrb[0].mxu0
    %v7437 = vadd.f32 %v7394, %v7436
    %7438 = vdwg.mxu0
    %7439 = vmatprep.subr.bf16.mxu0 %v6563
    %7440 = vmatpush1.bf16.msra.mxu0 %v6562
    %7441 = vmatprep.subr.bf16.mxu0 %v6567
    %7442 = vmatpush1.bf16.msra.mxu0 %v6566
    %7443 = vmatprep.subr.bf16.mxu0 %v6571
    %7444 = vmatpush1.bf16.msra.mxu0 %v6570
    %7445 = vmatprep.subr.bf16.mxu0 %v6575
    %7446 = vmatpush1.bf16.msra.mxu0 %v6574
    %7447 = vmatprep.subr.bf16.mxu0 %v6579
    %7448 = vmatpush1.bf16.msra.mxu0 %v6578
    %7449 = vmatprep.subr.bf16.mxu0 %v6583
    %7450 = vmatpush1.bf16.msra.mxu0 %v6582
    %7451 = vmatprep.subr.bf16.mxu0 %v6587
    %7452 = vmatpush1.bf16.msra.mxu0 %v6586
    %7453 = vmatprep.subr.bf16.mxu0 %v6591
    %7454 = vmatpush1.bf16.msra.mxu0 %v6590
    %7455 = vmatprep.subr.bf16.mxu0 %v6595
    %7456 = vmatpush1.bf16.msra.mxu0 %v6594
    %7457 = vmatprep.subr.bf16.mxu0 %v6599
    %7458 = vmatpush1.bf16.msra.mxu0 %v6598
    %7459 = vmatprep.subr.bf16.mxu0 %v6603
    %7460 = vmatpush1.bf16.msra.mxu0 %v6602
    %7461 = vmatprep.subr.bf16.mxu0 %v6607
    %7462 = vmatpush1.bf16.msra.mxu0 %v6606
    %7463 = vmatprep.subr.bf16.mxu0 %v6611
    %7464 = vmatpush1.bf16.msra.mxu0 %v6610
    %7465 = vmatprep.subr.bf16.mxu0 %v6615
    %7466 = vmatpush1.bf16.msra.mxu0 %v6614
    %7467 = vmatprep.subr.bf16.mxu0 %v6619
    %7468 = vmatpush1.bf16.msra.mxu0 %v6618
    %7469 = vmatprep.subr.bf16.mxu0 %v6623
    %7470 = vmatpush1.bf16.msra.mxu0 %v6622
    %7471 = vmatprep.mubr.bf16.mxu0 %v4043
    %7472 = vmatmul.mubr.bf16.gmra.mrb[0].mxu0 %v4042
    %v7473 = vpop.f32.mrb[0].mxu0
    %v7474 = vadd.f32 %v7431, %v7473
    %v7475 = vpop.f32.mrb[0].mxu0
    %v7476 = vadd.f32 %v7433, %v7475
    %v7477 = vpop.f32.mrb[0].mxu0
    %v7478 = vadd.f32 %v7435, %v7477
    %v7479 = vpop.f32.mrb[0].mxu0
    %v7480 = vadd.f32 %v7437, %v7479
    %7481 = vdwg.mxu0
    %7482 = vmatprep.subr.bf16.mxu0 %v6117
    %7483 = vmatpush1.bf16.msra.mxu0 %v6116
    %7484 = vmatprep.subr.bf16.mxu0 %v6121
    %7485 = vmatpush1.bf16.msra.mxu0 %v6120
    %7486 = vmatprep.subr.bf16.mxu0 %v6125
    %7487 = vmatpush1.bf16.msra.mxu0 %v6124
    %7488 = vmatprep.subr.bf16.mxu0 %v6129
    %7489 = vmatpush1.bf16.msra.mxu0 %v6128
    %7490 = vmatprep.subr.bf16.mxu0 %v6133
    %7491 = vmatpush1.bf16.msra.mxu0 %v6132
    %7492 = vmatprep.subr.bf16.mxu0 %v6137
    %7493 = vmatpush1.bf16.msra.mxu0 %v6136
    %7494 = vmatprep.subr.bf16.mxu0 %v6141
    %7495 = vmatpush1.bf16.msra.mxu0 %v6140
    %7496 = vmatprep.subr.bf16.mxu0 %v6145
    %7497 = vmatpush1.bf16.msra.mxu0 %v6144
    %7498 = vmatprep.subr.bf16.mxu0 %v6149
    %7499 = vmatpush1.bf16.msra.mxu0 %v6148
    %7500 = vmatprep.subr.bf16.mxu0 %v6153
    %7501 = vmatpush1.bf16.msra.mxu0 %v6152
    %7502 = vmatprep.subr.bf16.mxu0 %v6157
    %7503 = vmatpush1.bf16.msra.mxu0 %v6156
    %7504 = vmatprep.subr.bf16.mxu0 %v6161
    %7505 = vmatpush1.bf16.msra.mxu0 %v6160
    %7506 = vmatprep.subr.bf16.mxu0 %v6165
    %7507 = vmatpush1.bf16.msra.mxu0 %v6164
    %7508 = vmatprep.subr.bf16.mxu0 %v6169
    %7509 = vmatpush1.bf16.msra.mxu0 %v6168
    %7510 = vmatprep.subr.bf16.mxu0 %v6173
    %7511 = vmatpush1.bf16.msra.mxu0 %v6172
    %7512 = vmatprep.subr.bf16.mxu0 %v6177
    %7513 = vmatpush1.bf16.msra.mxu0 %v6176
    %7514 = vmatprep.mubr.bf16.mxu0 %v4029
    %7515 = vmatmul.mubr.bf16.gmra.mrb[0].mxu0 %v4028
    %v7516 = vpop.f32.mrb[0].mxu0
    %v7517 = vadd.f32 %v4569, %v7516
    %v7518 = vpop.f32.mrb[0].mxu0
    %v7519 = vadd.f32 %v4573, %v7518
    %v7520 = vpop.f32.mrb[0].mxu0
    %v7521 = vadd.f32 %v4569, %v7520
    %v7522 = vpop.f32.mrb[0].mxu0
    %v7523 = vadd.f32 %v4573, %v7522
    %7524 = vdwg.mxu0
    %7525 = vmatprep.subr.bf16.mxu0 %v6181
    %7526 = vmatpush1.bf16.msra.mxu0 %v6180
    %7527 = vmatprep.subr.bf16.mxu0 %v6185
    %7528 = vmatpush1.bf16.msra.mxu0 %v6184
    %7529 = vmatprep.subr.bf16.mxu0 %v6189
    %7530 = vmatpush1.bf16.msra.mxu0 %v6188
    %7531 = vmatprep.subr.bf16.mxu0 %v6193
    %7532 = vmatpush1.bf16.msra.mxu0 %v6192
    %7533 = vmatprep.subr.bf16.mxu0 %v6197
    %7534 = vmatpush1.bf16.msra.mxu0 %v6196
    %7535 = vmatprep.subr.bf16.mxu0 %v6201
    %7536 = vmatpush1.bf16.msra.mxu0 %v6200
    %7537 = vmatprep.subr.bf16.mxu0 %v6205
    %7538 = vmatpush1.bf16.msra.mxu0 %v6204
    %7539 = vmatprep.subr.bf16.mxu0 %v6209
    %7540 = vmatpush1.bf16.msra.mxu0 %v6208
    %7541 = vmatprep.subr.bf16.mxu0 %v6213
    %7542 = vmatpush1.bf16.msra.mxu0 %v6212
    %7543 = vmatprep.subr.bf16.mxu0 %v6217
    %7544 = vmatpush1.bf16.msra.mxu0 %v6216
    %7545 = vmatprep.subr.bf16.mxu0 %v6221
    %7546 = vmatpush1.bf16.msra.mxu0 %v6220
    %7547 = vmatprep.subr.bf16.mxu0 %v6225
    %7548 = vmatpush1.bf16.msra.mxu0 %v6224
    %7549 = vmatprep.subr.bf16.mxu0 %v6229
    %7550 = vmatpush1.bf16.msra.mxu0 %v6228
    %7551 = vmatprep.subr.bf16.mxu0 %v6233
    %7552 = vmatpush1.bf16.msra.mxu0 %v6232
    %7553 = vmatprep.subr.bf16.mxu0 %v6237
    %7554 = vmatpush1.bf16.msra.mxu0 %v6236
    %7555 = vmatprep.subr.bf16.mxu0 %v6241
    %7556 = vmatpush1.bf16.msra.mxu0 %v6240
    %7557 = vmatprep.mubr.bf16.mxu0 %v4031
    %7558 = vmatmul.mubr.bf16.gmra.mrb[0].mxu0 %v4030
    %v7559 = vpop.f32.mrb[0].mxu0
    %v7560 = vadd.f32 %v7517, %v7559
    %v7561 = vpop.f32.mrb[0].mxu0
    %v7562 = vadd.f32 %v7519, %v7561
    %v7563 = vpop.f32.mrb[0].mxu0
    %v7564 = vadd.f32 %v7521, %v7563
    %v7565 = vpop.f32.mrb[0].mxu0
    %v7566 = vadd.f32 %v7523, %v7565
    %7567 = vdwg.mxu0
    %7568 = vmatprep.subr.bf16.mxu0 %v6245
    %7569 = vmatpush1.bf16.msra.mxu0 %v6244
    %7570 = vmatprep.subr.bf16.mxu0 %v6249
    %7571 = vmatpush1.bf16.msra.mxu0 %v6248
    %7572 = vmatprep.subr.bf16.mxu0 %v6253
    %7573 = vmatpush1.bf16.msra.mxu0 %v6252
    %7574 = vmatprep.subr.bf16.mxu0 %v6257
    %7575 = vmatpush1.bf16.msra.mxu0 %v6256
    %7576 = vmatprep.subr.bf16.mxu0 %v6261
    %7577 = vmatpush1.bf16.msra.mxu0 %v6260
    %7578 = vmatprep.subr.bf16.mxu0 %v6265
    %7579 = vmatpush1.bf16.msra.mxu0 %v6264
    %7580 = vmatprep.subr.bf16.mxu0 %v6269
    %7581 = vmatpush1.bf16.msra.mxu0 %v6268
    %7582 = vmatprep.subr.bf16.mxu0 %v6273
    %7583 = vmatpush1.bf16.msra.mxu0 %v6272
    %7584 = vmatprep.subr.bf16.mxu0 %v6277
    %7585 = vmatpush1.bf16.msra.mxu0 %v6276
    %7586 = vmatprep.subr.bf16.mxu0 %v6281
    %7587 = vmatpush1.bf16.msra.mxu0 %v6280
    %7588 = vmatprep.subr.bf16.mxu0 %v6285
    %7589 = vmatpush1.bf16.msra.mxu0 %v6284
    %7590 = vmatprep.subr.bf16.mxu0 %v6289
    %7591 = vmatpush1.bf16.msra.mxu0 %v6288
    %7592 = vmatprep.subr.bf16.mxu0 %v6293
    %7593 = vmatpush1.bf16.msra.mxu0 %v6292
    %7594 = vmatprep.subr.bf16.mxu0 %v6297
    %7595 = vmatpush1.bf16.msra.mxu0 %v6296
    %7596 = vmatprep.subr.bf16.mxu0 %v6301
    %7597 = vmatpush1.bf16.msra.mxu0 %v6300
    %7598 = vmatprep.subr.bf16.mxu0 %v6305
    %7599 = vmatpush1.bf16.msra.mxu0 %v6304
    %7600 = vmatprep.mubr.bf16.mxu0 %v4033
    %7601 = vmatmul.mubr.bf16.gmra.mrb[0].mxu0 %v4032
    %v7602 = vpop.f32.mrb[0].mxu0
    %v7603 = vadd.f32 %v7560, %v7602
    %v7604 = vpop.f32.mrb[0].mxu0
    %v7605 = vadd.f32 %v7562, %v7604
    %v7606 = vpop.f32.mrb[0].mxu0
    %v7607 = vadd.f32 %v7564, %v7606
    %v7608 = vpop.f32.mrb[0].mxu0
    %v7609 = vadd.f32 %v7566, %v7608
    %7610 = vdwg.mxu0
    %7611 = vmatprep.subr.bf16.mxu0 %v6309
    %7612 = vmatpush1.bf16.msra.mxu0 %v6308
    %7613 = vmatprep.subr.bf16.mxu0 %v6313
    %7614 = vmatpush1.bf16.msra.mxu0 %v6312
    %7615 = vmatprep.subr.bf16.mxu0 %v6317
    %7616 = vmatpush1.bf16.msra.mxu0 %v6316
    %7617 = vmatprep.subr.bf16.mxu0 %v6321
    %7618 = vmatpush1.bf16.msra.mxu0 %v6320
    %7619 = vmatprep.subr.bf16.mxu0 %v6325
    %7620 = vmatpush1.bf16.msra.mxu0 %v6324
    %7621 = vmatprep.subr.bf16.mxu0 %v6329
    %7622 = vmatpush1.bf16.msra.mxu0 %v6328
    %7623 = vmatprep.subr.bf16.mxu0 %v6333
    %7624 = vmatpush1.bf16.msra.mxu0 %v6332
    %7625 = vmatprep.subr.bf16.mxu0 %v6337
    %7626 = vmatpush1.bf16.msra.mxu0 %v6336
    %7627 = vmatprep.subr.bf16.mxu0 %v6341
    %7628 = vmatpush1.bf16.msra.mxu0 %v6340
    %7629 = vmatprep.subr.bf16.mxu0 %v6345
    %7630 = vmatpush1.bf16.msra.mxu0 %v6344
    %7631 = vmatprep.subr.bf16.mxu0 %v6349
    %7632 = vmatpush1.bf16.msra.mxu0 %v6348
    %7633 = vmatprep.subr.bf16.mxu0 %v6353
    %7634 = vmatpush1.bf16.msra.mxu0 %v6352
    %7635 = vmatprep.subr.bf16.mxu0 %v6357
    %7636 = vmatpush1.bf16.msra.mxu0 %v6356
    %7637 = vmatprep.subr.bf16.mxu0 %v6361
    %7638 = vmatpush1.bf16.msra.mxu0 %v6360
    %7639 = vmatprep.subr.bf16.mxu0 %v6365
    %7640 = vmatpush1.bf16.msra.mxu0 %v6364
    %7641 = vmatprep.subr.bf16.mxu0 %v6369
    %7642 = vmatpush1.bf16.msra.mxu0 %v6368
    %7643 = vmatprep.mubr.bf16.mxu0 %v4035
    %7644 = vmatmul.mubr.bf16.gmra.mrb[0].mxu0 %v4034
    %v7645 = vpop.f32.mrb[0].mxu0
    %v7646 = vadd.f32 %v7603, %v7645
    %v7647 = vpop.f32.mrb[0].mxu0
    %v7648 = vadd.f32 %v7605, %v7647
    %v7649 = vpop.f32.mrb[0].mxu0
    %v7650 = vadd.f32 %v7607, %v7649
    %v7651 = vpop.f32.mrb[0].mxu0
    %v7652 = vadd.f32 %v7609, %v7651
    %7653 = vdwg.mxu0
    %7654 = vmatprep.subr.bf16.mxu0 %v6373
    %7655 = vmatpush1.bf16.msra.mxu0 %v6372
    %7656 = vmatprep.subr.bf16.mxu0 %v6377
    %7657 = vmatpush1.bf16.msra.mxu0 %v6376
    %7658 = vmatprep.subr.bf16.mxu0 %v6381
    %7659 = vmatpush1.bf16.msra.mxu0 %v6380
    %7660 = vmatprep.subr.bf16.mxu0 %v6385
    %7661 = vmatpush1.bf16.msra.mxu0 %v6384
    %7662 = vmatprep.subr.bf16.mxu0 %v6389
    %7663 = vmatpush1.bf16.msra.mxu0 %v6388
    %7664 = vmatprep.subr.bf16.mxu0 %v6393
    %7665 = vmatpush1.bf16.msra.mxu0 %v6392
    %7666 = vmatprep.subr.bf16.mxu0 %v6397
    %7667 = vmatpush1.bf16.msra.mxu0 %v6396
    %7668 = vmatprep.subr.bf16.mxu0 %v6401
    %7669 = vmatpush1.bf16.msra.mxu0 %v6400
    %7670 = vmatprep.subr.bf16.mxu0 %v6405
    %7671 = vmatpush1.bf16.msra.mxu0 %v6404
    %7672 = vmatprep.subr.bf16.mxu0 %v6409
    %7673 = vmatpush1.bf16.msra.mxu0 %v6408
    %7674 = vmatprep.subr.bf16.mxu0 %v6413
    %7675 = vmatpush1.bf16.msra.mxu0 %v6412
    %7676 = vmatprep.subr.bf16.mxu0 %v6417
    %7677 = vmatpush1.bf16.msra.mxu0 %v6416
    %7678 = vmatprep.subr.bf16.mxu0 %v6421
    %7679 = vmatpush1.bf16.msra.mxu0 %v6420
    %7680 = vmatprep.subr.bf16.mxu0 %v6425
    %7681 = vmatpush1.bf16.msra.mxu0 %v6424
    %7682 = vmatprep.subr.bf16.mxu0 %v6429
    %7683 = vmatpush1.bf16.msra.mxu0 %v6428
    %7684 = vmatprep.subr.bf16.mxu0 %v6433
    %7685 = vmatpush1.bf16.msra.mxu0 %v6432
    %7686 = vmatprep.mubr.bf16.mxu0 %v4037
    %7687 = vmatmul.mubr.bf16.gmra.mrb[0].mxu0 %v4036
    %v7688 = vpop.f32.mrb[0].mxu0
    %v7689 = vadd.f32 %v7646, %v7688
    %v7690 = vpop.f32.mrb[0].mxu0
    %v7691 = vadd.f32 %v7648, %v7690
    %v7692 = vpop.f32.mrb[0].mxu0
    %v7693 = vadd.f32 %v7650, %v7692
    %v7694 = vpop.f32.mrb[0].mxu0
    %v7695 = vadd.f32 %v7652, %v7694
    %7696 = vdwg.mxu0
    %7697 = vmatprep.subr.bf16.mxu0 %v6437
    %7698 = vmatpush1.bf16.msra.mxu0 %v6436
    %7699 = vmatprep.subr.bf16.mxu0 %v6441
    %7700 = vmatpush1.bf16.msra.mxu0 %v6440
    %7701 = vmatprep.subr.bf16.mxu0 %v6445
    %7702 = vmatpush1.bf16.msra.mxu0 %v6444
    %7703 = vmatprep.subr.bf16.mxu0 %v6449
    %7704 = vmatpush1.bf16.msra.mxu0 %v6448
    %7705 = vmatprep.subr.bf16.mxu0 %v6453
    %7706 = vmatpush1.bf16.msra.mxu0 %v6452
    %7707 = vmatprep.subr.bf16.mxu0 %v6457
    %7708 = vmatpush1.bf16.msra.mxu0 %v6456
    %7709 = vmatprep.subr.bf16.mxu0 %v6461
    %7710 = vmatpush1.bf16.msra.mxu0 %v6460
    %7711 = vmatprep.subr.bf16.mxu0 %v6465
    %7712 = vmatpush1.bf16.msra.mxu0 %v6464
    %7713 = vmatprep.subr.bf16.mxu0 %v6469
    %7714 = vmatpush1.bf16.msra.mxu0 %v6468
    %7715 = vmatprep.subr.bf16.mxu0 %v6473
    %7716 = vmatpush1.bf16.msra.mxu0 %v6472
    %7717 = vmatprep.subr.bf16.mxu0 %v6477
    %7718 = vmatpush1.bf16.msra.mxu0 %v6476
    %7719 = vmatprep.subr.bf16.mxu0 %v6481
    %7720 = vmatpush1.bf16.msra.mxu0 %v6480
    %7721 = vmatprep.subr.bf16.mxu0 %v6485
    %7722 = vmatpush1.bf16.msra.mxu0 %v6484
    %7723 = vmatprep.subr.bf16.mxu0 %v6489
    %7724 = vmatpush1.bf16.msra.mxu0 %v6488
    %7725 = vmatprep.subr.bf16.mxu0 %v6493
    %7726 = vmatpush1.bf16.msra.mxu0 %v6492
    %7727 = vmatprep.subr.bf16.mxu0 %v6497
    %7728 = vmatpush1.bf16.msra.mxu0 %v6496
    %7729 = vmatprep.mubr.bf16.mxu0 %v4039
    %7730 = vmatmul.mubr.bf16.gmra.mrb[0].mxu0 %v4038
    %v7731 = vpop.f32.mrb[0].mxu0
    %v7732 = vadd.f32 %v7689, %v7731
    %v7733 = vpop.f32.mrb[0].mxu0
    %v7734 = vadd.f32 %v7691, %v7733
    %v7735 = vpop.f32.mrb[0].mxu0
    %v7736 = vadd.f32 %v7693, %v7735
    %v7737 = vpop.f32.mrb[0].mxu0
    %v7738 = vadd.f32 %v7695, %v7737
    %7739 = vdwg.mxu0
    %7740 = vmatprep.subr.bf16.mxu0 %v6501
    %7741 = vmatpush1.bf16.msra.mxu0 %v6500
    %7742 = vmatprep.subr.bf16.mxu0 %v6505
    %7743 = vmatpush1.bf16.msra.mxu0 %v6504
    %7744 = vmatprep.subr.bf16.mxu0 %v6509
    %7745 = vmatpush1.bf16.msra.mxu0 %v6508
    %7746 = vmatprep.subr.bf16.mxu0 %v6513
    %7747 = vmatpush1.bf16.msra.mxu0 %v6512
    %7748 = vmatprep.subr.bf16.mxu0 %v6517
    %7749 = vmatpush1.bf16.msra.mxu0 %v6516
    %7750 = vmatprep.subr.bf16.mxu0 %v6521
    %7751 = vmatpush1.bf16.msra.mxu0 %v6520
    %7752 = vmatprep.subr.bf16.mxu0 %v6525
    %7753 = vmatpush1.bf16.msra.mxu0 %v6524
    %7754 = vmatprep.subr.bf16.mxu0 %v6529
    %7755 = vmatpush1.bf16.msra.mxu0 %v6528
    %7756 = vmatprep.subr.bf16.mxu0 %v6533
    %7757 = vmatpush1.bf16.msra.mxu0 %v6532
    %7758 = vmatprep.subr.bf16.mxu0 %v6537
    %7759 = vmatpush1.bf16.msra.mxu0 %v6536
    %7760 = vmatprep.subr.bf16.mxu0 %v6541
    %7761 = vmatpush1.bf16.msra.mxu0 %v6540
    %7762 = vmatprep.subr.bf16.mxu0 %v6545
    %7763 = vmatpush1.bf16.msra.mxu0 %v6544
    %7764 = vmatprep.subr.bf16.mxu0 %v6549
    %7765 = vmatpush1.bf16.msra.mxu0 %v6548
    %7766 = vmatprep.subr.bf16.mxu0 %v6553
    %7767 = vmatpush1.bf16.msra.mxu0 %v6552
    %7768 = vmatprep.subr.bf16.mxu0 %v6557
    %7769 = vmatpush1.bf16.msra.mxu0 %v6556
    %7770 = vmatprep.subr.bf16.mxu0 %v6561
    %7771 = vmatpush1.bf16.msra.mxu0 %v6560
    %7772 = vmatprep.mubr.bf16.mxu0 %v4041
    %7773 = vmatmul.mubr.bf16.gmra.mrb[0].mxu0 %v4040
    %v7774 = vpop.f32.mrb[0].mxu0
    %v7775 = vadd.f32 %v7732, %v7774
    %v7776 = vpop.f32.mrb[0].mxu0
    %v7777 = vadd.f32 %v7734, %v7776
    %v7778 = vpop.f32.mrb[0].mxu0
    %v7779 = vadd.f32 %v7736, %v7778
    %v7780 = vpop.f32.mrb[0].mxu0
    %v7781 = vadd.f32 %v7738, %v7780
    %7782 = vdwg.mxu0
    %7783 = vmatprep.subr.bf16.mxu0 %v6565
    %7784 = vmatpush1.bf16.msra.mxu0 %v6564
    %7785 = vmatprep.subr.bf16.mxu0 %v6569
    %7786 = vmatpush1.bf16.msra.mxu0 %v6568
    %7787 = vmatprep.subr.bf16.mxu0 %v6573
    %7788 = vmatpush1.bf16.msra.mxu0 %v6572
    %7789 = vmatprep.subr.bf16.mxu0 %v6577
    %7790 = vmatpush1.bf16.msra.mxu0 %v6576
    %7791 = vmatprep.subr.bf16.mxu0 %v6581
    %7792 = vmatpush1.bf16.msra.mxu0 %v6580
    %7793 = vmatprep.subr.bf16.mxu0 %v6585
    %7794 = vmatpush1.bf16.msra.mxu0 %v6584
    %7795 = vmatprep.subr.bf16.mxu0 %v6589
    %7796 = vmatpush1.bf16.msra.mxu0 %v6588
    %7797 = vmatprep.subr.bf16.mxu0 %v6593
    %7798 = vmatpush1.bf16.msra.mxu0 %v6592
    %7799 = vmatprep.subr.bf16.mxu0 %v6597
    %7800 = vmatpush1.bf16.msra.mxu0 %v6596
    %7801 = vmatprep.subr.bf16.mxu0 %v6601
    %7802 = vmatpush1.bf16.msra.mxu0 %v6600
    %7803 = vmatprep.subr.bf16.mxu0 %v6605
    %7804 = vmatpush1.bf16.msra.mxu0 %v6604
    %7805 = vmatprep.subr.bf16.mxu0 %v6609
    %7806 = vmatpush1.bf16.msra.mxu0 %v6608
    %7807 = vmatprep.subr.bf16.mxu0 %v6613
    %7808 = vmatpush1.bf16.msra.mxu0 %v6612
    %7809 = vmatprep.subr.bf16.mxu0 %v6617
    %7810 = vmatpush1.bf16.msra.mxu0 %v6616
    %7811 = vmatprep.subr.bf16.mxu0 %v6621
    %7812 = vmatpush1.bf16.msra.mxu0 %v6620
    %7813 = vmatprep.subr.bf16.mxu0 %v6625
    %7814 = vmatpush1.bf16.msra.mxu0 %v6624
    %7815 = vmatprep.mubr.bf16.mxu0 %v4043
    %7816 = vmatmul.mubr.bf16.gmra.mrb[0].mxu0 %v4042
    %v7817 = vpop.f32.mrb[0].mxu0
    %v7818 = vadd.f32 %v7775, %v7817
    %v7819 = vpop.f32.mrb[0].mxu0
    %v7820 = vadd.f32 %v7777, %v7819
    %v7821 = vpop.f32.mrb[0].mxu0
    %v7822 = vadd.f32 %v7779, %v7821
    %v7823 = vpop.f32.mrb[0].mxu0
    %v7824 = vadd.f32 %v7781, %v7823
    %7825 = vdwg.mxu0
    %v7826 = vadd.f32 %v27, %v7474
    %v7827 = vadd.f32 %v28, %v7476
    %v7828 = vadd.f32 %v29, %v7818
    %v7829 = vadd.f32 %v30, %v7820
    %v7830 = vadd.f32 %v31, %v7478
    %v7831 = vadd.f32 %v32, %v7480
    %v7832 = vadd.f32 %v33, %v7822
    %v7833 = vadd.f32 %v34, %v7824
    %7834 = vst [vmem:[#allocation2] sm:$0xff] %v7826
    %7835 = vst [vmem:[#allocation2 + $0x8] sm:$0xff] %v7827
    %7836 = vst [vmem:[#allocation2 + $0x10] sm:$0xff] %v7828
    %7837 = vst [vmem:[#allocation2 + $0x18] sm:$0xff] %v7829
    %7838 = vst [vmem:[#allocation2 + $0x20] sm:$0xff] %v7830
    %7839 = vst [vmem:[#allocation2 + $0x28] sm:$0xff] %v7831
    %7840 = vst [vmem:[#allocation2 + $0x30] sm:$0xff] %v7832
    %7841 = vst [vmem:[#allocation2 + $0x38] sm:$0xff] %v7833
    // Predicated region
    $region30: #{transformer_block.3} parent=1 // pred_check
      _
    $region31: #{transformer_block.3} parent=1 // pred_check_branch
      %7843 = sbr.rel (0) target = $region33
    $region32: #{transformer_block.3} parent=1 // pred_region
      %s7845 = ssub.s32 1024, 1024
      %7846 = vsyncadd [#allocation3], %s7845
      %s7847 = sshll.u32 [#allocation2], 4
      %s7848 = int_to_ptr.vmem [resolvable:$true] %s7847
      %7853 = dma.vmem_to_hbm [thread:$0]  %s7848, 1024, %s7, [#allocation3], 512, 512, 32
    $region33: #{transformer_block.3} parent=1 // pred_fallthru
      _
    // Predicated region
    $region34: #{transformer_block.3} parent=1 // pred_check
      _
    $region35: #{transformer_block.3} parent=1 // pred_check_branch
      %7855 = sbr.rel (0) target = $region37
    $region36: #{transformer_block.3} parent=1 // pred_region
      %7856 = dma.done [#allocation3], 1024
    $region37: #{transformer_block.3} parent=1 // pred_fallthru
      _
    %7857 = vsyncpa [#allocation3], 1

</llo_original>
